<compile_context>
chip_gen: v7x
topology: tpu7x:2x2x1
jax: 0.10.0
libtpu: 0.0.40
codegen_flags: <defaults>
</compile_context>

<pallas_src>
import jax
import jax.numpy as jnp
from jax.experimental import pallas as pl
from jax.experimental.pallas import tpu as pltpu


# ------------------------------ helpers ------------------------------

def _round_up(v, m):
    return (v + m - 1) // m * m


def _vmem_limit_bytes():
    """Per-generation scoped-VMEM budget (~3/4 of physical, capped at 100 MB)."""
    cap = 64 * 1024 * 1024  # conservative fallback (v7x physical VMEM)
    try:
        cap = int(pltpu.get_tpu_info().vmem_capacity_bytes)
    except Exception:  # best-effort hardware query
        pass
    return min(cap * 3 // 4, 100 * 1024 * 1024)


_VMEM_LIMIT = _vmem_limit_bytes()


def _cparams(sem):
    return pltpu.CompilerParams(dimension_semantics=sem,
                                vmem_limit_bytes=_VMEM_LIMIT)


def _pick_tile(m, cap):
    """Largest multiple-of-8 divisor of m up to `cap`; otherwise fall back to
    a 512-row sweet-spot tile with a masked boundary block (pl.cdiv grid)."""
    cap = max(8, min(int(cap), m))
    cap -= cap % 8
    for t in range(max(cap, 8), 7, -8):
        if m % t == 0:
            return t
    return max(8, min(512, cap))


def _pad2(w, r, c):
    return jnp.pad(w, ((0, r - w.shape[0]), (0, c - w.shape[1])))


def _pad_vec(v, n):
    return jnp.pad(v, (0, n - v.shape[0])).reshape(1, n).astype(jnp.float32)


# ------------------------------ stage A: cv1 + cv2 ------------------------------

def _make_cv1_cv2_kernel(c1, c1p):
    """h = silu(bn(x @ W1));  y2 = x @ W2  (x tile shared, lane-padded in VMEM)."""
    f32 = jnp.float32

    def _body(x, w1_ref, s1_ref, b1_ref, w2_ref, h_ref, y2_ref):
        t = jnp.dot(x, w1_ref[...], preferred_element_type=f32)
        t = t * s1_ref[...] + b1_ref[...]
        h_ref[...] = (t * jax.nn.sigmoid(t)).astype(h_ref.dtype)
        y2_ref[...] = jnp.dot(x, w2_ref[...],
                              preferred_element_type=f32).astype(y2_ref.dtype)

    if c1 == c1p:
        def kernel(x_ref, w1_ref, s1_ref, b1_ref, w2_ref, h_ref, y2_ref):
            _body(x_ref[...], w1_ref, s1_ref, b1_ref, w2_ref, h_ref, y2_ref)
        return kernel, False

    def kernel(x_ref, w1_ref, s1_ref, b1_ref, w2_ref, h_ref, y2_ref, xpad_ref):
        # Lane-pad the narrow-channel input inside VMEM instead of materializing
        # a 128-lane padded copy of x in HBM (saves a full HBM pad/cast pass).
        xpad_ref[...] = jnp.zeros(xpad_ref.shape, xpad_ref.dtype)
        xpad_ref[:, pl.ds(0, c1)] = x_ref[...]
        _body(xpad_ref[...], w1_ref, s1_ref, b1_ref, w2_ref, h_ref, y2_ref)

    return kernel, True


def _stage_a(xf, kp, tm):
    M, C1 = xf.shape
    C1p, Cp = kp['cv1_w'].shape
    kernel, needs_pad = _make_cv1_cv2_kernel(C1, C1p)
    row = lambda i: (i, 0)
    rep = lambda i: (0, 0)
    scratch = [pltpu.VMEM((tm, C1p), jnp.bfloat16)] if needs_pad else []
    return pl.pallas_call(
        kernel,
        out_shape=(jax.ShapeDtypeStruct((M, Cp), jnp.bfloat16),
                   jax.ShapeDtypeStruct((M, Cp), jnp.bfloat16)),
        grid=(pl.cdiv(M, tm),),
        in_specs=[pl.BlockSpec((tm, C1), row),
                  pl.BlockSpec((C1p, Cp), rep),
                  pl.BlockSpec((1, Cp), rep),
                  pl.BlockSpec((1, Cp), rep),
                  pl.BlockSpec((C1p, Cp), rep)],
        out_specs=(pl.BlockSpec((tm, Cp), row), pl.BlockSpec((tm, Cp), row)),
        scratch_shapes=scratch,
        compiler_params=_cparams(("parallel",)),
        cost_estimate=pl.CostEstimate(
            flops=4 * M * C1p * Cp, transcendentals=M * Cp,
            bytes_accessed=2 * M * C1 + 4 * C1p * Cp + 4 * M * Cp + 16 * Cp),
    )(xf, kp['cv1_w'], kp['cv1_s'], kp['cv1_b'], kp['cv2_w'])


# ------------------------------ stage C: m.* + cv3 (+ tail) ------------------------------

def _make_stage_c_kernel(H, W, Cp, fuse_tail):
    """m.cv1 -> 3x3 m.cv2 -> +shortcut -> cv3 (and optionally the CSP tail:
    concat-BN-SiLU + cv4 with its weight split in halves), one image/grid step."""
    HW = H * W
    IMG = W + 8                     # image row offset inside the flat pad buffer
    ROWS = HW + 2 * W + 16          # covers every 3x3 tap window
    f32, bf16 = jnp.float32, jnp.bfloat16

    def _mid(h, wm1_ref, sm1_ref, bm1_ref, wm2_ref, sm2_ref, bm2_ref,
             w3_ref, pad_ref):
        # --- m.cv1 : 1x1 conv + BN + SiLU (b1 never leaves VMEM) ---
        t = jnp.dot(h, wm1_ref[...], preferred_element_type=f32)
        t = t * sm1_ref[...] + bm1_ref[...]
        b1 = t * jax.nn.sigmoid(t)                          # (HW, Cp) f32
        # --- flat zero-padded image (bf16): only the vertical halo rows are
        # cleared each image; the interior is one contiguous aligned store ---
        pad_ref[pl.ds(0, IMG), :] = jnp.zeros((IMG, Cp), bf16)
        pad_ref[pl.ds(IMG + HW, W + 8), :] = jnp.zeros((W + 8, Cp), bf16)
        pad_ref[pl.ds(IMG, HW), :] = b1.astype(bf16)
        # --- horizontal SAME-padding masks (kill row-wrap contributions) ---
        col = jax.lax.broadcasted_iota(jnp.int32, (HW, 1), 0) % W
        not_first = (col != 0).astype(bf16)
        not_last = (col != W - 1).astype(bf16)
        # --- m.cv2 : 3x3 conv as 9 contiguous-slab MXU matmuls accumulated in
        # a local f32 value (no scratch zero fill / read-modify-write trips) ---
        acc = None
        for dy in range(3):
            for dx in range(3):
                win = pad_ref[pl.ds(dy * W + dx + (IMG - W - 1), HW), :]
                if dx == 0:
                    win = win * not_first
                elif dx == 2:
                    win = win * not_last
                part = jnp.dot(win, wm2_ref[dy * 3 + dx],
                               preferred_element_type=f32)
                acc = part if acc is None else acc + part
        y = acc * sm2_ref[...] + bm2_ref[...]
        y = y * jax.nn.sigmoid(y)
        m_out = h.astype(f32) + y                           # Bottleneck shortcut
        # --- cv3 : plain 1x1 conv while m_out is still in VMEM ---
        return jnp.dot(m_out.astype(bf16), w3_ref[...], preferred_element_type=f32)

    if fuse_tail:
        def kernel(h_ref, y2_ref, wm1_ref, sm1_ref, bm1_ref, wm2_ref, sm2_ref,
                   bm2_ref, w3_ref, sa_ref, ba_ref, sb_ref, bb_ref,
                   w4a_ref, w4b_ref, s4_ref, b4_ref, o_ref, pad_ref):
            y1 = _mid(h_ref[...], wm1_ref, sm1_ref, bm1_ref, wm2_ref, sm2_ref,
                      bm2_ref, w3_ref, pad_ref)
            # concat-BN-SiLU + cv4 with the cv4 weight split into y1/y2 halves:
            # no concat materialization and y1 never touches HBM.
            a = y1 * sa_ref[...] + ba_ref[...]
            a = a * jax.nn.sigmoid(a)
            b = y2_ref[...].astype(f32) * sb_ref[...] + bb_ref[...]
            b = b * jax.nn.sigmoid(b)
            acc = jnp.dot(a.astype(bf16), w4a_ref[...], preferred_element_type=f32)
            acc = acc + jnp.dot(b.astype(bf16), w4b_ref[...],
                                preferred_element_type=f32)
            z = acc * s4_ref[...] + b4_ref[...]
            o_ref[...] = (z * jax.nn.sigmoid(z)).astype(o_ref.dtype)
        return kernel

    def kernel(h_ref, wm1_ref, sm1_ref, bm1_ref, wm2_ref, sm2_ref, bm2_ref,
               w3_ref, y1_ref, pad_ref):
        y1 = _mid(h_ref[...], wm1_ref, sm1_ref, bm1_ref, wm2_ref, sm2_ref,
                  bm2_ref, w3_ref, pad_ref)
        y1_ref[...] = y1.astype(y1_ref.dtype)

    return kernel


def _fuse_tail_ok(HW, W, Cp, C2p):
    """Rough per-image VMEM estimate for the fused stage-C(+tail) kernel."""
    bf, f4 = 2, 4
    rows = HW + 2 * W + 16
    need = 2 * (2 * HW * Cp) * bf                       # h, y2 blocks (x2 buffers)
    need += 2 * HW * C2p * bf                           # output block (x2 buffers)
    need += 2 * (11 * Cp * Cp + 2 * Cp * C2p) * bf      # weights (x2 buffers)
    need += rows * Cp * bf                              # flat pad scratch
    need += 4 * HW * Cp * f4 + HW * C2p * f4            # live f32 temporaries
    return need <= (_VMEM_LIMIT * 9) // 10


def _stage_c(h, kp, N, H, W, y2=None):
    Cp = kp['m_cv1_w'].shape[0]
    C2p = kp['cv4_wa'].shape[1]
    HW = H * W
    M = N * HW
    rows = HW + 2 * W + 16
    fused = y2 is not None
    row = lambda n: (n, 0)
    rep2 = lambda n: (0, 0)
    rep3 = lambda n: (0, 0, 0)
    kernel = _make_stage_c_kernel(H, W, Cp, fused)

    common_in = [pl.BlockSpec((Cp, Cp), rep2),      # m.cv1 w
                 pl.BlockSpec((1, Cp), rep2),       # m.cv1 bn scale
                 pl.BlockSpec((1, Cp), rep2),       # m.cv1 bn bias
                 pl.BlockSpec((9, Cp, Cp), rep3),   # m.cv2 w (per tap)
                 pl.BlockSpec((1, Cp), rep2),       # m.cv2 bn scale
                 pl.BlockSpec((1, Cp), rep2),       # m.cv2 bn bias
                 pl.BlockSpec((Cp, Cp), rep2)]      # cv3 w
    common_args = (kp['m_cv1_w'], kp['m_cv1_s'], kp['m_cv1_b'],
                   kp['m_cv2_w'], kp['m_cv2_s'], kp['m_cv2_b'], kp['cv3_w'])
    scratch = [pltpu.VMEM((rows, Cp), jnp.bfloat16)]

    if fused:
        in_specs = ([pl.BlockSpec((HW, Cp), row), pl.BlockSpec((HW, Cp), row)]
                    + common_in
                    + [pl.BlockSpec((1, Cp), rep2), pl.BlockSpec((1, Cp), rep2),
                       pl.BlockSpec((1, Cp), rep2), pl.BlockSpec((1, Cp), rep2),
                       pl.BlockSpec((Cp, C2p), rep2), pl.BlockSpec((Cp, C2p), rep2),
                       pl.BlockSpec((1, C2p), rep2), pl.BlockSpec((1, C2p), rep2)])
        args = (h, y2) + common_args + (kp['bn_sa'], kp['bn_ba'],
                                        kp['bn_sb'], kp['bn_bb'],
                                        kp['cv4_wa'], kp['cv4_wb'],
                                        kp['cv4_s'], kp['cv4_b'])
        out_shape = jax.ShapeDtypeStruct((M, C2p), jnp.bfloat16)
        out_spec = pl.BlockSpec((HW, C2p), row)
        flops = 2 * M * Cp * (11 * Cp + 2 * C2p)
        trans = M * (4 * Cp + C2p)
        byts = 2 * M * (2 * Cp + C2p) + 2 * Cp * (11 * Cp + 2 * C2p)
    else:
        in_specs = [pl.BlockSpec((HW, Cp), row)] + common_in
        args = (h,) + common_args
        out_shape = jax.ShapeDtypeStruct((M, Cp), jnp.bfloat16)
        out_spec = pl.BlockSpec((HW, Cp), row)
        flops = 22 * M * Cp * Cp
        trans = 2 * M * Cp
        byts = 4 * M * Cp + 22 * Cp * Cp

    return pl.pallas_call(
        kernel,
        out_shape=out_shape,
        grid=(N,),
        in_specs=in_specs,
        out_specs=out_spec,
        scratch_shapes=scratch,
        compiler_params=_cparams(("parallel",)),
        cost_estimate=pl.CostEstimate(flops=flops, transcendentals=trans,
                                      bytes_accessed=byts),
    )(*args)


# ------------------------------ stage D (split-path fallback) ------------------------------

def _bn_cv4_kernel(y1_ref, y2_ref, sa_ref, ba_ref, sb_ref, bb_ref,
                   w4a_ref, w4b_ref, s4_ref, b4_ref, o_ref):
    """out = silu(bn4( silu(bn_a(y1)) @ W4a + silu(bn_b(y2)) @ W4b ))."""
    f32, bf16 = jnp.float32, jnp.bfloat16
    a = y1_ref[...].astype(f32) * sa_ref[...] + ba_ref[...]
    a = a * jax.nn.sigmoid(a)
    b = y2_ref[...].astype(f32) * sb_ref[...] + bb_ref[...]
    b = b * jax.nn.sigmoid(b)
    acc = jnp.dot(a.astype(bf16), w4a_ref[...], preferred_element_type=f32)
    acc = acc + jnp.dot(b.astype(bf16), w4b_ref[...], preferred_element_type=f32)
    z = acc * s4_ref[...] + b4_ref[...]
    o_ref[...] = (z * jax.nn.sigmoid(z)).astype(o_ref.dtype)


def _stage_d(y1, y2, kp, tm):
    M, Cp = y1.shape
    C2p = kp['cv4_wa'].shape[1]
    row = lambda i: (i, 0)
    rep = lambda i: (0, 0)
    return pl.pallas_call(
        _bn_cv4_kernel,
        out_shape=jax.ShapeDtypeStruct((M, C2p), jnp.bfloat16),
        grid=(pl.cdiv(M, tm),),
        in_specs=[pl.BlockSpec((tm, Cp), row),
                  pl.BlockSpec((tm, Cp), row),
                  pl.BlockSpec((1, Cp), rep),
                  pl.BlockSpec((1, Cp), rep),
                  pl.BlockSpec((1, Cp), rep),
                  pl.BlockSpec((1, Cp), rep),
                  pl.BlockSpec((Cp, C2p), rep),
                  pl.BlockSpec((Cp, C2p), rep),
                  pl.BlockSpec((1, C2p), rep),
                  pl.BlockSpec((1, C2p), rep)],
        out_specs=pl.BlockSpec((tm, C2p), row),
        compiler_params=_cparams(("parallel",)),
        cost_estimate=pl.CostEstimate(
            flops=4 * M * Cp * C2p, transcendentals=M * (2 * Cp + C2p),
            bytes_accessed=4 * M * Cp + 4 * Cp * C2p + 2 * M * C2p),
    )(y1, y2, kp['bn_sa'], kp['bn_ba'], kp['bn_sb'], kp['bn_bb'],
      kp['cv4_wa'], kp['cv4_wb'], kp['cv4_s'], kp['cv4_b'])


# ------------------------------ parameter prep & forward ------------------------------

def prepare_params(p):
    """Pad channels to multiples of 128 (lane-dense), bf16 MXU weights,
    split the post-concat BN and cv4 weight into y1/y2 halves."""
    c1 = p['cv1_w'].shape[0]
    c_ = p['cv1_w'].shape[1]
    c2 = p['cv4_w'].shape[1]
    C1p, Cp, C2p = _round_up(c1, 128), _round_up(c_, 128), _round_up(c2, 128)
    bf = jnp.bfloat16
    kp = {'_dims': (C1p, Cp, C2p, c2)}
    kp['cv1_w'] = _pad2(p['cv1_w'], C1p, Cp).astype(bf)
    kp['cv1_s'] = _pad_vec(p['cv1_s'], Cp)
    kp['cv1_b'] = _pad_vec(p['cv1_b'], Cp)
    kp['cv2_w'] = _pad2(p['cv2_w'], C1p, Cp).astype(bf)
    kp['m_cv1_w'] = _pad2(p['m_cv1_w'], Cp, Cp).astype(bf)
    kp['m_cv1_s'] = _pad_vec(p['m_cv1_s'], Cp)
    kp['m_cv1_b'] = _pad_vec(p['m_cv1_b'], Cp)
    w2 = jnp.pad(p['m_cv2_w'], ((0, 0), (0, 0), (0, Cp - c_), (0, Cp - c_)))
    kp['m_cv2_w'] = w2.reshape(9, Cp, Cp).astype(bf)          # (dy*3+dx, Cin, Cout)
    kp['m_cv2_s'] = _pad_vec(p['m_cv2_s'], Cp)
    kp['m_cv2_b'] = _pad_vec(p['m_cv2_b'], Cp)
    kp['cv3_w'] = _pad2(p['cv3_w'], Cp, Cp).astype(bf)
    kp['bn_sa'] = _pad_vec(p['bn_s'][:c_], Cp)
    kp['bn_ba'] = _pad_vec(p['bn_b'][:c_], Cp)
    kp['bn_sb'] = _pad_vec(p['bn_s'][c_:], Cp)
    kp['bn_bb'] = _pad_vec(p['bn_b'][c_:], Cp)
    kp['cv4_wa'] = _pad2(p['cv4_w'][:c_], Cp, C2p).astype(bf)
    kp['cv4_wb'] = _pad2(p['cv4_w'][c_:], Cp, C2p).astype(bf)
    kp['cv4_s'] = _pad_vec(p['cv4_s'], C2p)
    kp['cv4_b'] = _pad_vec(p['cv4_b'], C2p)
    return kp


def bottleneck_csp_forward(x_nchw, p, *, tile_m=1024, fuse_tail=None):
    N, C1, H, W = x_nchw.shape
    kp = prepare_params(p)
    C1p, Cp, C2p, c2 = kp['_dims']
    M = N * H * W
    tm = _pick_tile(M, tile_m)

    # NCHW -> (M, C1) NHWC rows, bf16 MXU operands; no channel padding in HBM.
    xf = jnp.transpose(x_nchw, (0, 2, 3, 1)).reshape(M, C1).astype(jnp.bfloat16)

    h, y2 = _stage_a(xf, kp, tm)                        # cv1(+BN+SiLU) & cv2
    if fuse_tail is None:
        fuse_tail = _fuse_tail_ok(H * W, W, Cp, C2p)
    if fuse_tail:
        out = _stage_c(h, kp, N, H, W, y2=y2)           # m.* + cv3 + bn/act + cv4
    else:
        y1 = _stage_c(h, kp, N, H, W)                   # m.* + cv3
        out = _stage_d(y1, y2, kp, tm)                  # concat-BN-SiLU + cv4

    # TODO(synk): keep NHWC/bf16 here if the consumer allows; the slice +
    # transpose back to NCHW f32 is an extra XLA pass kept for module parity.
    out = out.reshape(N, H, W, C2p)[..., :c2].astype(jnp.float32)
    return jnp.transpose(out, (0, 3, 1, 2))


# ------------------------------ reference ------------------------------

def reference_forward(x_nchw, p):
    """Pure-JAX/XLA reference mirroring the kernels' mixed-precision policy
    (bf16 MXU operands + bf16 intermediates, f32 accumulation / epilogues)."""
    f32, bf16 = jnp.float32, jnp.bfloat16
    silu = lambda t: t * jax.nn.sigmoid(t)
    mm = lambda a, b: jnp.dot(a.astype(bf16), b.astype(bf16),
                              preferred_element_type=f32)
    N, C1, H, W = x_nchw.shape
    c_ = p['cv1_w'].shape[1]
    x = jnp.transpose(x_nchw, (0, 2, 3, 1)).reshape(N * H * W, C1)

    h = silu(mm(x, p['cv1_w']) * p['cv1_s'] + p['cv1_b']).astype(bf16)     # cv1
    y2 = mm(x, p['cv2_w']).astype(bf16)                                    # cv2

    t = mm(h, p['m_cv1_w']) * p['m_cv1_s'] + p['m_cv1_b']                  # m.cv1
    b1 = silu(t).reshape(N, H, W, c_)
    conv = jax.lax.conv_general_dilated(
        b1.astype(bf16), p['m_cv2_w'].astype(bf16), (1, 1), 'SAME',
        dimension_numbers=('NHWC', 'HWIO', 'NHWC'),
        preferred_element_type=f32).reshape(N * H * W, c_)                 # m.cv2
    m_out = h.astype(f32) + silu(conv * p['m_cv2_s'] + p['m_cv2_b'])
    y1 = mm(m_out, p['cv3_w'])                                             # cv3 (f32, fused path)

    ycat = jnp.concatenate([y1, y2.astype(f32)], axis=-1)
    z = silu(ycat * p['bn_s'] + p['bn_b'])
    out = silu(mm(z, p['cv4_w']) * p['cv4_s'] + p['cv4_b'])                # cv4
    return jnp.transpose(out.reshape(N, H, W, -1), (0, 3, 1, 2))


# ------------------------------ parameter init ------------------------------

def _fold_bn(key, c, eps=1e-5):
    k1, k2, k3, k4 = jax.random.split(key, 4)
    gamma = 1.0 + 0.1 * jax.random.normal(k1, (c,), jnp.float32)
    beta = 0.1 * jax.random.normal(k2, (c,), jnp.float32)
    mean = 0.1 * jax.random.normal(k3, (c,), jnp.float32)
    var = 1.0 + 0.1 * jnp.abs(jax.random.normal(k4, (c,), jnp.float32))
    scale = gamma / jnp.sqrt(var + eps)
    bias = beta - mean * scale
    return scale, bias


def init_params(key, c1, c2, e=0.5):
    c_ = int(c2 * e)
    ks = jax.random.split(key, 16)
    nrm = lambda k, shp: 0.3 * jax.random.normal(k, shp, jnp.float32)
    p = {}
    p['cv1_w'] = nrm(ks[0], (c1, c_))
    p['cv1_s'], p['cv1_b'] = _fold_bn(ks[1], c_)
    p['cv2_w'] = nrm(ks[2], (c1, c_))                 # plain conv, bias=False
    p['cv3_w'] = nrm(ks[3], (c_, c_))                 # plain conv, bias=False
    p['cv4_w'] = nrm(ks[4], (2 * c_, c2))
    p['cv4_s'], p['cv4_b'] = _fold_bn(ks[5], c2)
    p['bn_s'], p['bn_b'] = _fold_bn(ks[6], 2 * c_)    # BN on concat
    p['m_cv1_w'] = nrm(ks[7], (c_, c_))               # Bottleneck cv1 (e=1.0)
    p['m_cv1_s'], p['m_cv1_b'] = _fold_bn(ks[8], c_)
    p['m_cv2_w'] = nrm(ks[9], (3, 3, c_, c_))         # 3x3 conv, HWIO layout
    p['m_cv2_s'], p['m_cv2_b'] = _fold_bn(ks[10], c_)
    return p


# ------------------------------ main ------------------------------

if __name__ == "__main__":
    key = jax.random.PRNGKey(0)
    kx, kparam = jax.random.split(key)

    N, C1, H, W = 2, 4, 16, 16
    C2 = 4
    x = jax.random.normal(kx, (N, C1, H, W), jnp.float32)
    params = init_params(kparam, C1, C2)

    fwd = jax.jit(bottleneck_csp_forward, static_argnames=("tile_m", "fuse_tail"))
    out = jax.block_until_ready(fwd(x, params, tile_m=128))  # 4-step grid in stage A

    ref = jax.block_until_ready(reference_forward(x, params))
    assert out.shape == (N, C2, H, W), out.shape
    err = float(jnp.max(jnp.abs(out - ref)))
    scale = float(jnp.max(jnp.abs(ref)))
    assert err <= 1e-2 + 2e-2 * scale, (err, scale)

    print("KERNEL_OK")
</pallas_src>

<mosaic_0001>
module attributes {stable_mosaic.version = 11 : i64} {
  func.func @kernel(%arg0: i32, %arg1: memref<128x4xbf16, #tpu.memory_space<vmem>>, %arg2: memref<128x128xbf16, #tpu.memory_space<vmem>>, %arg3: memref<1x128xf32, #tpu.memory_space<vmem>>, %arg4: memref<1x128xf32, #tpu.memory_space<vmem>>, %arg5: memref<128x128xbf16, #tpu.memory_space<vmem>>, %arg6: memref<128x128xbf16, #tpu.memory_space<vmem>>, %arg7: memref<128x128xbf16, #tpu.memory_space<vmem>>, %arg8: memref<128x128xbf16, #tpu.memory_space<vmem>>) attributes {dimension_semantics = [#tpu.dimension_semantics<parallel>], iteration_bounds = array<i64: 4>, scalar_prefetch = 0 : i64, scratch_operands = 1 : i64, tpu.core_type = #tpu.core_type<tc>, window_params = [{transform_indices = @transform_0, window_bounds = array<i64: 128, 4>}, {pipeline_mode = #tpu.pipeline_mode<synchronous>, transform_indices = @transform_1, window_bounds = array<i64: 128, 128>}, {pipeline_mode = #tpu.pipeline_mode<synchronous>, transform_indices = @transform_2, window_bounds = array<i64: 1, 128>}, {pipeline_mode = #tpu.pipeline_mode<synchronous>, transform_indices = @transform_3, window_bounds = array<i64: 1, 128>}, {pipeline_mode = #tpu.pipeline_mode<synchronous>, transform_indices = @transform_4, window_bounds = array<i64: 128, 128>}, {transform_indices = @transform_5, window_bounds = array<i64: 128, 128>}, {transform_indices = @transform_6, window_bounds = array<i64: 128, 128>}]} {
    %cst = arith.constant 0.000000e+00 : bf16
    %0 = vector.broadcast %cst : bf16 to vector<128x128xbf16>
    %c0 = arith.constant 0 : index
    %c0_0 = arith.constant 0 : index
    %1 = vector.load %arg8[%c0, %c0_0] : memref<128x128xbf16, #tpu.memory_space<vmem>>, vector<128x128xbf16>
    tpu.vector_store %arg8[%c0, %c0_0], %0 {strides = array<i32>} : memref<128x128xbf16, #tpu.memory_space<vmem>>, vector<128x128xbf16>,
    %c0_1 = arith.constant 0 : index
    %c0_2 = arith.constant 0 : index
    %2 = vector.load %arg1[%c0_1, %c0_2] : memref<128x4xbf16, #tpu.memory_space<vmem>>, vector<128x4xbf16>
    %c0_3 = arith.constant 0 : index
    %c0_4 = arith.constant 0 : index
    %3 = vector.load %arg8[%c0_3, %c0_4] : memref<128x128xbf16, #tpu.memory_space<vmem>>, vector<128x4xbf16>
    tpu.vector_store %arg8[%c0_3, %c0_4], %2 {strides = array<i32>} : memref<128x128xbf16, #tpu.memory_space<vmem>>, vector<128x4xbf16>,
    %c0_5 = arith.constant 0 : index
    %c0_6 = arith.constant 0 : index
    %4 = vector.load %arg8[%c0_5, %c0_6] : memref<128x128xbf16, #tpu.memory_space<vmem>>, vector<128x128xbf16>
    %c0_7 = arith.constant 0 : index
    %c0_8 = arith.constant 0 : index
    %5 = vector.load %arg2[%c0_7, %c0_8] : memref<128x128xbf16, #tpu.memory_space<vmem>>, vector<128x128xbf16>
    %cst_9 = arith.constant dense<0.000000e+00> : vector<128x128xf32>
    %6 = tpu.matmul %4, %5, %cst_9 {dimension_numbers = #tpu.dot_dimension_numbers<[1], [0], [0], [1], [0, 0, 1, 1], [], []>} : vector<128x128xbf16>, vector<128x128xbf16>, vector<128x128xf32> -> vector<128x128xf32>
    %c0_10 = arith.constant 0 : index
    %c0_11 = arith.constant 0 : index
    %7 = vector.load %arg3[%c0_10, %c0_11] : memref<1x128xf32, #tpu.memory_space<vmem>>, vector<1x128xf32>
    %8 = vector.broadcast %7 : vector<1x128xf32> to vector<128x128xf32>
    %9 = arith.mulf %6, %8 : vector<128x128xf32>
    %c0_12 = arith.constant 0 : index
    %c0_13 = arith.constant 0 : index
    %10 = vector.load %arg4[%c0_12, %c0_13] : memref<1x128xf32, #tpu.memory_space<vmem>>, vector<1x128xf32>
    %11 = vector.broadcast %10 : vector<1x128xf32> to vector<128x128xf32>
    %12 = arith.addf %9, %11 : vector<128x128xf32>
    %13 = arith.negf %12 : vector<128x128xf32>
    %14 = math.exp %13 : vector<128x128xf32>
    %cst_14 = arith.constant 1.000000e+00 : f32
    %15 = vector.broadcast %cst_14 : f32 to vector<128x128xf32>
    %16 = arith.addf %15, %14 : vector<128x128xf32>
    %17 = arith.divf %15, %16 : vector<128x128xf32>
    %18 = arith.mulf %12, %17 : vector<128x128xf32>
    %19 = arith.truncf %18 : vector<128x128xf32> to vector<128x128xbf16>
    %c0_15 = arith.constant 0 : index
    %c0_16 = arith.constant 0 : index
    %20 = vector.load %arg6[%c0_15, %c0_16] : memref<128x128xbf16, #tpu.memory_space<vmem>>, vector<128x128xbf16>
    tpu.vector_store %arg6[%c0_15, %c0_16], %19 {strides = array<i32>} : memref<128x128xbf16, #tpu.memory_space<vmem>>, vector<128x128xbf16>,
    %c0_17 = arith.constant 0 : index
    %c0_18 = arith.constant 0 : index
    %21 = vector.load %arg5[%c0_17, %c0_18] : memref<128x128xbf16, #tpu.memory_space<vmem>>, vector<128x128xbf16>
    %cst_19 = arith.constant dense<0.000000e+00> : vector<128x128xf32>
    %22 = tpu.matmul %4, %21, %cst_19 {dimension_numbers = #tpu.dot_dimension_numbers<[1], [0], [0], [1], [0, 0, 1, 1], [], []>} : vector<128x128xbf16>, vector<128x128xbf16>, vector<128x128xf32> -> vector<128x128xf32>
    %23 = arith.truncf %22 : vector<128x128xf32> to vector<128x128xbf16>
    %c0_20 = arith.constant 0 : index
    %c0_21 = arith.constant 0 : index
    %24 = vector.load %arg7[%c0_20, %c0_21] : memref<128x128xbf16, #tpu.memory_space<vmem>>, vector<128x128xbf16>
    tpu.vector_store %arg7[%c0_20, %c0_21], %23 {strides = array<i32>} : memref<128x128xbf16, #tpu.memory_space<vmem>>, vector<128x128xbf16>,
    return
  }
  func.func @transform_0(%arg0: i32) -> (i32, i32) {
    %c0_i32 = arith.constant 0 : i32
    %c0_i32_0 = arith.constant 0 : i32
    return %arg0, %c0_i32 : i32, i32
  }
  func.func @transform_1(%arg0: i32) -> (i32, i32) {
    %c0_i32 = arith.constant 0 : i32
    %c0_i32_0 = arith.constant 0 : i32
    %c0_i32_1 = arith.constant 0 : i32
    return %c0_i32, %c0_i32_0 : i32, i32
  }
  func.func @transform_2(%arg0: i32) -> (i32, i32) {
    %c0_i32 = arith.constant 0 : i32
    %c0_i32_0 = arith.constant 0 : i32
    %c0_i32_1 = arith.constant 0 : i32
    return %c0_i32, %c0_i32_0 : i32, i32
  }
  func.func @transform_3(%arg0: i32) -> (i32, i32) {
    %c0_i32 = arith.constant 0 : i32
    %c0_i32_0 = arith.constant 0 : i32
    %c0_i32_1 = arith.constant 0 : i32
    return %c0_i32, %c0_i32_0 : i32, i32
  }
  func.func @transform_4(%arg0: i32) -> (i32, i32) {
    %c0_i32 = arith.constant 0 : i32
    %c0_i32_0 = arith.constant 0 : i32
    %c0_i32_1 = arith.constant 0 : i32
    return %c0_i32, %c0_i32_0 : i32, i32
  }
  func.func @transform_5(%arg0: i32) -> (i32, i32) {
    %c0_i32 = arith.constant 0 : i32
    %c0_i32_0 = arith.constant 0 : i32
    return %arg0, %c0_i32 : i32, i32
  }
  func.func @transform_6(%arg0: i32) -> (i32, i32) {
    %c0_i32 = arith.constant 0 : i32
    %c0_i32_0 = arith.constant 0 : i32
    return %arg0, %c0_i32 : i32, i32
  }
}

module attributes {stable_mosaic.version = 11 : i64} {
  func.func @kernel(%arg0: i32, %arg1: memref<256x128xbf16, #tpu.memory_space<vmem>>, %arg2: memref<256x128xbf16, #tpu.memory_space<vmem>>, %arg3: memref<128x128xbf16, #tpu.memory_space<vmem>>, %arg4: memref<1x128xf32, #tpu.memory_space<vmem>>, %arg5: memref<1x128xf32, #tpu.memory_space<vmem>>, %arg6: memref<9x128x128xbf16, #tpu.memory_space<vmem>>, %arg7: memref<1x128xf32, #tpu.memory_space<vmem>>, %arg8: memref<1x128xf32, #tpu.memory_space<vmem>>, %arg9: memref<128x128xbf16, #tpu.memory_space<vmem>>, %arg10: memref<1x128xf32, #tpu.memory_space<vmem>>, %arg11: memref<1x128xf32, #tpu.memory_space<vmem>>, %arg12: memref<1x128xf32, #tpu.memory_space<vmem>>, %arg13: memref<1x128xf32, #tpu.memory_space<vmem>>, %arg14: memref<128x128xbf16, #tpu.memory_space<vmem>>, %arg15: memref<128x128xbf16, #tpu.memory_space<vmem>>, %arg16: memref<1x128xf32, #tpu.memory_space<vmem>>, %arg17: memref<1x128xf32, #tpu.memory_space<vmem>>, %arg18: memref<256x128xbf16, #tpu.memory_space<vmem>>, %arg19: memref<304x128xbf16, #tpu.memory_space<vmem>>) attributes {dimension_semantics = [#tpu.dimension_semantics<parallel>], iteration_bounds = array<i64: 2>, scalar_prefetch = 0 : i64, scratch_operands = 1 : i64, tpu.core_type = #tpu.core_type<tc>, window_params = [{transform_indices = @transform_0, window_bounds = array<i64: 256, 128>}, {transform_indices = @transform_1, window_bounds = array<i64: 256, 128>}, {pipeline_mode = #tpu.pipeline_mode<synchronous>, transform_indices = @transform_2, window_bounds = array<i64: 128, 128>}, {pipeline_mode = #tpu.pipeline_mode<synchronous>, transform_indices = @transform_3, window_bounds = array<i64: 1, 128>}, {pipeline_mode = #tpu.pipeline_mode<synchronous>, transform_indices = @transform_4, window_bounds = array<i64: 1, 128>}, {pipeline_mode = #tpu.pipeline_mode<synchronous>, transform_indices = @transform_5, window_bounds = array<i64: 9, 128, 128>}, {pipeline_mode = #tpu.pipeline_mode<synchronous>, transform_indices = @transform_6, window_bounds = array<i64: 1, 128>}, {pipeline_mode = #tpu.pipeline_mode<synchronous>, transform_indices = @transform_7, window_bounds = array<i64: 1, 128>}, {pipeline_mode = #tpu.pipeline_mode<synchronous>, transform_indices = @transform_8, window_bounds = array<i64: 128, 128>}, {pipeline_mode = #tpu.pipeline_mode<synchronous>, transform_indices = @transform_9, window_bounds = array<i64: 1, 128>}, {pipeline_mode = #tpu.pipeline_mode<synchronous>, transform_indices = @transform_10, window_bounds = array<i64: 1, 128>}, {pipeline_mode = #tpu.pipeline_mode<synchronous>, transform_indices = @transform_11, window_bounds = array<i64: 1, 128>}, {pipeline_mode = #tpu.pipeline_mode<synchronous>, transform_indices = @transform_12, window_bounds = array<i64: 1, 128>}, {pipeline_mode = #tpu.pipeline_mode<synchronous>, transform_indices = @transform_13, window_bounds = array<i64: 128, 128>}, {pipeline_mode = #tpu.pipeline_mode<synchronous>, transform_indices = @transform_14, window_bounds = array<i64: 128, 128>}, {pipeline_mode = #tpu.pipeline_mode<synchronous>, transform_indices = @transform_15, window_bounds = array<i64: 1, 128>}, {pipeline_mode = #tpu.pipeline_mode<synchronous>, transform_indices = @transform_16, window_bounds = array<i64: 1, 128>}, {transform_indices = @transform_17, window_bounds = array<i64: 256, 128>}]} {
    %c0 = arith.constant 0 : index
    %c0_0 = arith.constant 0 : index
    %0 = vector.load %arg1[%c0, %c0_0] : memref<256x128xbf16, #tpu.memory_space<vmem>>, vector<256x128xbf16>
    %c0_1 = arith.constant 0 : index
    %c0_2 = arith.constant 0 : index
    %1 = vector.load %arg3[%c0_1, %c0_2] : memref<128x128xbf16, #tpu.memory_space<vmem>>, vector<128x128xbf16>
    %cst = arith.constant dense<0.000000e+00> : vector<256x128xf32>
    %2 = tpu.matmul %0, %1, %cst {dimension_numbers = #tpu.dot_dimension_numbers<[1], [0], [0], [1], [0, 0, 1, 1], [], []>} : vector<256x128xbf16>, vector<128x128xbf16>, vector<256x128xf32> -> vector<256x128xf32>
    %c0_3 = arith.constant 0 : index
    %c0_4 = arith.constant 0 : index
    %3 = vector.load %arg4[%c0_3, %c0_4] : memref<1x128xf32, #tpu.memory_space<vmem>>, vector<1x128xf32>
    %4 = vector.broadcast %3 : vector<1x128xf32> to vector<256x128xf32>
    %5 = arith.mulf %2, %4 : vector<256x128xf32>
    %c0_5 = arith.constant 0 : index
    %c0_6 = arith.constant 0 : index
    %6 = vector.load %arg5[%c0_5, %c0_6] : memref<1x128xf32, #tpu.memory_space<vmem>>, vector<1x128xf32>
    %7 = vector.broadcast %6 : vector<1x128xf32> to vector<256x128xf32>
    %8 = arith.addf %5, %7 : vector<256x128xf32>
    %9 = arith.negf %8 : vector<256x128xf32>
    %10 = math.exp %9 : vector<256x128xf32>
    %cst_7 = arith.constant 1.000000e+00 : f32
    %11 = vector.broadcast %cst_7 : f32 to vector<256x128xf32>
    %12 = arith.addf %11, %10 : vector<256x128xf32>
    %13 = arith.divf %11, %12 : vector<256x128xf32>
    %14 = arith.mulf %8, %13 : vector<256x128xf32>
    %cst_8 = arith.constant 0.000000e+00 : bf16
    %15 = vector.broadcast %cst_8 : bf16 to vector<24x128xbf16>
    %c0_9 = arith.constant 0 : index
    %c0_10 = arith.constant 0 : index
    %16 = vector.load %arg19[%c0_9, %c0_10] : memref<304x128xbf16, #tpu.memory_space<vmem>>, vector<24x128xbf16>
    tpu.vector_store %arg19[%c0_9, %c0_10], %15 {strides = array<i32>} : memref<304x128xbf16, #tpu.memory_space<vmem>>, vector<24x128xbf16>,
    %cst_11 = arith.constant 0.000000e+00 : bf16
    %17 = vector.broadcast %cst_11 : bf16 to vector<24x128xbf16>
    %c280 = arith.constant 280 : index
    %c0_12 = arith.constant 0 : index
    %18 = vector.load %arg19[%c280, %c0_12] : memref<304x128xbf16, #tpu.memory_space<vmem>>, vector<24x128xbf16>
    tpu.vector_store %arg19[%c280, %c0_12], %17 {strides = array<i32>} : memref<304x128xbf16, #tpu.memory_space<vmem>>, vector<24x128xbf16>,
    %19 = arith.truncf %14 : vector<256x128xf32> to vector<256x128xbf16>
    %c24 = arith.constant 24 : index
    %c0_13 = arith.constant 0 : index
    %20 = vector.load %arg19[%c24, %c0_13] : memref<304x128xbf16, #tpu.memory_space<vmem>>, vector<256x128xbf16>
    tpu.vector_store %arg19[%c24, %c0_13], %19 {strides = array<i32>} : memref<304x128xbf16, #tpu.memory_space<vmem>>, vector<256x128xbf16>,
    %21 = tpu.iota {dimensions = array<i32: 0>} : vector<256x1xi32>
    %c16_i32 = arith.constant 16 : i32
    %c0_i32 = arith.constant 0 : i32
    %22 = arith.cmpi eq, %c16_i32, %c0_i32 : i32
    %c1_i32 = arith.constant 1 : i32
    %23 = arith.select %22, %c1_i32, %c16_i32 : i32
    %24 = vector.broadcast %23 : i32 to vector<256x1xi32>
    %25 = arith.remsi %21, %24 : vector<256x1xi32>
    %c0_i32_14 = arith.constant 0 : i32
    %26 = vector.broadcast %c0_i32_14 : i32 to vector<256x1xi32>
    %27 = arith.cmpi ne, %25, %26 : vector<256x1xi32>
    %c0_i32_15 = arith.constant 0 : i32
    %28 = vector.broadcast %c0_i32_15 : i32 to vector<256x1xi32>
    %29 = arith.cmpi slt, %25, %28 : vector<256x1xi32>
    %c0_i32_16 = arith.constant 0 : i32
    %30 = arith.cmpi slt, %23, %c0_i32_16 : i32
    %31 = vector.broadcast %30 : i1 to vector<256x1xi1>
    %32 = vector.broadcast %31 : vector<256x1xi1> to vector<256x1xi1>
    %33 = arith.xori %29, %32 : vector<256x1xi1>
    %34 = arith.andi %33, %27 : vector<256x1xi1>
    %35 = vector.broadcast %23 : i32 to vector<256x1xi32>
    %36 = arith.addi %25, %35 : vector<256x1xi32>
    %37 = arith.select %34, %36, %25 : vector<256x1xi1>, vector<256x1xi32>
    %c0_i32_17 = arith.constant 0 : i32
    %38 = vector.broadcast %c0_i32_17 : i32 to vector<256x1xi32>
    %39 = arith.cmpi ne, %37, %38 : vector<256x1xi32>
    %40 = arith.extui %39 : vector<256x1xi1> to vector<256x1xi32>
    %41 = arith.sitofp %40 : vector<256x1xi32> to vector<256x1xf32>
    %42 = arith.truncf %41 : vector<256x1xf32> to vector<256x1xbf16>
    %c15_i32 = arith.constant 15 : i32
    %43 = vector.broadcast %c15_i32 : i32 to vector<256x1xi32>
    %44 = arith.cmpi ne, %37, %43 : vector<256x1xi32>
    %45 = arith.extui %44 : vector<256x1xi1> to vector<256x1xi32>
    %46 = arith.sitofp %45 : vector<256x1xi32> to vector<256x1xf32>
    %47 = arith.truncf %46 : vector<256x1xf32> to vector<256x1xbf16>
    %c7 = arith.constant 7 : index
    %c0_18 = arith.constant 0 : index
    %48 = vector.load %arg19[%c7, %c0_18] : memref<304x128xbf16, #tpu.memory_space<vmem>>, vector<256x128xbf16>
    %49 = vector.broadcast %42 : vector<256x1xbf16> to vector<256x128xbf16>
    %50 = arith.mulf %48, %49 : vector<256x128xbf16>
    %c0_19 = arith.constant 0 : index
    %c0_20 = arith.constant 0 : index
    %c0_21 = arith.constant 0 : index
    %51 = vector.load %arg6[%c0_19, %c0_20, %c0_21] : memref<9x128x128xbf16, #tpu.memory_space<vmem>>, vector<1x128x128xbf16>
    %52 = vector.shape_cast %51 : vector<1x128x128xbf16> to vector<128x128xbf16>
    %cst_22 = arith.constant dense<0.000000e+00> : vector<256x128xf32>
    %53 = tpu.matmul %50, %52, %cst_22 {dimension_numbers = #tpu.dot_dimension_numbers<[1], [0], [0], [1], [0, 0, 1, 1], [], []>} : vector<256x128xbf16>, vector<128x128xbf16>, vector<256x128xf32> -> vector<256x128xf32>
    %c8 = arith.constant 8 : index
    %c0_23 = arith.constant 0 : index
    %54 = vector.load %arg19[%c8, %c0_23] : memref<304x128xbf16, #tpu.memory_space<vmem>>, vector<256x128xbf16>
    %c1 = arith.constant 1 : index
    %c0_24 = arith.constant 0 : index
    %c0_25 = arith.constant 0 : index
    %55 = vector.load %arg6[%c1, %c0_24, %c0_25] : memref<9x128x128xbf16, #tpu.memory_space<vmem>>, vector<1x128x128xbf16>
    %56 = vector.shape_cast %55 : vector<1x128x128xbf16> to vector<128x128xbf16>
    %cst_26 = arith.constant dense<0.000000e+00> : vector<256x128xf32>
    %57 = tpu.matmul %54, %56, %cst_26 {dimension_numbers = #tpu.dot_dimension_numbers<[1], [0], [0], [1], [0, 0, 1, 1], [], []>} : vector<256x128xbf16>, vector<128x128xbf16>, vector<256x128xf32> -> vector<256x128xf32>
    %58 = arith.addf %53, %57 : vector<256x128xf32>
    %c9 = arith.constant 9 : index
    %c0_27 = arith.constant 0 : index
    %59 = vector.load %arg19[%c9, %c0_27] : memref<304x128xbf16, #tpu.memory_space<vmem>>, vector<256x128xbf16>
    %60 = vector.broadcast %47 : vector<256x1xbf16> to vector<256x128xbf16>
    %61 = arith.mulf %59, %60 : vector<256x128xbf16>
    %c2 = arith.constant 2 : index
    %c0_28 = arith.constant 0 : index
    %c0_29 = arith.constant 0 : index
    %62 = vector.load %arg6[%c2, %c0_28, %c0_29] : memref<9x128x128xbf16, #tpu.memory_space<vmem>>, vector<1x128x128xbf16>
    %63 = vector.shape_cast %62 : vector<1x128x128xbf16> to vector<128x128xbf16>
    %cst_30 = arith.constant dense<0.000000e+00> : vector<256x128xf32>
    %64 = tpu.matmul %61, %63, %cst_30 {dimension_numbers = #tpu.dot_dimension_numbers<[1], [0], [0], [1], [0, 0, 1, 1], [], []>} : vector<256x128xbf16>, vector<128x128xbf16>, vector<256x128xf32> -> vector<256x128xf32>
    %65 = arith.addf %58, %64 : vector<256x128xf32>
    %c23 = arith.constant 23 : index
    %c0_31 = arith.constant 0 : index
    %66 = vector.load %arg19[%c23, %c0_31] : memref<304x128xbf16, #tpu.memory_space<vmem>>, vector<256x128xbf16>
    %67 = vector.broadcast %42 : vector<256x1xbf16> to vector<256x128xbf16>
    %68 = arith.mulf %66, %67 : vector<256x128xbf16>
    %c3 = arith.constant 3 : index
    %c0_32 = arith.constant 0 : index
    %c0_33 = arith.constant 0 : index
    %69 = vector.load %arg6[%c3, %c0_32, %c0_33] : memref<9x128x128xbf16, #tpu.memory_space<vmem>>, vector<1x128x128xbf16>
    %70 = vector.shape_cast %69 : vector<1x128x128xbf16> to vector<128x128xbf16>
    %cst_34 = arith.constant dense<0.000000e+00> : vector<256x128xf32>
    %71 = tpu.matmul %68, %70, %cst_34 {dimension_numbers = #tpu.dot_dimension_numbers<[1], [0], [0], [1], [0, 0, 1, 1], [], []>} : vector<256x128xbf16>, vector<128x128xbf16>, vector<256x128xf32> -> vector<256x128xf32>
    %72 = arith.addf %65, %71 : vector<256x128xf32>
    %c24_35 = arith.constant 24 : index
    %c0_36 = arith.constant 0 : index
    %73 = vector.load %arg19[%c24_35, %c0_36] : memref<304x128xbf16, #tpu.memory_space<vmem>>, vector<256x128xbf16>
    %c4 = arith.constant 4 : index
    %c0_37 = arith.constant 0 : index
    %c0_38 = arith.constant 0 : index
    %74 = vector.load %arg6[%c4, %c0_37, %c0_38] : memref<9x128x128xbf16, #tpu.memory_space<vmem>>, vector<1x128x128xbf16>
    %75 = vector.shape_cast %74 : vector<1x128x128xbf16> to vector<128x128xbf16>
    %cst_39 = arith.constant dense<0.000000e+00> : vector<256x128xf32>
    %76 = tpu.matmul %73, %75, %cst_39 {dimension_numbers = #tpu.dot_dimension_numbers<[1], [0], [0], [1], [0, 0, 1, 1], [], []>} : vector<256x128xbf16>, vector<128x128xbf16>, vector<256x128xf32> -> vector<256x128xf32>
    %77 = arith.addf %72, %76 : vector<256x128xf32>
    %c25 = arith.constant 25 : index
    %c0_40 = arith.constant 0 : index
    %78 = vector.load %arg19[%c25, %c0_40] : memref<304x128xbf16, #tpu.memory_space<vmem>>, vector<256x128xbf16>
    %79 = vector.broadcast %47 : vector<256x1xbf16> to vector<256x128xbf16>
    %80 = arith.mulf %78, %79 : vector<256x128xbf16>
    %c5 = arith.constant 5 : index
    %c0_41 = arith.constant 0 : index
    %c0_42 = arith.constant 0 : index
    %81 = vector.load %arg6[%c5, %c0_41, %c0_42] : memref<9x128x128xbf16, #tpu.memory_space<vmem>>, vector<1x128x128xbf16>
    %82 = vector.shape_cast %81 : vector<1x128x128xbf16> to vector<128x128xbf16>
    %cst_43 = arith.constant dense<0.000000e+00> : vector<256x128xf32>
    %83 = tpu.matmul %80, %82, %cst_43 {dimension_numbers = #tpu.dot_dimension_numbers<[1], [0], [0], [1], [0, 0, 1, 1], [], []>} : vector<256x128xbf16>, vector<128x128xbf16>, vector<256x128xf32> -> vector<256x128xf32>
    %84 = arith.addf %77, %83 : vector<256x128xf32>
    %c39 = arith.constant 39 : index
    %c0_44 = arith.constant 0 : index
    %85 = vector.load %arg19[%c39, %c0_44] : memref<304x128xbf16, #tpu.memory_space<vmem>>, vector<256x128xbf16>
    %86 = vector.broadcast %42 : vector<256x1xbf16> to vector<256x128xbf16>
    %87 = arith.mulf %85, %86 : vector<256x128xbf16>
    %c6 = arith.constant 6 : index
    %c0_45 = arith.constant 0 : index
    %c0_46 = arith.constant 0 : index
    %88 = vector.load %arg6[%c6, %c0_45, %c0_46] : memref<9x128x128xbf16, #tpu.memory_space<vmem>>, vector<1x128x128xbf16>
    %89 = vector.shape_cast %88 : vector<1x128x128xbf16> to vector<128x128xbf16>
    %cst_47 = arith.constant dense<0.000000e+00> : vector<256x128xf32>
    %90 = tpu.matmul %87, %89, %cst_47 {dimension_numbers = #tpu.dot_dimension_numbers<[1], [0], [0], [1], [0, 0, 1, 1], [], []>} : vector<256x128xbf16>, vector<128x128xbf16>, vector<256x128xf32> -> vector<256x128xf32>
    %91 = arith.addf %84, %90 : vector<256x128xf32>
    %c40 = arith.constant 40 : index
    %c0_48 = arith.constant 0 : index
    %92 = vector.load %arg19[%c40, %c0_48] : memref<304x128xbf16, #tpu.memory_space<vmem>>, vector<256x128xbf16>
    %c7_49 = arith.constant 7 : index
    %c0_50 = arith.constant 0 : index
    %c0_51 = arith.constant 0 : index
    %93 = vector.load %arg6[%c7_49, %c0_50, %c0_51] : memref<9x128x128xbf16, #tpu.memory_space<vmem>>, vector<1x128x128xbf16>
    %94 = vector.shape_cast %93 : vector<1x128x128xbf16> to vector<128x128xbf16>
    %cst_52 = arith.constant dense<0.000000e+00> : vector<256x128xf32>
    %95 = tpu.matmul %92, %94, %cst_52 {dimension_numbers = #tpu.dot_dimension_numbers<[1], [0], [0], [1], [0, 0, 1, 1], [], []>} : vector<256x128xbf16>, vector<128x128xbf16>, vector<256x128xf32> -> vector<256x128xf32>
    %96 = arith.addf %91, %95 : vector<256x128xf32>
    %c41 = arith.constant 41 : index
    %c0_53 = arith.constant 0 : index
    %97 = vector.load %arg19[%c41, %c0_53] : memref<304x128xbf16, #tpu.memory_space<vmem>>, vector<256x128xbf16>
    %98 = vector.broadcast %47 : vector<256x1xbf16> to vector<256x128xbf16>
    %99 = arith.mulf %97, %98 : vector<256x128xbf16>
    %c8_54 = arith.constant 8 : index
    %c0_55 = arith.constant 0 : index
    %c0_56 = arith.constant 0 : index
    %100 = vector.load %arg6[%c8_54, %c0_55, %c0_56] : memref<9x128x128xbf16, #tpu.memory_space<vmem>>, vector<1x128x128xbf16>
    %101 = vector.shape_cast %100 : vector<1x128x128xbf16> to vector<128x128xbf16>
    %cst_57 = arith.constant dense<0.000000e+00> : vector<256x128xf32>
    %102 = tpu.matmul %99, %101, %cst_57 {dimension_numbers = #tpu.dot_dimension_numbers<[1], [0], [0], [1], [0, 0, 1, 1], [], []>} : vector<256x128xbf16>, vector<128x128xbf16>, vector<256x128xf32> -> vector<256x128xf32>
    %103 = arith.addf %96, %102 : vector<256x128xf32>
    %c0_58 = arith.constant 0 : index
    %c0_59 = arith.constant 0 : index
    %104 = vector.load %arg7[%c0_58, %c0_59] : memref<1x128xf32, #tpu.memory_space<vmem>>, vector<1x128xf32>
    %105 = vector.broadcast %104 : vector<1x128xf32> to vector<256x128xf32>
    %106 = arith.mulf %103, %105 : vector<256x128xf32>
    %c0_60 = arith.constant 0 : index
    %c0_61 = arith.constant 0 : index
    %107 = vector.load %arg8[%c0_60, %c0_61] : memref<1x128xf32, #tpu.memory_space<vmem>>, vector<1x128xf32>
    %108 = vector.broadcast %107 : vector<1x128xf32> to vector<256x128xf32>
    %109 = arith.addf %106, %108 : vector<256x128xf32>
    %110 = arith.negf %109 : vector<256x128xf32>
    %111 = math.exp %110 : vector<256x128xf32>
    %cst_62 = arith.constant 1.000000e+00 : f32
    %112 = vector.broadcast %cst_62 : f32 to vector<256x128xf32>
    %113 = arith.addf %112, %111 : vector<256x128xf32>
    %114 = arith.divf %112, %113 : vector<256x128xf32>
    %115 = arith.mulf %109, %114 : vector<256x128xf32>
    %116 = arith.extf %0 : vector<256x128xbf16> to vector<256x128xf32>
    %117 = arith.addf %116, %115 : vector<256x128xf32>
    %118 = arith.truncf %117 : vector<256x128xf32> to vector<256x128xbf16>
    %c0_63 = arith.constant 0 : index
    %c0_64 = arith.constant 0 : index
    %119 = vector.load %arg9[%c0_63, %c0_64] : memref<128x128xbf16, #tpu.memory_space<vmem>>, vector<128x128xbf16>
    %cst_65 = arith.constant dense<0.000000e+00> : vector<256x128xf32>
    %120 = tpu.matmul %118, %119, %cst_65 {dimension_numbers = #tpu.dot_dimension_numbers<[1], [0], [0], [1], [0, 0, 1, 1], [], []>} : vector<256x128xbf16>, vector<128x128xbf16>, vector<256x128xf32> -> vector<256x128xf32>
    %c0_66 = arith.constant 0 : index
    %c0_67 = arith.constant 0 : index
    %121 = vector.load %arg10[%c0_66, %c0_67] : memref<1x128xf32, #tpu.memory_space<vmem>>, vector<1x128xf32>
    %122 = vector.broadcast %121 : vector<1x128xf32> to vector<256x128xf32>
    %123 = arith.mulf %120, %122 : vector<256x128xf32>
    %c0_68 = arith.constant 0 : index
    %c0_69 = arith.constant 0 : index
    %124 = vector.load %arg11[%c0_68, %c0_69] : memref<1x128xf32, #tpu.memory_space<vmem>>, vector<1x128xf32>
    %125 = vector.broadcast %124 : vector<1x128xf32> to vector<256x128xf32>
    %126 = arith.addf %123, %125 : vector<256x128xf32>
    %127 = arith.negf %126 : vector<256x128xf32>
    %128 = math.exp %127 : vector<256x128xf32>
    %cst_70 = arith.constant 1.000000e+00 : f32
    %129 = vector.broadcast %cst_70 : f32 to vector<256x128xf32>
    %130 = arith.addf %129, %128 : vector<256x128xf32>
    %131 = arith.divf %129, %130 : vector<256x128xf32>
    %132 = arith.mulf %126, %131 : vector<256x128xf32>
    %c0_71 = arith.constant 0 : index
    %c0_72 = arith.constant 0 : index
    %133 = vector.load %arg2[%c0_71, %c0_72] : memref<256x128xbf16, #tpu.memory_space<vmem>>, vector<256x128xbf16>
    %134 = arith.extf %133 : vector<256x128xbf16> to vector<256x128xf32>
    %c0_73 = arith.constant 0 : index
    %c0_74 = arith.constant 0 : index
    %135 = vector.load %arg12[%c0_73, %c0_74] : memref<1x128xf32, #tpu.memory_space<vmem>>, vector<1x128xf32>
    %136 = vector.broadcast %135 : vector<1x128xf32> to vector<256x128xf32>
    %137 = arith.mulf %134, %136 : vector<256x128xf32>
    %c0_75 = arith.constant 0 : index
    %c0_76 = arith.constant 0 : index
    %138 = vector.load %arg13[%c0_75, %c0_76] : memref<1x128xf32, #tpu.memory_space<vmem>>, vector<1x128xf32>
    %139 = vector.broadcast %138 : vector<1x128xf32> to vector<256x128xf32>
    %140 = arith.addf %137, %139 : vector<256x128xf32>
    %141 = arith.negf %140 : vector<256x128xf32>
    %142 = math.exp %141 : vector<256x128xf32>
    %cst_77 = arith.constant 1.000000e+00 : f32
    %143 = vector.broadcast %cst_77 : f32 to vector<256x128xf32>
    %144 = arith.addf %143, %142 : vector<256x128xf32>
    %145 = arith.divf %143, %144 : vector<256x128xf32>
    %146 = arith.mulf %140, %145 : vector<256x128xf32>
    %147 = arith.truncf %132 : vector<256x128xf32> to vector<256x128xbf16>
    %c0_78 = arith.constant 0 : index
    %c0_79 = arith.constant 0 : index
    %148 = vector.load %arg14[%c0_78, %c0_79] : memref<128x128xbf16, #tpu.memory_space<vmem>>, vector<128x128xbf16>
    %cst_80 = arith.constant dense<0.000000e+00> : vector<256x128xf32>
    %149 = tpu.matmul %147, %148, %cst_80 {dimension_numbers = #tpu.dot_dimension_numbers<[1], [0], [0], [1], [0, 0, 1, 1], [], []>} : vector<256x128xbf16>, vector<128x128xbf16>, vector<256x128xf32> -> vector<256x128xf32>
    %150 = arith.truncf %146 : vector<256x128xf32> to vector<256x128xbf16>
    %c0_81 = arith.constant 0 : index
    %c0_82 = arith.constant 0 : index
    %151 = vector.load %arg15[%c0_81, %c0_82] : memref<128x128xbf16, #tpu.memory_space<vmem>>, vector<128x128xbf16>
    %cst_83 = arith.constant dense<0.000000e+00> : vector<256x128xf32>
    %152 = tpu.matmul %150, %151, %cst_83 {dimension_numbers = #tpu.dot_dimension_numbers<[1], [0], [0], [1], [0, 0, 1, 1], [], []>} : vector<256x128xbf16>, vector<128x128xbf16>, vector<256x128xf32> -> vector<256x128xf32>
    %153 = arith.addf %149, %152 : vector<256x128xf32>
    %c0_84 = arith.constant 0 : index
    %c0_85 = arith.constant 0 : index
    %154 = vector.load %arg16[%c0_84, %c0_85] : memref<1x128xf32, #tpu.memory_space<vmem>>, vector<1x128xf32>
    %155 = vector.broadcast %154 : vector<1x128xf32> to vector<256x128xf32>
    %156 = arith.mulf %153, %155 : vector<256x128xf32>
    %c0_86 = arith.constant 0 : index
    %c0_87 = arith.constant 0 : index
    %157 = vector.load %arg17[%c0_86, %c0_87] : memref<1x128xf32, #tpu.memory_space<vmem>>, vector<1x128xf32>
    %158 = vector.broadcast %157 : vector<1x128xf32> to vector<256x128xf32>
    %159 = arith.addf %156, %158 : vector<256x128xf32>
    %160 = arith.negf %159 : vector<256x128xf32>
    %161 = math.exp %160 : vector<256x128xf32>
    %cst_88 = arith.constant 1.000000e+00 : f32
    %162 = vector.broadcast %cst_88 : f32 to vector<256x128xf32>
    %163 = arith.addf %162, %161 : vector<256x128xf32>
    %164 = arith.divf %162, %163 : vector<256x128xf32>
    %165 = arith.mulf %159, %164 : vector<256x128xf32>
    %166 = arith.truncf %165 : vector<256x128xf32> to vector<256x128xbf16>
    %c0_89 = arith.constant 0 : index
    %c0_90 = arith.constant 0 : index
    %167 = vector.load %arg18[%c0_89, %c0_90] : memref<256x128xbf16, #tpu.memory_space<vmem>>, vector<256x128xbf16>
    tpu.vector_store %arg18[%c0_89, %c0_90], %166 {strides = array<i32>} : memref<256x128xbf16, #tpu.memory_space<vmem>>, vector<256x128xbf16>,
    return
  }
  func.func @transform_0(%arg0: i32) -> (i32, i32) {
    %c0_i32 = arith.constant 0 : i32
    %c0_i32_0 = arith.constant 0 : i32
    return %arg0, %c0_i32 : i32, i32
  }
  func.func @transform_1(%arg0: i32) -> (i32, i32) {
    %c0_i32 = arith.constant 0 : i32
    %c0_i32_0 = arith.constant 0 : i32
    return %arg0, %c0_i32 : i32, i32
  }
  func.func @transform_2(%arg0: i32) -> (i32, i32) {
    %c0_i32 = arith.constant 0 : i32
    %c0_i32_0 = arith.constant 0 : i32
    %c0_i32_1 = arith.constant 0 : i32
    return %c0_i32, %c0_i32_0 : i32, i32
  }
  func.func @transform_3(%arg0: i32) -> (i32, i32) {
    %c0_i32 = arith.constant 0 : i32
    %c0_i32_0 = arith.constant 0 : i32
    %c0_i32_1 = arith.constant 0 : i32
    return %c0_i32, %c0_i32_0 : i32, i32
  }
  func.func @transform_4(%arg0: i32) -> (i32, i32) {
    %c0_i32 = arith.constant 0 : i32
    %c0_i32_0 = arith.constant 0 : i32
    %c0_i32_1 = arith.constant 0 : i32
    return %c0_i32, %c0_i32_0 : i32, i32
  }
  func.func @transform_5(%arg0: i32) -> (i32, i32, i32) {
    %c0_i32 = arith.constant 0 : i32
    %c0_i32_0 = arith.constant 0 : i32
    %c0_i32_1 = arith.constant 0 : i32
    %c0_i32_2 = arith.constant 0 : i32
    return %c0_i32, %c0_i32_0, %c0_i32_1 : i32, i32, i32
  }
  func.func @transform_6(%arg0: i32) -> (i32, i32) {
    %c0_i32 = arith.constant 0 : i32
    %c0_i32_0 = arith.constant 0 : i32
    %c0_i32_1 = arith.constant 0 : i32
    return %c0_i32, %c0_i32_0 : i32, i32
  }
  func.func @transform_7(%arg0: i32) -> (i32, i32) {
    %c0_i32 = arith.constant 0 : i32
    %c0_i32_0 = arith.constant 0 : i32
    %c0_i32_1 = arith.constant 0 : i32
    return %c0_i32, %c0_i32_0 : i32, i32
  }
  func.func @transform_8(%arg0: i32) -> (i32, i32) {
    %c0_i32 = arith.constant 0 : i32
    %c0_i32_0 = arith.constant 0 : i32
    %c0_i32_1 = arith.constant 0 : i32
    return %c0_i32, %c0_i32_0 : i32, i32
  }
  func.func @transform_9(%arg0: i32) -> (i32, i32) {
    %c0_i32 = arith.constant 0 : i32
    %c0_i32_0 = arith.constant 0 : i32
    %c0_i32_1 = arith.constant 0 : i32
    return %c0_i32, %c0_i32_0 : i32, i32
  }
  func.func @transform_10(%arg0: i32) -> (i32, i32) {
    %c0_i32 = arith.constant 0 : i32
    %c0_i32_0 = arith.constant 0 : i32
    %c0_i32_1 = arith.constant 0 : i32
    return %c0_i32, %c0_i32_0 : i32, i32
  }
  func.func @transform_11(%arg0: i32) -> (i32, i32) {
    %c0_i32 = arith.constant 0 : i32
    %c0_i32_0 = arith.constant 0 : i32
    %c0_i32_1 = arith.constant 0 : i32
    return %c0_i32, %c0_i32_0 : i32, i32
  }
  func.func @transform_12(%arg0: i32) -> (i32, i32) {
    %c0_i32 = arith.constant 0 : i32
    %c0_i32_0 = arith.constant 0 : i32
    %c0_i32_1 = arith.constant 0 : i32
    return %c0_i32, %c0_i32_0 : i32, i32
  }
  func.func @transform_13(%arg0: i32) -> (i32, i32) {
    %c0_i32 = arith.constant 0 : i32
    %c0_i32_0 = arith.constant 0 : i32
    %c0_i32_1 = arith.constant 0 : i32
    return %c0_i32, %c0_i32_0 : i32, i32
  }
  func.func @transform_14(%arg0: i32) -> (i32, i32) {
    %c0_i32 = arith.constant 0 : i32
    %c0_i32_0 = arith.constant 0 : i32
    %c0_i32_1 = arith.constant 0 : i32
    return %c0_i32, %c0_i32_0 : i32, i32
  }
  func.func @transform_15(%arg0: i32) -> (i32, i32) {
    %c0_i32 = arith.constant 0 : i32
    %c0_i32_0 = arith.constant 0 : i32
    %c0_i32_1 = arith.constant 0 : i32
    return %c0_i32, %c0_i32_0 : i32, i32
  }
  func.func @transform_16(%arg0: i32) -> (i32, i32) {
    %c0_i32 = arith.constant 0 : i32
    %c0_i32_0 = arith.constant 0 : i32
    %c0_i32_1 = arith.constant 0 : i32
    return %c0_i32, %c0_i32_0 : i32, i32
  }
  func.func @transform_17(%arg0: i32) -> (i32, i32) {
    %c0_i32 = arith.constant 0 : i32
    %c0_i32_0 = arith.constant 0 : i32
    return %arg0, %c0_i32 : i32, i32
  }
}

</mosaic_0001>

<llo_original>
// kernel: bottleneck_csp_forward.2
$region0: #{bottleneck_csp_forward.2}
  #allocation0 [shape = 'u32[]', space=smem, size = 0x4, offset = 0x4, fixed_abs, tag = 'smem constant byte address 0x4 - core index']
  #allocation1 [shape = 'u32[144,128]{1,0:T(1,128)}', space=vmem, size = 0x12000, scoped, tag = 'internal scratch']
  #allocation2 [shape = 'bf16[128,128]{1,0:T(16,128)(2,1)}', space=vmem, size = 0x8000, scoped, tag = 'scratch operand']
  %s0 = inlined_call_operand.vmem [shape: bf16[512,4], index: 0, kind: input, shape index: {}]
  %s1 = inlined_call_operand.vmem [shape: bf16[128,128], index: 1, kind: input, shape index: {}]
  %s2 = inlined_call_operand.vmem [shape: f32[1,128], index: 2, kind: input, shape index: {}]
  %s3 = inlined_call_operand.vmem [shape: f32[1,128], index: 3, kind: input, shape index: {}]
  %s4 = inlined_call_operand.vmem [shape: bf16[128,128], index: 4, kind: input, shape index: {}]
  %s5 = inlined_call_operand.vmem [shape: bf16[512,128], index: 5, kind: output, shape index: {0}]
  %s6 = inlined_call_operand.vmem [shape: bf16[512,128], index: 6, kind: output, shape index: {1}]
  %7 = xla_tuple %s5, %s6
  %s8 = sld [smem:[#allocation0]]
  $region61: #{bottleneck_csp_forward.2} parent=0
    _
  %s10 = ssub.s32 1, %s8
  %s11 = scalar_select 0, %s10, %s8
  loop: start=0, step=1, limit=6
  $region2: #{bottleneck_csp_forward.2} parent=0 // loop_pre_header
    _
  $region3: #{bottleneck_csp_forward.2} parent=0 // loop_header
    %s13 = sphi 0, %s17
    %p14 = scmp.ge.s32.totalorder %s13, 6
    %s23 = sphi 0, %s25
    %s26 = sphi 0, %s23
    %s27 = sphi 0, %s26
    %s43 = sphi 0, %s27
    %s47 = sphi 0, %s47
    %s49 = sphi 0, %s47
    %s50 = sphi 0, %s49
    %s64 = sphi 0, %s50
    %s68 = sphi 0, %s68
    %s70 = sphi 0, %s68
    %s71 = sphi 0, %s70
    %s85 = sphi 0, %s71
    %s89 = sphi 0, %s89
    %s91 = sphi 0, %s89
    %s92 = sphi 0, %s91
    %s106 = sphi 0, %s92
    %s110 = sphi 0, %s110
    %s112 = sphi 0, %s110
    %s113 = sphi 0, %s112
    %s127 = sphi 0, %s113
    %s133 = sphi 0, %s135
    %s136 = sphi 0, %s133
    %s137 = sphi 0, %s136
    %s153 = sphi 0, %s137
    %s159 = sphi 0, %s161
    %s162 = sphi 0, %s159
    %s163 = sphi 0, %s162
    %s179 = sphi 0, %s163
  $region4: #{bottleneck_csp_forward.2} parent=0 // loop_header_branch
    %16 = sbr.rel (%p14) target = $region8
  $region5: #{bottleneck_csp_forward.2} parent=0 // loop_body
    %s18 = ssub.s32 %s13, 1
    %s19 = ssub.s32 %s13, 2
    %s20 = sadd.s32 %s13, 1
    %s21 = ssub.s32 %s13, %s20
    %p22 = scmp.eq.s32.totalorder %s21, 0
    %s24 = sadd.s32 %s23, 1
    %s25 = scalar_select %p22, %s23, %s24
    %p28 = pneg %p22
    %p29 = scmp.eq.s32.totalorder %s13, 3
    %p30 = por %p28, %p29
    %p31 = scmp.ne.s32.totalorder %s23, %s26
    %p32 = scmp.eq.s32.totalorder %s13, 0
    %p33 = por %p31, %p32
    %p34 = scmp.ne.s32.totalorder %s23, %s26
    %p35 = scmp.eq.s32.totalorder %s18, 3
    %p36 = por %p34, %p35
    %p37 = scmp.ne.s32.totalorder %s26, %s27
    %p38 = scmp.eq.s32.totalorder %s18, 0
    %p39 = por %p37, %p38
    %p40 = scmp.ne.s32.totalorder %s26, %s27
    %p41 = scmp.eq.s32.totalorder %s19, 3
    %p42 = por %p40, %p41
    %p44 = scmp.ne.s32.totalorder %s27, %s43
    %p45 = scmp.eq.s32.totalorder %s19, 0
    %p46 = por %p44, %p45
    %s48 = sadd.s32 %s47, 1
    %p51 = scmp.eq.s32.totalorder %s13, 3
    %p52 = scmp.ne.s32.totalorder %s47, %s49
    %p53 = scmp.eq.s32.totalorder %s13, 0
    %p54 = por %p52, %p53
    %p55 = scmp.ne.s32.totalorder %s47, %s49
    %p56 = scmp.eq.s32.totalorder %s18, 3
    %p57 = por %p55, %p56
    %p58 = scmp.ne.s32.totalorder %s49, %s50
    %p59 = scmp.eq.s32.totalorder %s18, 0
    %p60 = por %p58, %p59
    %p61 = scmp.ne.s32.totalorder %s49, %s50
    %p62 = scmp.eq.s32.totalorder %s19, 3
    %p63 = por %p61, %p62
    %p65 = scmp.ne.s32.totalorder %s50, %s64
    %p66 = scmp.eq.s32.totalorder %s19, 0
    %p67 = por %p65, %p66
    %s69 = sadd.s32 %s68, 1
    %p72 = scmp.eq.s32.totalorder %s13, 3
    %p73 = scmp.ne.s32.totalorder %s68, %s70
    %p74 = scmp.eq.s32.totalorder %s13, 0
    %p75 = por %p73, %p74
    %p76 = scmp.ne.s32.totalorder %s68, %s70
    %p77 = scmp.eq.s32.totalorder %s18, 3
    %p78 = por %p76, %p77
    %p79 = scmp.ne.s32.totalorder %s70, %s71
    %p80 = scmp.eq.s32.totalorder %s18, 0
    %p81 = por %p79, %p80
    %p82 = scmp.ne.s32.totalorder %s70, %s71
    %p83 = scmp.eq.s32.totalorder %s19, 3
    %p84 = por %p82, %p83
    %p86 = scmp.ne.s32.totalorder %s71, %s85
    %p87 = scmp.eq.s32.totalorder %s19, 0
    %p88 = por %p86, %p87
    %s90 = sadd.s32 %s89, 1
    %p93 = scmp.eq.s32.totalorder %s13, 3
    %p94 = scmp.ne.s32.totalorder %s89, %s91
    %p95 = scmp.eq.s32.totalorder %s13, 0
    %p96 = por %p94, %p95
    %p97 = scmp.ne.s32.totalorder %s89, %s91
    %p98 = scmp.eq.s32.totalorder %s18, 3
    %p99 = por %p97, %p98
    %p100 = scmp.ne.s32.totalorder %s91, %s92
    %p101 = scmp.eq.s32.totalorder %s18, 0
    %p102 = por %p100, %p101
    %p103 = scmp.ne.s32.totalorder %s91, %s92
    %p104 = scmp.eq.s32.totalorder %s19, 3
    %p105 = por %p103, %p104
    %p107 = scmp.ne.s32.totalorder %s92, %s106
    %p108 = scmp.eq.s32.totalorder %s19, 0
    %p109 = por %p107, %p108
    %s111 = sadd.s32 %s110, 1
    %p114 = scmp.eq.s32.totalorder %s13, 3
    %p115 = scmp.ne.s32.totalorder %s110, %s112
    %p116 = scmp.eq.s32.totalorder %s13, 0
    %p117 = por %p115, %p116
    %p118 = scmp.ne.s32.totalorder %s110, %s112
    %p119 = scmp.eq.s32.totalorder %s18, 3
    %p120 = por %p118, %p119
    %p121 = scmp.ne.s32.totalorder %s112, %s113
    %p122 = scmp.eq.s32.totalorder %s18, 0
    %p123 = por %p121, %p122
    %p124 = scmp.ne.s32.totalorder %s112, %s113
    %p125 = scmp.eq.s32.totalorder %s19, 3
    %p126 = por %p124, %p125
    %p128 = scmp.ne.s32.totalorder %s113, %s127
    %p129 = scmp.eq.s32.totalorder %s19, 0
    %p130 = por %p128, %p129
    %s131 = ssub.s32 %s13, %s20
    %p132 = scmp.eq.s32.totalorder %s131, 0
    %s134 = sadd.s32 %s133, 1
    %s135 = scalar_select %p132, %s133, %s134
    %p138 = pneg %p132
    %p139 = scmp.eq.s32.totalorder %s13, 3
    %p140 = por %p138, %p139
    %p141 = scmp.ne.s32.totalorder %s133, %s136
    %p142 = scmp.eq.s32.totalorder %s13, 0
    %p143 = por %p141, %p142
    %p144 = scmp.ne.s32.totalorder %s133, %s136
    %p145 = scmp.eq.s32.totalorder %s18, 3
    %p146 = por %p144, %p145
    %p147 = scmp.ne.s32.totalorder %s136, %s137
    %p148 = scmp.eq.s32.totalorder %s18, 0
    %p149 = por %p147, %p148
    %p150 = scmp.ne.s32.totalorder %s136, %s137
    %p151 = scmp.eq.s32.totalorder %s19, 3
    %p152 = por %p150, %p151
    %p154 = scmp.ne.s32.totalorder %s137, %s153
    %p155 = scmp.eq.s32.totalorder %s19, 0
    %p156 = por %p154, %p155
    %s157 = ssub.s32 %s13, %s20
    %p158 = scmp.eq.s32.totalorder %s157, 0
    %s160 = sadd.s32 %s159, 1
    %s161 = scalar_select %p158, %s159, %s160
    %p164 = pneg %p158
    %p165 = scmp.eq.s32.totalorder %s13, 3
    %p166 = por %p164, %p165
    %p167 = scmp.ne.s32.totalorder %s159, %s162
    %p168 = scmp.eq.s32.totalorder %s13, 0
    %p169 = por %p167, %p168
    %p170 = scmp.ne.s32.totalorder %s159, %s162
    %p171 = scmp.eq.s32.totalorder %s18, 3
    %p172 = por %p170, %p171
    %p173 = scmp.ne.s32.totalorder %s162, %s163
    %p174 = scmp.eq.s32.totalorder %s18, 0
    %p175 = por %p173, %p174
    %p176 = scmp.ne.s32.totalorder %s162, %s163
    %p177 = scmp.eq.s32.totalorder %s19, 3
    %p178 = por %p176, %p177
    %p180 = scmp.ne.s32.totalorder %s163, %s179
    %p181 = scmp.eq.s32.totalorder %s19, 0
    %p182 = por %p180, %p181
    %p183 = scmp.le.s32.totalorder 1, %s13
    %p184 = scmp.lt.s32.totalorder %s13, 5
    %p185 = pnand %p183, %p184
    %p186 = pneg %p185
    // Predicated region
    $region9: #{bottleneck_csp_forward.2} parent=5 // pred_check
      _
    $region10: #{bottleneck_csp_forward.2} parent=5 // pred_check_branch
      %188 = sbr.rel (%p185) target = $region12
    $region11: #{bottleneck_csp_forward.2} parent=5 // pred_region
      %s189 = ssub.s32 %s13, 1
      // Predicated region
      $region13: #{bottleneck_csp_forward.2} parent=11 // pred_check
        %p190 = pneg %p60
      $region14: #{bottleneck_csp_forward.2} parent=11 // pred_check_branch
        %192 = sbr.rel (%p190) target = $region16
      $region15: #{bottleneck_csp_forward.2} parent=11 // pred_region
        _
      $region16: #{bottleneck_csp_forward.2} parent=11 // pred_fallthru
        _
      // Predicated region
      $region17: #{bottleneck_csp_forward.2} parent=11 // pred_check
        %p193 = pneg %p81
      $region18: #{bottleneck_csp_forward.2} parent=11 // pred_check_branch
        %195 = sbr.rel (%p193) target = $region20
      $region19: #{bottleneck_csp_forward.2} parent=11 // pred_region
        _
      $region20: #{bottleneck_csp_forward.2} parent=11 // pred_fallthru
        _
      // Predicated region
      $region21: #{bottleneck_csp_forward.2} parent=11 // pred_check
        %p196 = pneg %p102
      $region22: #{bottleneck_csp_forward.2} parent=11 // pred_check_branch
        %198 = sbr.rel (%p196) target = $region24
      $region23: #{bottleneck_csp_forward.2} parent=11 // pred_region
        _
      $region24: #{bottleneck_csp_forward.2} parent=11 // pred_fallthru
        _
      // Predicated region
      $region25: #{bottleneck_csp_forward.2} parent=11 // pred_check
        %p199 = pneg %p123
      $region26: #{bottleneck_csp_forward.2} parent=11 // pred_check_branch
        %201 = sbr.rel (%p199) target = $region28
      $region27: #{bottleneck_csp_forward.2} parent=11 // pred_region
        _
      $region28: #{bottleneck_csp_forward.2} parent=11 // pred_fallthru
        _
    $region12: #{bottleneck_csp_forward.2} parent=5 // pred_fallthru
      _
    %p202 = scmp.lt.s32.totalorder %s13, 4
    // Predicated region
    $region29: #{bottleneck_csp_forward.2} parent=5 // pred_check
      %p203 = pneg %p202
    $region30: #{bottleneck_csp_forward.2} parent=5 // pred_check_branch
      %205 = sbr.rel (%p203) target = $region32
    $region31: #{bottleneck_csp_forward.2} parent=5 // pred_region
      // Predicated region
      $region33: #{bottleneck_csp_forward.2} parent=31 // pred_check
        %p206 = pneg %p33
      $region34: #{bottleneck_csp_forward.2} parent=31 // pred_check_branch
        %208 = sbr.rel (%p206) target = $region36
      $region35: #{bottleneck_csp_forward.2} parent=31 // pred_region
        %s209 = smul.u32 16, %s13
        %p210 = scmp.lt.s32.totalorder %s209, 63
        %s211 = scalar_select %p210, %s209, 63
        %s212 = smul.addr %s211, 4
        %s213 = scalar_lea.vmem %s0, %s212
        %s214 = smul.u32 16, %s13
      $region36: #{bottleneck_csp_forward.2} parent=31 // pred_fallthru
        _
    $region32: #{bottleneck_csp_forward.2} parent=5 // pred_fallthru
      _
    %p215 = scmp.le.s32.totalorder 1, %s13
    %p216 = scmp.lt.s32.totalorder %s13, 5
    %p217 = pnand %p215, %p216
    %p218 = pneg %p217
    // Predicated region
    $region37: #{bottleneck_csp_forward.2} parent=5 // pred_check
      _
    $region38: #{bottleneck_csp_forward.2} parent=5 // pred_check_branch
      %220 = sbr.rel (%p217) target = $region40
    $region39: #{bottleneck_csp_forward.2} parent=5 // pred_region
      %s221 = ssub.s32 %s13, 1
      %s222 = smul.u32 16, %s18
      %p223 = scmp.lt.s32.totalorder %s222, 63
      %s224 = scalar_select %p223, %s222, 63
      %s225 = smul.addr %s224, 4
      %s226 = scalar_lea.vmem %s0, %s225
      %p227 = pneg %p39
      %p228 = pneg %p36
      %p229 = pneg %p60
      %p230 = pneg %p57
      %p231 = pneg %p81
      %p232 = pneg %p78
      %p233 = pneg %p102
      %p234 = pneg %p99
      %p235 = pneg %p123
      %p236 = pneg %p120
      %p237 = pneg %p149
      %p238 = pneg %p146
      %s239 = smul.u32 16, %s18
      %p240 = scmp.lt.s32.totalorder %s239, 63
      %s241 = scalar_select %p240, %s239, 63
      %s242 = smul.addr %s241, 4
      %s243 = scalar_lea.vmem %s5, %s242
      %p244 = pneg %p175
      %p245 = pneg %p172
      %s246 = smul.u32 16, %s18
      %p247 = scmp.lt.s32.totalorder %s246, 63
      %s248 = scalar_select %p247, %s246, 63
      %s249 = smul.addr %s248, 4
      %s250 = scalar_lea.vmem %s6, %s249
      %s251 = smul.u32 16, %s18
      %p252 = scmp.lt.s32.totalorder %s251, 63
      %s253 = scalar_select %p252, %s251, 63
      %s254 = smul.addr %s253, 4
      %s255 = scalar_lea.vmem %s0, %s254
      %s256 = smul.u32 16, %s18
      %s257 = smul.u32 16, %s18
      %p258 = scmp.lt.s32.totalorder %s257, 63
      %s259 = scalar_select %p258, %s257, 63
      %s260 = smul.addr %s259, 4
      %s261 = scalar_lea.vmem %s5, %s260
      %s262 = smul.u32 16, %s18
      %s263 = smul.u32 16, %s18
      %p264 = scmp.lt.s32.totalorder %s263, 63
      %s265 = scalar_select %p264, %s263, 63
      %s266 = smul.addr %s265, 4
      %s267 = scalar_lea.vmem %s6, %s266
      %s268 = smul.u32 16, %s18
      %270 = vst [vmem:[#allocation2] sm:$0xff] 0
      %271 = vst [vmem:[#allocation2 + $0x8] sm:$0xff] 0
      %272 = vst [vmem:[#allocation2 + $0x10] sm:$0xff] 0
      %273 = vst [vmem:[#allocation2 + $0x18] sm:$0xff] 0
      %274 = vst [vmem:[#allocation2 + $0x20] sm:$0xff] 0
      %275 = vst [vmem:[#allocation2 + $0x28] sm:$0xff] 0
      %276 = vst [vmem:[#allocation2 + $0x30] sm:$0xff] 0
      %277 = vst [vmem:[#allocation2 + $0x38] sm:$0xff] 0
      %v278 = vld [vmem:[%s255] sm:$0xf]
      %v279 = vld [vmem:[%s255 + $0x4] sm:$0xf]
      %v280 = vld [vmem:[%s255 + $0x8] sm:$0xf]
      %v281 = vld [vmem:[%s255 + $0xc] sm:$0xf]
      %v282 = vld [vmem:[%s255 + $0x10] sm:$0xf]
      %v283 = vld [vmem:[%s255 + $0x14] sm:$0xf]
      %v284 = vld [vmem:[%s255 + $0x18] sm:$0xf]
      %v285 = vld [vmem:[%s255 + $0x1c] sm:$0xf]
      %v286 = vld [vmem:[%s255 + $0x20] sm:$0xf]
      %v287 = vld [vmem:[%s255 + $0x24] sm:$0xf]
      %v288 = vld [vmem:[%s255 + $0x28] sm:$0xf]
      %v289 = vld [vmem:[%s255 + $0x2c] sm:$0xf]
      %v290 = vld [vmem:[%s255 + $0x30] sm:$0xf]
      %v291 = vld [vmem:[%s255 + $0x34] sm:$0xf]
      %v292 = vld [vmem:[%s255 + $0x38] sm:$0xf]
      %v293 = vld [vmem:[%s255 + $0x3c] sm:$0xf]
      %v310 = vunpack.c.l.b16 %v278
      %v311 = vunpack.c.l.b16 %v279
      %v312 = vunpack.c.l.b16 %v280
      %v313 = vunpack.c.l.b16 %v281
      %v314 = vunpack.c.l.b16 %v282
      %v315 = vunpack.c.l.b16 %v283
      %v316 = vunpack.c.l.b16 %v284
      %v317 = vunpack.c.l.b16 %v285
      %v318 = vunpack.c.l.b16 %v286
      %v319 = vunpack.c.l.b16 %v287
      %v320 = vunpack.c.l.b16 %v288
      %v321 = vunpack.c.l.b16 %v289
      %v322 = vunpack.c.l.b16 %v290
      %v323 = vunpack.c.l.b16 %v291
      %v324 = vunpack.c.l.b16 %v292
      %v325 = vunpack.c.l.b16 %v293
      %v326 = vpack.c.b16 %v311, %v310
      %v327 = vpack.c.b16 %v313, %v312
      %v328 = vpack.c.b16 %v315, %v314
      %v329 = vpack.c.b16 %v317, %v316
      %v330 = vpack.c.b16 %v319, %v318
      %v331 = vpack.c.b16 %v321, %v320
      %v332 = vpack.c.b16 %v323, %v322
      %v333 = vpack.c.b16 %v325, %v324
      %vm342 = vcmask 31744
      %343 = vst.msk [vmem:[#allocation2] sm:$0xff] %vm342, %v326
      %344 = vst.msk [vmem:[#allocation2 + $0x8] sm:$0xff] %vm342, %v327
      %345 = vst.msk [vmem:[#allocation2 + $0x10] sm:$0xff] %vm342, %v328
      %346 = vst.msk [vmem:[#allocation2 + $0x18] sm:$0xff] %vm342, %v329
      %347 = vst.msk [vmem:[#allocation2 + $0x20] sm:$0xff] %vm342, %v330
      %348 = vst.msk [vmem:[#allocation2 + $0x28] sm:$0xff] %vm342, %v331
      %349 = vst.msk [vmem:[#allocation2 + $0x30] sm:$0xff] %vm342, %v332
      %350 = vst.msk [vmem:[#allocation2 + $0x38] sm:$0xff] %vm342, %v333
      %v351 = vld [vmem:[#allocation2] sm:$0xff]
      %v352 = vld [vmem:[#allocation2 + $0x8] sm:$0xff]
      %v353 = vld [vmem:[#allocation2 + $0x10] sm:$0xff]
      %v354 = vld [vmem:[#allocation2 + $0x18] sm:$0xff]
      %v355 = vld [vmem:[#allocation2 + $0x20] sm:$0xff]
      %v356 = vld [vmem:[#allocation2 + $0x28] sm:$0xff]
      %v357 = vld [vmem:[#allocation2 + $0x30] sm:$0xff]
      %v358 = vld [vmem:[#allocation2 + $0x38] sm:$0xff]
      %v359 = vld [vmem:[%s1] sm:$0xf]
      %v360 = vld [vmem:[%s1 + $0x4] sm:$0xf]
      %v361 = vld [vmem:[%s1 + $0x8] sm:$0xf]
      %v362 = vld [vmem:[%s1 + $0xc] sm:$0xf]
      %v363 = vld [vmem:[%s1 + $0x10] sm:$0xf]
      %v364 = vld [vmem:[%s1 + $0x14] sm:$0xf]
      %v365 = vld [vmem:[%s1 + $0x18] sm:$0xf]
      %v366 = vld [vmem:[%s1 + $0x1c] sm:$0xf]
      %v367 = vld [vmem:[%s1 + $0x20] sm:$0xf]
      %v368 = vld [vmem:[%s1 + $0x24] sm:$0xf]
      %v369 = vld [vmem:[%s1 + $0x28] sm:$0xf]
      %v370 = vld [vmem:[%s1 + $0x2c] sm:$0xf]
      %v371 = vld [vmem:[%s1 + $0x30] sm:$0xf]
      %v372 = vld [vmem:[%s1 + $0x34] sm:$0xf]
      %v373 = vld [vmem:[%s1 + $0x38] sm:$0xf]
      %v374 = vld [vmem:[%s1 + $0x3c] sm:$0xf]
      %v391 = vunpack.c.l.b16 %v359
      %v392 = vunpack.c.l.b16 %v360
      %v393 = vunpack.c.l.b16 %v361
      %v394 = vunpack.c.l.b16 %v362
      %v395 = vunpack.c.l.b16 %v363
      %v396 = vunpack.c.l.b16 %v364
      %v397 = vunpack.c.l.b16 %v365
      %v398 = vunpack.c.l.b16 %v366
      %v399 = vunpack.c.l.b16 %v367
      %v400 = vunpack.c.l.b16 %v368
      %v401 = vunpack.c.l.b16 %v369
      %v402 = vunpack.c.l.b16 %v370
      %v403 = vunpack.c.l.b16 %v371
      %v404 = vunpack.c.l.b16 %v372
      %v405 = vunpack.c.l.b16 %v373
      %v406 = vunpack.c.l.b16 %v374
      %v407 = vpack.c.b16 %v392, %v391
      %v408 = vpack.c.b16 %v394, %v393
      %v409 = vpack.c.b16 %v396, %v395
      %v410 = vpack.c.b16 %v398, %v397
      %v411 = vpack.c.b16 %v400, %v399
      %v412 = vpack.c.b16 %v402, %v401
      %v413 = vpack.c.b16 %v404, %v403
      %v414 = vpack.c.b16 %v406, %v405
      %423 = vmatprep.subr.bf16.mxu0 0
      %424 = vmatpush1.bf16.msra.mxu0 %v407
      %425 = vmatprep.subr.bf16.mxu0 0
      %426 = vmatpush1.bf16.msra.mxu0 %v408
      %427 = vmatprep.subr.bf16.mxu0 0
      %428 = vmatpush1.bf16.msra.mxu0 %v409
      %429 = vmatprep.subr.bf16.mxu0 0
      %430 = vmatpush1.bf16.msra.mxu0 %v410
      %431 = vmatprep.subr.bf16.mxu0 0
      %432 = vmatpush1.bf16.msra.mxu0 %v411
      %433 = vmatprep.subr.bf16.mxu0 0
      %434 = vmatpush1.bf16.msra.mxu0 %v412
      %435 = vmatprep.subr.bf16.mxu0 0
      %436 = vmatpush1.bf16.msra.mxu0 %v413
      %437 = vmatprep.subr.bf16.mxu0 0
      %438 = vmatpush1.bf16.msra.mxu0 %v414
      %439 = vmatprep.subr.bf16.mxu0 0
      %440 = vmatpush1.bf16.msra.mxu0 0
      %441 = vmatprep.subr.bf16.mxu0 0
      %442 = vmatpush1.bf16.msra.mxu0 0
      %443 = vmatprep.subr.bf16.mxu0 0
      %444 = vmatpush1.bf16.msra.mxu0 0
      %445 = vmatprep.subr.bf16.mxu0 0
      %446 = vmatpush1.bf16.msra.mxu0 0
      %447 = vmatprep.subr.bf16.mxu0 0
      %448 = vmatpush1.bf16.msra.mxu0 0
      %449 = vmatprep.subr.bf16.mxu0 0
      %450 = vmatpush1.bf16.msra.mxu0 0
      %451 = vmatprep.subr.bf16.mxu0 0
      %452 = vmatpush1.bf16.msra.mxu0 0
      %453 = vmatprep.subr.bf16.mxu0 0
      %454 = vmatpush1.bf16.msra.mxu0 0
      %455 = vmatprep.mubr.bf16.mxu0 0
      %456 = vmatmul.mubr.bf16.gmra.mrb[0].mxu0 %v351
      %v457 = vpop.f32.mrb[0].mxu0
      %v458 = vadd.f32 0.0, %v457
      %v459 = vpop.f32.mrb[0].mxu0
      %v460 = vpop.f32.mrb[0].mxu0
      %v461 = vadd.f32 0.0, %v460
      %v462 = vpop.f32.mrb[0].mxu0
      %463 = vmatprep.mubr.bf16.mxu0 0
      %464 = vmatmul.mubr.bf16.gmra.mrb[0].mxu0 %v352
      %v465 = vpop.f32.mrb[0].mxu0
      %v466 = vadd.f32 0.0, %v465
      %v467 = vpop.f32.mrb[0].mxu0
      %v468 = vpop.f32.mrb[0].mxu0
      %v469 = vadd.f32 0.0, %v468
      %v470 = vpop.f32.mrb[0].mxu0
      %471 = vmatprep.mubr.bf16.mxu0 0
      %472 = vmatmul.mubr.bf16.gmra.mrb[0].mxu0 %v353
      %v473 = vpop.f32.mrb[0].mxu0
      %v474 = vadd.f32 0.0, %v473
      %v475 = vpop.f32.mrb[0].mxu0
      %v476 = vpop.f32.mrb[0].mxu0
      %v477 = vadd.f32 0.0, %v476
      %v478 = vpop.f32.mrb[0].mxu0
      %479 = vmatprep.mubr.bf16.mxu0 0
      %480 = vmatmul.mubr.bf16.gmra.mrb[0].mxu0 %v354
      %v481 = vpop.f32.mrb[0].mxu0
      %v482 = vadd.f32 0.0, %v481
      %v483 = vpop.f32.mrb[0].mxu0
      %v484 = vpop.f32.mrb[0].mxu0
      %v485 = vadd.f32 0.0, %v484
      %v486 = vpop.f32.mrb[0].mxu0
      %487 = vmatprep.mubr.bf16.mxu0 0
      %488 = vmatmul.mubr.bf16.gmra.mrb[0].mxu0 %v355
      %v489 = vpop.f32.mrb[0].mxu0
      %v490 = vadd.f32 0.0, %v489
      %v491 = vpop.f32.mrb[0].mxu0
      %v492 = vpop.f32.mrb[0].mxu0
      %v493 = vadd.f32 0.0, %v492
      %v494 = vpop.f32.mrb[0].mxu0
      %495 = vmatprep.mubr.bf16.mxu0 0
      %496 = vmatmul.mubr.bf16.gmra.mrb[0].mxu0 %v356
      %v497 = vpop.f32.mrb[0].mxu0
      %v498 = vadd.f32 0.0, %v497
      %v499 = vpop.f32.mrb[0].mxu0
      %v500 = vpop.f32.mrb[0].mxu0
      %v501 = vadd.f32 0.0, %v500
      %v502 = vpop.f32.mrb[0].mxu0
      %503 = vmatprep.mubr.bf16.mxu0 0
      %504 = vmatmul.mubr.bf16.gmra.mrb[0].mxu0 %v357
      %v505 = vpop.f32.mrb[0].mxu0
      %v506 = vadd.f32 0.0, %v505
      %v507 = vpop.f32.mrb[0].mxu0
      %v508 = vpop.f32.mrb[0].mxu0
      %v509 = vadd.f32 0.0, %v508
      %v510 = vpop.f32.mrb[0].mxu0
      %511 = vmatprep.mubr.bf16.mxu0 0
      %512 = vmatmul.mubr.bf16.gmra.mrb[0].mxu0 %v358
      %v513 = vpop.f32.mrb[0].mxu0
      %v514 = vadd.f32 0.0, %v513
      %v515 = vpop.f32.mrb[0].mxu0
      %v516 = vpop.f32.mrb[0].mxu0
      %v517 = vadd.f32 0.0, %v516
      %v518 = vpop.f32.mrb[0].mxu0
      %519 = vdwg.mxu0
      %v520 = vld [vmem:[%s2] sm:$0x1]
      %v522 = vlaneseq
      %v523 = vshrl.u32 %v522, 7
      %v524 = vsub.s32 0, %v523
      %v525 = vrot.slane %v520, %v524
      %v527 = vmul.f32 %v458, %v525
      %v528 = vmul.f32 %v461, %v525
      %v529 = vmul.f32 %v466, %v525
      %v530 = vmul.f32 %v469, %v525
      %v531 = vmul.f32 %v474, %v525
      %v532 = vmul.f32 %v477, %v525
      %v533 = vmul.f32 %v482, %v525
      %v534 = vmul.f32 %v485, %v525
      %v535 = vmul.f32 %v490, %v525
      %v536 = vmul.f32 %v493, %v525
      %v537 = vmul.f32 %v498, %v525
      %v538 = vmul.f32 %v501, %v525
      %v539 = vmul.f32 %v506, %v525
      %v540 = vmul.f32 %v509, %v525
      %v541 = vmul.f32 %v514, %v525
      %v542 = vmul.f32 %v517, %v525
      %v543 = vld [vmem:[%s3] sm:$0x1]
      %v545 = vlaneseq
      %v546 = vshrl.u32 %v545, 7
      %v547 = vsub.s32 0, %v546
      %v548 = vrot.slane %v543, %v547
      %v550 = vadd.f32 %v527, %v548
      %v551 = vadd.f32 %v528, %v548
      %v552 = vadd.f32 %v529, %v548
      %v553 = vadd.f32 %v530, %v548
      %v554 = vadd.f32 %v531, %v548
      %v555 = vadd.f32 %v532, %v548
      %v556 = vadd.f32 %v533, %v548
      %v557 = vadd.f32 %v534, %v548
      %v558 = vadd.f32 %v535, %v548
      %v559 = vadd.f32 %v536, %v548
      %v560 = vadd.f32 %v537, %v548
      %v561 = vadd.f32 %v538, %v548
      %v562 = vadd.f32 %v539, %v548
      %v563 = vadd.f32 %v540, %v548
      %v564 = vadd.f32 %v541, %v548
      %v565 = vadd.f32 %v542, %v548
      %v566 = vxor.u32 %v550, 2147483648
      %v567 = vxor.u32 %v551, 2147483648
      %v568 = vxor.u32 %v552, 2147483648
      %v569 = vxor.u32 %v553, 2147483648
      %v570 = vxor.u32 %v554, 2147483648
      %v571 = vxor.u32 %v555, 2147483648
      %v572 = vxor.u32 %v556, 2147483648
      %v573 = vxor.u32 %v557, 2147483648
      %v574 = vxor.u32 %v558, 2147483648
      %v575 = vxor.u32 %v559, 2147483648
      %v576 = vxor.u32 %v560, 2147483648
      %v577 = vxor.u32 %v561, 2147483648
      %v578 = vxor.u32 %v562, 2147483648
      %v579 = vxor.u32 %v563, 2147483648
      %v580 = vxor.u32 %v564, 2147483648
      %v581 = vxor.u32 %v565, 2147483648
      %v582 = vmul.f32 %v566, 1.442695
      %v583 = vpow.pop %v582
      %v584 = vmul.f32 %v567, 1.442695
      %v585 = vpow.pop %v584
      %v586 = vmul.f32 %v568, 1.442695
      %v587 = vpow.pop %v586
      %v588 = vmul.f32 %v569, 1.442695
      %v589 = vpow.pop %v588
      %v590 = vmul.f32 %v570, 1.442695
      %v591 = vpow.pop %v590
      %v592 = vmul.f32 %v571, 1.442695
      %v593 = vpow.pop %v592
      %v594 = vmul.f32 %v572, 1.442695
      %v595 = vpow.pop %v594
      %v596 = vmul.f32 %v573, 1.442695
      %v597 = vpow.pop %v596
      %v598 = vmul.f32 %v574, 1.442695
      %v599 = vpow.pop %v598
      %v600 = vmul.f32 %v575, 1.442695
      %v601 = vpow.pop %v600
      %v602 = vmul.f32 %v576, 1.442695
      %v603 = vpow.pop %v602
      %v604 = vmul.f32 %v577, 1.442695
      %v605 = vpow.pop %v604
      %v606 = vmul.f32 %v578, 1.442695
      %v607 = vpow.pop %v606
      %v608 = vmul.f32 %v579, 1.442695
      %v609 = vpow.pop %v608
      %v610 = vmul.f32 %v580, 1.442695
      %v611 = vpow.pop %v610
      %v612 = vmul.f32 %v581, 1.442695
      %v613 = vpow.pop %v612
      %v614 = vadd.f32 %v583, 1.0
      %v615 = vadd.f32 %v585, 1.0
      %v616 = vadd.f32 %v587, 1.0
      %v617 = vadd.f32 %v589, 1.0
      %v618 = vadd.f32 %v591, 1.0
      %v619 = vadd.f32 %v593, 1.0
      %v620 = vadd.f32 %v595, 1.0
      %v621 = vadd.f32 %v597, 1.0
      %v622 = vadd.f32 %v599, 1.0
      %v623 = vadd.f32 %v601, 1.0
      %v624 = vadd.f32 %v603, 1.0
      %v625 = vadd.f32 %v605, 1.0
      %v626 = vadd.f32 %v607, 1.0
      %v627 = vadd.f32 %v609, 1.0
      %v628 = vadd.f32 %v611, 1.0
      %v629 = vadd.f32 %v613, 1.0
      %v630 = vrcp.pop %v614
      %v631 = vmul.f32 1.0, %v630
      %v632 = vrcp.pop %v615
      %v633 = vmul.f32 1.0, %v632
      %v634 = vrcp.pop %v616
      %v635 = vmul.f32 1.0, %v634
      %v636 = vrcp.pop %v617
      %v637 = vmul.f32 1.0, %v636
      %v638 = vrcp.pop %v618
      %v639 = vmul.f32 1.0, %v638
      %v640 = vrcp.pop %v619
      %v641 = vmul.f32 1.0, %v640
      %v642 = vrcp.pop %v620
      %v643 = vmul.f32 1.0, %v642
      %v644 = vrcp.pop %v621
      %v645 = vmul.f32 1.0, %v644
      %v646 = vrcp.pop %v622
      %v647 = vmul.f32 1.0, %v646
      %v648 = vrcp.pop %v623
      %v649 = vmul.f32 1.0, %v648
      %v650 = vrcp.pop %v624
      %v651 = vmul.f32 1.0, %v650
      %v652 = vrcp.pop %v625
      %v653 = vmul.f32 1.0, %v652
      %v654 = vrcp.pop %v626
      %v655 = vmul.f32 1.0, %v654
      %v656 = vrcp.pop %v627
      %v657 = vmul.f32 1.0, %v656
      %v658 = vrcp.pop %v628
      %v659 = vmul.f32 1.0, %v658
      %v660 = vrcp.pop %v629
      %v661 = vmul.f32 1.0, %v660
      %v662 = vmul.f32 %v550, %v631
      %v663 = vmul.f32 %v551, %v633
      %v664 = vmul.f32 %v552, %v635
      %v665 = vmul.f32 %v553, %v637
      %v666 = vmul.f32 %v554, %v639
      %v667 = vmul.f32 %v555, %v641
      %v668 = vmul.f32 %v556, %v643
      %v669 = vmul.f32 %v557, %v645
      %v670 = vmul.f32 %v558, %v647
      %v671 = vmul.f32 %v559, %v649
      %v672 = vmul.f32 %v560, %v651
      %v673 = vmul.f32 %v561, %v653
      %v674 = vmul.f32 %v562, %v655
      %v675 = vmul.f32 %v563, %v657
      %v676 = vmul.f32 %v564, %v659
      %v677 = vmul.f32 %v565, %v661
      %v678 = vpack.c.bf16 %v663, %v662
      %v679 = vpack.c.bf16 %v665, %v664
      %v680 = vpack.c.bf16 %v667, %v666
      %v681 = vpack.c.bf16 %v669, %v668
      %v682 = vpack.c.bf16 %v671, %v670
      %v683 = vpack.c.bf16 %v673, %v672
      %v684 = vpack.c.bf16 %v675, %v674
      %v685 = vpack.c.bf16 %v677, %v676
      %v694 = vunpack.c.l.b16 %v678
      %v695 = vunpack.c.h.b16 %v678
      %v696 = vunpack.c.l.b16 %v679
      %v697 = vunpack.c.h.b16 %v679
      %v698 = vunpack.c.l.b16 %v680
      %v699 = vunpack.c.h.b16 %v680
      %v700 = vunpack.c.l.b16 %v681
      %v701 = vunpack.c.h.b16 %v681
      %v702 = vunpack.c.l.b16 %v682
      %v703 = vunpack.c.h.b16 %v682
      %v704 = vunpack.c.l.b16 %v683
      %v705 = vunpack.c.h.b16 %v683
      %v706 = vunpack.c.l.b16 %v684
      %v707 = vunpack.c.h.b16 %v684
      %v708 = vunpack.c.l.b16 %v685
      %v709 = vunpack.c.h.b16 %v685
      %v710 = vpack.c.b16 %v694, %v694
      %v711 = vpack.c.b16 %v695, %v695
      %v712 = vpack.c.b16 %v696, %v696
      %v713 = vpack.c.b16 %v697, %v697
      %v714 = vpack.c.b16 %v698, %v698
      %v715 = vpack.c.b16 %v699, %v699
      %v716 = vpack.c.b16 %v700, %v700
      %v717 = vpack.c.b16 %v701, %v701
      %v718 = vpack.c.b16 %v702, %v702
      %v719 = vpack.c.b16 %v703, %v703
      %v720 = vpack.c.b16 %v704, %v704
      %v721 = vpack.c.b16 %v705, %v705
      %v722 = vpack.c.b16 %v706, %v706
      %v723 = vpack.c.b16 %v707, %v707
      %v724 = vpack.c.b16 %v708, %v708
      %v725 = vpack.c.b16 %v709, %v709
      %742 = vst [vmem:[%s261] sm:$0xf] %v710
      %743 = vst [vmem:[%s261 + $0x4] sm:$0xf] %v711
      %744 = vst [vmem:[%s261 + $0x8] sm:$0xf] %v712
      %745 = vst [vmem:[%s261 + $0xc] sm:$0xf] %v713
      %746 = vst [vmem:[%s261 + $0x10] sm:$0xf] %v714
      %747 = vst [vmem:[%s261 + $0x14] sm:$0xf] %v715
      %748 = vst [vmem:[%s261 + $0x18] sm:$0xf] %v716
      %749 = vst [vmem:[%s261 + $0x1c] sm:$0xf] %v717
      %750 = vst [vmem:[%s261 + $0x20] sm:$0xf] %v718
      %751 = vst [vmem:[%s261 + $0x24] sm:$0xf] %v719
      %752 = vst [vmem:[%s261 + $0x28] sm:$0xf] %v720
      %753 = vst [vmem:[%s261 + $0x2c] sm:$0xf] %v721
      %754 = vst [vmem:[%s261 + $0x30] sm:$0xf] %v722
      %755 = vst [vmem:[%s261 + $0x34] sm:$0xf] %v723
      %756 = vst [vmem:[%s261 + $0x38] sm:$0xf] %v724
      %757 = vst [vmem:[%s261 + $0x3c] sm:$0xf] %v725
      %v758 = vld [vmem:[%s4] sm:$0xf]
      %v759 = vld [vmem:[%s4 + $0x4] sm:$0xf]
      %v760 = vld [vmem:[%s4 + $0x8] sm:$0xf]
      %v761 = vld [vmem:[%s4 + $0xc] sm:$0xf]
      %v762 = vld [vmem:[%s4 + $0x10] sm:$0xf]
      %v763 = vld [vmem:[%s4 + $0x14] sm:$0xf]
      %v764 = vld [vmem:[%s4 + $0x18] sm:$0xf]
      %v765 = vld [vmem:[%s4 + $0x1c] sm:$0xf]
      %v766 = vld [vmem:[%s4 + $0x20] sm:$0xf]
      %v767 = vld [vmem:[%s4 + $0x24] sm:$0xf]
      %v768 = vld [vmem:[%s4 + $0x28] sm:$0xf]
      %v769 = vld [vmem:[%s4 + $0x2c] sm:$0xf]
      %v770 = vld [vmem:[%s4 + $0x30] sm:$0xf]
      %v771 = vld [vmem:[%s4 + $0x34] sm:$0xf]
      %v772 = vld [vmem:[%s4 + $0x38] sm:$0xf]
      %v773 = vld [vmem:[%s4 + $0x3c] sm:$0xf]
      %v790 = vunpack.c.l.b16 %v758
      %v791 = vunpack.c.l.b16 %v759
      %v792 = vunpack.c.l.b16 %v760
      %v793 = vunpack.c.l.b16 %v761
      %v794 = vunpack.c.l.b16 %v762
      %v795 = vunpack.c.l.b16 %v763
      %v796 = vunpack.c.l.b16 %v764
      %v797 = vunpack.c.l.b16 %v765
      %v798 = vunpack.c.l.b16 %v766
      %v799 = vunpack.c.l.b16 %v767
      %v800 = vunpack.c.l.b16 %v768
      %v801 = vunpack.c.l.b16 %v769
      %v802 = vunpack.c.l.b16 %v770
      %v803 = vunpack.c.l.b16 %v771
      %v804 = vunpack.c.l.b16 %v772
      %v805 = vunpack.c.l.b16 %v773
      %v806 = vpack.c.b16 %v791, %v790
      %v807 = vpack.c.b16 %v793, %v792
      %v808 = vpack.c.b16 %v795, %v794
      %v809 = vpack.c.b16 %v797, %v796
      %v810 = vpack.c.b16 %v799, %v798
      %v811 = vpack.c.b16 %v801, %v800
      %v812 = vpack.c.b16 %v803, %v802
      %v813 = vpack.c.b16 %v805, %v804
      %822 = vmatprep.subr.bf16.mxu0 0
      %823 = vmatpush1.bf16.msra.mxu0 %v806
      %824 = vmatprep.subr.bf16.mxu0 0
      %825 = vmatpush1.bf16.msra.mxu0 %v807
      %826 = vmatprep.subr.bf16.mxu0 0
      %827 = vmatpush1.bf16.msra.mxu0 %v808
      %828 = vmatprep.subr.bf16.mxu0 0
      %829 = vmatpush1.bf16.msra.mxu0 %v809
      %830 = vmatprep.subr.bf16.mxu0 0
      %831 = vmatpush1.bf16.msra.mxu0 %v810
      %832 = vmatprep.subr.bf16.mxu0 0
      %833 = vmatpush1.bf16.msra.mxu0 %v811
      %834 = vmatprep.subr.bf16.mxu0 0
      %835 = vmatpush1.bf16.msra.mxu0 %v812
      %836 = vmatprep.subr.bf16.mxu0 0
      %837 = vmatpush1.bf16.msra.mxu0 %v813
      %838 = vmatprep.subr.bf16.mxu0 0
      %839 = vmatpush1.bf16.msra.mxu0 0
      %840 = vmatprep.subr.bf16.mxu0 0
      %841 = vmatpush1.bf16.msra.mxu0 0
      %842 = vmatprep.subr.bf16.mxu0 0
      %843 = vmatpush1.bf16.msra.mxu0 0
      %844 = vmatprep.subr.bf16.mxu0 0
      %845 = vmatpush1.bf16.msra.mxu0 0
      %846 = vmatprep.subr.bf16.mxu0 0
      %847 = vmatpush1.bf16.msra.mxu0 0
      %848 = vmatprep.subr.bf16.mxu0 0
      %849 = vmatpush1.bf16.msra.mxu0 0
      %850 = vmatprep.subr.bf16.mxu0 0
      %851 = vmatpush1.bf16.msra.mxu0 0
      %852 = vmatprep.subr.bf16.mxu0 0
      %853 = vmatpush1.bf16.msra.mxu0 0
      %854 = vmatprep.mubr.bf16.mxu0 0
      %855 = vmatmul.mubr.bf16.gmra.mrb[0].mxu0 %v351
      %v856 = vpop.f32.mrb[0].mxu0
      %v857 = vadd.f32 0.0, %v856
      %v858 = vpop.f32.mrb[0].mxu0
      %v859 = vpop.f32.mrb[0].mxu0
      %v860 = vadd.f32 0.0, %v859
      %v861 = vpop.f32.mrb[0].mxu0
      %862 = vmatprep.mubr.bf16.mxu0 0
      %863 = vmatmul.mubr.bf16.gmra.mrb[0].mxu0 %v352
      %v864 = vpop.f32.mrb[0].mxu0
      %v865 = vadd.f32 0.0, %v864
      %v866 = vpop.f32.mrb[0].mxu0
      %v867 = vpop.f32.mrb[0].mxu0
      %v868 = vadd.f32 0.0, %v867
      %v869 = vpop.f32.mrb[0].mxu0
      %870 = vmatprep.mubr.bf16.mxu0 0
      %871 = vmatmul.mubr.bf16.gmra.mrb[0].mxu0 %v353
      %v872 = vpop.f32.mrb[0].mxu0
      %v873 = vadd.f32 0.0, %v872
      %v874 = vpop.f32.mrb[0].mxu0
      %v875 = vpop.f32.mrb[0].mxu0
      %v876 = vadd.f32 0.0, %v875
      %v877 = vpop.f32.mrb[0].mxu0
      %878 = vmatprep.mubr.bf16.mxu0 0
      %879 = vmatmul.mubr.bf16.gmra.mrb[0].mxu0 %v354
      %v880 = vpop.f32.mrb[0].mxu0
      %v881 = vadd.f32 0.0, %v880
      %v882 = vpop.f32.mrb[0].mxu0
      %v883 = vpop.f32.mrb[0].mxu0
      %v884 = vadd.f32 0.0, %v883
      %v885 = vpop.f32.mrb[0].mxu0
      %886 = vmatprep.mubr.bf16.mxu0 0
      %887 = vmatmul.mubr.bf16.gmra.mrb[0].mxu0 %v355
      %v888 = vpop.f32.mrb[0].mxu0
      %v889 = vadd.f32 0.0, %v888
      %v890 = vpop.f32.mrb[0].mxu0
      %v891 = vpop.f32.mrb[0].mxu0
      %v892 = vadd.f32 0.0, %v891
      %v893 = vpop.f32.mrb[0].mxu0
      %894 = vmatprep.mubr.bf16.mxu0 0
      %895 = vmatmul.mubr.bf16.gmra.mrb[0].mxu0 %v356
      %v896 = vpop.f32.mrb[0].mxu0
      %v897 = vadd.f32 0.0, %v896
      %v898 = vpop.f32.mrb[0].mxu0
      %v899 = vpop.f32.mrb[0].mxu0
      %v900 = vadd.f32 0.0, %v899
      %v901 = vpop.f32.mrb[0].mxu0
      %902 = vmatprep.mubr.bf16.mxu0 0
      %903 = vmatmul.mubr.bf16.gmra.mrb[0].mxu0 %v357
      %v904 = vpop.f32.mrb[0].mxu0
      %v905 = vadd.f32 0.0, %v904
      %v906 = vpop.f32.mrb[0].mxu0
      %v907 = vpop.f32.mrb[0].mxu0
      %v908 = vadd.f32 0.0, %v907
      %v909 = vpop.f32.mrb[0].mxu0
      %910 = vmatprep.mubr.bf16.mxu0 0
      %911 = vmatmul.mubr.bf16.gmra.mrb[0].mxu0 %v358
      %v912 = vpop.f32.mrb[0].mxu0
      %v913 = vadd.f32 0.0, %v912
      %v914 = vpop.f32.mrb[0].mxu0
      %v915 = vpop.f32.mrb[0].mxu0
      %v916 = vadd.f32 0.0, %v915
      %v917 = vpop.f32.mrb[0].mxu0
      %918 = vdwg.mxu0
      %v919 = vpack.c.bf16 %v860, %v857
      %v920 = vpack.c.bf16 %v868, %v865
      %v921 = vpack.c.bf16 %v876, %v873
      %v922 = vpack.c.bf16 %v884, %v881
      %v923 = vpack.c.bf16 %v892, %v889
      %v924 = vpack.c.bf16 %v900, %v897
      %v925 = vpack.c.bf16 %v908, %v905
      %v926 = vpack.c.bf16 %v916, %v913
      %v935 = vunpack.c.l.b16 %v919
      %v936 = vunpack.c.h.b16 %v919
      %v937 = vunpack.c.l.b16 %v920
      %v938 = vunpack.c.h.b16 %v920
      %v939 = vunpack.c.l.b16 %v921
      %v940 = vunpack.c.h.b16 %v921
      %v941 = vunpack.c.l.b16 %v922
      %v942 = vunpack.c.h.b16 %v922
      %v943 = vunpack.c.l.b16 %v923
      %v944 = vunpack.c.h.b16 %v923
      %v945 = vunpack.c.l.b16 %v924
      %v946 = vunpack.c.h.b16 %v924
      %v947 = vunpack.c.l.b16 %v925
      %v948 = vunpack.c.h.b16 %v925
      %v949 = vunpack.c.l.b16 %v926
      %v950 = vunpack.c.h.b16 %v926
      %v951 = vpack.c.b16 %v935, %v935
      %v952 = vpack.c.b16 %v936, %v936
      %v953 = vpack.c.b16 %v937, %v937
      %v954 = vpack.c.b16 %v938, %v938
      %v955 = vpack.c.b16 %v939, %v939
      %v956 = vpack.c.b16 %v940, %v940
      %v957 = vpack.c.b16 %v941, %v941
      %v958 = vpack.c.b16 %v942, %v942
      %v959 = vpack.c.b16 %v943, %v943
      %v960 = vpack.c.b16 %v944, %v944
      %v961 = vpack.c.b16 %v945, %v945
      %v962 = vpack.c.b16 %v946, %v946
      %v963 = vpack.c.b16 %v947, %v947
      %v964 = vpack.c.b16 %v948, %v948
      %v965 = vpack.c.b16 %v949, %v949
      %v966 = vpack.c.b16 %v950, %v950
      %983 = vst [vmem:[%s267] sm:$0xf] %v951
      %984 = vst [vmem:[%s267 + $0x4] sm:$0xf] %v952
      %985 = vst [vmem:[%s267 + $0x8] sm:$0xf] %v953
      %986 = vst [vmem:[%s267 + $0xc] sm:$0xf] %v954
      %987 = vst [vmem:[%s267 + $0x10] sm:$0xf] %v955
      %988 = vst [vmem:[%s267 + $0x14] sm:$0xf] %v956
      %989 = vst [vmem:[%s267 + $0x18] sm:$0xf] %v957
      %990 = vst [vmem:[%s267 + $0x1c] sm:$0xf] %v958
      %991 = vst [vmem:[%s267 + $0x20] sm:$0xf] %v959
      %992 = vst [vmem:[%s267 + $0x24] sm:$0xf] %v960
      %993 = vst [vmem:[%s267 + $0x28] sm:$0xf] %v961
      %994 = vst [vmem:[%s267 + $0x2c] sm:$0xf] %v962
      %995 = vst [vmem:[%s267 + $0x30] sm:$0xf] %v963
      %996 = vst [vmem:[%s267 + $0x34] sm:$0xf] %v964
      %997 = vst [vmem:[%s267 + $0x38] sm:$0xf] %v965
      %998 = vst [vmem:[%s267 + $0x3c] sm:$0xf] %v966
      %s999 = smul.u32 16, %s18
      %p1000 = scmp.lt.s32.totalorder %s999, 63
      %s1001 = scalar_select %p1000, %s999, 63
      %s1002 = smul.addr %s1001, 4
      %s1003 = scalar_lea.vmem %s5, %s1002
      %s1004 = smul.u32 16, %s18
      %p1005 = scmp.lt.s32.totalorder %s1004, 63
      %s1006 = scalar_select %p1005, %s1004, 63
      %s1007 = smul.addr %s1006, 4
      %s1008 = scalar_lea.vmem %s6, %s1007
      // Predicated region
      $region41: #{bottleneck_csp_forward.2} parent=39 // pred_check
        %p1009 = pneg %p146
      $region42: #{bottleneck_csp_forward.2} parent=39 // pred_check_branch
        %1011 = sbr.rel (%p1009) target = $region44
      $region43: #{bottleneck_csp_forward.2} parent=39 // pred_region
        %s1012 = smul.u32 16, %s18
      $region44: #{bottleneck_csp_forward.2} parent=39 // pred_fallthru
        _
      // Predicated region
      $region45: #{bottleneck_csp_forward.2} parent=39 // pred_check
        %p1013 = pneg %p172
      $region46: #{bottleneck_csp_forward.2} parent=39 // pred_check_branch
        %1015 = sbr.rel (%p1013) target = $region48
      $region47: #{bottleneck_csp_forward.2} parent=39 // pred_region
        %s1016 = smul.u32 16, %s18
      $region48: #{bottleneck_csp_forward.2} parent=39 // pred_fallthru
        _
    $region40: #{bottleneck_csp_forward.2} parent=5 // pred_fallthru
      _
    %p1017 = scmp.le.s32.totalorder 2, %s13
    // Predicated region
    $region49: #{bottleneck_csp_forward.2} parent=5 // pred_check
      %p1018 = pneg %p1017
    $region50: #{bottleneck_csp_forward.2} parent=5 // pred_check_branch
      %1020 = sbr.rel (%p1018) target = $region52
    $region51: #{bottleneck_csp_forward.2} parent=5 // pred_region
      %s1021 = ssub.s32 %s13, 2
      // Predicated region
      $region53: #{bottleneck_csp_forward.2} parent=51 // pred_check
        %p1022 = pneg %p152
      $region54: #{bottleneck_csp_forward.2} parent=51 // pred_check_branch
        %1024 = sbr.rel (%p1022) target = $region56
      $region55: #{bottleneck_csp_forward.2} parent=51 // pred_region
        %s1025 = smul.u32 16, %s19
        %p1026 = scmp.lt.s32.totalorder %s1025, 63
        %s1027 = scalar_select %p1026, %s1025, 63
        %s1028 = smul.addr %s1027, 4
        %s1029 = scalar_lea.vmem %s5, %s1028
      $region56: #{bottleneck_csp_forward.2} parent=51 // pred_fallthru
        _
      // Predicated region
      $region57: #{bottleneck_csp_forward.2} parent=51 // pred_check
        %p1030 = pneg %p178
      $region58: #{bottleneck_csp_forward.2} parent=51 // pred_check_branch
        %1032 = sbr.rel (%p1030) target = $region60
      $region59: #{bottleneck_csp_forward.2} parent=51 // pred_region
        %s1033 = smul.u32 16, %s19
        %p1034 = scmp.lt.s32.totalorder %s1033, 63
        %s1035 = scalar_select %p1034, %s1033, 63
        %s1036 = smul.addr %s1035, 4
        %s1037 = scalar_lea.vmem %s6, %s1036
      $region60: #{bottleneck_csp_forward.2} parent=51 // pred_fallthru
        _
    $region52: #{bottleneck_csp_forward.2} parent=5 // pred_fallthru
      _
  $region6: #{bottleneck_csp_forward.2} parent=0 // loop_footer
    %s17 = sadd.s32 1, %s13
  $region7: #{bottleneck_csp_forward.2} parent=0 // loop_footer_branch
    %12 = sbr.rel target = $region3
  $region8: #{bottleneck_csp_forward.2} parent=0 // loop_exit
    _

// kernel: bottleneck_csp_forward.3
$region0: #{bottleneck_csp_forward.3}
  #allocation0 [shape = 'u32[]', space=smem, size = 0x4, offset = 0x4, fixed_abs, tag = 'smem constant byte address 0x4 - core index']
  #allocation1 [shape = 'u32[144,128]{1,0:T(1,128)}', space=vmem, size = 0x12000, scoped, tag = 'internal scratch']
  #allocation2 [shape = 'bf16[304,128]{1,0:T(16,128)(2,1)}', space=vmem, size = 0x13000, scoped, tag = 'scratch operand']
  %s0 = inlined_call_operand.vmem [shape: bf16[512,128], index: 0, kind: input, shape index: {}]
  %s1 = inlined_call_operand.vmem [shape: bf16[512,128], index: 1, kind: input, shape index: {}]
  %s2 = inlined_call_operand.vmem [shape: bf16[128,128], index: 2, kind: input, shape index: {}]
  %s3 = inlined_call_operand.vmem [shape: f32[1,128], index: 3, kind: input, shape index: {}]
  %s4 = inlined_call_operand.vmem [shape: f32[1,128], index: 4, kind: input, shape index: {}]
  %s5 = inlined_call_operand.vmem [shape: bf16[9,128,128], index: 5, kind: input, shape index: {}]
  %s6 = inlined_call_operand.vmem [shape: f32[1,128], index: 6, kind: input, shape index: {}]
  %s7 = inlined_call_operand.vmem [shape: f32[1,128], index: 7, kind: input, shape index: {}]
  %s8 = inlined_call_operand.vmem [shape: bf16[128,128], index: 8, kind: input, shape index: {}]
  %s9 = inlined_call_operand.vmem [shape: f32[1,128], index: 9, kind: input, shape index: {}]
  %s10 = inlined_call_operand.vmem [shape: f32[1,128], index: 10, kind: input, shape index: {}]
  %s11 = inlined_call_operand.vmem [shape: f32[1,128], index: 11, kind: input, shape index: {}]
  %s12 = inlined_call_operand.vmem [shape: f32[1,128], index: 12, kind: input, shape index: {}]
  %s13 = inlined_call_operand.vmem [shape: bf16[128,128], index: 13, kind: input, shape index: {}]
  %s14 = inlined_call_operand.vmem [shape: bf16[128,128], index: 14, kind: input, shape index: {}]
  %s15 = inlined_call_operand.vmem [shape: f32[1,128], index: 15, kind: input, shape index: {}]
  %s16 = inlined_call_operand.vmem [shape: f32[1,128], index: 16, kind: input, shape index: {}]
  %s17 = inlined_call_operand.vmem [shape: bf16[512,128], index: 17, kind: output, shape index: {}]
  %s18 = sld [smem:[#allocation0]]
  $region101: #{bottleneck_csp_forward.3} parent=0
    _
  %s20 = ssub.s32 1, %s18
  %s21 = scalar_select 0, %s20, %s18
  loop: start=0, step=1, limit=4
  $region2: #{bottleneck_csp_forward.3} parent=0 // loop_pre_header
    _
  $region3: #{bottleneck_csp_forward.3} parent=0 // loop_header
    %s23 = sphi 0, %s27
    %p24 = scmp.ge.s32.totalorder %s23, 4
    %s33 = sphi 0, %s35
    %s36 = sphi 0, %s33
    %s37 = sphi 0, %s36
    %s53 = sphi 0, %s37
    %s59 = sphi 0, %s61
    %s62 = sphi 0, %s59
    %s63 = sphi 0, %s62
    %s79 = sphi 0, %s63
    %s83 = sphi 0, %s83
    %s85 = sphi 0, %s83
    %s86 = sphi 0, %s85
    %s100 = sphi 0, %s86
    %s104 = sphi 0, %s104
    %s106 = sphi 0, %s104
    %s107 = sphi 0, %s106
    %s121 = sphi 0, %s107
    %s125 = sphi 0, %s125
    %s127 = sphi 0, %s125
    %s128 = sphi 0, %s127
    %s142 = sphi 0, %s128
    %s146 = sphi 0, %s146
    %s148 = sphi 0, %s146
    %s149 = sphi 0, %s148
    %s163 = sphi 0, %s149
    %s167 = sphi 0, %s167
    %s169 = sphi 0, %s167
    %s170 = sphi 0, %s169
    %s184 = sphi 0, %s170
    %s188 = sphi 0, %s188
    %s190 = sphi 0, %s188
    %s191 = sphi 0, %s190
    %s205 = sphi 0, %s191
    %s209 = sphi 0, %s209
    %s211 = sphi 0, %s209
    %s212 = sphi 0, %s211
    %s226 = sphi 0, %s212
    %s230 = sphi 0, %s230
    %s232 = sphi 0, %s230
    %s233 = sphi 0, %s232
    %s247 = sphi 0, %s233
    %s251 = sphi 0, %s251
    %s253 = sphi 0, %s251
    %s254 = sphi 0, %s253
    %s268 = sphi 0, %s254
    %s272 = sphi 0, %s272
    %s274 = sphi 0, %s272
    %s275 = sphi 0, %s274
    %s289 = sphi 0, %s275
    %s293 = sphi 0, %s293
    %s295 = sphi 0, %s293
    %s296 = sphi 0, %s295
    %s310 = sphi 0, %s296
    %s314 = sphi 0, %s314
    %s316 = sphi 0, %s314
    %s317 = sphi 0, %s316
    %s331 = sphi 0, %s317
    %s335 = sphi 0, %s335
    %s337 = sphi 0, %s335
    %s338 = sphi 0, %s337
    %s352 = sphi 0, %s338
    %s356 = sphi 0, %s356
    %s358 = sphi 0, %s356
    %s359 = sphi 0, %s358
    %s373 = sphi 0, %s359
    %s377 = sphi 0, %s377
    %s379 = sphi 0, %s377
    %s380 = sphi 0, %s379
    %s394 = sphi 0, %s380
    %s400 = sphi 0, %s402
    %s403 = sphi 0, %s400
    %s404 = sphi 0, %s403
    %s420 = sphi 0, %s404
  $region4: #{bottleneck_csp_forward.3} parent=0 // loop_header_branch
    %26 = sbr.rel (%p24) target = $region8
  $region5: #{bottleneck_csp_forward.3} parent=0 // loop_body
    %s28 = ssub.s32 %s23, 1
    %s29 = ssub.s32 %s23, 2
    %s30 = sadd.s32 %s23, 1
    %s31 = ssub.s32 %s23, %s30
    %p32 = scmp.eq.s32.totalorder %s31, 0
    %s34 = sadd.s32 %s33, 1
    %s35 = scalar_select %p32, %s33, %s34
    %p38 = pneg %p32
    %p39 = scmp.eq.s32.totalorder %s23, 1
    %p40 = por %p38, %p39
    %p41 = scmp.ne.s32.totalorder %s33, %s36
    %p42 = scmp.eq.s32.totalorder %s23, 0
    %p43 = por %p41, %p42
    %p44 = scmp.ne.s32.totalorder %s33, %s36
    %p45 = scmp.eq.s32.totalorder %s28, 1
    %p46 = por %p44, %p45
    %p47 = scmp.ne.s32.totalorder %s36, %s37
    %p48 = scmp.eq.s32.totalorder %s28, 0
    %p49 = por %p47, %p48
    %p50 = scmp.ne.s32.totalorder %s36, %s37
    %p51 = scmp.eq.s32.totalorder %s29, 1
    %p52 = por %p50, %p51
    %p54 = scmp.ne.s32.totalorder %s37, %s53
    %p55 = scmp.eq.s32.totalorder %s29, 0
    %p56 = por %p54, %p55
    %s57 = ssub.s32 %s23, %s30
    %p58 = scmp.eq.s32.totalorder %s57, 0
    %s60 = sadd.s32 %s59, 1
    %s61 = scalar_select %p58, %s59, %s60
    %p64 = pneg %p58
    %p65 = scmp.eq.s32.totalorder %s23, 1
    %p66 = por %p64, %p65
    %p67 = scmp.ne.s32.totalorder %s59, %s62
    %p68 = scmp.eq.s32.totalorder %s23, 0
    %p69 = por %p67, %p68
    %p70 = scmp.ne.s32.totalorder %s59, %s62
    %p71 = scmp.eq.s32.totalorder %s28, 1
    %p72 = por %p70, %p71
    %p73 = scmp.ne.s32.totalorder %s62, %s63
    %p74 = scmp.eq.s32.totalorder %s28, 0
    %p75 = por %p73, %p74
    %p76 = scmp.ne.s32.totalorder %s62, %s63
    %p77 = scmp.eq.s32.totalorder %s29, 1
    %p78 = por %p76, %p77
    %p80 = scmp.ne.s32.totalorder %s63, %s79
    %p81 = scmp.eq.s32.totalorder %s29, 0
    %p82 = por %p80, %p81
    %s84 = sadd.s32 %s83, 1
    %p87 = scmp.eq.s32.totalorder %s23, 1
    %p88 = scmp.ne.s32.totalorder %s83, %s85
    %p89 = scmp.eq.s32.totalorder %s23, 0
    %p90 = por %p88, %p89
    %p91 = scmp.ne.s32.totalorder %s83, %s85
    %p92 = scmp.eq.s32.totalorder %s28, 1
    %p93 = por %p91, %p92
    %p94 = scmp.ne.s32.totalorder %s85, %s86
    %p95 = scmp.eq.s32.totalorder %s28, 0
    %p96 = por %p94, %p95
    %p97 = scmp.ne.s32.totalorder %s85, %s86
    %p98 = scmp.eq.s32.totalorder %s29, 1
    %p99 = por %p97, %p98
    %p101 = scmp.ne.s32.totalorder %s86, %s100
    %p102 = scmp.eq.s32.totalorder %s29, 0
    %p103 = por %p101, %p102
    %s105 = sadd.s32 %s104, 1
    %p108 = scmp.eq.s32.totalorder %s23, 1
    %p109 = scmp.ne.s32.totalorder %s104, %s106
    %p110 = scmp.eq.s32.totalorder %s23, 0
    %p111 = por %p109, %p110
    %p112 = scmp.ne.s32.totalorder %s104, %s106
    %p113 = scmp.eq.s32.totalorder %s28, 1
    %p114 = por %p112, %p113
    %p115 = scmp.ne.s32.totalorder %s106, %s107
    %p116 = scmp.eq.s32.totalorder %s28, 0
    %p117 = por %p115, %p116
    %p118 = scmp.ne.s32.totalorder %s106, %s107
    %p119 = scmp.eq.s32.totalorder %s29, 1
    %p120 = por %p118, %p119
    %p122 = scmp.ne.s32.totalorder %s107, %s121
    %p123 = scmp.eq.s32.totalorder %s29, 0
    %p124 = por %p122, %p123
    %s126 = sadd.s32 %s125, 1
    %p129 = scmp.eq.s32.totalorder %s23, 1
    %p130 = scmp.ne.s32.totalorder %s125, %s127
    %p131 = scmp.eq.s32.totalorder %s23, 0
    %p132 = por %p130, %p131
    %p133 = scmp.ne.s32.totalorder %s125, %s127
    %p134 = scmp.eq.s32.totalorder %s28, 1
    %p135 = por %p133, %p134
    %p136 = scmp.ne.s32.totalorder %s127, %s128
    %p137 = scmp.eq.s32.totalorder %s28, 0
    %p138 = por %p136, %p137
    %p139 = scmp.ne.s32.totalorder %s127, %s128
    %p140 = scmp.eq.s32.totalorder %s29, 1
    %p141 = por %p139, %p140
    %p143 = scmp.ne.s32.totalorder %s128, %s142
    %p144 = scmp.eq.s32.totalorder %s29, 0
    %p145 = por %p143, %p144
    %s147 = sadd.s32 %s146, 1
    %p150 = scmp.eq.s32.totalorder %s23, 1
    %p151 = scmp.ne.s32.totalorder %s146, %s148
    %p152 = scmp.eq.s32.totalorder %s23, 0
    %p153 = por %p151, %p152
    %p154 = scmp.ne.s32.totalorder %s146, %s148
    %p155 = scmp.eq.s32.totalorder %s28, 1
    %p156 = por %p154, %p155
    %p157 = scmp.ne.s32.totalorder %s148, %s149
    %p158 = scmp.eq.s32.totalorder %s28, 0
    %p159 = por %p157, %p158
    %p160 = scmp.ne.s32.totalorder %s148, %s149
    %p161 = scmp.eq.s32.totalorder %s29, 1
    %p162 = por %p160, %p161
    %p164 = scmp.ne.s32.totalorder %s149, %s163
    %p165 = scmp.eq.s32.totalorder %s29, 0
    %p166 = por %p164, %p165
    %s168 = sadd.s32 %s167, 1
    %p171 = scmp.eq.s32.totalorder %s23, 1
    %p172 = scmp.ne.s32.totalorder %s167, %s169
    %p173 = scmp.eq.s32.totalorder %s23, 0
    %p174 = por %p172, %p173
    %p175 = scmp.ne.s32.totalorder %s167, %s169
    %p176 = scmp.eq.s32.totalorder %s28, 1
    %p177 = por %p175, %p176
    %p178 = scmp.ne.s32.totalorder %s169, %s170
    %p179 = scmp.eq.s32.totalorder %s28, 0
    %p180 = por %p178, %p179
    %p181 = scmp.ne.s32.totalorder %s169, %s170
    %p182 = scmp.eq.s32.totalorder %s29, 1
    %p183 = por %p181, %p182
    %p185 = scmp.ne.s32.totalorder %s170, %s184
    %p186 = scmp.eq.s32.totalorder %s29, 0
    %p187 = por %p185, %p186
    %s189 = sadd.s32 %s188, 1
    %p192 = scmp.eq.s32.totalorder %s23, 1
    %p193 = scmp.ne.s32.totalorder %s188, %s190
    %p194 = scmp.eq.s32.totalorder %s23, 0
    %p195 = por %p193, %p194
    %p196 = scmp.ne.s32.totalorder %s188, %s190
    %p197 = scmp.eq.s32.totalorder %s28, 1
    %p198 = por %p196, %p197
    %p199 = scmp.ne.s32.totalorder %s190, %s191
    %p200 = scmp.eq.s32.totalorder %s28, 0
    %p201 = por %p199, %p200
    %p202 = scmp.ne.s32.totalorder %s190, %s191
    %p203 = scmp.eq.s32.totalorder %s29, 1
    %p204 = por %p202, %p203
    %p206 = scmp.ne.s32.totalorder %s191, %s205
    %p207 = scmp.eq.s32.totalorder %s29, 0
    %p208 = por %p206, %p207
    %s210 = sadd.s32 %s209, 1
    %p213 = scmp.eq.s32.totalorder %s23, 1
    %p214 = scmp.ne.s32.totalorder %s209, %s211
    %p215 = scmp.eq.s32.totalorder %s23, 0
    %p216 = por %p214, %p215
    %p217 = scmp.ne.s32.totalorder %s209, %s211
    %p218 = scmp.eq.s32.totalorder %s28, 1
    %p219 = por %p217, %p218
    %p220 = scmp.ne.s32.totalorder %s211, %s212
    %p221 = scmp.eq.s32.totalorder %s28, 0
    %p222 = por %p220, %p221
    %p223 = scmp.ne.s32.totalorder %s211, %s212
    %p224 = scmp.eq.s32.totalorder %s29, 1
    %p225 = por %p223, %p224
    %p227 = scmp.ne.s32.totalorder %s212, %s226
    %p228 = scmp.eq.s32.totalorder %s29, 0
    %p229 = por %p227, %p228
    %s231 = sadd.s32 %s230, 1
    %p234 = scmp.eq.s32.totalorder %s23, 1
    %p235 = scmp.ne.s32.totalorder %s230, %s232
    %p236 = scmp.eq.s32.totalorder %s23, 0
    %p237 = por %p235, %p236
    %p238 = scmp.ne.s32.totalorder %s230, %s232
    %p239 = scmp.eq.s32.totalorder %s28, 1
    %p240 = por %p238, %p239
    %p241 = scmp.ne.s32.totalorder %s232, %s233
    %p242 = scmp.eq.s32.totalorder %s28, 0
    %p243 = por %p241, %p242
    %p244 = scmp.ne.s32.totalorder %s232, %s233
    %p245 = scmp.eq.s32.totalorder %s29, 1
    %p246 = por %p244, %p245
    %p248 = scmp.ne.s32.totalorder %s233, %s247
    %p249 = scmp.eq.s32.totalorder %s29, 0
    %p250 = por %p248, %p249
    %s252 = sadd.s32 %s251, 1
    %p255 = scmp.eq.s32.totalorder %s23, 1
    %p256 = scmp.ne.s32.totalorder %s251, %s253
    %p257 = scmp.eq.s32.totalorder %s23, 0
    %p258 = por %p256, %p257
    %p259 = scmp.ne.s32.totalorder %s251, %s253
    %p260 = scmp.eq.s32.totalorder %s28, 1
    %p261 = por %p259, %p260
    %p262 = scmp.ne.s32.totalorder %s253, %s254
    %p263 = scmp.eq.s32.totalorder %s28, 0
    %p264 = por %p262, %p263
    %p265 = scmp.ne.s32.totalorder %s253, %s254
    %p266 = scmp.eq.s32.totalorder %s29, 1
    %p267 = por %p265, %p266
    %p269 = scmp.ne.s32.totalorder %s254, %s268
    %p270 = scmp.eq.s32.totalorder %s29, 0
    %p271 = por %p269, %p270
    %s273 = sadd.s32 %s272, 1
    %p276 = scmp.eq.s32.totalorder %s23, 1
    %p277 = scmp.ne.s32.totalorder %s272, %s274
    %p278 = scmp.eq.s32.totalorder %s23, 0
    %p279 = por %p277, %p278
    %p280 = scmp.ne.s32.totalorder %s272, %s274
    %p281 = scmp.eq.s32.totalorder %s28, 1
    %p282 = por %p280, %p281
    %p283 = scmp.ne.s32.totalorder %s274, %s275
    %p284 = scmp.eq.s32.totalorder %s28, 0
    %p285 = por %p283, %p284
    %p286 = scmp.ne.s32.totalorder %s274, %s275
    %p287 = scmp.eq.s32.totalorder %s29, 1
    %p288 = por %p286, %p287
    %p290 = scmp.ne.s32.totalorder %s275, %s289
    %p291 = scmp.eq.s32.totalorder %s29, 0
    %p292 = por %p290, %p291
    %s294 = sadd.s32 %s293, 1
    %p297 = scmp.eq.s32.totalorder %s23, 1
    %p298 = scmp.ne.s32.totalorder %s293, %s295
    %p299 = scmp.eq.s32.totalorder %s23, 0
    %p300 = por %p298, %p299
    %p301 = scmp.ne.s32.totalorder %s293, %s295
    %p302 = scmp.eq.s32.totalorder %s28, 1
    %p303 = por %p301, %p302
    %p304 = scmp.ne.s32.totalorder %s295, %s296
    %p305 = scmp.eq.s32.totalorder %s28, 0
    %p306 = por %p304, %p305
    %p307 = scmp.ne.s32.totalorder %s295, %s296
    %p308 = scmp.eq.s32.totalorder %s29, 1
    %p309 = por %p307, %p308
    %p311 = scmp.ne.s32.totalorder %s296, %s310
    %p312 = scmp.eq.s32.totalorder %s29, 0
    %p313 = por %p311, %p312
    %s315 = sadd.s32 %s314, 1
    %p318 = scmp.eq.s32.totalorder %s23, 1
    %p319 = scmp.ne.s32.totalorder %s314, %s316
    %p320 = scmp.eq.s32.totalorder %s23, 0
    %p321 = por %p319, %p320
    %p322 = scmp.ne.s32.totalorder %s314, %s316
    %p323 = scmp.eq.s32.totalorder %s28, 1
    %p324 = por %p322, %p323
    %p325 = scmp.ne.s32.totalorder %s316, %s317
    %p326 = scmp.eq.s32.totalorder %s28, 0
    %p327 = por %p325, %p326
    %p328 = scmp.ne.s32.totalorder %s316, %s317
    %p329 = scmp.eq.s32.totalorder %s29, 1
    %p330 = por %p328, %p329
    %p332 = scmp.ne.s32.totalorder %s317, %s331
    %p333 = scmp.eq.s32.totalorder %s29, 0
    %p334 = por %p332, %p333
    %s336 = sadd.s32 %s335, 1
    %p339 = scmp.eq.s32.totalorder %s23, 1
    %p340 = scmp.ne.s32.totalorder %s335, %s337
    %p341 = scmp.eq.s32.totalorder %s23, 0
    %p342 = por %p340, %p341
    %p343 = scmp.ne.s32.totalorder %s335, %s337
    %p344 = scmp.eq.s32.totalorder %s28, 1
    %p345 = por %p343, %p344
    %p346 = scmp.ne.s32.totalorder %s337, %s338
    %p347 = scmp.eq.s32.totalorder %s28, 0
    %p348 = por %p346, %p347
    %p349 = scmp.ne.s32.totalorder %s337, %s338
    %p350 = scmp.eq.s32.totalorder %s29, 1
    %p351 = por %p349, %p350
    %p353 = scmp.ne.s32.totalorder %s338, %s352
    %p354 = scmp.eq.s32.totalorder %s29, 0
    %p355 = por %p353, %p354
    %s357 = sadd.s32 %s356, 1
    %p360 = scmp.eq.s32.totalorder %s23, 1
    %p361 = scmp.ne.s32.totalorder %s356, %s358
    %p362 = scmp.eq.s32.totalorder %s23, 0
    %p363 = por %p361, %p362
    %p364 = scmp.ne.s32.totalorder %s356, %s358
    %p365 = scmp.eq.s32.totalorder %s28, 1
    %p366 = por %p364, %p365
    %p367 = scmp.ne.s32.totalorder %s358, %s359
    %p368 = scmp.eq.s32.totalorder %s28, 0
    %p369 = por %p367, %p368
    %p370 = scmp.ne.s32.totalorder %s358, %s359
    %p371 = scmp.eq.s32.totalorder %s29, 1
    %p372 = por %p370, %p371
    %p374 = scmp.ne.s32.totalorder %s359, %s373
    %p375 = scmp.eq.s32.totalorder %s29, 0
    %p376 = por %p374, %p375
    %s378 = sadd.s32 %s377, 1
    %p381 = scmp.eq.s32.totalorder %s23, 1
    %p382 = scmp.ne.s32.totalorder %s377, %s379
    %p383 = scmp.eq.s32.totalorder %s23, 0
    %p384 = por %p382, %p383
    %p385 = scmp.ne.s32.totalorder %s377, %s379
    %p386 = scmp.eq.s32.totalorder %s28, 1
    %p387 = por %p385, %p386
    %p388 = scmp.ne.s32.totalorder %s379, %s380
    %p389 = scmp.eq.s32.totalorder %s28, 0
    %p390 = por %p388, %p389
    %p391 = scmp.ne.s32.totalorder %s379, %s380
    %p392 = scmp.eq.s32.totalorder %s29, 1
    %p393 = por %p391, %p392
    %p395 = scmp.ne.s32.totalorder %s380, %s394
    %p396 = scmp.eq.s32.totalorder %s29, 0
    %p397 = por %p395, %p396
    %s398 = ssub.s32 %s23, %s30
    %p399 = scmp.eq.s32.totalorder %s398, 0
    %s401 = sadd.s32 %s400, 1
    %s402 = scalar_select %p399, %s400, %s401
    %p405 = pneg %p399
    %p406 = scmp.eq.s32.totalorder %s23, 1
    %p407 = por %p405, %p406
    %p408 = scmp.ne.s32.totalorder %s400, %s403
    %p409 = scmp.eq.s32.totalorder %s23, 0
    %p410 = por %p408, %p409
    %p411 = scmp.ne.s32.totalorder %s400, %s403
    %p412 = scmp.eq.s32.totalorder %s28, 1
    %p413 = por %p411, %p412
    %p414 = scmp.ne.s32.totalorder %s403, %s404
    %p415 = scmp.eq.s32.totalorder %s28, 0
    %p416 = por %p414, %p415
    %p417 = scmp.ne.s32.totalorder %s403, %s404
    %p418 = scmp.eq.s32.totalorder %s29, 1
    %p419 = por %p417, %p418
    %p421 = scmp.ne.s32.totalorder %s404, %s420
    %p422 = scmp.eq.s32.totalorder %s29, 0
    %p423 = por %p421, %p422
    %p424 = scmp.le.s32.totalorder 1, %s23
    %p425 = scmp.lt.s32.totalorder %s23, 3
    %p426 = pnand %p424, %p425
    %p427 = pneg %p426
    // Predicated region
    $region9: #{bottleneck_csp_forward.3} parent=5 // pred_check
      _
    $region10: #{bottleneck_csp_forward.3} parent=5 // pred_check_branch
      %429 = sbr.rel (%p426) target = $region12
    $region11: #{bottleneck_csp_forward.3} parent=5 // pred_region
      %s430 = ssub.s32 %s23, 1
      // Predicated region
      $region13: #{bottleneck_csp_forward.3} parent=11 // pred_check
        %p431 = pneg %p96
      $region14: #{bottleneck_csp_forward.3} parent=11 // pred_check_branch
        %433 = sbr.rel (%p431) target = $region16
      $region15: #{bottleneck_csp_forward.3} parent=11 // pred_region
        _
      $region16: #{bottleneck_csp_forward.3} parent=11 // pred_fallthru
        _
      // Predicated region
      $region17: #{bottleneck_csp_forward.3} parent=11 // pred_check
        %p434 = pneg %p117
      $region18: #{bottleneck_csp_forward.3} parent=11 // pred_check_branch
        %436 = sbr.rel (%p434) target = $region20
      $region19: #{bottleneck_csp_forward.3} parent=11 // pred_region
        _
      $region20: #{bottleneck_csp_forward.3} parent=11 // pred_fallthru
        _
      // Predicated region
      $region21: #{bottleneck_csp_forward.3} parent=11 // pred_check
        %p437 = pneg %p138
      $region22: #{bottleneck_csp_forward.3} parent=11 // pred_check_branch
        %439 = sbr.rel (%p437) target = $region24
      $region23: #{bottleneck_csp_forward.3} parent=11 // pred_region
        _
      $region24: #{bottleneck_csp_forward.3} parent=11 // pred_fallthru
        _
      // Predicated region
      $region25: #{bottleneck_csp_forward.3} parent=11 // pred_check
        %p440 = pneg %p159
      $region26: #{bottleneck_csp_forward.3} parent=11 // pred_check_branch
        %442 = sbr.rel (%p440) target = $region28
      $region27: #{bottleneck_csp_forward.3} parent=11 // pred_region
        _
      $region28: #{bottleneck_csp_forward.3} parent=11 // pred_fallthru
        _
      // Predicated region
      $region29: #{bottleneck_csp_forward.3} parent=11 // pred_check
        %p443 = pneg %p180
      $region30: #{bottleneck_csp_forward.3} parent=11 // pred_check_branch
        %445 = sbr.rel (%p443) target = $region32
      $region31: #{bottleneck_csp_forward.3} parent=11 // pred_region
        _
      $region32: #{bottleneck_csp_forward.3} parent=11 // pred_fallthru
        _
      // Predicated region
      $region33: #{bottleneck_csp_forward.3} parent=11 // pred_check
        %p446 = pneg %p201
      $region34: #{bottleneck_csp_forward.3} parent=11 // pred_check_branch
        %448 = sbr.rel (%p446) target = $region36
      $region35: #{bottleneck_csp_forward.3} parent=11 // pred_region
        _
      $region36: #{bottleneck_csp_forward.3} parent=11 // pred_fallthru
        _
      // Predicated region
      $region37: #{bottleneck_csp_forward.3} parent=11 // pred_check
        %p449 = pneg %p222
      $region38: #{bottleneck_csp_forward.3} parent=11 // pred_check_branch
        %451 = sbr.rel (%p449) target = $region40
      $region39: #{bottleneck_csp_forward.3} parent=11 // pred_region
        _
      $region40: #{bottleneck_csp_forward.3} parent=11 // pred_fallthru
        _
      // Predicated region
      $region41: #{bottleneck_csp_forward.3} parent=11 // pred_check
        %p452 = pneg %p243
      $region42: #{bottleneck_csp_forward.3} parent=11 // pred_check_branch
        %454 = sbr.rel (%p452) target = $region44
      $region43: #{bottleneck_csp_forward.3} parent=11 // pred_region
        _
      $region44: #{bottleneck_csp_forward.3} parent=11 // pred_fallthru
        _
      // Predicated region
      $region45: #{bottleneck_csp_forward.3} parent=11 // pred_check
        %p455 = pneg %p264
      $region46: #{bottleneck_csp_forward.3} parent=11 // pred_check_branch
        %457 = sbr.rel (%p455) target = $region48
      $region47: #{bottleneck_csp_forward.3} parent=11 // pred_region
        _
      $region48: #{bottleneck_csp_forward.3} parent=11 // pred_fallthru
        _
      // Predicated region
      $region49: #{bottleneck_csp_forward.3} parent=11 // pred_check
        %p458 = pneg %p285
      $region50: #{bottleneck_csp_forward.3} parent=11 // pred_check_branch
        %460 = sbr.rel (%p458) target = $region52
      $region51: #{bottleneck_csp_forward.3} parent=11 // pred_region
        _
      $region52: #{bottleneck_csp_forward.3} parent=11 // pred_fallthru
        _
      // Predicated region
      $region53: #{bottleneck_csp_forward.3} parent=11 // pred_check
        %p461 = pneg %p306
      $region54: #{bottleneck_csp_forward.3} parent=11 // pred_check_branch
        %463 = sbr.rel (%p461) target = $region56
      $region55: #{bottleneck_csp_forward.3} parent=11 // pred_region
        _
      $region56: #{bottleneck_csp_forward.3} parent=11 // pred_fallthru
        _
      // Predicated region
      $region57: #{bottleneck_csp_forward.3} parent=11 // pred_check
        %p464 = pneg %p327
      $region58: #{bottleneck_csp_forward.3} parent=11 // pred_check_branch
        %466 = sbr.rel (%p464) target = $region60
      $region59: #{bottleneck_csp_forward.3} parent=11 // pred_region
        _
      $region60: #{bottleneck_csp_forward.3} parent=11 // pred_fallthru
        _
      // Predicated region
      $region61: #{bottleneck_csp_forward.3} parent=11 // pred_check
        %p467 = pneg %p348
      $region62: #{bottleneck_csp_forward.3} parent=11 // pred_check_branch
        %469 = sbr.rel (%p467) target = $region64
      $region63: #{bottleneck_csp_forward.3} parent=11 // pred_region
        _
      $region64: #{bottleneck_csp_forward.3} parent=11 // pred_fallthru
        _
      // Predicated region
      $region65: #{bottleneck_csp_forward.3} parent=11 // pred_check
        %p470 = pneg %p369
      $region66: #{bottleneck_csp_forward.3} parent=11 // pred_check_branch
        %472 = sbr.rel (%p470) target = $region68
      $region67: #{bottleneck_csp_forward.3} parent=11 // pred_region
        _
      $region68: #{bottleneck_csp_forward.3} parent=11 // pred_fallthru
        _
      // Predicated region
      $region69: #{bottleneck_csp_forward.3} parent=11 // pred_check
        %p473 = pneg %p390
      $region70: #{bottleneck_csp_forward.3} parent=11 // pred_check_branch
        %475 = sbr.rel (%p473) target = $region72
      $region71: #{bottleneck_csp_forward.3} parent=11 // pred_region
        _
      $region72: #{bottleneck_csp_forward.3} parent=11 // pred_fallthru
        _
    $region12: #{bottleneck_csp_forward.3} parent=5 // pred_fallthru
      _
    %p476 = scmp.lt.s32.totalorder %s23, 2
    // Predicated region
    $region73: #{bottleneck_csp_forward.3} parent=5 // pred_check
      %p477 = pneg %p476
    $region74: #{bottleneck_csp_forward.3} parent=5 // pred_check_branch
      %479 = sbr.rel (%p477) target = $region76
    $region75: #{bottleneck_csp_forward.3} parent=5 // pred_region
      // Predicated region
      $region77: #{bottleneck_csp_forward.3} parent=75 // pred_check
        %p480 = pneg %p43
      $region78: #{bottleneck_csp_forward.3} parent=75 // pred_check_branch
        %482 = sbr.rel (%p480) target = $region80
      $region79: #{bottleneck_csp_forward.3} parent=75 // pred_region
        %s483 = smul.u32 32, %s23
        %p484 = scmp.lt.s32.totalorder %s483, 63
        %s485 = scalar_select %p484, %s483, 63
        %s486 = smul.addr %s485, 4
        %s487 = scalar_lea.vmem %s0, %s486
        %s488 = smul.u32 32, %s23
      $region80: #{bottleneck_csp_forward.3} parent=75 // pred_fallthru
        _
      // Predicated region
      $region81: #{bottleneck_csp_forward.3} parent=75 // pred_check
        %p489 = pneg %p69
      $region82: #{bottleneck_csp_forward.3} parent=75 // pred_check_branch
        %491 = sbr.rel (%p489) target = $region84
      $region83: #{bottleneck_csp_forward.3} parent=75 // pred_region
        %s492 = smul.u32 32, %s23
        %p493 = scmp.lt.s32.totalorder %s492, 63
        %s494 = scalar_select %p493, %s492, 63
        %s495 = smul.addr %s494, 4
        %s496 = scalar_lea.vmem %s1, %s495
        %s497 = smul.u32 32, %s23
      $region84: #{bottleneck_csp_forward.3} parent=75 // pred_fallthru
        _
    $region76: #{bottleneck_csp_forward.3} parent=5 // pred_fallthru
      _
    %p498 = scmp.le.s32.totalorder 1, %s23
    %p499 = scmp.lt.s32.totalorder %s23, 3
    %p500 = pnand %p498, %p499
    %p501 = pneg %p500
    // Predicated region
    $region85: #{bottleneck_csp_forward.3} parent=5 // pred_check
      _
    $region86: #{bottleneck_csp_forward.3} parent=5 // pred_check_branch
      %503 = sbr.rel (%p500) target = $region88
    $region87: #{bottleneck_csp_forward.3} parent=5 // pred_region
      %s504 = ssub.s32 %s23, 1
      %s505 = smul.u32 32, %s28
      %p506 = scmp.lt.s32.totalorder %s505, 63
      %s507 = scalar_select %p506, %s505, 63
      %s508 = smul.addr %s507, 4
      %s509 = scalar_lea.vmem %s0, %s508
      %p510 = pneg %p49
      %p511 = pneg %p46
      %s512 = smul.u32 32, %s28
      %p513 = scmp.lt.s32.totalorder %s512, 63
      %s514 = scalar_select %p513, %s512, 63
      %s515 = smul.addr %s514, 4
      %s516 = scalar_lea.vmem %s1, %s515
      %p517 = pneg %p75
      %p518 = pneg %p72
      %p519 = pneg %p96
      %p520 = pneg %p93
      %p521 = pneg %p117
      %p522 = pneg %p114
      %p523 = pneg %p138
      %p524 = pneg %p135
      %p525 = pneg %p159
      %p526 = pneg %p156
      %p527 = pneg %p180
      %p528 = pneg %p177
      %p529 = pneg %p201
      %p530 = pneg %p198
      %p531 = pneg %p222
      %p532 = pneg %p219
      %p533 = pneg %p243
      %p534 = pneg %p240
      %p535 = pneg %p264
      %p536 = pneg %p261
      %p537 = pneg %p285
      %p538 = pneg %p282
      %p539 = pneg %p306
      %p540 = pneg %p303
      %p541 = pneg %p327
      %p542 = pneg %p324
      %p543 = pneg %p348
      %p544 = pneg %p345
      %p545 = pneg %p369
      %p546 = pneg %p366
      %p547 = pneg %p390
      %p548 = pneg %p387
      %p549 = pneg %p416
      %p550 = pneg %p413
      %s551 = smul.u32 32, %s28
      %p552 = scmp.lt.s32.totalorder %s551, 63
      %s553 = scalar_select %p552, %s551, 63
      %s554 = smul.addr %s553, 4
      %s555 = scalar_lea.vmem %s17, %s554
      %s556 = smul.u32 32, %s28
      %p557 = scmp.lt.s32.totalorder %s556, 63
      %s558 = scalar_select %p557, %s556, 63
      %s559 = smul.addr %s558, 4
      %s560 = scalar_lea.vmem %s0, %s559
      %s561 = smul.u32 32, %s28
      %s562 = smul.u32 32, %s28
      %p563 = scmp.lt.s32.totalorder %s562, 63
      %s564 = scalar_select %p563, %s562, 63
      %s565 = smul.addr %s564, 4
      %s566 = scalar_lea.vmem %s1, %s565
      %s567 = smul.u32 32, %s28
      %s568 = smul.u32 32, %s28
      %p569 = scmp.lt.s32.totalorder %s568, 63
      %s570 = scalar_select %p569, %s568, 63
      %s571 = smul.addr %s570, 4
      %s572 = scalar_lea.vmem %s17, %s571
      %s573 = smul.u32 32, %s28
      %v575 = vld [vmem:[%s560] sm:$0xf]
      %v576 = vld [vmem:[%s560 + $0x4] sm:$0xf]
      %v577 = vld [vmem:[%s560 + $0x8] sm:$0xf]
      %v578 = vld [vmem:[%s560 + $0xc] sm:$0xf]
      %v579 = vld [vmem:[%s560 + $0x10] sm:$0xf]
      %v580 = vld [vmem:[%s560 + $0x14] sm:$0xf]
      %v581 = vld [vmem:[%s560 + $0x18] sm:$0xf]
      %v582 = vld [vmem:[%s560 + $0x1c] sm:$0xf]
      %v583 = vld [vmem:[%s560 + $0x20] sm:$0xf]
      %v584 = vld [vmem:[%s560 + $0x24] sm:$0xf]
      %v585 = vld [vmem:[%s560 + $0x28] sm:$0xf]
      %v586 = vld [vmem:[%s560 + $0x2c] sm:$0xf]
      %v587 = vld [vmem:[%s560 + $0x30] sm:$0xf]
      %v588 = vld [vmem:[%s560 + $0x34] sm:$0xf]
      %v589 = vld [vmem:[%s560 + $0x38] sm:$0xf]
      %v590 = vld [vmem:[%s560 + $0x3c] sm:$0xf]
      %v591 = vld [vmem:[%s560 + $0x40] sm:$0xf]
      %v592 = vld [vmem:[%s560 + $0x44] sm:$0xf]
      %v593 = vld [vmem:[%s560 + $0x48] sm:$0xf]
      %v594 = vld [vmem:[%s560 + $0x4c] sm:$0xf]
      %v595 = vld [vmem:[%s560 + $0x50] sm:$0xf]
      %v596 = vld [vmem:[%s560 + $0x54] sm:$0xf]
      %v597 = vld [vmem:[%s560 + $0x58] sm:$0xf]
      %v598 = vld [vmem:[%s560 + $0x5c] sm:$0xf]
      %v599 = vld [vmem:[%s560 + $0x60] sm:$0xf]
      %v600 = vld [vmem:[%s560 + $0x64] sm:$0xf]
      %v601 = vld [vmem:[%s560 + $0x68] sm:$0xf]
      %v602 = vld [vmem:[%s560 + $0x6c] sm:$0xf]
      %v603 = vld [vmem:[%s560 + $0x70] sm:$0xf]
      %v604 = vld [vmem:[%s560 + $0x74] sm:$0xf]
      %v605 = vld [vmem:[%s560 + $0x78] sm:$0xf]
      %v606 = vld [vmem:[%s560 + $0x7c] sm:$0xf]
      %v607 = vld [vmem:[%s2] sm:$0xf]
      %v608 = vld [vmem:[%s2 + $0x4] sm:$0xf]
      %v609 = vld [vmem:[%s2 + $0x8] sm:$0xf]
      %v610 = vld [vmem:[%s2 + $0xc] sm:$0xf]
      %v611 = vld [vmem:[%s2 + $0x10] sm:$0xf]
      %v612 = vld [vmem:[%s2 + $0x14] sm:$0xf]
      %v613 = vld [vmem:[%s2 + $0x18] sm:$0xf]
      %v614 = vld [vmem:[%s2 + $0x1c] sm:$0xf]
      %v615 = vld [vmem:[%s2 + $0x20] sm:$0xf]
      %v616 = vld [vmem:[%s2 + $0x24] sm:$0xf]
      %v617 = vld [vmem:[%s2 + $0x28] sm:$0xf]
      %v618 = vld [vmem:[%s2 + $0x2c] sm:$0xf]
      %v619 = vld [vmem:[%s2 + $0x30] sm:$0xf]
      %v620 = vld [vmem:[%s2 + $0x34] sm:$0xf]
      %v621 = vld [vmem:[%s2 + $0x38] sm:$0xf]
      %v622 = vld [vmem:[%s2 + $0x3c] sm:$0xf]
      %v655 = vunpack.c.l.b16 %v575
      %v656 = vunpack.c.l.b16 %v576
      %v657 = vunpack.c.l.b16 %v577
      %v658 = vunpack.c.l.b16 %v578
      %v659 = vunpack.c.l.b16 %v579
      %v660 = vunpack.c.l.b16 %v580
      %v661 = vunpack.c.l.b16 %v581
      %v662 = vunpack.c.l.b16 %v582
      %v663 = vunpack.c.l.b16 %v583
      %v664 = vunpack.c.l.b16 %v584
      %v665 = vunpack.c.l.b16 %v585
      %v666 = vunpack.c.l.b16 %v586
      %v667 = vunpack.c.l.b16 %v587
      %v668 = vunpack.c.l.b16 %v588
      %v669 = vunpack.c.l.b16 %v589
      %v670 = vunpack.c.l.b16 %v590
      %v671 = vunpack.c.l.b16 %v591
      %v672 = vunpack.c.l.b16 %v592
      %v673 = vunpack.c.l.b16 %v593
      %v674 = vunpack.c.l.b16 %v594
      %v675 = vunpack.c.l.b16 %v595
      %v676 = vunpack.c.l.b16 %v596
      %v677 = vunpack.c.l.b16 %v597
      %v678 = vunpack.c.l.b16 %v598
      %v679 = vunpack.c.l.b16 %v599
      %v680 = vunpack.c.l.b16 %v600
      %v681 = vunpack.c.l.b16 %v601
      %v682 = vunpack.c.l.b16 %v602
      %v683 = vunpack.c.l.b16 %v603
      %v684 = vunpack.c.l.b16 %v604
      %v685 = vunpack.c.l.b16 %v605
      %v686 = vunpack.c.l.b16 %v606
      %v687 = vpack.c.b16 %v656, %v655
      %v688 = vpack.c.b16 %v658, %v657
      %v689 = vpack.c.b16 %v660, %v659
      %v690 = vpack.c.b16 %v662, %v661
      %v691 = vpack.c.b16 %v664, %v663
      %v692 = vpack.c.b16 %v666, %v665
      %v693 = vpack.c.b16 %v668, %v667
      %v694 = vpack.c.b16 %v670, %v669
      %v695 = vpack.c.b16 %v672, %v671
      %v696 = vpack.c.b16 %v674, %v673
      %v697 = vpack.c.b16 %v676, %v675
      %v698 = vpack.c.b16 %v678, %v677
      %v699 = vpack.c.b16 %v680, %v679
      %v700 = vpack.c.b16 %v682, %v681
      %v701 = vpack.c.b16 %v684, %v683
      %v702 = vpack.c.b16 %v686, %v685
      %v735 = vunpack.c.l.b16 %v607
      %v736 = vunpack.c.l.b16 %v608
      %v737 = vunpack.c.l.b16 %v609
      %v738 = vunpack.c.l.b16 %v610
      %v739 = vunpack.c.l.b16 %v611
      %v740 = vunpack.c.l.b16 %v612
      %v741 = vunpack.c.l.b16 %v613
      %v742 = vunpack.c.l.b16 %v614
      %v743 = vunpack.c.l.b16 %v615
      %v744 = vunpack.c.l.b16 %v616
      %v745 = vunpack.c.l.b16 %v617
      %v746 = vunpack.c.l.b16 %v618
      %v747 = vunpack.c.l.b16 %v619
      %v748 = vunpack.c.l.b16 %v620
      %v749 = vunpack.c.l.b16 %v621
      %v750 = vunpack.c.l.b16 %v622
      %v751 = vpack.c.b16 %v736, %v735
      %v752 = vpack.c.b16 %v738, %v737
      %v753 = vpack.c.b16 %v740, %v739
      %v754 = vpack.c.b16 %v742, %v741
      %v755 = vpack.c.b16 %v744, %v743
      %v756 = vpack.c.b16 %v746, %v745
      %v757 = vpack.c.b16 %v748, %v747
      %v758 = vpack.c.b16 %v750, %v749
      %767 = vmatprep.subr.bf16.mxu0 0
      %768 = vmatpush1.bf16.msra.mxu0 %v751
      %769 = vmatprep.subr.bf16.mxu0 0
      %770 = vmatpush1.bf16.msra.mxu0 %v752
      %771 = vmatprep.subr.bf16.mxu0 0
      %772 = vmatpush1.bf16.msra.mxu0 %v753
      %773 = vmatprep.subr.bf16.mxu0 0
      %774 = vmatpush1.bf16.msra.mxu0 %v754
      %775 = vmatprep.subr.bf16.mxu0 0
      %776 = vmatpush1.bf16.msra.mxu0 %v755
      %777 = vmatprep.subr.bf16.mxu0 0
      %778 = vmatpush1.bf16.msra.mxu0 %v756
      %779 = vmatprep.subr.bf16.mxu0 0
      %780 = vmatpush1.bf16.msra.mxu0 %v757
      %781 = vmatprep.subr.bf16.mxu0 0
      %782 = vmatpush1.bf16.msra.mxu0 %v758
      %783 = vmatprep.subr.bf16.mxu0 0
      %784 = vmatpush1.bf16.msra.mxu0 0
      %785 = vmatprep.subr.bf16.mxu0 0
      %786 = vmatpush1.bf16.msra.mxu0 0
      %787 = vmatprep.subr.bf16.mxu0 0
      %788 = vmatpush1.bf16.msra.mxu0 0
      %789 = vmatprep.subr.bf16.mxu0 0
      %790 = vmatpush1.bf16.msra.mxu0 0
      %791 = vmatprep.subr.bf16.mxu0 0
      %792 = vmatpush1.bf16.msra.mxu0 0
      %793 = vmatprep.subr.bf16.mxu0 0
      %794 = vmatpush1.bf16.msra.mxu0 0
      %795 = vmatprep.subr.bf16.mxu0 0
      %796 = vmatpush1.bf16.msra.mxu0 0
      %797 = vmatprep.subr.bf16.mxu0 0
      %798 = vmatpush1.bf16.msra.mxu0 0
      %799 = vmatprep.mubr.bf16.mxu0 0
      %800 = vmatmul.mubr.bf16.gmra.mrb[0].mxu0 %v687
      %v801 = vpop.f32.mrb[0].mxu0
      %v802 = vadd.f32 0.0, %v801
      %v803 = vpop.f32.mrb[0].mxu0
      %v804 = vpop.f32.mrb[0].mxu0
      %v805 = vadd.f32 0.0, %v804
      %v806 = vpop.f32.mrb[0].mxu0
      %807 = vmatprep.mubr.bf16.mxu0 0
      %808 = vmatmul.mubr.bf16.gmra.mrb[0].mxu0 %v688
      %v809 = vpop.f32.mrb[0].mxu0
      %v810 = vadd.f32 0.0, %v809
      %v811 = vpop.f32.mrb[0].mxu0
      %v812 = vpop.f32.mrb[0].mxu0
      %v813 = vadd.f32 0.0, %v812
      %v814 = vpop.f32.mrb[0].mxu0
      %815 = vmatprep.mubr.bf16.mxu0 0
      %816 = vmatmul.mubr.bf16.gmra.mrb[0].mxu0 %v689
      %v817 = vpop.f32.mrb[0].mxu0
      %v818 = vadd.f32 0.0, %v817
      %v819 = vpop.f32.mrb[0].mxu0
      %v820 = vpop.f32.mrb[0].mxu0
      %v821 = vadd.f32 0.0, %v820
      %v822 = vpop.f32.mrb[0].mxu0
      %823 = vmatprep.mubr.bf16.mxu0 0
      %824 = vmatmul.mubr.bf16.gmra.mrb[0].mxu0 %v690
      %v825 = vpop.f32.mrb[0].mxu0
      %v826 = vadd.f32 0.0, %v825
      %v827 = vpop.f32.mrb[0].mxu0
      %v828 = vpop.f32.mrb[0].mxu0
      %v829 = vadd.f32 0.0, %v828
      %v830 = vpop.f32.mrb[0].mxu0
      %831 = vmatprep.mubr.bf16.mxu0 0
      %832 = vmatmul.mubr.bf16.gmra.mrb[0].mxu0 %v691
      %v833 = vpop.f32.mrb[0].mxu0
      %v834 = vadd.f32 0.0, %v833
      %v835 = vpop.f32.mrb[0].mxu0
      %v836 = vpop.f32.mrb[0].mxu0
      %v837 = vadd.f32 0.0, %v836
      %v838 = vpop.f32.mrb[0].mxu0
      %839 = vmatprep.mubr.bf16.mxu0 0
      %840 = vmatmul.mubr.bf16.gmra.mrb[0].mxu0 %v692
      %v841 = vpop.f32.mrb[0].mxu0
      %v842 = vadd.f32 0.0, %v841
      %v843 = vpop.f32.mrb[0].mxu0
      %v844 = vpop.f32.mrb[0].mxu0
      %v845 = vadd.f32 0.0, %v844
      %v846 = vpop.f32.mrb[0].mxu0
      %847 = vmatprep.mubr.bf16.mxu0 0
      %848 = vmatmul.mubr.bf16.gmra.mrb[0].mxu0 %v693
      %v849 = vpop.f32.mrb[0].mxu0
      %v850 = vadd.f32 0.0, %v849
      %v851 = vpop.f32.mrb[0].mxu0
      %v852 = vpop.f32.mrb[0].mxu0
      %v853 = vadd.f32 0.0, %v852
      %v854 = vpop.f32.mrb[0].mxu0
      %855 = vmatprep.mubr.bf16.mxu0 0
      %856 = vmatmul.mubr.bf16.gmra.mrb[0].mxu0 %v694
      %v857 = vpop.f32.mrb[0].mxu0
      %v858 = vadd.f32 0.0, %v857
      %v859 = vpop.f32.mrb[0].mxu0
      %v860 = vpop.f32.mrb[0].mxu0
      %v861 = vadd.f32 0.0, %v860
      %v862 = vpop.f32.mrb[0].mxu0
      %863 = vmatprep.mubr.bf16.mxu0 0
      %864 = vmatmul.mubr.bf16.gmra.mrb[0].mxu0 %v695
      %v865 = vpop.f32.mrb[0].mxu0
      %v866 = vadd.f32 0.0, %v865
      %v867 = vpop.f32.mrb[0].mxu0
      %v868 = vpop.f32.mrb[0].mxu0
      %v869 = vadd.f32 0.0, %v868
      %v870 = vpop.f32.mrb[0].mxu0
      %871 = vmatprep.mubr.bf16.mxu0 0
      %872 = vmatmul.mubr.bf16.gmra.mrb[0].mxu0 %v696
      %v873 = vpop.f32.mrb[0].mxu0
      %v874 = vadd.f32 0.0, %v873
      %v875 = vpop.f32.mrb[0].mxu0
      %v876 = vpop.f32.mrb[0].mxu0
      %v877 = vadd.f32 0.0, %v876
      %v878 = vpop.f32.mrb[0].mxu0
      %879 = vmatprep.mubr.bf16.mxu0 0
      %880 = vmatmul.mubr.bf16.gmra.mrb[0].mxu0 %v697
      %v881 = vpop.f32.mrb[0].mxu0
      %v882 = vadd.f32 0.0, %v881
      %v883 = vpop.f32.mrb[0].mxu0
      %v884 = vpop.f32.mrb[0].mxu0
      %v885 = vadd.f32 0.0, %v884
      %v886 = vpop.f32.mrb[0].mxu0
      %887 = vmatprep.mubr.bf16.mxu0 0
      %888 = vmatmul.mubr.bf16.gmra.mrb[0].mxu0 %v698
      %v889 = vpop.f32.mrb[0].mxu0
      %v890 = vadd.f32 0.0, %v889
      %v891 = vpop.f32.mrb[0].mxu0
      %v892 = vpop.f32.mrb[0].mxu0
      %v893 = vadd.f32 0.0, %v892
      %v894 = vpop.f32.mrb[0].mxu0
      %895 = vmatprep.mubr.bf16.mxu0 0
      %896 = vmatmul.mubr.bf16.gmra.mrb[0].mxu0 %v699
      %v897 = vpop.f32.mrb[0].mxu0
      %v898 = vadd.f32 0.0, %v897
      %v899 = vpop.f32.mrb[0].mxu0
      %v900 = vpop.f32.mrb[0].mxu0
      %v901 = vadd.f32 0.0, %v900
      %v902 = vpop.f32.mrb[0].mxu0
      %903 = vmatprep.mubr.bf16.mxu0 0
      %904 = vmatmul.mubr.bf16.gmra.mrb[0].mxu0 %v700
      %v905 = vpop.f32.mrb[0].mxu0
      %v906 = vadd.f32 0.0, %v905
      %v907 = vpop.f32.mrb[0].mxu0
      %v908 = vpop.f32.mrb[0].mxu0
      %v909 = vadd.f32 0.0, %v908
      %v910 = vpop.f32.mrb[0].mxu0
      %911 = vmatprep.mubr.bf16.mxu0 0
      %912 = vmatmul.mubr.bf16.gmra.mrb[0].mxu0 %v701
      %v913 = vpop.f32.mrb[0].mxu0
      %v914 = vadd.f32 0.0, %v913
      %v915 = vpop.f32.mrb[0].mxu0
      %v916 = vpop.f32.mrb[0].mxu0
      %v917 = vadd.f32 0.0, %v916
      %v918 = vpop.f32.mrb[0].mxu0
      %919 = vmatprep.mubr.bf16.mxu0 0
      %920 = vmatmul.mubr.bf16.gmra.mrb[0].mxu0 %v702
      %v921 = vpop.f32.mrb[0].mxu0
      %v922 = vadd.f32 0.0, %v921
      %v923 = vpop.f32.mrb[0].mxu0
      %v924 = vpop.f32.mrb[0].mxu0
      %v925 = vadd.f32 0.0, %v924
      %v926 = vpop.f32.mrb[0].mxu0
      %927 = vdwg.mxu0
      %v928 = vld [vmem:[%s3] sm:$0x1]
      %v930 = vlaneseq
      %v931 = vshrl.u32 %v930, 7
      %v932 = vsub.s32 0, %v931
      %v933 = vrot.slane %v928, %v932
      %v935 = vmul.f32 %v802, %v933
      %v936 = vmul.f32 %v805, %v933
      %v937 = vmul.f32 %v810, %v933
      %v938 = vmul.f32 %v813, %v933
      %v939 = vmul.f32 %v818, %v933
      %v940 = vmul.f32 %v821, %v933
      %v941 = vmul.f32 %v826, %v933
      %v942 = vmul.f32 %v829, %v933
      %v943 = vmul.f32 %v834, %v933
      %v944 = vmul.f32 %v837, %v933
      %v945 = vmul.f32 %v842, %v933
      %v946 = vmul.f32 %v845, %v933
      %v947 = vmul.f32 %v850, %v933
      %v948 = vmul.f32 %v853, %v933
      %v949 = vmul.f32 %v858, %v933
      %v950 = vmul.f32 %v861, %v933
      %v951 = vmul.f32 %v866, %v933
      %v952 = vmul.f32 %v869, %v933
      %v953 = vmul.f32 %v874, %v933
      %v954 = vmul.f32 %v877, %v933
      %v955 = vmul.f32 %v882, %v933
      %v956 = vmul.f32 %v885, %v933
      %v957 = vmul.f32 %v890, %v933
      %v958 = vmul.f32 %v893, %v933
      %v959 = vmul.f32 %v898, %v933
      %v960 = vmul.f32 %v901, %v933
      %v961 = vmul.f32 %v906, %v933
      %v962 = vmul.f32 %v909, %v933
      %v963 = vmul.f32 %v914, %v933
      %v964 = vmul.f32 %v917, %v933
      %v965 = vmul.f32 %v922, %v933
      %v966 = vmul.f32 %v925, %v933
      %v967 = vld [vmem:[%s4] sm:$0x1]
      %v969 = vlaneseq
      %v970 = vshrl.u32 %v969, 7
      %v971 = vsub.s32 0, %v970
      %v972 = vrot.slane %v967, %v971
      %v974 = vadd.f32 %v935, %v972
      %v975 = vadd.f32 %v936, %v972
      %v976 = vadd.f32 %v937, %v972
      %v977 = vadd.f32 %v938, %v972
      %v978 = vadd.f32 %v939, %v972
      %v979 = vadd.f32 %v940, %v972
      %v980 = vadd.f32 %v941, %v972
      %v981 = vadd.f32 %v942, %v972
      %v982 = vadd.f32 %v943, %v972
      %v983 = vadd.f32 %v944, %v972
      %v984 = vadd.f32 %v945, %v972
      %v985 = vadd.f32 %v946, %v972
      %v986 = vadd.f32 %v947, %v972
      %v987 = vadd.f32 %v948, %v972
      %v988 = vadd.f32 %v949, %v972
      %v989 = vadd.f32 %v950, %v972
      %v990 = vadd.f32 %v951, %v972
      %v991 = vadd.f32 %v952, %v972
      %v992 = vadd.f32 %v953, %v972
      %v993 = vadd.f32 %v954, %v972
      %v994 = vadd.f32 %v955, %v972
      %v995 = vadd.f32 %v956, %v972
      %v996 = vadd.f32 %v957, %v972
      %v997 = vadd.f32 %v958, %v972
      %v998 = vadd.f32 %v959, %v972
      %v999 = vadd.f32 %v960, %v972
      %v1000 = vadd.f32 %v961, %v972
      %v1001 = vadd.f32 %v962, %v972
      %v1002 = vadd.f32 %v963, %v972
      %v1003 = vadd.f32 %v964, %v972
      %v1004 = vadd.f32 %v965, %v972
      %v1005 = vadd.f32 %v966, %v972
      %v1006 = vxor.u32 %v974, 2147483648
      %v1007 = vxor.u32 %v975, 2147483648
      %v1008 = vxor.u32 %v976, 2147483648
      %v1009 = vxor.u32 %v977, 2147483648
      %v1010 = vxor.u32 %v978, 2147483648
      %v1011 = vxor.u32 %v979, 2147483648
      %v1012 = vxor.u32 %v980, 2147483648
      %v1013 = vxor.u32 %v981, 2147483648
      %v1014 = vxor.u32 %v982, 2147483648
      %v1015 = vxor.u32 %v983, 2147483648
      %v1016 = vxor.u32 %v984, 2147483648
      %v1017 = vxor.u32 %v985, 2147483648
      %v1018 = vxor.u32 %v986, 2147483648
      %v1019 = vxor.u32 %v987, 2147483648
      %v1020 = vxor.u32 %v988, 2147483648
      %v1021 = vxor.u32 %v989, 2147483648
      %v1022 = vxor.u32 %v990, 2147483648
      %v1023 = vxor.u32 %v991, 2147483648
      %v1024 = vxor.u32 %v992, 2147483648
      %v1025 = vxor.u32 %v993, 2147483648
      %v1026 = vxor.u32 %v994, 2147483648
      %v1027 = vxor.u32 %v995, 2147483648
      %v1028 = vxor.u32 %v996, 2147483648
      %v1029 = vxor.u32 %v997, 2147483648
      %v1030 = vxor.u32 %v998, 2147483648
      %v1031 = vxor.u32 %v999, 2147483648
      %v1032 = vxor.u32 %v1000, 2147483648
      %v1033 = vxor.u32 %v1001, 2147483648
      %v1034 = vxor.u32 %v1002, 2147483648
      %v1035 = vxor.u32 %v1003, 2147483648
      %v1036 = vxor.u32 %v1004, 2147483648
      %v1037 = vxor.u32 %v1005, 2147483648
      %v1038 = vmul.f32 %v1006, 1.442695
      %v1039 = vpow.pop %v1038
      %v1040 = vmul.f32 %v1007, 1.442695
      %v1041 = vpow.pop %v1040
      %v1042 = vmul.f32 %v1008, 1.442695
      %v1043 = vpow.pop %v1042
      %v1044 = vmul.f32 %v1009, 1.442695
      %v1045 = vpow.pop %v1044
      %v1046 = vmul.f32 %v1010, 1.442695
      %v1047 = vpow.pop %v1046
      %v1048 = vmul.f32 %v1011, 1.442695
      %v1049 = vpow.pop %v1048
      %v1050 = vmul.f32 %v1012, 1.442695
      %v1051 = vpow.pop %v1050
      %v1052 = vmul.f32 %v1013, 1.442695
      %v1053 = vpow.pop %v1052
      %v1054 = vmul.f32 %v1014, 1.442695
      %v1055 = vpow.pop %v1054
      %v1056 = vmul.f32 %v1015, 1.442695
      %v1057 = vpow.pop %v1056
      %v1058 = vmul.f32 %v1016, 1.442695
      %v1059 = vpow.pop %v1058
      %v1060 = vmul.f32 %v1017, 1.442695
      %v1061 = vpow.pop %v1060
      %v1062 = vmul.f32 %v1018, 1.442695
      %v1063 = vpow.pop %v1062
      %v1064 = vmul.f32 %v1019, 1.442695
      %v1065 = vpow.pop %v1064
      %v1066 = vmul.f32 %v1020, 1.442695
      %v1067 = vpow.pop %v1066
      %v1068 = vmul.f32 %v1021, 1.442695
      %v1069 = vpow.pop %v1068
      %v1070 = vmul.f32 %v1022, 1.442695
      %v1071 = vpow.pop %v1070
      %v1072 = vmul.f32 %v1023, 1.442695
      %v1073 = vpow.pop %v1072
      %v1074 = vmul.f32 %v1024, 1.442695
      %v1075 = vpow.pop %v1074
      %v1076 = vmul.f32 %v1025, 1.442695
      %v1077 = vpow.pop %v1076
      %v1078 = vmul.f32 %v1026, 1.442695
      %v1079 = vpow.pop %v1078
      %v1080 = vmul.f32 %v1027, 1.442695
      %v1081 = vpow.pop %v1080
      %v1082 = vmul.f32 %v1028, 1.442695
      %v1083 = vpow.pop %v1082
      %v1084 = vmul.f32 %v1029, 1.442695
      %v1085 = vpow.pop %v1084
      %v1086 = vmul.f32 %v1030, 1.442695
      %v1087 = vpow.pop %v1086
      %v1088 = vmul.f32 %v1031, 1.442695
      %v1089 = vpow.pop %v1088
      %v1090 = vmul.f32 %v1032, 1.442695
      %v1091 = vpow.pop %v1090
      %v1092 = vmul.f32 %v1033, 1.442695
      %v1093 = vpow.pop %v1092
      %v1094 = vmul.f32 %v1034, 1.442695
      %v1095 = vpow.pop %v1094
      %v1096 = vmul.f32 %v1035, 1.442695
      %v1097 = vpow.pop %v1096
      %v1098 = vmul.f32 %v1036, 1.442695
      %v1099 = vpow.pop %v1098
      %v1100 = vmul.f32 %v1037, 1.442695
      %v1101 = vpow.pop %v1100
      %v1102 = vadd.f32 %v1039, 1.0
      %v1103 = vadd.f32 %v1041, 1.0
      %v1104 = vadd.f32 %v1043, 1.0
      %v1105 = vadd.f32 %v1045, 1.0
      %v1106 = vadd.f32 %v1047, 1.0
      %v1107 = vadd.f32 %v1049, 1.0
      %v1108 = vadd.f32 %v1051, 1.0
      %v1109 = vadd.f32 %v1053, 1.0
      %v1110 = vadd.f32 %v1055, 1.0
      %v1111 = vadd.f32 %v1057, 1.0
      %v1112 = vadd.f32 %v1059, 1.0
      %v1113 = vadd.f32 %v1061, 1.0
      %v1114 = vadd.f32 %v1063, 1.0
      %v1115 = vadd.f32 %v1065, 1.0
      %v1116 = vadd.f32 %v1067, 1.0
      %v1117 = vadd.f32 %v1069, 1.0
      %v1118 = vadd.f32 %v1071, 1.0
      %v1119 = vadd.f32 %v1073, 1.0
      %v1120 = vadd.f32 %v1075, 1.0
      %v1121 = vadd.f32 %v1077, 1.0
      %v1122 = vadd.f32 %v1079, 1.0
      %v1123 = vadd.f32 %v1081, 1.0
      %v1124 = vadd.f32 %v1083, 1.0
      %v1125 = vadd.f32 %v1085, 1.0
      %v1126 = vadd.f32 %v1087, 1.0
      %v1127 = vadd.f32 %v1089, 1.0
      %v1128 = vadd.f32 %v1091, 1.0
      %v1129 = vadd.f32 %v1093, 1.0
      %v1130 = vadd.f32 %v1095, 1.0
      %v1131 = vadd.f32 %v1097, 1.0
      %v1132 = vadd.f32 %v1099, 1.0
      %v1133 = vadd.f32 %v1101, 1.0
      %v1134 = vrcp.pop %v1102
      %v1135 = vmul.f32 1.0, %v1134
      %v1136 = vrcp.pop %v1103
      %v1137 = vmul.f32 1.0, %v1136
      %v1138 = vrcp.pop %v1104
      %v1139 = vmul.f32 1.0, %v1138
      %v1140 = vrcp.pop %v1105
      %v1141 = vmul.f32 1.0, %v1140
      %v1142 = vrcp.pop %v1106
      %v1143 = vmul.f32 1.0, %v1142
      %v1144 = vrcp.pop %v1107
      %v1145 = vmul.f32 1.0, %v1144
      %v1146 = vrcp.pop %v1108
      %v1147 = vmul.f32 1.0, %v1146
      %v1148 = vrcp.pop %v1109
      %v1149 = vmul.f32 1.0, %v1148
      %v1150 = vrcp.pop %v1110
      %v1151 = vmul.f32 1.0, %v1150
      %v1152 = vrcp.pop %v1111
      %v1153 = vmul.f32 1.0, %v1152
      %v1154 = vrcp.pop %v1112
      %v1155 = vmul.f32 1.0, %v1154
      %v1156 = vrcp.pop %v1113
      %v1157 = vmul.f32 1.0, %v1156
      %v1158 = vrcp.pop %v1114
      %v1159 = vmul.f32 1.0, %v1158
      %v1160 = vrcp.pop %v1115
      %v1161 = vmul.f32 1.0, %v1160
      %v1162 = vrcp.pop %v1116
      %v1163 = vmul.f32 1.0, %v1162
      %v1164 = vrcp.pop %v1117
      %v1165 = vmul.f32 1.0, %v1164
      %v1166 = vrcp.pop %v1118
      %v1167 = vmul.f32 1.0, %v1166
      %v1168 = vrcp.pop %v1119
      %v1169 = vmul.f32 1.0, %v1168
      %v1170 = vrcp.pop %v1120
      %v1171 = vmul.f32 1.0, %v1170
      %v1172 = vrcp.pop %v1121
      %v1173 = vmul.f32 1.0, %v1172
      %v1174 = vrcp.pop %v1122
      %v1175 = vmul.f32 1.0, %v1174
      %v1176 = vrcp.pop %v1123
      %v1177 = vmul.f32 1.0, %v1176
      %v1178 = vrcp.pop %v1124
      %v1179 = vmul.f32 1.0, %v1178
      %v1180 = vrcp.pop %v1125
      %v1181 = vmul.f32 1.0, %v1180
      %v1182 = vrcp.pop %v1126
      %v1183 = vmul.f32 1.0, %v1182
      %v1184 = vrcp.pop %v1127
      %v1185 = vmul.f32 1.0, %v1184
      %v1186 = vrcp.pop %v1128
      %v1187 = vmul.f32 1.0, %v1186
      %v1188 = vrcp.pop %v1129
      %v1189 = vmul.f32 1.0, %v1188
      %v1190 = vrcp.pop %v1130
      %v1191 = vmul.f32 1.0, %v1190
      %v1192 = vrcp.pop %v1131
      %v1193 = vmul.f32 1.0, %v1192
      %v1194 = vrcp.pop %v1132
      %v1195 = vmul.f32 1.0, %v1194
      %v1196 = vrcp.pop %v1133
      %v1197 = vmul.f32 1.0, %v1196
      %v1198 = vmul.f32 %v974, %v1135
      %v1199 = vmul.f32 %v975, %v1137
      %v1200 = vmul.f32 %v976, %v1139
      %v1201 = vmul.f32 %v977, %v1141
      %v1202 = vmul.f32 %v978, %v1143
      %v1203 = vmul.f32 %v979, %v1145
      %v1204 = vmul.f32 %v980, %v1147
      %v1205 = vmul.f32 %v981, %v1149
      %v1206 = vmul.f32 %v982, %v1151
      %v1207 = vmul.f32 %v983, %v1153
      %v1208 = vmul.f32 %v984, %v1155
      %v1209 = vmul.f32 %v985, %v1157
      %v1210 = vmul.f32 %v986, %v1159
      %v1211 = vmul.f32 %v987, %v1161
      %v1212 = vmul.f32 %v988, %v1163
      %v1213 = vmul.f32 %v989, %v1165
      %v1214 = vmul.f32 %v990, %v1167
      %v1215 = vmul.f32 %v991, %v1169
      %v1216 = vmul.f32 %v992, %v1171
      %v1217 = vmul.f32 %v993, %v1173
      %v1218 = vmul.f32 %v994, %v1175
      %v1219 = vmul.f32 %v995, %v1177
      %v1220 = vmul.f32 %v996, %v1179
      %v1221 = vmul.f32 %v997, %v1181
      %v1222 = vmul.f32 %v998, %v1183
      %v1223 = vmul.f32 %v999, %v1185
      %v1224 = vmul.f32 %v1000, %v1187
      %v1225 = vmul.f32 %v1001, %v1189
      %v1226 = vmul.f32 %v1002, %v1191
      %v1227 = vmul.f32 %v1003, %v1193
      %v1228 = vmul.f32 %v1004, %v1195
      %v1229 = vmul.f32 %v1005, %v1197
      %1230 = vst [vmem:[#allocation2] sm:$0xff] 0
      %1231 = vst [vmem:[#allocation2 + $0x8] sm:$0xf] 0
      %1232 = vst [vmem:[#allocation2 + $0x88] sm:$0xf0] 0
      %1233 = vst [vmem:[#allocation2 + $0x90] sm:$0xff] 0
      %v1234 = vpack.c.bf16 %v1199, %v1198
      %v1235 = vpack.c.bf16 %v1201, %v1200
      %v1236 = vpack.c.bf16 %v1203, %v1202
      %v1237 = vpack.c.bf16 %v1205, %v1204
      %v1238 = vpack.c.bf16 %v1207, %v1206
      %v1239 = vpack.c.bf16 %v1209, %v1208
      %v1240 = vpack.c.bf16 %v1211, %v1210
      %v1241 = vpack.c.bf16 %v1213, %v1212
      %v1242 = vpack.c.bf16 %v1215, %v1214
      %v1243 = vpack.c.bf16 %v1217, %v1216
      %v1244 = vpack.c.bf16 %v1219, %v1218
      %v1245 = vpack.c.bf16 %v1221, %v1220
      %v1246 = vpack.c.bf16 %v1223, %v1222
      %v1247 = vpack.c.bf16 %v1225, %v1224
      %v1248 = vpack.c.bf16 %v1227, %v1226
      %v1249 = vpack.c.bf16 %v1229, %v1228
      %vm1266 = vcmask 1043456
      %v1267 = vrot.slane %v1234, 4
      %v1268 = vrot.slane %v1235, 4
      %v1269 = vsel %vm1266, %v1267, %v1268
      %v1270 = vrot.slane %v1236, 4
      %v1271 = vsel %vm1266, %v1268, %v1270
      %v1272 = vrot.slane %v1237, 4
      %v1273 = vsel %vm1266, %v1270, %v1272
      %v1274 = vrot.slane %v1238, 4
      %v1275 = vsel %vm1266, %v1272, %v1274
      %v1276 = vrot.slane %v1239, 4
      %v1277 = vsel %vm1266, %v1274, %v1276
      %v1278 = vrot.slane %v1240, 4
      %v1279 = vsel %vm1266, %v1276, %v1278
      %v1280 = vrot.slane %v1241, 4
      %v1281 = vsel %vm1266, %v1278, %v1280
      %v1282 = vrot.slane %v1242, 4
      %v1283 = vsel %vm1266, %v1280, %v1282
      %v1284 = vrot.slane %v1243, 4
      %v1285 = vsel %vm1266, %v1282, %v1284
      %v1286 = vrot.slane %v1244, 4
      %v1287 = vsel %vm1266, %v1284, %v1286
      %v1288 = vrot.slane %v1245, 4
      %v1289 = vsel %vm1266, %v1286, %v1288
      %v1290 = vrot.slane %v1246, 4
      %v1291 = vsel %vm1266, %v1288, %v1290
      %v1292 = vrot.slane %v1247, 4
      %v1293 = vsel %vm1266, %v1290, %v1292
      %v1294 = vrot.slane %v1248, 4
      %v1295 = vsel %vm1266, %v1292, %v1294
      %v1296 = vrot.slane %v1249, 4
      %v1297 = vsel %vm1266, %v1294, %v1296
      %1315 = vst [vmem:[#allocation2 + $0x8] sm:$0xf0] %v1267
      %1316 = vst [vmem:[#allocation2 + $0x10] sm:$0xff] %v1269
      %1317 = vst [vmem:[#allocation2 + $0x18] sm:$0xff] %v1271
      %1318 = vst [vmem:[#allocation2 + $0x20] sm:$0xff] %v1273
      %1319 = vst [vmem:[#allocation2 + $0x28] sm:$0xff] %v1275
      %1320 = vst [vmem:[#allocation2 + $0x30] sm:$0xff] %v1277
      %1321 = vst [vmem:[#allocation2 + $0x38] sm:$0xff] %v1279
      %1322 = vst [vmem:[#allocation2 + $0x40] sm:$0xff] %v1281
      %1323 = vst [vmem:[#allocation2 + $0x48] sm:$0xff] %v1283
      %1324 = vst [vmem:[#allocation2 + $0x50] sm:$0xff] %v1285
      %1325 = vst [vmem:[#allocation2 + $0x58] sm:$0xff] %v1287
      %1326 = vst [vmem:[#allocation2 + $0x60] sm:$0xff] %v1289
      %1327 = vst [vmem:[#allocation2 + $0x68] sm:$0xff] %v1291
      %1328 = vst [vmem:[#allocation2 + $0x70] sm:$0xff] %v1293
      %1329 = vst [vmem:[#allocation2 + $0x78] sm:$0xff] %v1295
      %1330 = vst [vmem:[#allocation2 + $0x80] sm:$0xff] %v1297
      %1331 = vst [vmem:[#allocation2 + $0x88] sm:$0xf] %v1296
      %v1332 = vlaneseq
      %v1333 = vshrl.u32 %v1332, 7
      %v1334 = vadd.s32 %v1333, 8
      %v1335 = vadd.s32 %v1333, 16
      %v1336 = vadd.s32 %v1333, 24
      %v1337 = vadd.s32 %v1333, 32
      %v1338 = vadd.s32 %v1333, 40
      %v1339 = vadd.s32 %v1333, 48
      %v1340 = vadd.s32 %v1333, 56
      %v1341 = vadd.s32 %v1333, 64
      %v1342 = vadd.s32 %v1333, 72
      %v1343 = vadd.s32 %v1333, 80
      %v1344 = vadd.s32 %v1333, 88
      %v1345 = vadd.s32 %v1333, 96
      %v1346 = vadd.s32 %v1333, 104
      %v1347 = vadd.s32 %v1333, 112
      %v1348 = vadd.s32 %v1333, 120
      %v1349 = vadd.s32 %v1333, 128
      %v1350 = vadd.s32 %v1333, 136
      %v1351 = vadd.s32 %v1333, 144
      %v1352 = vadd.s32 %v1333, 152
      %v1353 = vadd.s32 %v1333, 160
      %v1354 = vadd.s32 %v1333, 168
      %v1355 = vadd.s32 %v1333, 176
      %v1356 = vadd.s32 %v1333, 184
      %v1357 = vadd.s32 %v1333, 192
      %v1358 = vadd.s32 %v1333, 200
      %v1359 = vadd.s32 %v1333, 208
      %v1360 = vadd.s32 %v1333, 216
      %v1361 = vadd.s32 %v1333, 224
      %v1362 = vadd.s32 %v1333, 232
      %v1363 = vadd.s32 %v1333, 240
      %v1364 = vadd.s32 %v1333, 248
      %vm1365 = vcmp.lt.s32.totalorder %v1333, 0
      %v1366 = vsub.s32 0, %v1333
      %v1367 = vsel %vm1365, %v1366, %v1333
      %v1368 = vshrl.u32 %v1367, 4
      %v1369 = vand.u32 %v1367, 15
      %v1370 = vsub.s32 0, %v1369
      %v1371 = vsel %vm1365, %v1370, %v1369
      %vm1372 = vcmp.lt.s32.totalorder %v1334, 0
      %v1373 = vsub.s32 0, %v1334
      %v1374 = vsel %vm1372, %v1373, %v1334
      %v1375 = vshrl.u32 %v1374, 4
      %v1376 = vand.u32 %v1374, 15
      %v1377 = vsub.s32 0, %v1376
      %v1378 = vsel %vm1372, %v1377, %v1376
      %vm1379 = vcmp.lt.s32.totalorder %v1335, 0
      %v1380 = vsub.s32 0, %v1335
      %v1381 = vsel %vm1379, %v1380, %v1335
      %v1382 = vshrl.u32 %v1381, 4
      %v1383 = vand.u32 %v1381, 15
      %v1384 = vsub.s32 0, %v1383
      %v1385 = vsel %vm1379, %v1384, %v1383
      %vm1386 = vcmp.lt.s32.totalorder %v1336, 0
      %v1387 = vsub.s32 0, %v1336
      %v1388 = vsel %vm1386, %v1387, %v1336
      %v1389 = vshrl.u32 %v1388, 4
      %v1390 = vand.u32 %v1388, 15
      %v1391 = vsub.s32 0, %v1390
      %v1392 = vsel %vm1386, %v1391, %v1390
      %vm1393 = vcmp.lt.s32.totalorder %v1337, 0
      %v1394 = vsub.s32 0, %v1337
      %v1395 = vsel %vm1393, %v1394, %v1337
      %v1396 = vshrl.u32 %v1395, 4
      %v1397 = vand.u32 %v1395, 15
      %v1398 = vsub.s32 0, %v1397
      %v1399 = vsel %vm1393, %v1398, %v1397
      %vm1400 = vcmp.lt.s32.totalorder %v1338, 0
      %v1401 = vsub.s32 0, %v1338
      %v1402 = vsel %vm1400, %v1401, %v1338
      %v1403 = vshrl.u32 %v1402, 4
      %v1404 = vand.u32 %v1402, 15
      %v1405 = vsub.s32 0, %v1404
      %v1406 = vsel %vm1400, %v1405, %v1404
      %vm1407 = vcmp.lt.s32.totalorder %v1339, 0
      %v1408 = vsub.s32 0, %v1339
      %v1409 = vsel %vm1407, %v1408, %v1339
      %v1410 = vshrl.u32 %v1409, 4
      %v1411 = vand.u32 %v1409, 15
      %v1412 = vsub.s32 0, %v1411
      %v1413 = vsel %vm1407, %v1412, %v1411
      %vm1414 = vcmp.lt.s32.totalorder %v1340, 0
      %v1415 = vsub.s32 0, %v1340
      %v1416 = vsel %vm1414, %v1415, %v1340
      %v1417 = vshrl.u32 %v1416, 4
      %v1418 = vand.u32 %v1416, 15
      %v1419 = vsub.s32 0, %v1418
      %v1420 = vsel %vm1414, %v1419, %v1418
      %vm1421 = vcmp.lt.s32.totalorder %v1341, 0
      %v1422 = vsub.s32 0, %v1341
      %v1423 = vsel %vm1421, %v1422, %v1341
      %v1424 = vshrl.u32 %v1423, 4
      %v1425 = vand.u32 %v1423, 15
      %v1426 = vsub.s32 0, %v1425
      %v1427 = vsel %vm1421, %v1426, %v1425
      %vm1428 = vcmp.lt.s32.totalorder %v1342, 0
      %v1429 = vsub.s32 0, %v1342
      %v1430 = vsel %vm1428, %v1429, %v1342
      %v1431 = vshrl.u32 %v1430, 4
      %v1432 = vand.u32 %v1430, 15
      %v1433 = vsub.s32 0, %v1432
      %v1434 = vsel %vm1428, %v1433, %v1432
      %vm1435 = vcmp.lt.s32.totalorder %v1343, 0
      %v1436 = vsub.s32 0, %v1343
      %v1437 = vsel %vm1435, %v1436, %v1343
      %v1438 = vshrl.u32 %v1437, 4
      %v1439 = vand.u32 %v1437, 15
      %v1440 = vsub.s32 0, %v1439
      %v1441 = vsel %vm1435, %v1440, %v1439
      %vm1442 = vcmp.lt.s32.totalorder %v1344, 0
      %v1443 = vsub.s32 0, %v1344
      %v1444 = vsel %vm1442, %v1443, %v1344
      %v1445 = vshrl.u32 %v1444, 4
      %v1446 = vand.u32 %v1444, 15
      %v1447 = vsub.s32 0, %v1446
      %v1448 = vsel %vm1442, %v1447, %v1446
      %vm1449 = vcmp.lt.s32.totalorder %v1345, 0
      %v1450 = vsub.s32 0, %v1345
      %v1451 = vsel %vm1449, %v1450, %v1345
      %v1452 = vshrl.u32 %v1451, 4
      %v1453 = vand.u32 %v1451, 15
      %v1454 = vsub.s32 0, %v1453
      %v1455 = vsel %vm1449, %v1454, %v1453
      %vm1456 = vcmp.lt.s32.totalorder %v1346, 0
      %v1457 = vsub.s32 0, %v1346
      %v1458 = vsel %vm1456, %v1457, %v1346
      %v1459 = vshrl.u32 %v1458, 4
      %v1460 = vand.u32 %v1458, 15
      %v1461 = vsub.s32 0, %v1460
      %v1462 = vsel %vm1456, %v1461, %v1460
      %vm1463 = vcmp.lt.s32.totalorder %v1347, 0
      %v1464 = vsub.s32 0, %v1347
      %v1465 = vsel %vm1463, %v1464, %v1347
      %v1466 = vshrl.u32 %v1465, 4
      %v1467 = vand.u32 %v1465, 15
      %v1468 = vsub.s32 0, %v1467
      %v1469 = vsel %vm1463, %v1468, %v1467
      %vm1470 = vcmp.lt.s32.totalorder %v1348, 0
      %v1471 = vsub.s32 0, %v1348
      %v1472 = vsel %vm1470, %v1471, %v1348
      %v1473 = vshrl.u32 %v1472, 4
      %v1474 = vand.u32 %v1472, 15
      %v1475 = vsub.s32 0, %v1474
      %v1476 = vsel %vm1470, %v1475, %v1474
      %vm1477 = vcmp.lt.s32.totalorder %v1349, 0
      %v1478 = vsub.s32 0, %v1349
      %v1479 = vsel %vm1477, %v1478, %v1349
      %v1480 = vshrl.u32 %v1479, 4
      %v1481 = vand.u32 %v1479, 15
      %v1482 = vsub.s32 0, %v1481
      %v1483 = vsel %vm1477, %v1482, %v1481
      %vm1484 = vcmp.lt.s32.totalorder %v1350, 0
      %v1485 = vsub.s32 0, %v1350
      %v1486 = vsel %vm1484, %v1485, %v1350
      %v1487 = vshrl.u32 %v1486, 4
      %v1488 = vand.u32 %v1486, 15
      %v1489 = vsub.s32 0, %v1488
      %v1490 = vsel %vm1484, %v1489, %v1488
      %vm1491 = vcmp.lt.s32.totalorder %v1351, 0
      %v1492 = vsub.s32 0, %v1351
      %v1493 = vsel %vm1491, %v1492, %v1351
      %v1494 = vshrl.u32 %v1493, 4
      %v1495 = vand.u32 %v1493, 15
      %v1496 = vsub.s32 0, %v1495
      %v1497 = vsel %vm1491, %v1496, %v1495
      %vm1498 = vcmp.lt.s32.totalorder %v1352, 0
      %v1499 = vsub.s32 0, %v1352
      %v1500 = vsel %vm1498, %v1499, %v1352
      %v1501 = vshrl.u32 %v1500, 4
      %v1502 = vand.u32 %v1500, 15
      %v1503 = vsub.s32 0, %v1502
      %v1504 = vsel %vm1498, %v1503, %v1502
      %vm1505 = vcmp.lt.s32.totalorder %v1353, 0
      %v1506 = vsub.s32 0, %v1353
      %v1507 = vsel %vm1505, %v1506, %v1353
      %v1508 = vshrl.u32 %v1507, 4
      %v1509 = vand.u32 %v1507, 15
      %v1510 = vsub.s32 0, %v1509
      %v1511 = vsel %vm1505, %v1510, %v1509
      %vm1512 = vcmp.lt.s32.totalorder %v1354, 0
      %v1513 = vsub.s32 0, %v1354
      %v1514 = vsel %vm1512, %v1513, %v1354
      %v1515 = vshrl.u32 %v1514, 4
      %v1516 = vand.u32 %v1514, 15
      %v1517 = vsub.s32 0, %v1516
      %v1518 = vsel %vm1512, %v1517, %v1516
      %vm1519 = vcmp.lt.s32.totalorder %v1355, 0
      %v1520 = vsub.s32 0, %v1355
      %v1521 = vsel %vm1519, %v1520, %v1355
      %v1522 = vshrl.u32 %v1521, 4
      %v1523 = vand.u32 %v1521, 15
      %v1524 = vsub.s32 0, %v1523
      %v1525 = vsel %vm1519, %v1524, %v1523
      %vm1526 = vcmp.lt.s32.totalorder %v1356, 0
      %v1527 = vsub.s32 0, %v1356
      %v1528 = vsel %vm1526, %v1527, %v1356
      %v1529 = vshrl.u32 %v1528, 4
      %v1530 = vand.u32 %v1528, 15
      %v1531 = vsub.s32 0, %v1530
      %v1532 = vsel %vm1526, %v1531, %v1530
      %vm1533 = vcmp.lt.s32.totalorder %v1357, 0
      %v1534 = vsub.s32 0, %v1357
      %v1535 = vsel %vm1533, %v1534, %v1357
      %v1536 = vshrl.u32 %v1535, 4
      %v1537 = vand.u32 %v1535, 15
      %v1538 = vsub.s32 0, %v1537
      %v1539 = vsel %vm1533, %v1538, %v1537
      %vm1540 = vcmp.lt.s32.totalorder %v1358, 0
      %v1541 = vsub.s32 0, %v1358
      %v1542 = vsel %vm1540, %v1541, %v1358
      %v1543 = vshrl.u32 %v1542, 4
      %v1544 = vand.u32 %v1542, 15
      %v1545 = vsub.s32 0, %v1544
      %v1546 = vsel %vm1540, %v1545, %v1544
      %vm1547 = vcmp.lt.s32.totalorder %v1359, 0
      %v1548 = vsub.s32 0, %v1359
      %v1549 = vsel %vm1547, %v1548, %v1359
      %v1550 = vshrl.u32 %v1549, 4
      %v1551 = vand.u32 %v1549, 15
      %v1552 = vsub.s32 0, %v1551
      %v1553 = vsel %vm1547, %v1552, %v1551
      %vm1554 = vcmp.lt.s32.totalorder %v1360, 0
      %v1555 = vsub.s32 0, %v1360
      %v1556 = vsel %vm1554, %v1555, %v1360
      %v1557 = vshrl.u32 %v1556, 4
      %v1558 = vand.u32 %v1556, 15
      %v1559 = vsub.s32 0, %v1558
      %v1560 = vsel %vm1554, %v1559, %v1558
      %vm1561 = vcmp.lt.s32.totalorder %v1361, 0
      %v1562 = vsub.s32 0, %v1361
      %v1563 = vsel %vm1561, %v1562, %v1361
      %v1564 = vshrl.u32 %v1563, 4
      %v1565 = vand.u32 %v1563, 15
      %v1566 = vsub.s32 0, %v1565
      %v1567 = vsel %vm1561, %v1566, %v1565
      %vm1568 = vcmp.lt.s32.totalorder %v1362, 0
      %v1569 = vsub.s32 0, %v1362
      %v1570 = vsel %vm1568, %v1569, %v1362
      %v1571 = vshrl.u32 %v1570, 4
      %v1572 = vand.u32 %v1570, 15
      %v1573 = vsub.s32 0, %v1572
      %v1574 = vsel %vm1568, %v1573, %v1572
      %vm1575 = vcmp.lt.s32.totalorder %v1363, 0
      %v1576 = vsub.s32 0, %v1363
      %v1577 = vsel %vm1575, %v1576, %v1363
      %v1578 = vshrl.u32 %v1577, 4
      %v1579 = vand.u32 %v1577, 15
      %v1580 = vsub.s32 0, %v1579
      %v1581 = vsel %vm1575, %v1580, %v1579
      %vm1582 = vcmp.lt.s32.totalorder %v1364, 0
      %v1583 = vsub.s32 0, %v1364
      %v1584 = vsel %vm1582, %v1583, %v1364
      %v1585 = vshrl.u32 %v1584, 4
      %v1586 = vand.u32 %v1584, 15
      %v1587 = vsub.s32 0, %v1586
      %v1588 = vsel %vm1582, %v1587, %v1586
      %vm1589 = vcmp.ne.s32.totalorder %v1371, 0
      %vm1590 = vcmp.ne.s32.totalorder %v1378, 0
      %vm1591 = vcmp.ne.s32.totalorder %v1385, 0
      %vm1592 = vcmp.ne.s32.totalorder %v1392, 0
      %vm1593 = vcmp.ne.s32.totalorder %v1399, 0
      %vm1594 = vcmp.ne.s32.totalorder %v1406, 0
      %vm1595 = vcmp.ne.s32.totalorder %v1413, 0
      %vm1596 = vcmp.ne.s32.totalorder %v1420, 0
      %vm1597 = vcmp.ne.s32.totalorder %v1427, 0
      %vm1598 = vcmp.ne.s32.totalorder %v1434, 0
      %vm1599 = vcmp.ne.s32.totalorder %v1441, 0
      %vm1600 = vcmp.ne.s32.totalorder %v1448, 0
      %vm1601 = vcmp.ne.s32.totalorder %v1455, 0
      %vm1602 = vcmp.ne.s32.totalorder %v1462, 0
      %vm1603 = vcmp.ne.s32.totalorder %v1469, 0
      %vm1604 = vcmp.ne.s32.totalorder %v1476, 0
      %vm1605 = vcmp.ne.s32.totalorder %v1483, 0
      %vm1606 = vcmp.ne.s32.totalorder %v1490, 0
      %vm1607 = vcmp.ne.s32.totalorder %v1497, 0
      %vm1608 = vcmp.ne.s32.totalorder %v1504, 0
      %vm1609 = vcmp.ne.s32.totalorder %v1511, 0
      %vm1610 = vcmp.ne.s32.totalorder %v1518, 0
      %vm1611 = vcmp.ne.s32.totalorder %v1525, 0
      %vm1612 = vcmp.ne.s32.totalorder %v1532, 0
      %vm1613 = vcmp.ne.s32.totalorder %v1539, 0
      %vm1614 = vcmp.ne.s32.totalorder %v1546, 0
      %vm1615 = vcmp.ne.s32.totalorder %v1553, 0
      %vm1616 = vcmp.ne.s32.totalorder %v1560, 0
      %vm1617 = vcmp.ne.s32.totalorder %v1567, 0
      %vm1618 = vcmp.ne.s32.totalorder %v1574, 0
      %vm1619 = vcmp.ne.s32.totalorder %v1581, 0
      %vm1620 = vcmp.ne.s32.totalorder %v1588, 0
      %vm1621 = vcmp.lt.s32.totalorder %v1371, 0
      %vm1622 = vcmp.lt.s32.totalorder %v1378, 0
      %vm1623 = vcmp.lt.s32.totalorder %v1385, 0
      %vm1624 = vcmp.lt.s32.totalorder %v1392, 0
      %vm1625 = vcmp.lt.s32.totalorder %v1399, 0
      %vm1626 = vcmp.lt.s32.totalorder %v1406, 0
      %vm1627 = vcmp.lt.s32.totalorder %v1413, 0
      %vm1628 = vcmp.lt.s32.totalorder %v1420, 0
      %vm1629 = vcmp.lt.s32.totalorder %v1427, 0
      %vm1630 = vcmp.lt.s32.totalorder %v1434, 0
      %vm1631 = vcmp.lt.s32.totalorder %v1441, 0
      %vm1632 = vcmp.lt.s32.totalorder %v1448, 0
      %vm1633 = vcmp.lt.s32.totalorder %v1455, 0
      %vm1634 = vcmp.lt.s32.totalorder %v1462, 0
      %vm1635 = vcmp.lt.s32.totalorder %v1469, 0
      %vm1636 = vcmp.lt.s32.totalorder %v1476, 0
      %vm1637 = vcmp.lt.s32.totalorder %v1483, 0
      %vm1638 = vcmp.lt.s32.totalorder %v1490, 0
      %vm1639 = vcmp.lt.s32.totalorder %v1497, 0
      %vm1640 = vcmp.lt.s32.totalorder %v1504, 0
      %vm1641 = vcmp.lt.s32.totalorder %v1511, 0
      %vm1642 = vcmp.lt.s32.totalorder %v1518, 0
      %vm1643 = vcmp.lt.s32.totalorder %v1525, 0
      %vm1644 = vcmp.lt.s32.totalorder %v1532, 0
      %vm1645 = vcmp.lt.s32.totalorder %v1539, 0
      %vm1646 = vcmp.lt.s32.totalorder %v1546, 0
      %vm1647 = vcmp.lt.s32.totalorder %v1553, 0
      %vm1648 = vcmp.lt.s32.totalorder %v1560, 0
      %vm1649 = vcmp.lt.s32.totalorder %v1567, 0
      %vm1650 = vcmp.lt.s32.totalorder %v1574, 0
      %vm1651 = vcmp.lt.s32.totalorder %v1581, 0
      %vm1652 = vcmp.lt.s32.totalorder %v1588, 0
      %vm1653 = vmand %vm1621, %vm1589
      %vm1654 = vmand %vm1622, %vm1590
      %vm1655 = vmand %vm1623, %vm1591
      %vm1656 = vmand %vm1624, %vm1592
      %vm1657 = vmand %vm1625, %vm1593
      %vm1658 = vmand %vm1626, %vm1594
      %vm1659 = vmand %vm1627, %vm1595
      %vm1660 = vmand %vm1628, %vm1596
      %vm1661 = vmand %vm1629, %vm1597
      %vm1662 = vmand %vm1630, %vm1598
      %vm1663 = vmand %vm1631, %vm1599
      %vm1664 = vmand %vm1632, %vm1600
      %vm1665 = vmand %vm1633, %vm1601
      %vm1666 = vmand %vm1634, %vm1602
      %vm1667 = vmand %vm1635, %vm1603
      %vm1668 = vmand %vm1636, %vm1604
      %vm1669 = vmand %vm1637, %vm1605
      %vm1670 = vmand %vm1638, %vm1606
      %vm1671 = vmand %vm1639, %vm1607
      %vm1672 = vmand %vm1640, %vm1608
      %vm1673 = vmand %vm1641, %vm1609
      %vm1674 = vmand %vm1642, %vm1610
      %vm1675 = vmand %vm1643, %vm1611
      %vm1676 = vmand %vm1644, %vm1612
      %vm1677 = vmand %vm1645, %vm1613
      %vm1678 = vmand %vm1646, %vm1614
      %vm1679 = vmand %vm1647, %vm1615
      %vm1680 = vmand %vm1648, %vm1616
      %vm1681 = vmand %vm1649, %vm1617
      %vm1682 = vmand %vm1650, %vm1618
      %vm1683 = vmand %vm1651, %vm1619
      %vm1684 = vmand %vm1652, %vm1620
      %v1685 = vadd.s32 %v1371, 16
      %v1686 = vadd.s32 %v1378, 16
      %v1687 = vadd.s32 %v1385, 16
      %v1688 = vadd.s32 %v1392, 16
      %v1689 = vadd.s32 %v1399, 16
      %v1690 = vadd.s32 %v1406, 16
      %v1691 = vadd.s32 %v1413, 16
      %v1692 = vadd.s32 %v1420, 16
      %v1693 = vadd.s32 %v1427, 16
      %v1694 = vadd.s32 %v1434, 16
      %v1695 = vadd.s32 %v1441, 16
      %v1696 = vadd.s32 %v1448, 16
      %v1697 = vadd.s32 %v1455, 16
      %v1698 = vadd.s32 %v1462, 16
      %v1699 = vadd.s32 %v1469, 16
      %v1700 = vadd.s32 %v1476, 16
      %v1701 = vadd.s32 %v1483, 16
      %v1702 = vadd.s32 %v1490, 16
      %v1703 = vadd.s32 %v1497, 16
      %v1704 = vadd.s32 %v1504, 16
      %v1705 = vadd.s32 %v1511, 16
      %v1706 = vadd.s32 %v1518, 16
      %v1707 = vadd.s32 %v1525, 16
      %v1708 = vadd.s32 %v1532, 16
      %v1709 = vadd.s32 %v1539, 16
      %v1710 = vadd.s32 %v1546, 16
      %v1711 = vadd.s32 %v1553, 16
      %v1712 = vadd.s32 %v1560, 16
      %v1713 = vadd.s32 %v1567, 16
      %v1714 = vadd.s32 %v1574, 16
      %v1715 = vadd.s32 %v1581, 16
      %v1716 = vadd.s32 %v1588, 16
      %v1717 = vsel %vm1653, %v1685, %v1371
      %v1718 = vsel %vm1654, %v1686, %v1378
      %v1719 = vsel %vm1655, %v1687, %v1385
      %v1720 = vsel %vm1656, %v1688, %v1392
      %v1721 = vsel %vm1657, %v1689, %v1399
      %v1722 = vsel %vm1658, %v1690, %v1406
      %v1723 = vsel %vm1659, %v1691, %v1413
      %v1724 = vsel %vm1660, %v1692, %v1420
      %v1725 = vsel %vm1661, %v1693, %v1427
      %v1726 = vsel %vm1662, %v1694, %v1434
      %v1727 = vsel %vm1663, %v1695, %v1441
      %v1728 = vsel %vm1664, %v1696, %v1448
      %v1729 = vsel %vm1665, %v1697, %v1455
      %v1730 = vsel %vm1666, %v1698, %v1462
      %v1731 = vsel %vm1667, %v1699, %v1469
      %v1732 = vsel %vm1668, %v1700, %v1476
      %v1733 = vsel %vm1669, %v1701, %v1483
      %v1734 = vsel %vm1670, %v1702, %v1490
      %v1735 = vsel %vm1671, %v1703, %v1497
      %v1736 = vsel %vm1672, %v1704, %v1504
      %v1737 = vsel %vm1673, %v1705, %v1511
      %v1738 = vsel %vm1674, %v1706, %v1518
      %v1739 = vsel %vm1675, %v1707, %v1525
      %v1740 = vsel %vm1676, %v1708, %v1532
      %v1741 = vsel %vm1677, %v1709, %v1539
      %v1742 = vsel %vm1678, %v1710, %v1546
      %v1743 = vsel %vm1679, %v1711, %v1553
      %v1744 = vsel %vm1680, %v1712, %v1560
      %v1745 = vsel %vm1681, %v1713, %v1567
      %v1746 = vsel %vm1682, %v1714, %v1574
      %v1747 = vsel %vm1683, %v1715, %v1581
      %v1748 = vsel %vm1684, %v1716, %v1588
      %vm1749 = vcmp.ne.s32.totalorder %v1717, 0
      %vm1750 = vcmp.ne.s32.totalorder %v1718, 0
      %vm1751 = vcmp.ne.s32.totalorder %v1719, 0
      %vm1752 = vcmp.ne.s32.totalorder %v1720, 0
      %vm1753 = vcmp.ne.s32.totalorder %v1721, 0
      %vm1754 = vcmp.ne.s32.totalorder %v1722, 0
      %vm1755 = vcmp.ne.s32.totalorder %v1723, 0
      %vm1756 = vcmp.ne.s32.totalorder %v1724, 0
      %vm1757 = vcmp.ne.s32.totalorder %v1725, 0
      %vm1758 = vcmp.ne.s32.totalorder %v1726, 0
      %vm1759 = vcmp.ne.s32.totalorder %v1727, 0
      %vm1760 = vcmp.ne.s32.totalorder %v1728, 0
      %vm1761 = vcmp.ne.s32.totalorder %v1729, 0
      %vm1762 = vcmp.ne.s32.totalorder %v1730, 0
      %vm1763 = vcmp.ne.s32.totalorder %v1731, 0
      %vm1764 = vcmp.ne.s32.totalorder %v1732, 0
      %vm1765 = vcmp.ne.s32.totalorder %v1733, 0
      %vm1766 = vcmp.ne.s32.totalorder %v1734, 0
      %vm1767 = vcmp.ne.s32.totalorder %v1735, 0
      %vm1768 = vcmp.ne.s32.totalorder %v1736, 0
      %vm1769 = vcmp.ne.s32.totalorder %v1737, 0
      %vm1770 = vcmp.ne.s32.totalorder %v1738, 0
      %vm1771 = vcmp.ne.s32.totalorder %v1739, 0
      %vm1772 = vcmp.ne.s32.totalorder %v1740, 0
      %vm1773 = vcmp.ne.s32.totalorder %v1741, 0
      %vm1774 = vcmp.ne.s32.totalorder %v1742, 0
      %vm1775 = vcmp.ne.s32.totalorder %v1743, 0
      %vm1776 = vcmp.ne.s32.totalorder %v1744, 0
      %vm1777 = vcmp.ne.s32.totalorder %v1745, 0
      %vm1778 = vcmp.ne.s32.totalorder %v1746, 0
      %vm1779 = vcmp.ne.s32.totalorder %v1747, 0
      %vm1780 = vcmp.ne.s32.totalorder %v1748, 0
      %v1781 = vsel %vm1749, 1, 0
      %v1782 = vsel %vm1750, 1, 0
      %v1783 = vsel %vm1751, 1, 0
      %v1784 = vsel %vm1752, 1, 0
      %v1785 = vsel %vm1753, 1, 0
      %v1786 = vsel %vm1754, 1, 0
      %v1787 = vsel %vm1755, 1, 0
      %v1788 = vsel %vm1756, 1, 0
      %v1789 = vsel %vm1757, 1, 0
      %v1790 = vsel %vm1758, 1, 0
      %v1791 = vsel %vm1759, 1, 0
      %v1792 = vsel %vm1760, 1, 0
      %v1793 = vsel %vm1761, 1, 0
      %v1794 = vsel %vm1762, 1, 0
      %v1795 = vsel %vm1763, 1, 0
      %v1796 = vsel %vm1764, 1, 0
      %v1797 = vsel %vm1765, 1, 0
      %v1798 = vsel %vm1766, 1, 0
      %v1799 = vsel %vm1767, 1, 0
      %v1800 = vsel %vm1768, 1, 0
      %v1801 = vsel %vm1769, 1, 0
      %v1802 = vsel %vm1770, 1, 0
      %v1803 = vsel %vm1771, 1, 0
      %v1804 = vsel %vm1772, 1, 0
      %v1805 = vsel %vm1773, 1, 0
      %v1806 = vsel %vm1774, 1, 0
      %v1807 = vsel %vm1775, 1, 0
      %v1808 = vsel %vm1776, 1, 0
      %v1809 = vsel %vm1777, 1, 0
      %v1810 = vsel %vm1778, 1, 0
      %v1811 = vsel %vm1779, 1, 0
      %v1812 = vsel %vm1780, 1, 0
      %v1813 = vcvt.s32.f32 %v1781
      %v1814 = vcvt.s32.f32 %v1782
      %v1815 = vcvt.s32.f32 %v1783
      %v1816 = vcvt.s32.f32 %v1784
      %v1817 = vcvt.s32.f32 %v1785
      %v1818 = vcvt.s32.f32 %v1786
      %v1819 = vcvt.s32.f32 %v1787
      %v1820 = vcvt.s32.f32 %v1788
      %v1821 = vcvt.s32.f32 %v1789
      %v1822 = vcvt.s32.f32 %v1790
      %v1823 = vcvt.s32.f32 %v1791
      %v1824 = vcvt.s32.f32 %v1792
      %v1825 = vcvt.s32.f32 %v1793
      %v1826 = vcvt.s32.f32 %v1794
      %v1827 = vcvt.s32.f32 %v1795
      %v1828 = vcvt.s32.f32 %v1796
      %v1829 = vcvt.s32.f32 %v1797
      %v1830 = vcvt.s32.f32 %v1798
      %v1831 = vcvt.s32.f32 %v1799
      %v1832 = vcvt.s32.f32 %v1800
      %v1833 = vcvt.s32.f32 %v1801
      %v1834 = vcvt.s32.f32 %v1802
      %v1835 = vcvt.s32.f32 %v1803
      %v1836 = vcvt.s32.f32 %v1804
      %v1837 = vcvt.s32.f32 %v1805
      %v1838 = vcvt.s32.f32 %v1806
      %v1839 = vcvt.s32.f32 %v1807
      %v1840 = vcvt.s32.f32 %v1808
      %v1841 = vcvt.s32.f32 %v1809
      %v1842 = vcvt.s32.f32 %v1810
      %v1843 = vcvt.s32.f32 %v1811
      %v1844 = vcvt.s32.f32 %v1812
      %v1845 = vpack.c.bf16 %v1814, %v1813
      %v1846 = vpack.c.bf16 %v1816, %v1815
      %v1847 = vpack.c.bf16 %v1818, %v1817
      %v1848 = vpack.c.bf16 %v1820, %v1819
      %v1849 = vpack.c.bf16 %v1822, %v1821
      %v1850 = vpack.c.bf16 %v1824, %v1823
      %v1851 = vpack.c.bf16 %v1826, %v1825
      %v1852 = vpack.c.bf16 %v1828, %v1827
      %v1853 = vpack.c.bf16 %v1830, %v1829
      %v1854 = vpack.c.bf16 %v1832, %v1831
      %v1855 = vpack.c.bf16 %v1834, %v1833
      %v1856 = vpack.c.bf16 %v1836, %v1835
      %v1857 = vpack.c.bf16 %v1838, %v1837
      %v1858 = vpack.c.bf16 %v1840, %v1839
      %v1859 = vpack.c.bf16 %v1842, %v1841
      %v1860 = vpack.c.bf16 %v1844, %v1843
      %vm1861 = vcmp.ne.s32.totalorder %v1717, 15
      %vm1862 = vcmp.ne.s32.totalorder %v1718, 15
      %vm1863 = vcmp.ne.s32.totalorder %v1719, 15
      %vm1864 = vcmp.ne.s32.totalorder %v1720, 15
      %vm1865 = vcmp.ne.s32.totalorder %v1721, 15
      %vm1866 = vcmp.ne.s32.totalorder %v1722, 15
      %vm1867 = vcmp.ne.s32.totalorder %v1723, 15
      %vm1868 = vcmp.ne.s32.totalorder %v1724, 15
      %vm1869 = vcmp.ne.s32.totalorder %v1725, 15
      %vm1870 = vcmp.ne.s32.totalorder %v1726, 15
      %vm1871 = vcmp.ne.s32.totalorder %v1727, 15
      %vm1872 = vcmp.ne.s32.totalorder %v1728, 15
      %vm1873 = vcmp.ne.s32.totalorder %v1729, 15
      %vm1874 = vcmp.ne.s32.totalorder %v1730, 15
      %vm1875 = vcmp.ne.s32.totalorder %v1731, 15
      %vm1876 = vcmp.ne.s32.totalorder %v1732, 15
      %vm1877 = vcmp.ne.s32.totalorder %v1733, 15
      %vm1878 = vcmp.ne.s32.totalorder %v1734, 15
      %vm1879 = vcmp.ne.s32.totalorder %v1735, 15
      %vm1880 = vcmp.ne.s32.totalorder %v1736, 15
      %vm1881 = vcmp.ne.s32.totalorder %v1737, 15
      %vm1882 = vcmp.ne.s32.totalorder %v1738, 15
      %vm1883 = vcmp.ne.s32.totalorder %v1739, 15
      %vm1884 = vcmp.ne.s32.totalorder %v1740, 15
      %vm1885 = vcmp.ne.s32.totalorder %v1741, 15
      %vm1886 = vcmp.ne.s32.totalorder %v1742, 15
      %vm1887 = vcmp.ne.s32.totalorder %v1743, 15
      %vm1888 = vcmp.ne.s32.totalorder %v1744, 15
      %vm1889 = vcmp.ne.s32.totalorder %v1745, 15
      %vm1890 = vcmp.ne.s32.totalorder %v1746, 15
      %vm1891 = vcmp.ne.s32.totalorder %v1747, 15
      %vm1892 = vcmp.ne.s32.totalorder %v1748, 15
      %v1893 = vsel %vm1861, 1, 0
      %v1894 = vsel %vm1862, 1, 0
      %v1895 = vsel %vm1863, 1, 0
      %v1896 = vsel %vm1864, 1, 0
      %v1897 = vsel %vm1865, 1, 0
      %v1898 = vsel %vm1866, 1, 0
      %v1899 = vsel %vm1867, 1, 0
      %v1900 = vsel %vm1868, 1, 0
      %v1901 = vsel %vm1869, 1, 0
      %v1902 = vsel %vm1870, 1, 0
      %v1903 = vsel %vm1871, 1, 0
      %v1904 = vsel %vm1872, 1, 0
      %v1905 = vsel %vm1873, 1, 0
      %v1906 = vsel %vm1874, 1, 0
      %v1907 = vsel %vm1875, 1, 0
      %v1908 = vsel %vm1876, 1, 0
      %v1909 = vsel %vm1877, 1, 0
      %v1910 = vsel %vm1878, 1, 0
      %v1911 = vsel %vm1879, 1, 0
      %v1912 = vsel %vm1880, 1, 0
      %v1913 = vsel %vm1881, 1, 0
      %v1914 = vsel %vm1882, 1, 0
      %v1915 = vsel %vm1883, 1, 0
      %v1916 = vsel %vm1884, 1, 0
      %v1917 = vsel %vm1885, 1, 0
      %v1918 = vsel %vm1886, 1, 0
      %v1919 = vsel %vm1887, 1, 0
      %v1920 = vsel %vm1888, 1, 0
      %v1921 = vsel %vm1889, 1, 0
      %v1922 = vsel %vm1890, 1, 0
      %v1923 = vsel %vm1891, 1, 0
      %v1924 = vsel %vm1892, 1, 0
      %v1925 = vcvt.s32.f32 %v1893
      %v1926 = vcvt.s32.f32 %v1894
      %v1927 = vcvt.s32.f32 %v1895
      %v1928 = vcvt.s32.f32 %v1896
      %v1929 = vcvt.s32.f32 %v1897
      %v1930 = vcvt.s32.f32 %v1898
      %v1931 = vcvt.s32.f32 %v1899
      %v1932 = vcvt.s32.f32 %v1900
      %v1933 = vcvt.s32.f32 %v1901
      %v1934 = vcvt.s32.f32 %v1902
      %v1935 = vcvt.s32.f32 %v1903
      %v1936 = vcvt.s32.f32 %v1904
      %v1937 = vcvt.s32.f32 %v1905
      %v1938 = vcvt.s32.f32 %v1906
      %v1939 = vcvt.s32.f32 %v1907
      %v1940 = vcvt.s32.f32 %v1908
      %v1941 = vcvt.s32.f32 %v1909
      %v1942 = vcvt.s32.f32 %v1910
      %v1943 = vcvt.s32.f32 %v1911
      %v1944 = vcvt.s32.f32 %v1912
      %v1945 = vcvt.s32.f32 %v1913
      %v1946 = vcvt.s32.f32 %v1914
      %v1947 = vcvt.s32.f32 %v1915
      %v1948 = vcvt.s32.f32 %v1916
      %v1949 = vcvt.s32.f32 %v1917
      %v1950 = vcvt.s32.f32 %v1918
      %v1951 = vcvt.s32.f32 %v1919
      %v1952 = vcvt.s32.f32 %v1920
      %v1953 = vcvt.s32.f32 %v1921
      %v1954 = vcvt.s32.f32 %v1922
      %v1955 = vcvt.s32.f32 %v1923
      %v1956 = vcvt.s32.f32 %v1924
      %v1957 = vpack.c.bf16 %v1926, %v1925
      %v1958 = vpack.c.bf16 %v1928, %v1927
      %v1959 = vpack.c.bf16 %v1930, %v1929
      %v1960 = vpack.c.bf16 %v1932, %v1931
      %v1961 = vpack.c.bf16 %v1934, %v1933
      %v1962 = vpack.c.bf16 %v1936, %v1935
      %v1963 = vpack.c.bf16 %v1938, %v1937
      %v1964 = vpack.c.bf16 %v1940, %v1939
      %v1965 = vpack.c.bf16 %v1942, %v1941
      %v1966 = vpack.c.bf16 %v1944, %v1943
      %v1967 = vpack.c.bf16 %v1946, %v1945
      %v1968 = vpack.c.bf16 %v1948, %v1947
      %v1969 = vpack.c.bf16 %v1950, %v1949
      %v1970 = vpack.c.bf16 %v1952, %v1951
      %v1971 = vpack.c.bf16 %v1954, %v1953
      %v1972 = vpack.c.bf16 %v1956, %v1955
      %v1973 = vld [vmem:[#allocation2] sm:$0xf8]
      %v1974 = vld [vmem:[#allocation2 + $0x8] sm:$0xff]
      %v1975 = vld [vmem:[#allocation2 + $0x10] sm:$0xff]
      %v1976 = vld [vmem:[#allocation2 + $0x18] sm:$0xff]
      %v1977 = vld [vmem:[#allocation2 + $0x20] sm:$0xff]
      %v1978 = vld [vmem:[#allocation2 + $0x28] sm:$0xff]
      %v1979 = vld [vmem:[#allocation2 + $0x30] sm:$0xff]
      %v1980 = vld [vmem:[#allocation2 + $0x38] sm:$0xff]
      %v1981 = vld [vmem:[#allocation2 + $0x40] sm:$0xff]
      %v1982 = vld [vmem:[#allocation2 + $0x48] sm:$0xff]
      %v1983 = vld [vmem:[#allocation2 + $0x50] sm:$0xff]
      %v1984 = vld [vmem:[#allocation2 + $0x58] sm:$0xff]
      %v1985 = vld [vmem:[#allocation2 + $0x60] sm:$0xff]
      %v1986 = vld [vmem:[#allocation2 + $0x68] sm:$0xff]
      %v1987 = vld [vmem:[#allocation2 + $0x70] sm:$0xff]
      %v1988 = vld [vmem:[#allocation2 + $0x78] sm:$0xff]
      %v1989 = vld [vmem:[#allocation2 + $0x80] sm:$0xf]
      %vm1990 = vsmask.f32 3328
      %v1992 = vshrl.u32 %v1845, 16
      %v1994 = vrot.slane %v1992, 4
      %v1995 = vshll.u32 %v1845, 16
      %v1997 = vrot.slane %v1995, 5
      %v1998 = vor.u32 %v1994, %v1997
      %v2000 = vshrl.u32 %v1846, 16
      %v2002 = vrot.slane %v2000, 4
      %v2003 = vshll.u32 %v1846, 16
      %v2005 = vrot.slane %v2003, 5
      %v2006 = vor.u32 %v2002, %v2005
      %v2007 = vsel %vm1990, %v1998, %v2006
      %v2009 = vshrl.u32 %v1847, 16
      %v2011 = vrot.slane %v2009, 4
      %v2012 = vshll.u32 %v1847, 16
      %v2014 = vrot.slane %v2012, 5
      %v2015 = vor.u32 %v2011, %v2014
      %v2016 = vsel %vm1990, %v2006, %v2015
      %v2018 = vshrl.u32 %v1848, 16
      %v2020 = vrot.slane %v2018, 4
      %v2021 = vshll.u32 %v1848, 16
      %v2023 = vrot.slane %v2021, 5
      %v2024 = vor.u32 %v2020, %v2023
      %v2025 = vsel %vm1990, %v2015, %v2024
      %v2027 = vshrl.u32 %v1849, 16
      %v2029 = vrot.slane %v2027, 4
      %v2030 = vshll.u32 %v1849, 16
      %v2032 = vrot.slane %v2030, 5
      %v2033 = vor.u32 %v2029, %v2032
      %v2034 = vsel %vm1990, %v2024, %v2033
      %v2036 = vshrl.u32 %v1850, 16
      %v2038 = vrot.slane %v2036, 4
      %v2039 = vshll.u32 %v1850, 16
      %v2041 = vrot.slane %v2039, 5
      %v2042 = vor.u32 %v2038, %v2041
      %v2043 = vsel %vm1990, %v2033, %v2042
      %v2045 = vshrl.u32 %v1851, 16
      %v2047 = vrot.slane %v2045, 4
      %v2048 = vshll.u32 %v1851, 16
      %v2050 = vrot.slane %v2048, 5
      %v2051 = vor.u32 %v2047, %v2050
      %v2052 = vsel %vm1990, %v2042, %v2051
      %v2054 = vshrl.u32 %v1852, 16
      %v2056 = vrot.slane %v2054, 4
      %v2057 = vshll.u32 %v1852, 16
      %v2059 = vrot.slane %v2057, 5
      %v2060 = vor.u32 %v2056, %v2059
      %v2061 = vsel %vm1990, %v2051, %v2060
      %v2063 = vshrl.u32 %v1853, 16
      %v2065 = vrot.slane %v2063, 4
      %v2066 = vshll.u32 %v1853, 16
      %v2068 = vrot.slane %v2066, 5
      %v2069 = vor.u32 %v2065, %v2068
      %v2070 = vsel %vm1990, %v2060, %v2069
      %v2072 = vshrl.u32 %v1854, 16
      %v2074 = vrot.slane %v2072, 4
      %v2075 = vshll.u32 %v1854, 16
      %v2077 = vrot.slane %v2075, 5
      %v2078 = vor.u32 %v2074, %v2077
      %v2079 = vsel %vm1990, %v2069, %v2078
      %v2081 = vshrl.u32 %v1855, 16
      %v2083 = vrot.slane %v2081, 4
      %v2084 = vshll.u32 %v1855, 16
      %v2086 = vrot.slane %v2084, 5
      %v2087 = vor.u32 %v2083, %v2086
      %v2088 = vsel %vm1990, %v2078, %v2087
      %v2090 = vshrl.u32 %v1856, 16
      %v2092 = vrot.slane %v2090, 4
      %v2093 = vshll.u32 %v1856, 16
      %v2095 = vrot.slane %v2093, 5
      %v2096 = vor.u32 %v2092, %v2095
      %v2097 = vsel %vm1990, %v2087, %v2096
      %v2099 = vshrl.u32 %v1857, 16
      %v2101 = vrot.slane %v2099, 4
      %v2102 = vshll.u32 %v1857, 16
      %v2104 = vrot.slane %v2102, 5
      %v2105 = vor.u32 %v2101, %v2104
      %v2106 = vsel %vm1990, %v2096, %v2105
      %v2108 = vshrl.u32 %v1858, 16
      %v2110 = vrot.slane %v2108, 4
      %v2111 = vshll.u32 %v1858, 16
      %v2113 = vrot.slane %v2111, 5
      %v2114 = vor.u32 %v2110, %v2113
      %v2115 = vsel %vm1990, %v2105, %v2114
      %v2117 = vshrl.u32 %v1859, 16
      %v2119 = vrot.slane %v2117, 4
      %v2120 = vshll.u32 %v1859, 16
      %v2122 = vrot.slane %v2120, 5
      %v2123 = vor.u32 %v2119, %v2122
      %v2124 = vsel %vm1990, %v2114, %v2123
      %v2126 = vshrl.u32 %v1860, 16
      %v2128 = vrot.slane %v2126, 4
      %v2129 = vshll.u32 %v1860, 16
      %v2131 = vrot.slane %v2129, 5
      %v2132 = vor.u32 %v2128, %v2131
      %v2133 = vsel %vm1990, %v2123, %v2132
      %v2151 = vmul.bf16 %v1973, %v1998
      %v2152 = vmul.bf16 %v1974, %v2007
      %v2153 = vmul.bf16 %v1975, %v2016
      %v2154 = vmul.bf16 %v1976, %v2025
      %v2155 = vmul.bf16 %v1977, %v2034
      %v2156 = vmul.bf16 %v1978, %v2043
      %v2157 = vmul.bf16 %v1979, %v2052
      %v2158 = vmul.bf16 %v1980, %v2061
      %v2159 = vmul.bf16 %v1981, %v2070
      %v2160 = vmul.bf16 %v1982, %v2079
      %v2161 = vmul.bf16 %v1983, %v2088
      %v2162 = vmul.bf16 %v1984, %v2097
      %v2163 = vmul.bf16 %v1985, %v2106
      %v2164 = vmul.bf16 %v1986, %v2115
      %v2165 = vmul.bf16 %v1987, %v2124
      %v2166 = vmul.bf16 %v1988, %v2133
      %v2167 = vmul.bf16 %v1989, %v2132
      %v2168 = vld [vmem:[%s5] sm:$0xf]
      %v2169 = vld [vmem:[%s5 + $0x4] sm:$0xf]
      %v2170 = vld [vmem:[%s5 + $0x8] sm:$0xf]
      %v2171 = vld [vmem:[%s5 + $0xc] sm:$0xf]
      %v2172 = vld [vmem:[%s5 + $0x10] sm:$0xf]
      %v2173 = vld [vmem:[%s5 + $0x14] sm:$0xf]
      %v2174 = vld [vmem:[%s5 + $0x18] sm:$0xf]
      %v2175 = vld [vmem:[%s5 + $0x1c] sm:$0xf]
      %v2176 = vld [vmem:[%s5 + $0x20] sm:$0xf]
      %v2177 = vld [vmem:[%s5 + $0x24] sm:$0xf]
      %v2178 = vld [vmem:[%s5 + $0x28] sm:$0xf]
      %v2179 = vld [vmem:[%s5 + $0x2c] sm:$0xf]
      %v2180 = vld [vmem:[%s5 + $0x30] sm:$0xf]
      %v2181 = vld [vmem:[%s5 + $0x34] sm:$0xf]
      %v2182 = vld [vmem:[%s5 + $0x38] sm:$0xf]
      %v2183 = vld [vmem:[%s5 + $0x3c] sm:$0xf]
      %v2184 = vld [vmem:[#allocation2] sm:$0xf0]
      %s2185 = scalar_lea.vmem %s5, 64
      %v2186 = vld [vmem:[%s2185] sm:$0xf]
      %v2187 = vld [vmem:[%s2185 + $0x4] sm:$0xf]
      %v2188 = vld [vmem:[%s2185 + $0x8] sm:$0xf]
      %v2189 = vld [vmem:[%s2185 + $0xc] sm:$0xf]
      %v2190 = vld [vmem:[%s2185 + $0x10] sm:$0xf]
      %v2191 = vld [vmem:[%s2185 + $0x14] sm:$0xf]
      %v2192 = vld [vmem:[%s2185 + $0x18] sm:$0xf]
      %v2193 = vld [vmem:[%s2185 + $0x1c] sm:$0xf]
      %v2194 = vld [vmem:[%s2185 + $0x20] sm:$0xf]
      %v2195 = vld [vmem:[%s2185 + $0x24] sm:$0xf]
      %v2196 = vld [vmem:[%s2185 + $0x28] sm:$0xf]
      %v2197 = vld [vmem:[%s2185 + $0x2c] sm:$0xf]
      %v2198 = vld [vmem:[%s2185 + $0x30] sm:$0xf]
      %v2199 = vld [vmem:[%s2185 + $0x34] sm:$0xf]
      %v2200 = vld [vmem:[%s2185 + $0x38] sm:$0xf]
      %v2201 = vld [vmem:[%s2185 + $0x3c] sm:$0xf]
      %v2219 = vrot.slane %v2184, 4
      %v2220 = vrot.slane %v1974, 4
      %v2221 = vsel %vm1266, %v2219, %v2220
      %v2222 = vrot.slane %v1975, 4
      %v2223 = vsel %vm1266, %v2220, %v2222
      %v2224 = vrot.slane %v1976, 4
      %v2225 = vsel %vm1266, %v2222, %v2224
      %v2226 = vrot.slane %v1977, 4
      %v2227 = vsel %vm1266, %v2224, %v2226
      %v2228 = vrot.slane %v1978, 4
      %v2229 = vsel %vm1266, %v2226, %v2228
      %v2230 = vrot.slane %v1979, 4
      %v2231 = vsel %vm1266, %v2228, %v2230
      %v2232 = vrot.slane %v1980, 4
      %v2233 = vsel %vm1266, %v2230, %v2232
      %v2234 = vrot.slane %v1981, 4
      %v2235 = vsel %vm1266, %v2232, %v2234
      %v2236 = vrot.slane %v1982, 4
      %v2237 = vsel %vm1266, %v2234, %v2236
      %v2238 = vrot.slane %v1983, 4
      %v2239 = vsel %vm1266, %v2236, %v2238
      %v2240 = vrot.slane %v1984, 4
      %v2241 = vsel %vm1266, %v2238, %v2240
      %v2242 = vrot.slane %v1985, 4
      %v2243 = vsel %vm1266, %v2240, %v2242
      %v2244 = vrot.slane %v1986, 4
      %v2245 = vsel %vm1266, %v2242, %v2244
      %v2246 = vrot.slane %v1987, 4
      %v2247 = vsel %vm1266, %v2244, %v2246
      %v2248 = vrot.slane %v1988, 4
      %v2249 = vsel %vm1266, %v2246, %v2248
      %v2250 = vrot.slane %v1989, 4
      %v2251 = vsel %vm1266, %v2248, %v2250
      %v2284 = vunpack.c.l.b16 %v2186
      %v2285 = vunpack.c.l.b16 %v2187
      %v2286 = vunpack.c.l.b16 %v2188
      %v2287 = vunpack.c.l.b16 %v2189
      %v2288 = vunpack.c.l.b16 %v2190
      %v2289 = vunpack.c.l.b16 %v2191
      %v2290 = vunpack.c.l.b16 %v2192
      %v2291 = vunpack.c.l.b16 %v2193
      %v2292 = vunpack.c.l.b16 %v2194
      %v2293 = vunpack.c.l.b16 %v2195
      %v2294 = vunpack.c.l.b16 %v2196
      %v2295 = vunpack.c.l.b16 %v2197
      %v2296 = vunpack.c.l.b16 %v2198
      %v2297 = vunpack.c.l.b16 %v2199
      %v2298 = vunpack.c.l.b16 %v2200
      %v2299 = vunpack.c.l.b16 %v2201
      %v2300 = vpack.c.b16 %v2285, %v2284
      %v2301 = vpack.c.b16 %v2287, %v2286
      %v2302 = vpack.c.b16 %v2289, %v2288
      %v2303 = vpack.c.b16 %v2291, %v2290
      %v2304 = vpack.c.b16 %v2293, %v2292
      %v2305 = vpack.c.b16 %v2295, %v2294
      %v2306 = vpack.c.b16 %v2297, %v2296
      %v2307 = vpack.c.b16 %v2299, %v2298
      %2316 = vmatprep.subr.bf16.mxu0 0
      %2317 = vmatpush1.bf16.msra.mxu0 %v2300
      %2318 = vmatprep.subr.bf16.mxu0 0
      %2319 = vmatpush1.bf16.msra.mxu0 %v2301
      %2320 = vmatprep.subr.bf16.mxu0 0
      %2321 = vmatpush1.bf16.msra.mxu0 %v2302
      %2322 = vmatprep.subr.bf16.mxu0 0
      %2323 = vmatpush1.bf16.msra.mxu0 %v2303
      %2324 = vmatprep.subr.bf16.mxu0 0
      %2325 = vmatpush1.bf16.msra.mxu0 %v2304
      %2326 = vmatprep.subr.bf16.mxu0 0
      %2327 = vmatpush1.bf16.msra.mxu0 %v2305
      %2328 = vmatprep.subr.bf16.mxu0 0
      %2329 = vmatpush1.bf16.msra.mxu0 %v2306
      %2330 = vmatprep.subr.bf16.mxu0 0
      %2331 = vmatpush1.bf16.msra.mxu0 %v2307
      %2332 = vmatprep.subr.bf16.mxu0 0
      %2333 = vmatpush1.bf16.msra.mxu0 0
      %2334 = vmatprep.subr.bf16.mxu0 0
      %2335 = vmatpush1.bf16.msra.mxu0 0
      %2336 = vmatprep.subr.bf16.mxu0 0
      %2337 = vmatpush1.bf16.msra.mxu0 0
      %2338 = vmatprep.subr.bf16.mxu0 0
      %2339 = vmatpush1.bf16.msra.mxu0 0
      %2340 = vmatprep.subr.bf16.mxu0 0
      %2341 = vmatpush1.bf16.msra.mxu0 0
      %2342 = vmatprep.subr.bf16.mxu0 0
      %2343 = vmatpush1.bf16.msra.mxu0 0
      %2344 = vmatprep.subr.bf16.mxu0 0
      %2345 = vmatpush1.bf16.msra.mxu0 0
      %2346 = vmatprep.subr.bf16.mxu0 0
      %2347 = vmatpush1.bf16.msra.mxu0 0
      %2348 = vmatprep.mubr.bf16.mxu0 0
      %2349 = vmatmul.mubr.bf16.gmra.mrb[0].mxu0 %v2221
      %v2350 = vpop.f32.mrb[0].mxu0
      %v2351 = vadd.f32 0.0, %v2350
      %v2352 = vpop.f32.mrb[0].mxu0
      %v2353 = vpop.f32.mrb[0].mxu0
      %v2354 = vadd.f32 0.0, %v2353
      %v2355 = vpop.f32.mrb[0].mxu0
      %2356 = vmatprep.mubr.bf16.mxu0 0
      %2357 = vmatmul.mubr.bf16.gmra.mrb[0].mxu0 %v2223
      %v2358 = vpop.f32.mrb[0].mxu0
      %v2359 = vadd.f32 0.0, %v2358
      %v2360 = vpop.f32.mrb[0].mxu0
      %v2361 = vpop.f32.mrb[0].mxu0
      %v2362 = vadd.f32 0.0, %v2361
      %v2363 = vpop.f32.mrb[0].mxu0
      %2364 = vmatprep.mubr.bf16.mxu0 0
      %2365 = vmatmul.mubr.bf16.gmra.mrb[0].mxu0 %v2225
      %v2366 = vpop.f32.mrb[0].mxu0
      %v2367 = vadd.f32 0.0, %v2366
      %v2368 = vpop.f32.mrb[0].mxu0
      %v2369 = vpop.f32.mrb[0].mxu0
      %v2370 = vadd.f32 0.0, %v2369
      %v2371 = vpop.f32.mrb[0].mxu0
      %2372 = vmatprep.mubr.bf16.mxu0 0
      %2373 = vmatmul.mubr.bf16.gmra.mrb[0].mxu0 %v2227
      %v2374 = vpop.f32.mrb[0].mxu0
      %v2375 = vadd.f32 0.0, %v2374
      %v2376 = vpop.f32.mrb[0].mxu0
      %v2377 = vpop.f32.mrb[0].mxu0
      %v2378 = vadd.f32 0.0, %v2377
      %v2379 = vpop.f32.mrb[0].mxu0
      %2380 = vmatprep.mubr.bf16.mxu0 0
      %2381 = vmatmul.mubr.bf16.gmra.mrb[0].mxu0 %v2229
      %v2382 = vpop.f32.mrb[0].mxu0
      %v2383 = vadd.f32 0.0, %v2382
      %v2384 = vpop.f32.mrb[0].mxu0
      %v2385 = vpop.f32.mrb[0].mxu0
      %v2386 = vadd.f32 0.0, %v2385
      %v2387 = vpop.f32.mrb[0].mxu0
      %2388 = vmatprep.mubr.bf16.mxu0 0
      %2389 = vmatmul.mubr.bf16.gmra.mrb[0].mxu0 %v2231
      %v2390 = vpop.f32.mrb[0].mxu0
      %v2391 = vadd.f32 0.0, %v2390
      %v2392 = vpop.f32.mrb[0].mxu0
      %v2393 = vpop.f32.mrb[0].mxu0
      %v2394 = vadd.f32 0.0, %v2393
      %v2395 = vpop.f32.mrb[0].mxu0
      %2396 = vmatprep.mubr.bf16.mxu0 0
      %2397 = vmatmul.mubr.bf16.gmra.mrb[0].mxu0 %v2233
      %v2398 = vpop.f32.mrb[0].mxu0
      %v2399 = vadd.f32 0.0, %v2398
      %v2400 = vpop.f32.mrb[0].mxu0
      %v2401 = vpop.f32.mrb[0].mxu0
      %v2402 = vadd.f32 0.0, %v2401
      %v2403 = vpop.f32.mrb[0].mxu0
      %2404 = vmatprep.mubr.bf16.mxu0 0
      %2405 = vmatmul.mubr.bf16.gmra.mrb[0].mxu0 %v2235
      %v2406 = vpop.f32.mrb[0].mxu0
      %v2407 = vadd.f32 0.0, %v2406
      %v2408 = vpop.f32.mrb[0].mxu0
      %v2409 = vpop.f32.mrb[0].mxu0
      %v2410 = vadd.f32 0.0, %v2409
      %v2411 = vpop.f32.mrb[0].mxu0
      %2412 = vmatprep.mubr.bf16.mxu0 0
      %2413 = vmatmul.mubr.bf16.gmra.mrb[0].mxu0 %v2237
      %v2414 = vpop.f32.mrb[0].mxu0
      %v2415 = vadd.f32 0.0, %v2414
      %v2416 = vpop.f32.mrb[0].mxu0
      %v2417 = vpop.f32.mrb[0].mxu0
      %v2418 = vadd.f32 0.0, %v2417
      %v2419 = vpop.f32.mrb[0].mxu0
      %2420 = vmatprep.mubr.bf16.mxu0 0
      %2421 = vmatmul.mubr.bf16.gmra.mrb[0].mxu0 %v2239
      %v2422 = vpop.f32.mrb[0].mxu0
      %v2423 = vadd.f32 0.0, %v2422
      %v2424 = vpop.f32.mrb[0].mxu0
      %v2425 = vpop.f32.mrb[0].mxu0
      %v2426 = vadd.f32 0.0, %v2425
      %v2427 = vpop.f32.mrb[0].mxu0
      %2428 = vmatprep.mubr.bf16.mxu0 0
      %2429 = vmatmul.mubr.bf16.gmra.mrb[0].mxu0 %v2241
      %v2430 = vpop.f32.mrb[0].mxu0
      %v2431 = vadd.f32 0.0, %v2430
      %v2432 = vpop.f32.mrb[0].mxu0
      %v2433 = vpop.f32.mrb[0].mxu0
      %v2434 = vadd.f32 0.0, %v2433
      %v2435 = vpop.f32.mrb[0].mxu0
      %2436 = vmatprep.mubr.bf16.mxu0 0
      %2437 = vmatmul.mubr.bf16.gmra.mrb[0].mxu0 %v2243
      %v2438 = vpop.f32.mrb[0].mxu0
      %v2439 = vadd.f32 0.0, %v2438
      %v2440 = vpop.f32.mrb[0].mxu0
      %v2441 = vpop.f32.mrb[0].mxu0
      %v2442 = vadd.f32 0.0, %v2441
      %v2443 = vpop.f32.mrb[0].mxu0
      %2444 = vmatprep.mubr.bf16.mxu0 0
      %2445 = vmatmul.mubr.bf16.gmra.mrb[0].mxu0 %v2245
      %v2446 = vpop.f32.mrb[0].mxu0
      %v2447 = vadd.f32 0.0, %v2446
      %v2448 = vpop.f32.mrb[0].mxu0
      %v2449 = vpop.f32.mrb[0].mxu0
      %v2450 = vadd.f32 0.0, %v2449
      %v2451 = vpop.f32.mrb[0].mxu0
      %2452 = vmatprep.mubr.bf16.mxu0 0
      %2453 = vmatmul.mubr.bf16.gmra.mrb[0].mxu0 %v2247
      %v2454 = vpop.f32.mrb[0].mxu0
      %v2455 = vadd.f32 0.0, %v2454
      %v2456 = vpop.f32.mrb[0].mxu0
      %v2457 = vpop.f32.mrb[0].mxu0
      %v2458 = vadd.f32 0.0, %v2457
      %v2459 = vpop.f32.mrb[0].mxu0
      %2460 = vmatprep.mubr.bf16.mxu0 0
      %2461 = vmatmul.mubr.bf16.gmra.mrb[0].mxu0 %v2249
      %v2462 = vpop.f32.mrb[0].mxu0
      %v2463 = vadd.f32 0.0, %v2462
      %v2464 = vpop.f32.mrb[0].mxu0
      %v2465 = vpop.f32.mrb[0].mxu0
      %v2466 = vadd.f32 0.0, %v2465
      %v2467 = vpop.f32.mrb[0].mxu0
      %2468 = vmatprep.mubr.bf16.mxu0 0
      %2469 = vmatmul.mubr.bf16.gmra.mrb[0].mxu0 %v2251
      %v2470 = vpop.f32.mrb[0].mxu0
      %v2471 = vadd.f32 0.0, %v2470
      %v2472 = vpop.f32.mrb[0].mxu0
      %v2473 = vpop.f32.mrb[0].mxu0
      %v2474 = vadd.f32 0.0, %v2473
      %v2475 = vpop.f32.mrb[0].mxu0
      %2476 = vdwg.mxu0
      %vm2477 = vsmask.f32 4352
      %v2479 = vshrl.u32 %v2151, 16
      %v2481 = vrot.slane %v2479, 3
      %v2482 = vshll.u32 %v2151, 16
      %v2484 = vrot.slane %v2482, 4
      %v2485 = vor.u32 %v2481, %v2484
      %v2487 = vshrl.u32 %v2152, 16
      %v2489 = vrot.slane %v2487, 3
      %v2490 = vshll.u32 %v2152, 16
      %v2492 = vrot.slane %v2490, 4
      %v2493 = vor.u32 %v2489, %v2492
      %v2494 = vsel %vm2477, %v2485, %v2493
      %v2496 = vshrl.u32 %v2153, 16
      %v2498 = vrot.slane %v2496, 3
      %v2499 = vshll.u32 %v2153, 16
      %v2501 = vrot.slane %v2499, 4
      %v2502 = vor.u32 %v2498, %v2501
      %v2503 = vsel %vm2477, %v2493, %v2502
      %v2505 = vshrl.u32 %v2154, 16
      %v2507 = vrot.slane %v2505, 3
      %v2508 = vshll.u32 %v2154, 16
      %v2510 = vrot.slane %v2508, 4
      %v2511 = vor.u32 %v2507, %v2510
      %v2512 = vsel %vm2477, %v2502, %v2511
      %v2514 = vshrl.u32 %v2155, 16
      %v2516 = vrot.slane %v2514, 3
      %v2517 = vshll.u32 %v2155, 16
      %v2519 = vrot.slane %v2517, 4
      %v2520 = vor.u32 %v2516, %v2519
      %v2521 = vsel %vm2477, %v2511, %v2520
      %v2523 = vshrl.u32 %v2156, 16
      %v2525 = vrot.slane %v2523, 3
      %v2526 = vshll.u32 %v2156, 16
      %v2528 = vrot.slane %v2526, 4
      %v2529 = vor.u32 %v2525, %v2528
      %v2530 = vsel %vm2477, %v2520, %v2529
      %v2532 = vshrl.u32 %v2157, 16
      %v2534 = vrot.slane %v2532, 3
      %v2535 = vshll.u32 %v2157, 16
      %v2537 = vrot.slane %v2535, 4
      %v2538 = vor.u32 %v2534, %v2537
      %v2539 = vsel %vm2477, %v2529, %v2538
      %v2541 = vshrl.u32 %v2158, 16
      %v2543 = vrot.slane %v2541, 3
      %v2544 = vshll.u32 %v2158, 16
      %v2546 = vrot.slane %v2544, 4
      %v2547 = vor.u32 %v2543, %v2546
      %v2548 = vsel %vm2477, %v2538, %v2547
      %v2550 = vshrl.u32 %v2159, 16
      %v2552 = vrot.slane %v2550, 3
      %v2553 = vshll.u32 %v2159, 16
      %v2555 = vrot.slane %v2553, 4
      %v2556 = vor.u32 %v2552, %v2555
      %v2557 = vsel %vm2477, %v2547, %v2556
      %v2559 = vshrl.u32 %v2160, 16
      %v2561 = vrot.slane %v2559, 3
      %v2562 = vshll.u32 %v2160, 16
      %v2564 = vrot.slane %v2562, 4
      %v2565 = vor.u32 %v2561, %v2564
      %v2566 = vsel %vm2477, %v2556, %v2565
      %v2568 = vshrl.u32 %v2161, 16
      %v2570 = vrot.slane %v2568, 3
      %v2571 = vshll.u32 %v2161, 16
      %v2573 = vrot.slane %v2571, 4
      %v2574 = vor.u32 %v2570, %v2573
      %v2575 = vsel %vm2477, %v2565, %v2574
      %v2577 = vshrl.u32 %v2162, 16
      %v2579 = vrot.slane %v2577, 3
      %v2580 = vshll.u32 %v2162, 16
      %v2582 = vrot.slane %v2580, 4
      %v2583 = vor.u32 %v2579, %v2582
      %v2584 = vsel %vm2477, %v2574, %v2583
      %v2586 = vshrl.u32 %v2163, 16
      %v2588 = vrot.slane %v2586, 3
      %v2589 = vshll.u32 %v2163, 16
      %v2591 = vrot.slane %v2589, 4
      %v2592 = vor.u32 %v2588, %v2591
      %v2593 = vsel %vm2477, %v2583, %v2592
      %v2595 = vshrl.u32 %v2164, 16
      %v2597 = vrot.slane %v2595, 3
      %v2598 = vshll.u32 %v2164, 16
      %v2600 = vrot.slane %v2598, 4
      %v2601 = vor.u32 %v2597, %v2600
      %v2602 = vsel %vm2477, %v2592, %v2601
      %v2604 = vshrl.u32 %v2165, 16
      %v2606 = vrot.slane %v2604, 3
      %v2607 = vshll.u32 %v2165, 16
      %v2609 = vrot.slane %v2607, 4
      %v2610 = vor.u32 %v2606, %v2609
      %v2611 = vsel %vm2477, %v2601, %v2610
      %v2613 = vshrl.u32 %v2166, 16
      %v2615 = vrot.slane %v2613, 3
      %v2616 = vshll.u32 %v2166, 16
      %v2618 = vrot.slane %v2616, 4
      %v2619 = vor.u32 %v2615, %v2618
      %v2620 = vsel %vm2477, %v2610, %v2619
      %v2622 = vshrl.u32 %v2167, 16
      %v2624 = vrot.slane %v2622, 3
      %v2625 = vshll.u32 %v2167, 16
      %v2627 = vrot.slane %v2625, 4
      %v2628 = vor.u32 %v2624, %v2627
      %v2629 = vsel %vm2477, %v2619, %v2628
      %v2662 = vunpack.c.l.b16 %v2168
      %v2663 = vunpack.c.l.b16 %v2169
      %v2664 = vunpack.c.l.b16 %v2170
      %v2665 = vunpack.c.l.b16 %v2171
      %v2666 = vunpack.c.l.b16 %v2172
      %v2667 = vunpack.c.l.b16 %v2173
      %v2668 = vunpack.c.l.b16 %v2174
      %v2669 = vunpack.c.l.b16 %v2175
      %v2670 = vunpack.c.l.b16 %v2176
      %v2671 = vunpack.c.l.b16 %v2177
      %v2672 = vunpack.c.l.b16 %v2178
      %v2673 = vunpack.c.l.b16 %v2179
      %v2674 = vunpack.c.l.b16 %v2180
      %v2675 = vunpack.c.l.b16 %v2181
      %v2676 = vunpack.c.l.b16 %v2182
      %v2677 = vunpack.c.l.b16 %v2183
      %v2678 = vpack.c.b16 %v2663, %v2662
      %v2679 = vpack.c.b16 %v2665, %v2664
      %v2680 = vpack.c.b16 %v2667, %v2666
      %v2681 = vpack.c.b16 %v2669, %v2668
      %v2682 = vpack.c.b16 %v2671, %v2670
      %v2683 = vpack.c.b16 %v2673, %v2672
      %v2684 = vpack.c.b16 %v2675, %v2674
      %v2685 = vpack.c.b16 %v2677, %v2676
      %2694 = vmatprep.subr.bf16.mxu0 0
      %2695 = vmatpush1.bf16.msra.mxu0 %v2678
      %2696 = vmatprep.subr.bf16.mxu0 0
      %2697 = vmatpush1.bf16.msra.mxu0 %v2679
      %2698 = vmatprep.subr.bf16.mxu0 0
      %2699 = vmatpush1.bf16.msra.mxu0 %v2680
      %2700 = vmatprep.subr.bf16.mxu0 0
      %2701 = vmatpush1.bf16.msra.mxu0 %v2681
      %2702 = vmatprep.subr.bf16.mxu0 0
      %2703 = vmatpush1.bf16.msra.mxu0 %v2682
      %2704 = vmatprep.subr.bf16.mxu0 0
      %2705 = vmatpush1.bf16.msra.mxu0 %v2683
      %2706 = vmatprep.subr.bf16.mxu0 0
      %2707 = vmatpush1.bf16.msra.mxu0 %v2684
      %2708 = vmatprep.subr.bf16.mxu0 0
      %2709 = vmatpush1.bf16.msra.mxu0 %v2685
      %2710 = vmatprep.subr.bf16.mxu0 0
      %2711 = vmatpush1.bf16.msra.mxu0 0
      %2712 = vmatprep.subr.bf16.mxu0 0
      %2713 = vmatpush1.bf16.msra.mxu0 0
      %2714 = vmatprep.subr.bf16.mxu0 0
      %2715 = vmatpush1.bf16.msra.mxu0 0
      %2716 = vmatprep.subr.bf16.mxu0 0
      %2717 = vmatpush1.bf16.msra.mxu0 0
      %2718 = vmatprep.subr.bf16.mxu0 0
      %2719 = vmatpush1.bf16.msra.mxu0 0
      %2720 = vmatprep.subr.bf16.mxu0 0
      %2721 = vmatpush1.bf16.msra.mxu0 0
      %2722 = vmatprep.subr.bf16.mxu0 0
      %2723 = vmatpush1.bf16.msra.mxu0 0
      %2724 = vmatprep.subr.bf16.mxu0 0
      %2725 = vmatpush1.bf16.msra.mxu0 0
      %2726 = vmatprep.mubr.bf16.mxu0 0
      %2727 = vmatmul.mubr.bf16.gmra.mrb[0].mxu0 %v2494
      %v2728 = vpop.f32.mrb[0].mxu0
      %v2729 = vadd.f32 %v2351, %v2728
      %v2730 = vpop.f32.mrb[0].mxu0
      %v2731 = vpop.f32.mrb[0].mxu0
      %v2732 = vadd.f32 %v2354, %v2731
      %v2733 = vpop.f32.mrb[0].mxu0
      %2734 = vmatprep.mubr.bf16.mxu0 0
      %2735 = vmatmul.mubr.bf16.gmra.mrb[0].mxu0 %v2503
      %v2736 = vpop.f32.mrb[0].mxu0
      %v2737 = vadd.f32 %v2359, %v2736
      %v2738 = vpop.f32.mrb[0].mxu0
      %v2739 = vpop.f32.mrb[0].mxu0
      %v2740 = vadd.f32 %v2362, %v2739
      %v2741 = vpop.f32.mrb[0].mxu0
      %2742 = vmatprep.mubr.bf16.mxu0 0
      %2743 = vmatmul.mubr.bf16.gmra.mrb[0].mxu0 %v2512
      %v2744 = vpop.f32.mrb[0].mxu0
      %v2745 = vadd.f32 %v2367, %v2744
      %v2746 = vpop.f32.mrb[0].mxu0
      %v2747 = vpop.f32.mrb[0].mxu0
      %v2748 = vadd.f32 %v2370, %v2747
      %v2749 = vpop.f32.mrb[0].mxu0
      %2750 = vmatprep.mubr.bf16.mxu0 0
      %2751 = vmatmul.mubr.bf16.gmra.mrb[0].mxu0 %v2521
      %v2752 = vpop.f32.mrb[0].mxu0
      %v2753 = vadd.f32 %v2375, %v2752
      %v2754 = vpop.f32.mrb[0].mxu0
      %v2755 = vpop.f32.mrb[0].mxu0
      %v2756 = vadd.f32 %v2378, %v2755
      %v2757 = vpop.f32.mrb[0].mxu0
      %2758 = vmatprep.mubr.bf16.mxu0 0
      %2759 = vmatmul.mubr.bf16.gmra.mrb[0].mxu0 %v2530
      %v2760 = vpop.f32.mrb[0].mxu0
      %v2761 = vadd.f32 %v2383, %v2760
      %v2762 = vpop.f32.mrb[0].mxu0
      %v2763 = vpop.f32.mrb[0].mxu0
      %v2764 = vadd.f32 %v2386, %v2763
      %v2765 = vpop.f32.mrb[0].mxu0
      %2766 = vmatprep.mubr.bf16.mxu0 0
      %2767 = vmatmul.mubr.bf16.gmra.mrb[0].mxu0 %v2539
      %v2768 = vpop.f32.mrb[0].mxu0
      %v2769 = vadd.f32 %v2391, %v2768
      %v2770 = vpop.f32.mrb[0].mxu0
      %v2771 = vpop.f32.mrb[0].mxu0
      %v2772 = vadd.f32 %v2394, %v2771
      %v2773 = vpop.f32.mrb[0].mxu0
      %2774 = vmatprep.mubr.bf16.mxu0 0
      %2775 = vmatmul.mubr.bf16.gmra.mrb[0].mxu0 %v2548
      %v2776 = vpop.f32.mrb[0].mxu0
      %v2777 = vadd.f32 %v2399, %v2776
      %v2778 = vpop.f32.mrb[0].mxu0
      %v2779 = vpop.f32.mrb[0].mxu0
      %v2780 = vadd.f32 %v2402, %v2779
      %v2781 = vpop.f32.mrb[0].mxu0
      %2782 = vmatprep.mubr.bf16.mxu0 0
      %2783 = vmatmul.mubr.bf16.gmra.mrb[0].mxu0 %v2557
      %v2784 = vpop.f32.mrb[0].mxu0
      %v2785 = vadd.f32 %v2407, %v2784
      %v2786 = vpop.f32.mrb[0].mxu0
      %v2787 = vpop.f32.mrb[0].mxu0
      %v2788 = vadd.f32 %v2410, %v2787
      %v2789 = vpop.f32.mrb[0].mxu0
      %2790 = vmatprep.mubr.bf16.mxu0 0
      %2791 = vmatmul.mubr.bf16.gmra.mrb[0].mxu0 %v2566
      %v2792 = vpop.f32.mrb[0].mxu0
      %v2793 = vadd.f32 %v2415, %v2792
      %v2794 = vpop.f32.mrb[0].mxu0
      %v2795 = vpop.f32.mrb[0].mxu0
      %v2796 = vadd.f32 %v2418, %v2795
      %v2797 = vpop.f32.mrb[0].mxu0
      %2798 = vmatprep.mubr.bf16.mxu0 0
      %2799 = vmatmul.mubr.bf16.gmra.mrb[0].mxu0 %v2575
      %v2800 = vpop.f32.mrb[0].mxu0
      %v2801 = vadd.f32 %v2423, %v2800
      %v2802 = vpop.f32.mrb[0].mxu0
      %v2803 = vpop.f32.mrb[0].mxu0
      %v2804 = vadd.f32 %v2426, %v2803
      %v2805 = vpop.f32.mrb[0].mxu0
      %2806 = vmatprep.mubr.bf16.mxu0 0
      %2807 = vmatmul.mubr.bf16.gmra.mrb[0].mxu0 %v2584
      %v2808 = vpop.f32.mrb[0].mxu0
      %v2809 = vadd.f32 %v2431, %v2808
      %v2810 = vpop.f32.mrb[0].mxu0
      %v2811 = vpop.f32.mrb[0].mxu0
      %v2812 = vadd.f32 %v2434, %v2811
      %v2813 = vpop.f32.mrb[0].mxu0
      %2814 = vmatprep.mubr.bf16.mxu0 0
      %2815 = vmatmul.mubr.bf16.gmra.mrb[0].mxu0 %v2593
      %v2816 = vpop.f32.mrb[0].mxu0
      %v2817 = vadd.f32 %v2439, %v2816
      %v2818 = vpop.f32.mrb[0].mxu0
      %v2819 = vpop.f32.mrb[0].mxu0
      %v2820 = vadd.f32 %v2442, %v2819
      %v2821 = vpop.f32.mrb[0].mxu0
      %2822 = vmatprep.mubr.bf16.mxu0 0
      %2823 = vmatmul.mubr.bf16.gmra.mrb[0].mxu0 %v2602
      %v2824 = vpop.f32.mrb[0].mxu0
      %v2825 = vadd.f32 %v2447, %v2824
      %v2826 = vpop.f32.mrb[0].mxu0
      %v2827 = vpop.f32.mrb[0].mxu0
      %v2828 = vadd.f32 %v2450, %v2827
      %v2829 = vpop.f32.mrb[0].mxu0
      %2830 = vmatprep.mubr.bf16.mxu0 0
      %2831 = vmatmul.mubr.bf16.gmra.mrb[0].mxu0 %v2611
      %v2832 = vpop.f32.mrb[0].mxu0
      %v2833 = vadd.f32 %v2455, %v2832
      %v2834 = vpop.f32.mrb[0].mxu0
      %v2835 = vpop.f32.mrb[0].mxu0
      %v2836 = vadd.f32 %v2458, %v2835
      %v2837 = vpop.f32.mrb[0].mxu0
      %2838 = vmatprep.mubr.bf16.mxu0 0
      %2839 = vmatmul.mubr.bf16.gmra.mrb[0].mxu0 %v2620
      %v2840 = vpop.f32.mrb[0].mxu0
      %v2841 = vadd.f32 %v2463, %v2840
      %v2842 = vpop.f32.mrb[0].mxu0
      %v2843 = vpop.f32.mrb[0].mxu0
      %v2844 = vadd.f32 %v2466, %v2843
      %v2845 = vpop.f32.mrb[0].mxu0
      %2846 = vmatprep.mubr.bf16.mxu0 0
      %2847 = vmatmul.mubr.bf16.gmra.mrb[0].mxu0 %v2629
      %v2848 = vpop.f32.mrb[0].mxu0
      %v2849 = vadd.f32 %v2471, %v2848
      %v2850 = vpop.f32.mrb[0].mxu0
      %v2851 = vpop.f32.mrb[0].mxu0
      %v2852 = vadd.f32 %v2474, %v2851
      %v2853 = vpop.f32.mrb[0].mxu0
      %2854 = vdwg.mxu0
      %v2855 = vld [vmem:[#allocation2 + $0x80] sm:$0x1f]
      %v2857 = vshrl.u32 %v1957, 16
      %v2859 = vrot.slane %v2857, 3
      %v2860 = vshll.u32 %v1957, 16
      %v2862 = vrot.slane %v2860, 4
      %v2863 = vor.u32 %v2859, %v2862
      %v2865 = vshrl.u32 %v1958, 16
      %v2867 = vrot.slane %v2865, 3
      %v2868 = vshll.u32 %v1958, 16
      %v2870 = vrot.slane %v2868, 4
      %v2871 = vor.u32 %v2867, %v2870
      %v2872 = vsel %vm2477, %v2863, %v2871
      %v2874 = vshrl.u32 %v1959, 16
      %v2876 = vrot.slane %v2874, 3
      %v2877 = vshll.u32 %v1959, 16
      %v2879 = vrot.slane %v2877, 4
      %v2880 = vor.u32 %v2876, %v2879
      %v2881 = vsel %vm2477, %v2871, %v2880
      %v2883 = vshrl.u32 %v1960, 16
      %v2885 = vrot.slane %v2883, 3
      %v2886 = vshll.u32 %v1960, 16
      %v2888 = vrot.slane %v2886, 4
      %v2889 = vor.u32 %v2885, %v2888
      %v2890 = vsel %vm2477, %v2880, %v2889
      %v2892 = vshrl.u32 %v1961, 16
      %v2894 = vrot.slane %v2892, 3
      %v2895 = vshll.u32 %v1961, 16
      %v2897 = vrot.slane %v2895, 4
      %v2898 = vor.u32 %v2894, %v2897
      %v2899 = vsel %vm2477, %v2889, %v2898
      %v2901 = vshrl.u32 %v1962, 16
      %v2903 = vrot.slane %v2901, 3
      %v2904 = vshll.u32 %v1962, 16
      %v2906 = vrot.slane %v2904, 4
      %v2907 = vor.u32 %v2903, %v2906
      %v2908 = vsel %vm2477, %v2898, %v2907
      %v2910 = vshrl.u32 %v1963, 16
      %v2912 = vrot.slane %v2910, 3
      %v2913 = vshll.u32 %v1963, 16
      %v2915 = vrot.slane %v2913, 4
      %v2916 = vor.u32 %v2912, %v2915
      %v2917 = vsel %vm2477, %v2907, %v2916
      %v2919 = vshrl.u32 %v1964, 16
      %v2921 = vrot.slane %v2919, 3
      %v2922 = vshll.u32 %v1964, 16
      %v2924 = vrot.slane %v2922, 4
      %v2925 = vor.u32 %v2921, %v2924
      %v2926 = vsel %vm2477, %v2916, %v2925
      %v2928 = vshrl.u32 %v1965, 16
      %v2930 = vrot.slane %v2928, 3
      %v2931 = vshll.u32 %v1965, 16
      %v2933 = vrot.slane %v2931, 4
      %v2934 = vor.u32 %v2930, %v2933
      %v2935 = vsel %vm2477, %v2925, %v2934
      %v2937 = vshrl.u32 %v1966, 16
      %v2939 = vrot.slane %v2937, 3
      %v2940 = vshll.u32 %v1966, 16
      %v2942 = vrot.slane %v2940, 4
      %v2943 = vor.u32 %v2939, %v2942
      %v2944 = vsel %vm2477, %v2934, %v2943
      %v2946 = vshrl.u32 %v1967, 16
      %v2948 = vrot.slane %v2946, 3
      %v2949 = vshll.u32 %v1967, 16
      %v2951 = vrot.slane %v2949, 4
      %v2952 = vor.u32 %v2948, %v2951
      %v2953 = vsel %vm2477, %v2943, %v2952
      %v2955 = vshrl.u32 %v1968, 16
      %v2957 = vrot.slane %v2955, 3
      %v2958 = vshll.u32 %v1968, 16
      %v2960 = vrot.slane %v2958, 4
      %v2961 = vor.u32 %v2957, %v2960
      %v2962 = vsel %vm2477, %v2952, %v2961
      %v2964 = vshrl.u32 %v1969, 16
      %v2966 = vrot.slane %v2964, 3
      %v2967 = vshll.u32 %v1969, 16
      %v2969 = vrot.slane %v2967, 4
      %v2970 = vor.u32 %v2966, %v2969
      %v2971 = vsel %vm2477, %v2961, %v2970
      %v2973 = vshrl.u32 %v1970, 16
      %v2975 = vrot.slane %v2973, 3
      %v2976 = vshll.u32 %v1970, 16
      %v2978 = vrot.slane %v2976, 4
      %v2979 = vor.u32 %v2975, %v2978
      %v2980 = vsel %vm2477, %v2970, %v2979
      %v2982 = vshrl.u32 %v1971, 16
      %v2984 = vrot.slane %v2982, 3
      %v2985 = vshll.u32 %v1971, 16
      %v2987 = vrot.slane %v2985, 4
      %v2988 = vor.u32 %v2984, %v2987
      %v2989 = vsel %vm2477, %v2979, %v2988
      %v2991 = vshrl.u32 %v1972, 16
      %v2993 = vrot.slane %v2991, 3
      %v2994 = vshll.u32 %v1972, 16
      %v2996 = vrot.slane %v2994, 4
      %v2997 = vor.u32 %v2993, %v2996
      %v2998 = vsel %vm2477, %v2988, %v2997
      %v3016 = vmul.bf16 %v2184, %v2863
      %v3017 = vmul.bf16 %v1974, %v2872
      %v3018 = vmul.bf16 %v1975, %v2881
      %v3019 = vmul.bf16 %v1976, %v2890
      %v3020 = vmul.bf16 %v1977, %v2899
      %v3021 = vmul.bf16 %v1978, %v2908
      %v3022 = vmul.bf16 %v1979, %v2917
      %v3023 = vmul.bf16 %v1980, %v2926
      %v3024 = vmul.bf16 %v1981, %v2935
      %v3025 = vmul.bf16 %v1982, %v2944
      %v3026 = vmul.bf16 %v1983, %v2953
      %v3027 = vmul.bf16 %v1984, %v2962
      %v3028 = vmul.bf16 %v1985, %v2971
      %v3029 = vmul.bf16 %v1986, %v2980
      %v3030 = vmul.bf16 %v1987, %v2989
      %v3031 = vmul.bf16 %v1988, %v2998
      %v3032 = vmul.bf16 %v2855, %v2997
      %s3033 = scalar_lea.vmem %s5, 128
      %v3034 = vld [vmem:[%s3033] sm:$0xf]
      %v3035 = vld [vmem:[%s3033 + $0x4] sm:$0xf]
      %v3036 = vld [vmem:[%s3033 + $0x8] sm:$0xf]
      %v3037 = vld [vmem:[%s3033 + $0xc] sm:$0xf]
      %v3038 = vld [vmem:[%s3033 + $0x10] sm:$0xf]
      %v3039 = vld [vmem:[%s3033 + $0x14] sm:$0xf]
      %v3040 = vld [vmem:[%s3033 + $0x18] sm:$0xf]
      %v3041 = vld [vmem:[%s3033 + $0x1c] sm:$0xf]
      %v3042 = vld [vmem:[%s3033 + $0x20] sm:$0xf]
      %v3043 = vld [vmem:[%s3033 + $0x24] sm:$0xf]
      %v3044 = vld [vmem:[%s3033 + $0x28] sm:$0xf]
      %v3045 = vld [vmem:[%s3033 + $0x2c] sm:$0xf]
      %v3046 = vld [vmem:[%s3033 + $0x30] sm:$0xf]
      %v3047 = vld [vmem:[%s3033 + $0x34] sm:$0xf]
      %v3048 = vld [vmem:[%s3033 + $0x38] sm:$0xf]
      %v3049 = vld [vmem:[%s3033 + $0x3c] sm:$0xf]
      %v3051 = vshrl.u32 %v3016, 16
      %v3053 = vrot.slane %v3051, 4
      %v3054 = vshll.u32 %v3016, 16
      %v3056 = vrot.slane %v3054, 5
      %v3057 = vor.u32 %v3053, %v3056
      %v3059 = vshrl.u32 %v3017, 16
      %v3061 = vrot.slane %v3059, 4
      %v3062 = vshll.u32 %v3017, 16
      %v3064 = vrot.slane %v3062, 5
      %v3065 = vor.u32 %v3061, %v3064
      %v3066 = vsel %vm1990, %v3057, %v3065
      %v3068 = vshrl.u32 %v3018, 16
      %v3070 = vrot.slane %v3068, 4
      %v3071 = vshll.u32 %v3018, 16
      %v3073 = vrot.slane %v3071, 5
      %v3074 = vor.u32 %v3070, %v3073
      %v3075 = vsel %vm1990, %v3065, %v3074
      %v3077 = vshrl.u32 %v3019, 16
      %v3079 = vrot.slane %v3077, 4
      %v3080 = vshll.u32 %v3019, 16
      %v3082 = vrot.slane %v3080, 5
      %v3083 = vor.u32 %v3079, %v3082
      %v3084 = vsel %vm1990, %v3074, %v3083
      %v3086 = vshrl.u32 %v3020, 16
      %v3088 = vrot.slane %v3086, 4
      %v3089 = vshll.u32 %v3020, 16
      %v3091 = vrot.slane %v3089, 5
      %v3092 = vor.u32 %v3088, %v3091
      %v3093 = vsel %vm1990, %v3083, %v3092
      %v3095 = vshrl.u32 %v3021, 16
      %v3097 = vrot.slane %v3095, 4
      %v3098 = vshll.u32 %v3021, 16
      %v3100 = vrot.slane %v3098, 5
      %v3101 = vor.u32 %v3097, %v3100
      %v3102 = vsel %vm1990, %v3092, %v3101
      %v3104 = vshrl.u32 %v3022, 16
      %v3106 = vrot.slane %v3104, 4
      %v3107 = vshll.u32 %v3022, 16
      %v3109 = vrot.slane %v3107, 5
      %v3110 = vor.u32 %v3106, %v3109
      %v3111 = vsel %vm1990, %v3101, %v3110
      %v3113 = vshrl.u32 %v3023, 16
      %v3115 = vrot.slane %v3113, 4
      %v3116 = vshll.u32 %v3023, 16
      %v3118 = vrot.slane %v3116, 5
      %v3119 = vor.u32 %v3115, %v3118
      %v3120 = vsel %vm1990, %v3110, %v3119
      %v3122 = vshrl.u32 %v3024, 16
      %v3124 = vrot.slane %v3122, 4
      %v3125 = vshll.u32 %v3024, 16
      %v3127 = vrot.slane %v3125, 5
      %v3128 = vor.u32 %v3124, %v3127
      %v3129 = vsel %vm1990, %v3119, %v3128
      %v3131 = vshrl.u32 %v3025, 16
      %v3133 = vrot.slane %v3131, 4
      %v3134 = vshll.u32 %v3025, 16
      %v3136 = vrot.slane %v3134, 5
      %v3137 = vor.u32 %v3133, %v3136
      %v3138 = vsel %vm1990, %v3128, %v3137
      %v3140 = vshrl.u32 %v3026, 16
      %v3142 = vrot.slane %v3140, 4
      %v3143 = vshll.u32 %v3026, 16
      %v3145 = vrot.slane %v3143, 5
      %v3146 = vor.u32 %v3142, %v3145
      %v3147 = vsel %vm1990, %v3137, %v3146
      %v3149 = vshrl.u32 %v3027, 16
      %v3151 = vrot.slane %v3149, 4
      %v3152 = vshll.u32 %v3027, 16
      %v3154 = vrot.slane %v3152, 5
      %v3155 = vor.u32 %v3151, %v3154
      %v3156 = vsel %vm1990, %v3146, %v3155
      %v3158 = vshrl.u32 %v3028, 16
      %v3160 = vrot.slane %v3158, 4
      %v3161 = vshll.u32 %v3028, 16
      %v3163 = vrot.slane %v3161, 5
      %v3164 = vor.u32 %v3160, %v3163
      %v3165 = vsel %vm1990, %v3155, %v3164
      %v3167 = vshrl.u32 %v3029, 16
      %v3169 = vrot.slane %v3167, 4
      %v3170 = vshll.u32 %v3029, 16
      %v3172 = vrot.slane %v3170, 5
      %v3173 = vor.u32 %v3169, %v3172
      %v3174 = vsel %vm1990, %v3164, %v3173
      %v3176 = vshrl.u32 %v3030, 16
      %v3178 = vrot.slane %v3176, 4
      %v3179 = vshll.u32 %v3030, 16
      %v3181 = vrot.slane %v3179, 5
      %v3182 = vor.u32 %v3178, %v3181
      %v3183 = vsel %vm1990, %v3173, %v3182
      %v3185 = vshrl.u32 %v3031, 16
      %v3187 = vrot.slane %v3185, 4
      %v3188 = vshll.u32 %v3031, 16
      %v3190 = vrot.slane %v3188, 5
      %v3191 = vor.u32 %v3187, %v3190
      %v3192 = vsel %vm1990, %v3182, %v3191
      %v3194 = vshrl.u32 %v3032, 16
      %v3196 = vrot.slane %v3194, 4
      %v3197 = vshll.u32 %v3032, 16
      %v3199 = vrot.slane %v3197, 5
      %v3200 = vor.u32 %v3196, %v3199
      %v3201 = vsel %vm1990, %v3191, %v3200
      %v3234 = vunpack.c.l.b16 %v3034
      %v3235 = vunpack.c.l.b16 %v3035
      %v3236 = vunpack.c.l.b16 %v3036
      %v3237 = vunpack.c.l.b16 %v3037
      %v3238 = vunpack.c.l.b16 %v3038
      %v3239 = vunpack.c.l.b16 %v3039
      %v3240 = vunpack.c.l.b16 %v3040
      %v3241 = vunpack.c.l.b16 %v3041
      %v3242 = vunpack.c.l.b16 %v3042
      %v3243 = vunpack.c.l.b16 %v3043
      %v3244 = vunpack.c.l.b16 %v3044
      %v3245 = vunpack.c.l.b16 %v3045
      %v3246 = vunpack.c.l.b16 %v3046
      %v3247 = vunpack.c.l.b16 %v3047
      %v3248 = vunpack.c.l.b16 %v3048
      %v3249 = vunpack.c.l.b16 %v3049
      %v3250 = vpack.c.b16 %v3235, %v3234
      %v3251 = vpack.c.b16 %v3237, %v3236
      %v3252 = vpack.c.b16 %v3239, %v3238
      %v3253 = vpack.c.b16 %v3241, %v3240
      %v3254 = vpack.c.b16 %v3243, %v3242
      %v3255 = vpack.c.b16 %v3245, %v3244
      %v3256 = vpack.c.b16 %v3247, %v3246
      %v3257 = vpack.c.b16 %v3249, %v3248
      %3266 = vmatprep.subr.bf16.mxu0 0
      %3267 = vmatpush1.bf16.msra.mxu0 %v3250
      %3268 = vmatprep.subr.bf16.mxu0 0
      %3269 = vmatpush1.bf16.msra.mxu0 %v3251
      %3270 = vmatprep.subr.bf16.mxu0 0
      %3271 = vmatpush1.bf16.msra.mxu0 %v3252
      %3272 = vmatprep.subr.bf16.mxu0 0
      %3273 = vmatpush1.bf16.msra.mxu0 %v3253
      %3274 = vmatprep.subr.bf16.mxu0 0
      %3275 = vmatpush1.bf16.msra.mxu0 %v3254
      %3276 = vmatprep.subr.bf16.mxu0 0
      %3277 = vmatpush1.bf16.msra.mxu0 %v3255
      %3278 = vmatprep.subr.bf16.mxu0 0
      %3279 = vmatpush1.bf16.msra.mxu0 %v3256
      %3280 = vmatprep.subr.bf16.mxu0 0
      %3281 = vmatpush1.bf16.msra.mxu0 %v3257
      %3282 = vmatprep.subr.bf16.mxu0 0
      %3283 = vmatpush1.bf16.msra.mxu0 0
      %3284 = vmatprep.subr.bf16.mxu0 0
      %3285 = vmatpush1.bf16.msra.mxu0 0
      %3286 = vmatprep.subr.bf16.mxu0 0
      %3287 = vmatpush1.bf16.msra.mxu0 0
      %3288 = vmatprep.subr.bf16.mxu0 0
      %3289 = vmatpush1.bf16.msra.mxu0 0
      %3290 = vmatprep.subr.bf16.mxu0 0
      %3291 = vmatpush1.bf16.msra.mxu0 0
      %3292 = vmatprep.subr.bf16.mxu0 0
      %3293 = vmatpush1.bf16.msra.mxu0 0
      %3294 = vmatprep.subr.bf16.mxu0 0
      %3295 = vmatpush1.bf16.msra.mxu0 0
      %3296 = vmatprep.subr.bf16.mxu0 0
      %3297 = vmatpush1.bf16.msra.mxu0 0
      %3298 = vmatprep.mubr.bf16.mxu0 0
      %3299 = vmatmul.mubr.bf16.gmra.mrb[0].mxu0 %v3066
      %v3300 = vpop.f32.mrb[0].mxu0
      %v3301 = vadd.f32 0.0, %v3300
      %v3302 = vpop.f32.mrb[0].mxu0
      %v3303 = vpop.f32.mrb[0].mxu0
      %v3304 = vadd.f32 0.0, %v3303
      %v3305 = vpop.f32.mrb[0].mxu0
      %3306 = vmatprep.mubr.bf16.mxu0 0
      %3307 = vmatmul.mubr.bf16.gmra.mrb[0].mxu0 %v3075
      %v3308 = vpop.f32.mrb[0].mxu0
      %v3309 = vadd.f32 0.0, %v3308
      %v3310 = vpop.f32.mrb[0].mxu0
      %v3311 = vpop.f32.mrb[0].mxu0
      %v3312 = vadd.f32 0.0, %v3311
      %v3313 = vpop.f32.mrb[0].mxu0
      %3314 = vmatprep.mubr.bf16.mxu0 0
      %3315 = vmatmul.mubr.bf16.gmra.mrb[0].mxu0 %v3084
      %v3316 = vpop.f32.mrb[0].mxu0
      %v3317 = vadd.f32 0.0, %v3316
      %v3318 = vpop.f32.mrb[0].mxu0
      %v3319 = vpop.f32.mrb[0].mxu0
      %v3320 = vadd.f32 0.0, %v3319
      %v3321 = vpop.f32.mrb[0].mxu0
      %3322 = vmatprep.mubr.bf16.mxu0 0
      %3323 = vmatmul.mubr.bf16.gmra.mrb[0].mxu0 %v3093
      %v3324 = vpop.f32.mrb[0].mxu0
      %v3325 = vadd.f32 0.0, %v3324
      %v3326 = vpop.f32.mrb[0].mxu0
      %v3327 = vpop.f32.mrb[0].mxu0
      %v3328 = vadd.f32 0.0, %v3327
      %v3329 = vpop.f32.mrb[0].mxu0
      %3330 = vmatprep.mubr.bf16.mxu0 0
      %3331 = vmatmul.mubr.bf16.gmra.mrb[0].mxu0 %v3102
      %v3332 = vpop.f32.mrb[0].mxu0
      %v3333 = vadd.f32 0.0, %v3332
      %v3334 = vpop.f32.mrb[0].mxu0
      %v3335 = vpop.f32.mrb[0].mxu0
      %v3336 = vadd.f32 0.0, %v3335
      %v3337 = vpop.f32.mrb[0].mxu0
      %3338 = vmatprep.mubr.bf16.mxu0 0
      %3339 = vmatmul.mubr.bf16.gmra.mrb[0].mxu0 %v3111
      %v3340 = vpop.f32.mrb[0].mxu0
      %v3341 = vadd.f32 0.0, %v3340
      %v3342 = vpop.f32.mrb[0].mxu0
      %v3343 = vpop.f32.mrb[0].mxu0
      %v3344 = vadd.f32 0.0, %v3343
      %v3345 = vpop.f32.mrb[0].mxu0
      %3346 = vmatprep.mubr.bf16.mxu0 0
      %3347 = vmatmul.mubr.bf16.gmra.mrb[0].mxu0 %v3120
      %v3348 = vpop.f32.mrb[0].mxu0
      %v3349 = vadd.f32 0.0, %v3348
      %v3350 = vpop.f32.mrb[0].mxu0
      %v3351 = vpop.f32.mrb[0].mxu0
      %v3352 = vadd.f32 0.0, %v3351
      %v3353 = vpop.f32.mrb[0].mxu0
      %3354 = vmatprep.mubr.bf16.mxu0 0
      %3355 = vmatmul.mubr.bf16.gmra.mrb[0].mxu0 %v3129
      %v3356 = vpop.f32.mrb[0].mxu0
      %v3357 = vadd.f32 0.0, %v3356
      %v3358 = vpop.f32.mrb[0].mxu0
      %v3359 = vpop.f32.mrb[0].mxu0
      %v3360 = vadd.f32 0.0, %v3359
      %v3361 = vpop.f32.mrb[0].mxu0
      %3362 = vmatprep.mubr.bf16.mxu0 0
      %3363 = vmatmul.mubr.bf16.gmra.mrb[0].mxu0 %v3138
      %v3364 = vpop.f32.mrb[0].mxu0
      %v3365 = vadd.f32 0.0, %v3364
      %v3366 = vpop.f32.mrb[0].mxu0
      %v3367 = vpop.f32.mrb[0].mxu0
      %v3368 = vadd.f32 0.0, %v3367
      %v3369 = vpop.f32.mrb[0].mxu0
      %3370 = vmatprep.mubr.bf16.mxu0 0
      %3371 = vmatmul.mubr.bf16.gmra.mrb[0].mxu0 %v3147
      %v3372 = vpop.f32.mrb[0].mxu0
      %v3373 = vadd.f32 0.0, %v3372
      %v3374 = vpop.f32.mrb[0].mxu0
      %v3375 = vpop.f32.mrb[0].mxu0
      %v3376 = vadd.f32 0.0, %v3375
      %v3377 = vpop.f32.mrb[0].mxu0
      %3378 = vmatprep.mubr.bf16.mxu0 0
      %3379 = vmatmul.mubr.bf16.gmra.mrb[0].mxu0 %v3156
      %v3380 = vpop.f32.mrb[0].mxu0
      %v3381 = vadd.f32 0.0, %v3380
      %v3382 = vpop.f32.mrb[0].mxu0
      %v3383 = vpop.f32.mrb[0].mxu0
      %v3384 = vadd.f32 0.0, %v3383
      %v3385 = vpop.f32.mrb[0].mxu0
      %3386 = vmatprep.mubr.bf16.mxu0 0
      %3387 = vmatmul.mubr.bf16.gmra.mrb[0].mxu0 %v3165
      %v3388 = vpop.f32.mrb[0].mxu0
      %v3389 = vadd.f32 0.0, %v3388
      %v3390 = vpop.f32.mrb[0].mxu0
      %v3391 = vpop.f32.mrb[0].mxu0
      %v3392 = vadd.f32 0.0, %v3391
      %v3393 = vpop.f32.mrb[0].mxu0
      %3394 = vmatprep.mubr.bf16.mxu0 0
      %3395 = vmatmul.mubr.bf16.gmra.mrb[0].mxu0 %v3174
      %v3396 = vpop.f32.mrb[0].mxu0
      %v3397 = vadd.f32 0.0, %v3396
      %v3398 = vpop.f32.mrb[0].mxu0
      %v3399 = vpop.f32.mrb[0].mxu0
      %v3400 = vadd.f32 0.0, %v3399
      %v3401 = vpop.f32.mrb[0].mxu0
      %3402 = vmatprep.mubr.bf16.mxu0 0
      %3403 = vmatmul.mubr.bf16.gmra.mrb[0].mxu0 %v3183
      %v3404 = vpop.f32.mrb[0].mxu0
      %v3405 = vadd.f32 0.0, %v3404
      %v3406 = vpop.f32.mrb[0].mxu0
      %v3407 = vpop.f32.mrb[0].mxu0
      %v3408 = vadd.f32 0.0, %v3407
      %v3409 = vpop.f32.mrb[0].mxu0
      %3410 = vmatprep.mubr.bf16.mxu0 0
      %3411 = vmatmul.mubr.bf16.gmra.mrb[0].mxu0 %v3192
      %v3412 = vpop.f32.mrb[0].mxu0
      %v3413 = vadd.f32 0.0, %v3412
      %v3414 = vpop.f32.mrb[0].mxu0
      %v3415 = vpop.f32.mrb[0].mxu0
      %v3416 = vadd.f32 0.0, %v3415
      %v3417 = vpop.f32.mrb[0].mxu0
      %3418 = vmatprep.mubr.bf16.mxu0 0
      %3419 = vmatmul.mubr.bf16.gmra.mrb[0].mxu0 %v3201
      %v3420 = vpop.f32.mrb[0].mxu0
      %v3421 = vadd.f32 0.0, %v3420
      %v3422 = vpop.f32.mrb[0].mxu0
      %v3423 = vpop.f32.mrb[0].mxu0
      %v3424 = vadd.f32 0.0, %v3423
      %v3425 = vpop.f32.mrb[0].mxu0
      %3426 = vdwg.mxu0
      %v3427 = vadd.f32 %v2729, %v3301
      %v3428 = vadd.f32 %v2732, %v3304
      %v3429 = vadd.f32 %v2737, %v3309
      %v3430 = vadd.f32 %v2740, %v3312
      %v3431 = vadd.f32 %v2745, %v3317
      %v3432 = vadd.f32 %v2748, %v3320
      %v3433 = vadd.f32 %v2753, %v3325
      %v3434 = vadd.f32 %v2756, %v3328
      %v3435 = vadd.f32 %v2761, %v3333
      %v3436 = vadd.f32 %v2764, %v3336
      %v3437 = vadd.f32 %v2769, %v3341
      %v3438 = vadd.f32 %v2772, %v3344
      %v3439 = vadd.f32 %v2777, %v3349
      %v3440 = vadd.f32 %v2780, %v3352
      %v3441 = vadd.f32 %v2785, %v3357
      %v3442 = vadd.f32 %v2788, %v3360
      %v3443 = vadd.f32 %v2793, %v3365
      %v3444 = vadd.f32 %v2796, %v3368
      %v3445 = vadd.f32 %v2801, %v3373
      %v3446 = vadd.f32 %v2804, %v3376
      %v3447 = vadd.f32 %v2809, %v3381
      %v3448 = vadd.f32 %v2812, %v3384
      %v3449 = vadd.f32 %v2817, %v3389
      %v3450 = vadd.f32 %v2820, %v3392
      %v3451 = vadd.f32 %v2825, %v3397
      %v3452 = vadd.f32 %v2828, %v3400
      %v3453 = vadd.f32 %v2833, %v3405
      %v3454 = vadd.f32 %v2836, %v3408
      %v3455 = vadd.f32 %v2841, %v3413
      %v3456 = vadd.f32 %v2844, %v3416
      %v3457 = vadd.f32 %v2849, %v3421
      %v3458 = vadd.f32 %v2852, %v3424
      %v3459 = vld [vmem:[#allocation2 + $0x8] sm:$0xf8]
      %v3460 = vld [vmem:[#allocation2 + $0x10] sm:$0xff]
      %v3461 = vld [vmem:[#allocation2 + $0x18] sm:$0xff]
      %v3462 = vld [vmem:[#allocation2 + $0x20] sm:$0xff]
      %v3463 = vld [vmem:[#allocation2 + $0x28] sm:$0xff]
      %v3464 = vld [vmem:[#allocation2 + $0x30] sm:$0xff]
      %v3465 = vld [vmem:[#allocation2 + $0x38] sm:$0xff]
      %v3466 = vld [vmem:[#allocation2 + $0x40] sm:$0xff]
      %v3467 = vld [vmem:[#allocation2 + $0x48] sm:$0xff]
      %v3468 = vld [vmem:[#allocation2 + $0x50] sm:$0xff]
      %v3469 = vld [vmem:[#allocation2 + $0x58] sm:$0xff]
      %v3470 = vld [vmem:[#allocation2 + $0x60] sm:$0xff]
      %v3471 = vld [vmem:[#allocation2 + $0x68] sm:$0xff]
      %v3472 = vld [vmem:[#allocation2 + $0x70] sm:$0xff]
      %v3473 = vld [vmem:[#allocation2 + $0x78] sm:$0xff]
      %v3474 = vld [vmem:[#allocation2 + $0x80] sm:$0xff]
      %v3475 = vld [vmem:[#allocation2 + $0x88] sm:$0xf]
      %v3476 = vmul.bf16 %v3459, %v1998
      %v3477 = vmul.bf16 %v3460, %v2007
      %v3478 = vmul.bf16 %v3461, %v2016
      %v3479 = vmul.bf16 %v3462, %v2025
      %v3480 = vmul.bf16 %v3463, %v2034
      %v3481 = vmul.bf16 %v3464, %v2043
      %v3482 = vmul.bf16 %v3465, %v2052
      %v3483 = vmul.bf16 %v3466, %v2061
      %v3484 = vmul.bf16 %v3467, %v2070
      %v3485 = vmul.bf16 %v3468, %v2079
      %v3486 = vmul.bf16 %v3469, %v2088
      %v3487 = vmul.bf16 %v3470, %v2097
      %v3488 = vmul.bf16 %v3471, %v2106
      %v3489 = vmul.bf16 %v3472, %v2115
      %v3490 = vmul.bf16 %v3473, %v2124
      %v3491 = vmul.bf16 %v3474, %v2133
      %v3492 = vmul.bf16 %v3475, %v2132
      %s3493 = scalar_lea.vmem %s5, 192
      %v3494 = vld [vmem:[%s3493] sm:$0xf]
      %v3495 = vld [vmem:[%s3493 + $0x4] sm:$0xf]
      %v3496 = vld [vmem:[%s3493 + $0x8] sm:$0xf]
      %v3497 = vld [vmem:[%s3493 + $0xc] sm:$0xf]
      %v3498 = vld [vmem:[%s3493 + $0x10] sm:$0xf]
      %v3499 = vld [vmem:[%s3493 + $0x14] sm:$0xf]
      %v3500 = vld [vmem:[%s3493 + $0x18] sm:$0xf]
      %v3501 = vld [vmem:[%s3493 + $0x1c] sm:$0xf]
      %v3502 = vld [vmem:[%s3493 + $0x20] sm:$0xf]
      %v3503 = vld [vmem:[%s3493 + $0x24] sm:$0xf]
      %v3504 = vld [vmem:[%s3493 + $0x28] sm:$0xf]
      %v3505 = vld [vmem:[%s3493 + $0x2c] sm:$0xf]
      %v3506 = vld [vmem:[%s3493 + $0x30] sm:$0xf]
      %v3507 = vld [vmem:[%s3493 + $0x34] sm:$0xf]
      %v3508 = vld [vmem:[%s3493 + $0x38] sm:$0xf]
      %v3509 = vld [vmem:[%s3493 + $0x3c] sm:$0xf]
      %v3511 = vshrl.u32 %v3476, 16
      %v3513 = vrot.slane %v3511, 3
      %v3514 = vshll.u32 %v3476, 16
      %v3516 = vrot.slane %v3514, 4
      %v3517 = vor.u32 %v3513, %v3516
      %v3519 = vshrl.u32 %v3477, 16
      %v3521 = vrot.slane %v3519, 3
      %v3522 = vshll.u32 %v3477, 16
      %v3524 = vrot.slane %v3522, 4
      %v3525 = vor.u32 %v3521, %v3524
      %v3526 = vsel %vm2477, %v3517, %v3525
      %v3528 = vshrl.u32 %v3478, 16
      %v3530 = vrot.slane %v3528, 3
      %v3531 = vshll.u32 %v3478, 16
      %v3533 = vrot.slane %v3531, 4
      %v3534 = vor.u32 %v3530, %v3533
      %v3535 = vsel %vm2477, %v3525, %v3534
      %v3537 = vshrl.u32 %v3479, 16
      %v3539 = vrot.slane %v3537, 3
      %v3540 = vshll.u32 %v3479, 16
      %v3542 = vrot.slane %v3540, 4
      %v3543 = vor.u32 %v3539, %v3542
      %v3544 = vsel %vm2477, %v3534, %v3543
      %v3546 = vshrl.u32 %v3480, 16
      %v3548 = vrot.slane %v3546, 3
      %v3549 = vshll.u32 %v3480, 16
      %v3551 = vrot.slane %v3549, 4
      %v3552 = vor.u32 %v3548, %v3551
      %v3553 = vsel %vm2477, %v3543, %v3552
      %v3555 = vshrl.u32 %v3481, 16
      %v3557 = vrot.slane %v3555, 3
      %v3558 = vshll.u32 %v3481, 16
      %v3560 = vrot.slane %v3558, 4
      %v3561 = vor.u32 %v3557, %v3560
      %v3562 = vsel %vm2477, %v3552, %v3561
      %v3564 = vshrl.u32 %v3482, 16
      %v3566 = vrot.slane %v3564, 3
      %v3567 = vshll.u32 %v3482, 16
      %v3569 = vrot.slane %v3567, 4
      %v3570 = vor.u32 %v3566, %v3569
      %v3571 = vsel %vm2477, %v3561, %v3570
      %v3573 = vshrl.u32 %v3483, 16
      %v3575 = vrot.slane %v3573, 3
      %v3576 = vshll.u32 %v3483, 16
      %v3578 = vrot.slane %v3576, 4
      %v3579 = vor.u32 %v3575, %v3578
      %v3580 = vsel %vm2477, %v3570, %v3579
      %v3582 = vshrl.u32 %v3484, 16
      %v3584 = vrot.slane %v3582, 3
      %v3585 = vshll.u32 %v3484, 16
      %v3587 = vrot.slane %v3585, 4
      %v3588 = vor.u32 %v3584, %v3587
      %v3589 = vsel %vm2477, %v3579, %v3588
      %v3591 = vshrl.u32 %v3485, 16
      %v3593 = vrot.slane %v3591, 3
      %v3594 = vshll.u32 %v3485, 16
      %v3596 = vrot.slane %v3594, 4
      %v3597 = vor.u32 %v3593, %v3596
      %v3598 = vsel %vm2477, %v3588, %v3597
      %v3600 = vshrl.u32 %v3486, 16
      %v3602 = vrot.slane %v3600, 3
      %v3603 = vshll.u32 %v3486, 16
      %v3605 = vrot.slane %v3603, 4
      %v3606 = vor.u32 %v3602, %v3605
      %v3607 = vsel %vm2477, %v3597, %v3606
      %v3609 = vshrl.u32 %v3487, 16
      %v3611 = vrot.slane %v3609, 3
      %v3612 = vshll.u32 %v3487, 16
      %v3614 = vrot.slane %v3612, 4
      %v3615 = vor.u32 %v3611, %v3614
      %v3616 = vsel %vm2477, %v3606, %v3615
      %v3618 = vshrl.u32 %v3488, 16
      %v3620 = vrot.slane %v3618, 3
      %v3621 = vshll.u32 %v3488, 16
      %v3623 = vrot.slane %v3621, 4
      %v3624 = vor.u32 %v3620, %v3623
      %v3625 = vsel %vm2477, %v3615, %v3624
      %v3627 = vshrl.u32 %v3489, 16
      %v3629 = vrot.slane %v3627, 3
      %v3630 = vshll.u32 %v3489, 16
      %v3632 = vrot.slane %v3630, 4
      %v3633 = vor.u32 %v3629, %v3632
      %v3634 = vsel %vm2477, %v3624, %v3633
      %v3636 = vshrl.u32 %v3490, 16
      %v3638 = vrot.slane %v3636, 3
      %v3639 = vshll.u32 %v3490, 16
      %v3641 = vrot.slane %v3639, 4
      %v3642 = vor.u32 %v3638, %v3641
      %v3643 = vsel %vm2477, %v3633, %v3642
      %v3645 = vshrl.u32 %v3491, 16
      %v3647 = vrot.slane %v3645, 3
      %v3648 = vshll.u32 %v3491, 16
      %v3650 = vrot.slane %v3648, 4
      %v3651 = vor.u32 %v3647, %v3650
      %v3652 = vsel %vm2477, %v3642, %v3651
      %v3654 = vshrl.u32 %v3492, 16
      %v3656 = vrot.slane %v3654, 3
      %v3657 = vshll.u32 %v3492, 16
      %v3659 = vrot.slane %v3657, 4
      %v3660 = vor.u32 %v3656, %v3659
      %v3661 = vsel %vm2477, %v3651, %v3660
      %v3694 = vunpack.c.l.b16 %v3494
      %v3695 = vunpack.c.l.b16 %v3495
      %v3696 = vunpack.c.l.b16 %v3496
      %v3697 = vunpack.c.l.b16 %v3497
      %v3698 = vunpack.c.l.b16 %v3498
      %v3699 = vunpack.c.l.b16 %v3499
      %v3700 = vunpack.c.l.b16 %v3500
      %v3701 = vunpack.c.l.b16 %v3501
      %v3702 = vunpack.c.l.b16 %v3502
      %v3703 = vunpack.c.l.b16 %v3503
      %v3704 = vunpack.c.l.b16 %v3504
      %v3705 = vunpack.c.l.b16 %v3505
      %v3706 = vunpack.c.l.b16 %v3506
      %v3707 = vunpack.c.l.b16 %v3507
      %v3708 = vunpack.c.l.b16 %v3508
      %v3709 = vunpack.c.l.b16 %v3509
      %v3710 = vpack.c.b16 %v3695, %v3694
      %v3711 = vpack.c.b16 %v3697, %v3696
      %v3712 = vpack.c.b16 %v3699, %v3698
      %v3713 = vpack.c.b16 %v3701, %v3700
      %v3714 = vpack.c.b16 %v3703, %v3702
      %v3715 = vpack.c.b16 %v3705, %v3704
      %v3716 = vpack.c.b16 %v3707, %v3706
      %v3717 = vpack.c.b16 %v3709, %v3708
      %3726 = vmatprep.subr.bf16.mxu0 0
      %3727 = vmatpush1.bf16.msra.mxu0 %v3710
      %3728 = vmatprep.subr.bf16.mxu0 0
      %3729 = vmatpush1.bf16.msra.mxu0 %v3711
      %3730 = vmatprep.subr.bf16.mxu0 0
      %3731 = vmatpush1.bf16.msra.mxu0 %v3712
      %3732 = vmatprep.subr.bf16.mxu0 0
      %3733 = vmatpush1.bf16.msra.mxu0 %v3713
      %3734 = vmatprep.subr.bf16.mxu0 0
      %3735 = vmatpush1.bf16.msra.mxu0 %v3714
      %3736 = vmatprep.subr.bf16.mxu0 0
      %3737 = vmatpush1.bf16.msra.mxu0 %v3715
      %3738 = vmatprep.subr.bf16.mxu0 0
      %3739 = vmatpush1.bf16.msra.mxu0 %v3716
      %3740 = vmatprep.subr.bf16.mxu0 0
      %3741 = vmatpush1.bf16.msra.mxu0 %v3717
      %3742 = vmatprep.subr.bf16.mxu0 0
      %3743 = vmatpush1.bf16.msra.mxu0 0
      %3744 = vmatprep.subr.bf16.mxu0 0
      %3745 = vmatpush1.bf16.msra.mxu0 0
      %3746 = vmatprep.subr.bf16.mxu0 0
      %3747 = vmatpush1.bf16.msra.mxu0 0
      %3748 = vmatprep.subr.bf16.mxu0 0
      %3749 = vmatpush1.bf16.msra.mxu0 0
      %3750 = vmatprep.subr.bf16.mxu0 0
      %3751 = vmatpush1.bf16.msra.mxu0 0
      %3752 = vmatprep.subr.bf16.mxu0 0
      %3753 = vmatpush1.bf16.msra.mxu0 0
      %3754 = vmatprep.subr.bf16.mxu0 0
      %3755 = vmatpush1.bf16.msra.mxu0 0
      %3756 = vmatprep.subr.bf16.mxu0 0
      %3757 = vmatpush1.bf16.msra.mxu0 0
      %3758 = vmatprep.mubr.bf16.mxu0 0
      %3759 = vmatmul.mubr.bf16.gmra.mrb[0].mxu0 %v3526
      %v3760 = vpop.f32.mrb[0].mxu0
      %v3761 = vadd.f32 0.0, %v3760
      %v3762 = vpop.f32.mrb[0].mxu0
      %v3763 = vpop.f32.mrb[0].mxu0
      %v3764 = vadd.f32 0.0, %v3763
      %v3765 = vpop.f32.mrb[0].mxu0
      %3766 = vmatprep.mubr.bf16.mxu0 0
      %3767 = vmatmul.mubr.bf16.gmra.mrb[0].mxu0 %v3535
      %v3768 = vpop.f32.mrb[0].mxu0
      %v3769 = vadd.f32 0.0, %v3768
      %v3770 = vpop.f32.mrb[0].mxu0
      %v3771 = vpop.f32.mrb[0].mxu0
      %v3772 = vadd.f32 0.0, %v3771
      %v3773 = vpop.f32.mrb[0].mxu0
      %3774 = vmatprep.mubr.bf16.mxu0 0
      %3775 = vmatmul.mubr.bf16.gmra.mrb[0].mxu0 %v3544
      %v3776 = vpop.f32.mrb[0].mxu0
      %v3777 = vadd.f32 0.0, %v3776
      %v3778 = vpop.f32.mrb[0].mxu0
      %v3779 = vpop.f32.mrb[0].mxu0
      %v3780 = vadd.f32 0.0, %v3779
      %v3781 = vpop.f32.mrb[0].mxu0
      %3782 = vmatprep.mubr.bf16.mxu0 0
      %3783 = vmatmul.mubr.bf16.gmra.mrb[0].mxu0 %v3553
      %v3784 = vpop.f32.mrb[0].mxu0
      %v3785 = vadd.f32 0.0, %v3784
      %v3786 = vpop.f32.mrb[0].mxu0
      %v3787 = vpop.f32.mrb[0].mxu0
      %v3788 = vadd.f32 0.0, %v3787
      %v3789 = vpop.f32.mrb[0].mxu0
      %3790 = vmatprep.mubr.bf16.mxu0 0
      %3791 = vmatmul.mubr.bf16.gmra.mrb[0].mxu0 %v3562
      %v3792 = vpop.f32.mrb[0].mxu0
      %v3793 = vadd.f32 0.0, %v3792
      %v3794 = vpop.f32.mrb[0].mxu0
      %v3795 = vpop.f32.mrb[0].mxu0
      %v3796 = vadd.f32 0.0, %v3795
      %v3797 = vpop.f32.mrb[0].mxu0
      %3798 = vmatprep.mubr.bf16.mxu0 0
      %3799 = vmatmul.mubr.bf16.gmra.mrb[0].mxu0 %v3571
      %v3800 = vpop.f32.mrb[0].mxu0
      %v3801 = vadd.f32 0.0, %v3800
      %v3802 = vpop.f32.mrb[0].mxu0
      %v3803 = vpop.f32.mrb[0].mxu0
      %v3804 = vadd.f32 0.0, %v3803
      %v3805 = vpop.f32.mrb[0].mxu0
      %3806 = vmatprep.mubr.bf16.mxu0 0
      %3807 = vmatmul.mubr.bf16.gmra.mrb[0].mxu0 %v3580
      %v3808 = vpop.f32.mrb[0].mxu0
      %v3809 = vadd.f32 0.0, %v3808
      %v3810 = vpop.f32.mrb[0].mxu0
      %v3811 = vpop.f32.mrb[0].mxu0
      %v3812 = vadd.f32 0.0, %v3811
      %v3813 = vpop.f32.mrb[0].mxu0
      %3814 = vmatprep.mubr.bf16.mxu0 0
      %3815 = vmatmul.mubr.bf16.gmra.mrb[0].mxu0 %v3589
      %v3816 = vpop.f32.mrb[0].mxu0
      %v3817 = vadd.f32 0.0, %v3816
      %v3818 = vpop.f32.mrb[0].mxu0
      %v3819 = vpop.f32.mrb[0].mxu0
      %v3820 = vadd.f32 0.0, %v3819
      %v3821 = vpop.f32.mrb[0].mxu0
      %3822 = vmatprep.mubr.bf16.mxu0 0
      %3823 = vmatmul.mubr.bf16.gmra.mrb[0].mxu0 %v3598
      %v3824 = vpop.f32.mrb[0].mxu0
      %v3825 = vadd.f32 0.0, %v3824
      %v3826 = vpop.f32.mrb[0].mxu0
      %v3827 = vpop.f32.mrb[0].mxu0
      %v3828 = vadd.f32 0.0, %v3827
      %v3829 = vpop.f32.mrb[0].mxu0
      %3830 = vmatprep.mubr.bf16.mxu0 0
      %3831 = vmatmul.mubr.bf16.gmra.mrb[0].mxu0 %v3607
      %v3832 = vpop.f32.mrb[0].mxu0
      %v3833 = vadd.f32 0.0, %v3832
      %v3834 = vpop.f32.mrb[0].mxu0
      %v3835 = vpop.f32.mrb[0].mxu0
      %v3836 = vadd.f32 0.0, %v3835
      %v3837 = vpop.f32.mrb[0].mxu0
      %3838 = vmatprep.mubr.bf16.mxu0 0
      %3839 = vmatmul.mubr.bf16.gmra.mrb[0].mxu0 %v3616
      %v3840 = vpop.f32.mrb[0].mxu0
      %v3841 = vadd.f32 0.0, %v3840
      %v3842 = vpop.f32.mrb[0].mxu0
      %v3843 = vpop.f32.mrb[0].mxu0
      %v3844 = vadd.f32 0.0, %v3843
      %v3845 = vpop.f32.mrb[0].mxu0
      %3846 = vmatprep.mubr.bf16.mxu0 0
      %3847 = vmatmul.mubr.bf16.gmra.mrb[0].mxu0 %v3625
      %v3848 = vpop.f32.mrb[0].mxu0
      %v3849 = vadd.f32 0.0, %v3848
      %v3850 = vpop.f32.mrb[0].mxu0
      %v3851 = vpop.f32.mrb[0].mxu0
      %v3852 = vadd.f32 0.0, %v3851
      %v3853 = vpop.f32.mrb[0].mxu0
      %3854 = vmatprep.mubr.bf16.mxu0 0
      %3855 = vmatmul.mubr.bf16.gmra.mrb[0].mxu0 %v3634
      %v3856 = vpop.f32.mrb[0].mxu0
      %v3857 = vadd.f32 0.0, %v3856
      %v3858 = vpop.f32.mrb[0].mxu0
      %v3859 = vpop.f32.mrb[0].mxu0
      %v3860 = vadd.f32 0.0, %v3859
      %v3861 = vpop.f32.mrb[0].mxu0
      %3862 = vmatprep.mubr.bf16.mxu0 0
      %3863 = vmatmul.mubr.bf16.gmra.mrb[0].mxu0 %v3643
      %v3864 = vpop.f32.mrb[0].mxu0
      %v3865 = vadd.f32 0.0, %v3864
      %v3866 = vpop.f32.mrb[0].mxu0
      %v3867 = vpop.f32.mrb[0].mxu0
      %v3868 = vadd.f32 0.0, %v3867
      %v3869 = vpop.f32.mrb[0].mxu0
      %3870 = vmatprep.mubr.bf16.mxu0 0
      %3871 = vmatmul.mubr.bf16.gmra.mrb[0].mxu0 %v3652
      %v3872 = vpop.f32.mrb[0].mxu0
      %v3873 = vadd.f32 0.0, %v3872
      %v3874 = vpop.f32.mrb[0].mxu0
      %v3875 = vpop.f32.mrb[0].mxu0
      %v3876 = vadd.f32 0.0, %v3875
      %v3877 = vpop.f32.mrb[0].mxu0
      %3878 = vmatprep.mubr.bf16.mxu0 0
      %3879 = vmatmul.mubr.bf16.gmra.mrb[0].mxu0 %v3661
      %v3880 = vpop.f32.mrb[0].mxu0
      %v3881 = vadd.f32 0.0, %v3880
      %v3882 = vpop.f32.mrb[0].mxu0
      %v3883 = vpop.f32.mrb[0].mxu0
      %v3884 = vadd.f32 0.0, %v3883
      %v3885 = vpop.f32.mrb[0].mxu0
      %3886 = vdwg.mxu0
      %v3887 = vadd.f32 %v3427, %v3761
      %v3888 = vadd.f32 %v3428, %v3764
      %v3889 = vadd.f32 %v3429, %v3769
      %v3890 = vadd.f32 %v3430, %v3772
      %v3891 = vadd.f32 %v3431, %v3777
      %v3892 = vadd.f32 %v3432, %v3780
      %v3893 = vadd.f32 %v3433, %v3785
      %v3894 = vadd.f32 %v3434, %v3788
      %v3895 = vadd.f32 %v3435, %v3793
      %v3896 = vadd.f32 %v3436, %v3796
      %v3897 = vadd.f32 %v3437, %v3801
      %v3898 = vadd.f32 %v3438, %v3804
      %v3899 = vadd.f32 %v3439, %v3809
      %v3900 = vadd.f32 %v3440, %v3812
      %v3901 = vadd.f32 %v3441, %v3817
      %v3902 = vadd.f32 %v3442, %v3820
      %v3903 = vadd.f32 %v3443, %v3825
      %v3904 = vadd.f32 %v3444, %v3828
      %v3905 = vadd.f32 %v3445, %v3833
      %v3906 = vadd.f32 %v3446, %v3836
      %v3907 = vadd.f32 %v3447, %v3841
      %v3908 = vadd.f32 %v3448, %v3844
      %v3909 = vadd.f32 %v3449, %v3849
      %v3910 = vadd.f32 %v3450, %v3852
      %v3911 = vadd.f32 %v3451, %v3857
      %v3912 = vadd.f32 %v3452, %v3860
      %v3913 = vadd.f32 %v3453, %v3865
      %v3914 = vadd.f32 %v3454, %v3868
      %v3915 = vadd.f32 %v3455, %v3873
      %v3916 = vadd.f32 %v3456, %v3876
      %v3917 = vadd.f32 %v3457, %v3881
      %v3918 = vadd.f32 %v3458, %v3884
      %v3919 = vld [vmem:[#allocation2 + $0x8] sm:$0xf0]
      %s3920 = scalar_lea.vmem %s5, 256
      %v3921 = vld [vmem:[%s3920] sm:$0xf]
      %v3922 = vld [vmem:[%s3920 + $0x4] sm:$0xf]
      %v3923 = vld [vmem:[%s3920 + $0x8] sm:$0xf]
      %v3924 = vld [vmem:[%s3920 + $0xc] sm:$0xf]
      %v3925 = vld [vmem:[%s3920 + $0x10] sm:$0xf]
      %v3926 = vld [vmem:[%s3920 + $0x14] sm:$0xf]
      %v3927 = vld [vmem:[%s3920 + $0x18] sm:$0xf]
      %v3928 = vld [vmem:[%s3920 + $0x1c] sm:$0xf]
      %v3929 = vld [vmem:[%s3920 + $0x20] sm:$0xf]
      %v3930 = vld [vmem:[%s3920 + $0x24] sm:$0xf]
      %v3931 = vld [vmem:[%s3920 + $0x28] sm:$0xf]
      %v3932 = vld [vmem:[%s3920 + $0x2c] sm:$0xf]
      %v3933 = vld [vmem:[%s3920 + $0x30] sm:$0xf]
      %v3934 = vld [vmem:[%s3920 + $0x34] sm:$0xf]
      %v3935 = vld [vmem:[%s3920 + $0x38] sm:$0xf]
      %v3936 = vld [vmem:[%s3920 + $0x3c] sm:$0xf]
      %v3954 = vrot.slane %v3919, 4
      %v3955 = vrot.slane %v3460, 4
      %v3956 = vsel %vm1266, %v3954, %v3955
      %v3957 = vrot.slane %v3461, 4
      %v3958 = vsel %vm1266, %v3955, %v3957
      %v3959 = vrot.slane %v3462, 4
      %v3960 = vsel %vm1266, %v3957, %v3959
      %v3961 = vrot.slane %v3463, 4
      %v3962 = vsel %vm1266, %v3959, %v3961
      %v3963 = vrot.slane %v3464, 4
      %v3964 = vsel %vm1266, %v3961, %v3963
      %v3965 = vrot.slane %v3465, 4
      %v3966 = vsel %vm1266, %v3963, %v3965
      %v3967 = vrot.slane %v3466, 4
      %v3968 = vsel %vm1266, %v3965, %v3967
      %v3969 = vrot.slane %v3467, 4
      %v3970 = vsel %vm1266, %v3967, %v3969
      %v3971 = vrot.slane %v3468, 4
      %v3972 = vsel %vm1266, %v3969, %v3971
      %v3973 = vrot.slane %v3469, 4
      %v3974 = vsel %vm1266, %v3971, %v3973
      %v3975 = vrot.slane %v3470, 4
      %v3976 = vsel %vm1266, %v3973, %v3975
      %v3977 = vrot.slane %v3471, 4
      %v3978 = vsel %vm1266, %v3975, %v3977
      %v3979 = vrot.slane %v3472, 4
      %v3980 = vsel %vm1266, %v3977, %v3979
      %v3981 = vrot.slane %v3473, 4
      %v3982 = vsel %vm1266, %v3979, %v3981
      %v3983 = vrot.slane %v3474, 4
      %v3984 = vsel %vm1266, %v3981, %v3983
      %v3985 = vrot.slane %v3475, 4
      %v3986 = vsel %vm1266, %v3983, %v3985
      %v4019 = vunpack.c.l.b16 %v3921
      %v4020 = vunpack.c.l.b16 %v3922
      %v4021 = vunpack.c.l.b16 %v3923
      %v4022 = vunpack.c.l.b16 %v3924
      %v4023 = vunpack.c.l.b16 %v3925
      %v4024 = vunpack.c.l.b16 %v3926
      %v4025 = vunpack.c.l.b16 %v3927
      %v4026 = vunpack.c.l.b16 %v3928
      %v4027 = vunpack.c.l.b16 %v3929
      %v4028 = vunpack.c.l.b16 %v3930
      %v4029 = vunpack.c.l.b16 %v3931
      %v4030 = vunpack.c.l.b16 %v3932
      %v4031 = vunpack.c.l.b16 %v3933
      %v4032 = vunpack.c.l.b16 %v3934
      %v4033 = vunpack.c.l.b16 %v3935
      %v4034 = vunpack.c.l.b16 %v3936
      %v4035 = vpack.c.b16 %v4020, %v4019
      %v4036 = vpack.c.b16 %v4022, %v4021
      %v4037 = vpack.c.b16 %v4024, %v4023
      %v4038 = vpack.c.b16 %v4026, %v4025
      %v4039 = vpack.c.b16 %v4028, %v4027
      %v4040 = vpack.c.b16 %v4030, %v4029
      %v4041 = vpack.c.b16 %v4032, %v4031
      %v4042 = vpack.c.b16 %v4034, %v4033
      %4051 = vmatprep.subr.bf16.mxu0 0
      %4052 = vmatpush1.bf16.msra.mxu0 %v4035
      %4053 = vmatprep.subr.bf16.mxu0 0
      %4054 = vmatpush1.bf16.msra.mxu0 %v4036
      %4055 = vmatprep.subr.bf16.mxu0 0
      %4056 = vmatpush1.bf16.msra.mxu0 %v4037
      %4057 = vmatprep.subr.bf16.mxu0 0
      %4058 = vmatpush1.bf16.msra.mxu0 %v4038
      %4059 = vmatprep.subr.bf16.mxu0 0
      %4060 = vmatpush1.bf16.msra.mxu0 %v4039
      %4061 = vmatprep.subr.bf16.mxu0 0
      %4062 = vmatpush1.bf16.msra.mxu0 %v4040
      %4063 = vmatprep.subr.bf16.mxu0 0
      %4064 = vmatpush1.bf16.msra.mxu0 %v4041
      %4065 = vmatprep.subr.bf16.mxu0 0
      %4066 = vmatpush1.bf16.msra.mxu0 %v4042
      %4067 = vmatprep.subr.bf16.mxu0 0
      %4068 = vmatpush1.bf16.msra.mxu0 0
      %4069 = vmatprep.subr.bf16.mxu0 0
      %4070 = vmatpush1.bf16.msra.mxu0 0
      %4071 = vmatprep.subr.bf16.mxu0 0
      %4072 = vmatpush1.bf16.msra.mxu0 0
      %4073 = vmatprep.subr.bf16.mxu0 0
      %4074 = vmatpush1.bf16.msra.mxu0 0
      %4075 = vmatprep.subr.bf16.mxu0 0
      %4076 = vmatpush1.bf16.msra.mxu0 0
      %4077 = vmatprep.subr.bf16.mxu0 0
      %4078 = vmatpush1.bf16.msra.mxu0 0
      %4079 = vmatprep.subr.bf16.mxu0 0
      %4080 = vmatpush1.bf16.msra.mxu0 0
      %4081 = vmatprep.subr.bf16.mxu0 0
      %4082 = vmatpush1.bf16.msra.mxu0 0
      %4083 = vmatprep.mubr.bf16.mxu0 0
      %4084 = vmatmul.mubr.bf16.gmra.mrb[0].mxu0 %v3956
      %v4085 = vpop.f32.mrb[0].mxu0
      %v4086 = vadd.f32 0.0, %v4085
      %v4087 = vpop.f32.mrb[0].mxu0
      %v4088 = vpop.f32.mrb[0].mxu0
      %v4089 = vadd.f32 0.0, %v4088
      %v4090 = vpop.f32.mrb[0].mxu0
      %4091 = vmatprep.mubr.bf16.mxu0 0
      %4092 = vmatmul.mubr.bf16.gmra.mrb[0].mxu0 %v3958
      %v4093 = vpop.f32.mrb[0].mxu0
      %v4094 = vadd.f32 0.0, %v4093
      %v4095 = vpop.f32.mrb[0].mxu0
      %v4096 = vpop.f32.mrb[0].mxu0
      %v4097 = vadd.f32 0.0, %v4096
      %v4098 = vpop.f32.mrb[0].mxu0
      %4099 = vmatprep.mubr.bf16.mxu0 0
      %4100 = vmatmul.mubr.bf16.gmra.mrb[0].mxu0 %v3960
      %v4101 = vpop.f32.mrb[0].mxu0
      %v4102 = vadd.f32 0.0, %v4101
      %v4103 = vpop.f32.mrb[0].mxu0
      %v4104 = vpop.f32.mrb[0].mxu0
      %v4105 = vadd.f32 0.0, %v4104
      %v4106 = vpop.f32.mrb[0].mxu0
      %4107 = vmatprep.mubr.bf16.mxu0 0
      %4108 = vmatmul.mubr.bf16.gmra.mrb[0].mxu0 %v3962
      %v4109 = vpop.f32.mrb[0].mxu0
      %v4110 = vadd.f32 0.0, %v4109
      %v4111 = vpop.f32.mrb[0].mxu0
      %v4112 = vpop.f32.mrb[0].mxu0
      %v4113 = vadd.f32 0.0, %v4112
      %v4114 = vpop.f32.mrb[0].mxu0
      %4115 = vmatprep.mubr.bf16.mxu0 0
      %4116 = vmatmul.mubr.bf16.gmra.mrb[0].mxu0 %v3964
      %v4117 = vpop.f32.mrb[0].mxu0
      %v4118 = vadd.f32 0.0, %v4117
      %v4119 = vpop.f32.mrb[0].mxu0
      %v4120 = vpop.f32.mrb[0].mxu0
      %v4121 = vadd.f32 0.0, %v4120
      %v4122 = vpop.f32.mrb[0].mxu0
      %4123 = vmatprep.mubr.bf16.mxu0 0
      %4124 = vmatmul.mubr.bf16.gmra.mrb[0].mxu0 %v3966
      %v4125 = vpop.f32.mrb[0].mxu0
      %v4126 = vadd.f32 0.0, %v4125
      %v4127 = vpop.f32.mrb[0].mxu0
      %v4128 = vpop.f32.mrb[0].mxu0
      %v4129 = vadd.f32 0.0, %v4128
      %v4130 = vpop.f32.mrb[0].mxu0
      %4131 = vmatprep.mubr.bf16.mxu0 0
      %4132 = vmatmul.mubr.bf16.gmra.mrb[0].mxu0 %v3968
      %v4133 = vpop.f32.mrb[0].mxu0
      %v4134 = vadd.f32 0.0, %v4133
      %v4135 = vpop.f32.mrb[0].mxu0
      %v4136 = vpop.f32.mrb[0].mxu0
      %v4137 = vadd.f32 0.0, %v4136
      %v4138 = vpop.f32.mrb[0].mxu0
      %4139 = vmatprep.mubr.bf16.mxu0 0
      %4140 = vmatmul.mubr.bf16.gmra.mrb[0].mxu0 %v3970
      %v4141 = vpop.f32.mrb[0].mxu0
      %v4142 = vadd.f32 0.0, %v4141
      %v4143 = vpop.f32.mrb[0].mxu0
      %v4144 = vpop.f32.mrb[0].mxu0
      %v4145 = vadd.f32 0.0, %v4144
      %v4146 = vpop.f32.mrb[0].mxu0
      %4147 = vmatprep.mubr.bf16.mxu0 0
      %4148 = vmatmul.mubr.bf16.gmra.mrb[0].mxu0 %v3972
      %v4149 = vpop.f32.mrb[0].mxu0
      %v4150 = vadd.f32 0.0, %v4149
      %v4151 = vpop.f32.mrb[0].mxu0
      %v4152 = vpop.f32.mrb[0].mxu0
      %v4153 = vadd.f32 0.0, %v4152
      %v4154 = vpop.f32.mrb[0].mxu0
      %4155 = vmatprep.mubr.bf16.mxu0 0
      %4156 = vmatmul.mubr.bf16.gmra.mrb[0].mxu0 %v3974
      %v4157 = vpop.f32.mrb[0].mxu0
      %v4158 = vadd.f32 0.0, %v4157
      %v4159 = vpop.f32.mrb[0].mxu0
      %v4160 = vpop.f32.mrb[0].mxu0
      %v4161 = vadd.f32 0.0, %v4160
      %v4162 = vpop.f32.mrb[0].mxu0
      %4163 = vmatprep.mubr.bf16.mxu0 0
      %4164 = vmatmul.mubr.bf16.gmra.mrb[0].mxu0 %v3976
      %v4165 = vpop.f32.mrb[0].mxu0
      %v4166 = vadd.f32 0.0, %v4165
      %v4167 = vpop.f32.mrb[0].mxu0
      %v4168 = vpop.f32.mrb[0].mxu0
      %v4169 = vadd.f32 0.0, %v4168
      %v4170 = vpop.f32.mrb[0].mxu0
      %4171 = vmatprep.mubr.bf16.mxu0 0
      %4172 = vmatmul.mubr.bf16.gmra.mrb[0].mxu0 %v3978
      %v4173 = vpop.f32.mrb[0].mxu0
      %v4174 = vadd.f32 0.0, %v4173
      %v4175 = vpop.f32.mrb[0].mxu0
      %v4176 = vpop.f32.mrb[0].mxu0
      %v4177 = vadd.f32 0.0, %v4176
      %v4178 = vpop.f32.mrb[0].mxu0
      %4179 = vmatprep.mubr.bf16.mxu0 0
      %4180 = vmatmul.mubr.bf16.gmra.mrb[0].mxu0 %v3980
      %v4181 = vpop.f32.mrb[0].mxu0
      %v4182 = vadd.f32 0.0, %v4181
      %v4183 = vpop.f32.mrb[0].mxu0
      %v4184 = vpop.f32.mrb[0].mxu0
      %v4185 = vadd.f32 0.0, %v4184
      %v4186 = vpop.f32.mrb[0].mxu0
      %4187 = vmatprep.mubr.bf16.mxu0 0
      %4188 = vmatmul.mubr.bf16.gmra.mrb[0].mxu0 %v3982
      %v4189 = vpop.f32.mrb[0].mxu0
      %v4190 = vadd.f32 0.0, %v4189
      %v4191 = vpop.f32.mrb[0].mxu0
      %v4192 = vpop.f32.mrb[0].mxu0
      %v4193 = vadd.f32 0.0, %v4192
      %v4194 = vpop.f32.mrb[0].mxu0
      %4195 = vmatprep.mubr.bf16.mxu0 0
      %4196 = vmatmul.mubr.bf16.gmra.mrb[0].mxu0 %v3984
      %v4197 = vpop.f32.mrb[0].mxu0
      %v4198 = vadd.f32 0.0, %v4197
      %v4199 = vpop.f32.mrb[0].mxu0
      %v4200 = vpop.f32.mrb[0].mxu0
      %v4201 = vadd.f32 0.0, %v4200
      %v4202 = vpop.f32.mrb[0].mxu0
      %4203 = vmatprep.mubr.bf16.mxu0 0
      %4204 = vmatmul.mubr.bf16.gmra.mrb[0].mxu0 %v3986
      %v4205 = vpop.f32.mrb[0].mxu0
      %v4206 = vadd.f32 0.0, %v4205
      %v4207 = vpop.f32.mrb[0].mxu0
      %v4208 = vpop.f32.mrb[0].mxu0
      %v4209 = vadd.f32 0.0, %v4208
      %v4210 = vpop.f32.mrb[0].mxu0
      %4211 = vdwg.mxu0
      %v4212 = vadd.f32 %v3887, %v4086
      %v4213 = vadd.f32 %v3888, %v4089
      %v4214 = vadd.f32 %v3889, %v4094
      %v4215 = vadd.f32 %v3890, %v4097
      %v4216 = vadd.f32 %v3891, %v4102
      %v4217 = vadd.f32 %v3892, %v4105
      %v4218 = vadd.f32 %v3893, %v4110
      %v4219 = vadd.f32 %v3894, %v4113
      %v4220 = vadd.f32 %v3895, %v4118
      %v4221 = vadd.f32 %v3896, %v4121
      %v4222 = vadd.f32 %v3897, %v4126
      %v4223 = vadd.f32 %v3898, %v4129
      %v4224 = vadd.f32 %v3899, %v4134
      %v4225 = vadd.f32 %v3900, %v4137
      %v4226 = vadd.f32 %v3901, %v4142
      %v4227 = vadd.f32 %v3902, %v4145
      %v4228 = vadd.f32 %v3903, %v4150
      %v4229 = vadd.f32 %v3904, %v4153
      %v4230 = vadd.f32 %v3905, %v4158
      %v4231 = vadd.f32 %v3906, %v4161
      %v4232 = vadd.f32 %v3907, %v4166
      %v4233 = vadd.f32 %v3908, %v4169
      %v4234 = vadd.f32 %v3909, %v4174
      %v4235 = vadd.f32 %v3910, %v4177
      %v4236 = vadd.f32 %v3911, %v4182
      %v4237 = vadd.f32 %v3912, %v4185
      %v4238 = vadd.f32 %v3913, %v4190
      %v4239 = vadd.f32 %v3914, %v4193
      %v4240 = vadd.f32 %v3915, %v4198
      %v4241 = vadd.f32 %v3916, %v4201
      %v4242 = vadd.f32 %v3917, %v4206
      %v4243 = vadd.f32 %v3918, %v4209
      %v4244 = vld [vmem:[#allocation2 + $0x88] sm:$0x1f]
      %v4245 = vmul.bf16 %v3919, %v2863
      %v4246 = vmul.bf16 %v3460, %v2872
      %v4247 = vmul.bf16 %v3461, %v2881
      %v4248 = vmul.bf16 %v3462, %v2890
      %v4249 = vmul.bf16 %v3463, %v2899
      %v4250 = vmul.bf16 %v3464, %v2908
      %v4251 = vmul.bf16 %v3465, %v2917
      %v4252 = vmul.bf16 %v3466, %v2926
      %v4253 = vmul.bf16 %v3467, %v2935
      %v4254 = vmul.bf16 %v3468, %v2944
      %v4255 = vmul.bf16 %v3469, %v2953
      %v4256 = vmul.bf16 %v3470, %v2962
      %v4257 = vmul.bf16 %v3471, %v2971
      %v4258 = vmul.bf16 %v3472, %v2980
      %v4259 = vmul.bf16 %v3473, %v2989
      %v4260 = vmul.bf16 %v3474, %v2998
      %v4261 = vmul.bf16 %v4244, %v2997
      %s4262 = scalar_lea.vmem %s5, 320
      %v4263 = vld [vmem:[%s4262] sm:$0xf]
      %v4264 = vld [vmem:[%s4262 + $0x4] sm:$0xf]
      %v4265 = vld [vmem:[%s4262 + $0x8] sm:$0xf]
      %v4266 = vld [vmem:[%s4262 + $0xc] sm:$0xf]
      %v4267 = vld [vmem:[%s4262 + $0x10] sm:$0xf]
      %v4268 = vld [vmem:[%s4262 + $0x14] sm:$0xf]
      %v4269 = vld [vmem:[%s4262 + $0x18] sm:$0xf]
      %v4270 = vld [vmem:[%s4262 + $0x1c] sm:$0xf]
      %v4271 = vld [vmem:[%s4262 + $0x20] sm:$0xf]
      %v4272 = vld [vmem:[%s4262 + $0x24] sm:$0xf]
      %v4273 = vld [vmem:[%s4262 + $0x28] sm:$0xf]
      %v4274 = vld [vmem:[%s4262 + $0x2c] sm:$0xf]
      %v4275 = vld [vmem:[%s4262 + $0x30] sm:$0xf]
      %v4276 = vld [vmem:[%s4262 + $0x34] sm:$0xf]
      %v4277 = vld [vmem:[%s4262 + $0x38] sm:$0xf]
      %v4278 = vld [vmem:[%s4262 + $0x3c] sm:$0xf]
      %v4280 = vshrl.u32 %v4245, 16
      %v4282 = vrot.slane %v4280, 4
      %v4283 = vshll.u32 %v4245, 16
      %v4285 = vrot.slane %v4283, 5
      %v4286 = vor.u32 %v4282, %v4285
      %v4288 = vshrl.u32 %v4246, 16
      %v4290 = vrot.slane %v4288, 4
      %v4291 = vshll.u32 %v4246, 16
      %v4293 = vrot.slane %v4291, 5
      %v4294 = vor.u32 %v4290, %v4293
      %v4295 = vsel %vm1990, %v4286, %v4294
      %v4297 = vshrl.u32 %v4247, 16
      %v4299 = vrot.slane %v4297, 4
      %v4300 = vshll.u32 %v4247, 16
      %v4302 = vrot.slane %v4300, 5
      %v4303 = vor.u32 %v4299, %v4302
      %v4304 = vsel %vm1990, %v4294, %v4303
      %v4306 = vshrl.u32 %v4248, 16
      %v4308 = vrot.slane %v4306, 4
      %v4309 = vshll.u32 %v4248, 16
      %v4311 = vrot.slane %v4309, 5
      %v4312 = vor.u32 %v4308, %v4311
      %v4313 = vsel %vm1990, %v4303, %v4312
      %v4315 = vshrl.u32 %v4249, 16
      %v4317 = vrot.slane %v4315, 4
      %v4318 = vshll.u32 %v4249, 16
      %v4320 = vrot.slane %v4318, 5
      %v4321 = vor.u32 %v4317, %v4320
      %v4322 = vsel %vm1990, %v4312, %v4321
      %v4324 = vshrl.u32 %v4250, 16
      %v4326 = vrot.slane %v4324, 4
      %v4327 = vshll.u32 %v4250, 16
      %v4329 = vrot.slane %v4327, 5
      %v4330 = vor.u32 %v4326, %v4329
      %v4331 = vsel %vm1990, %v4321, %v4330
      %v4333 = vshrl.u32 %v4251, 16
      %v4335 = vrot.slane %v4333, 4
      %v4336 = vshll.u32 %v4251, 16
      %v4338 = vrot.slane %v4336, 5
      %v4339 = vor.u32 %v4335, %v4338
      %v4340 = vsel %vm1990, %v4330, %v4339
      %v4342 = vshrl.u32 %v4252, 16
      %v4344 = vrot.slane %v4342, 4
      %v4345 = vshll.u32 %v4252, 16
      %v4347 = vrot.slane %v4345, 5
      %v4348 = vor.u32 %v4344, %v4347
      %v4349 = vsel %vm1990, %v4339, %v4348
      %v4351 = vshrl.u32 %v4253, 16
      %v4353 = vrot.slane %v4351, 4
      %v4354 = vshll.u32 %v4253, 16
      %v4356 = vrot.slane %v4354, 5
      %v4357 = vor.u32 %v4353, %v4356
      %v4358 = vsel %vm1990, %v4348, %v4357
      %v4360 = vshrl.u32 %v4254, 16
      %v4362 = vrot.slane %v4360, 4
      %v4363 = vshll.u32 %v4254, 16
      %v4365 = vrot.slane %v4363, 5
      %v4366 = vor.u32 %v4362, %v4365
      %v4367 = vsel %vm1990, %v4357, %v4366
      %v4369 = vshrl.u32 %v4255, 16
      %v4371 = vrot.slane %v4369, 4
      %v4372 = vshll.u32 %v4255, 16
      %v4374 = vrot.slane %v4372, 5
      %v4375 = vor.u32 %v4371, %v4374
      %v4376 = vsel %vm1990, %v4366, %v4375
      %v4378 = vshrl.u32 %v4256, 16
      %v4380 = vrot.slane %v4378, 4
      %v4381 = vshll.u32 %v4256, 16
      %v4383 = vrot.slane %v4381, 5
      %v4384 = vor.u32 %v4380, %v4383
      %v4385 = vsel %vm1990, %v4375, %v4384
      %v4387 = vshrl.u32 %v4257, 16
      %v4389 = vrot.slane %v4387, 4
      %v4390 = vshll.u32 %v4257, 16
      %v4392 = vrot.slane %v4390, 5
      %v4393 = vor.u32 %v4389, %v4392
      %v4394 = vsel %vm1990, %v4384, %v4393
      %v4396 = vshrl.u32 %v4258, 16
      %v4398 = vrot.slane %v4396, 4
      %v4399 = vshll.u32 %v4258, 16
      %v4401 = vrot.slane %v4399, 5
      %v4402 = vor.u32 %v4398, %v4401
      %v4403 = vsel %vm1990, %v4393, %v4402
      %v4405 = vshrl.u32 %v4259, 16
      %v4407 = vrot.slane %v4405, 4
      %v4408 = vshll.u32 %v4259, 16
      %v4410 = vrot.slane %v4408, 5
      %v4411 = vor.u32 %v4407, %v4410
      %v4412 = vsel %vm1990, %v4402, %v4411
      %v4414 = vshrl.u32 %v4260, 16
      %v4416 = vrot.slane %v4414, 4
      %v4417 = vshll.u32 %v4260, 16
      %v4419 = vrot.slane %v4417, 5
      %v4420 = vor.u32 %v4416, %v4419
      %v4421 = vsel %vm1990, %v4411, %v4420
      %v4423 = vshrl.u32 %v4261, 16
      %v4425 = vrot.slane %v4423, 4
      %v4426 = vshll.u32 %v4261, 16
      %v4428 = vrot.slane %v4426, 5
      %v4429 = vor.u32 %v4425, %v4428
      %v4430 = vsel %vm1990, %v4420, %v4429
      %v4463 = vunpack.c.l.b16 %v4263
      %v4464 = vunpack.c.l.b16 %v4264
      %v4465 = vunpack.c.l.b16 %v4265
      %v4466 = vunpack.c.l.b16 %v4266
      %v4467 = vunpack.c.l.b16 %v4267
      %v4468 = vunpack.c.l.b16 %v4268
      %v4469 = vunpack.c.l.b16 %v4269
      %v4470 = vunpack.c.l.b16 %v4270
      %v4471 = vunpack.c.l.b16 %v4271
      %v4472 = vunpack.c.l.b16 %v4272
      %v4473 = vunpack.c.l.b16 %v4273
      %v4474 = vunpack.c.l.b16 %v4274
      %v4475 = vunpack.c.l.b16 %v4275
      %v4476 = vunpack.c.l.b16 %v4276
      %v4477 = vunpack.c.l.b16 %v4277
      %v4478 = vunpack.c.l.b16 %v4278
      %v4479 = vpack.c.b16 %v4464, %v4463
      %v4480 = vpack.c.b16 %v4466, %v4465
      %v4481 = vpack.c.b16 %v4468, %v4467
      %v4482 = vpack.c.b16 %v4470, %v4469
      %v4483 = vpack.c.b16 %v4472, %v4471
      %v4484 = vpack.c.b16 %v4474, %v4473
      %v4485 = vpack.c.b16 %v4476, %v4475
      %v4486 = vpack.c.b16 %v4478, %v4477
      %4495 = vmatprep.subr.bf16.mxu0 0
      %4496 = vmatpush1.bf16.msra.mxu0 %v4479
      %4497 = vmatprep.subr.bf16.mxu0 0
      %4498 = vmatpush1.bf16.msra.mxu0 %v4480
      %4499 = vmatprep.subr.bf16.mxu0 0
      %4500 = vmatpush1.bf16.msra.mxu0 %v4481
      %4501 = vmatprep.subr.bf16.mxu0 0
      %4502 = vmatpush1.bf16.msra.mxu0 %v4482
      %4503 = vmatprep.subr.bf16.mxu0 0
      %4504 = vmatpush1.bf16.msra.mxu0 %v4483
      %4505 = vmatprep.subr.bf16.mxu0 0
      %4506 = vmatpush1.bf16.msra.mxu0 %v4484
      %4507 = vmatprep.subr.bf16.mxu0 0
      %4508 = vmatpush1.bf16.msra.mxu0 %v4485
      %4509 = vmatprep.subr.bf16.mxu0 0
      %4510 = vmatpush1.bf16.msra.mxu0 %v4486
      %4511 = vmatprep.subr.bf16.mxu0 0
      %4512 = vmatpush1.bf16.msra.mxu0 0
      %4513 = vmatprep.subr.bf16.mxu0 0
      %4514 = vmatpush1.bf16.msra.mxu0 0
      %4515 = vmatprep.subr.bf16.mxu0 0
      %4516 = vmatpush1.bf16.msra.mxu0 0
      %4517 = vmatprep.subr.bf16.mxu0 0
      %4518 = vmatpush1.bf16.msra.mxu0 0
      %4519 = vmatprep.subr.bf16.mxu0 0
      %4520 = vmatpush1.bf16.msra.mxu0 0
      %4521 = vmatprep.subr.bf16.mxu0 0
      %4522 = vmatpush1.bf16.msra.mxu0 0
      %4523 = vmatprep.subr.bf16.mxu0 0
      %4524 = vmatpush1.bf16.msra.mxu0 0
      %4525 = vmatprep.subr.bf16.mxu0 0
      %4526 = vmatpush1.bf16.msra.mxu0 0
      %4527 = vmatprep.mubr.bf16.mxu0 0
      %4528 = vmatmul.mubr.bf16.gmra.mrb[0].mxu0 %v4295
      %v4529 = vpop.f32.mrb[0].mxu0
      %v4530 = vadd.f32 0.0, %v4529
      %v4531 = vpop.f32.mrb[0].mxu0
      %v4532 = vpop.f32.mrb[0].mxu0
      %v4533 = vadd.f32 0.0, %v4532
      %v4534 = vpop.f32.mrb[0].mxu0
      %4535 = vmatprep.mubr.bf16.mxu0 0
      %4536 = vmatmul.mubr.bf16.gmra.mrb[0].mxu0 %v4304
      %v4537 = vpop.f32.mrb[0].mxu0
      %v4538 = vadd.f32 0.0, %v4537
      %v4539 = vpop.f32.mrb[0].mxu0
      %v4540 = vpop.f32.mrb[0].mxu0
      %v4541 = vadd.f32 0.0, %v4540
      %v4542 = vpop.f32.mrb[0].mxu0
      %4543 = vmatprep.mubr.bf16.mxu0 0
      %4544 = vmatmul.mubr.bf16.gmra.mrb[0].mxu0 %v4313
      %v4545 = vpop.f32.mrb[0].mxu0
      %v4546 = vadd.f32 0.0, %v4545
      %v4547 = vpop.f32.mrb[0].mxu0
      %v4548 = vpop.f32.mrb[0].mxu0
      %v4549 = vadd.f32 0.0, %v4548
      %v4550 = vpop.f32.mrb[0].mxu0
      %4551 = vmatprep.mubr.bf16.mxu0 0
      %4552 = vmatmul.mubr.bf16.gmra.mrb[0].mxu0 %v4322
      %v4553 = vpop.f32.mrb[0].mxu0
      %v4554 = vadd.f32 0.0, %v4553
      %v4555 = vpop.f32.mrb[0].mxu0
      %v4556 = vpop.f32.mrb[0].mxu0
      %v4557 = vadd.f32 0.0, %v4556
      %v4558 = vpop.f32.mrb[0].mxu0
      %4559 = vmatprep.mubr.bf16.mxu0 0
      %4560 = vmatmul.mubr.bf16.gmra.mrb[0].mxu0 %v4331
      %v4561 = vpop.f32.mrb[0].mxu0
      %v4562 = vadd.f32 0.0, %v4561
      %v4563 = vpop.f32.mrb[0].mxu0
      %v4564 = vpop.f32.mrb[0].mxu0
      %v4565 = vadd.f32 0.0, %v4564
      %v4566 = vpop.f32.mrb[0].mxu0
      %4567 = vmatprep.mubr.bf16.mxu0 0
      %4568 = vmatmul.mubr.bf16.gmra.mrb[0].mxu0 %v4340
      %v4569 = vpop.f32.mrb[0].mxu0
      %v4570 = vadd.f32 0.0, %v4569
      %v4571 = vpop.f32.mrb[0].mxu0
      %v4572 = vpop.f32.mrb[0].mxu0
      %v4573 = vadd.f32 0.0, %v4572
      %v4574 = vpop.f32.mrb[0].mxu0
      %4575 = vmatprep.mubr.bf16.mxu0 0
      %4576 = vmatmul.mubr.bf16.gmra.mrb[0].mxu0 %v4349
      %v4577 = vpop.f32.mrb[0].mxu0
      %v4578 = vadd.f32 0.0, %v4577
      %v4579 = vpop.f32.mrb[0].mxu0
      %v4580 = vpop.f32.mrb[0].mxu0
      %v4581 = vadd.f32 0.0, %v4580
      %v4582 = vpop.f32.mrb[0].mxu0
      %4583 = vmatprep.mubr.bf16.mxu0 0
      %4584 = vmatmul.mubr.bf16.gmra.mrb[0].mxu0 %v4358
      %v4585 = vpop.f32.mrb[0].mxu0
      %v4586 = vadd.f32 0.0, %v4585
      %v4587 = vpop.f32.mrb[0].mxu0
      %v4588 = vpop.f32.mrb[0].mxu0
      %v4589 = vadd.f32 0.0, %v4588
      %v4590 = vpop.f32.mrb[0].mxu0
      %4591 = vmatprep.mubr.bf16.mxu0 0
      %4592 = vmatmul.mubr.bf16.gmra.mrb[0].mxu0 %v4367
      %v4593 = vpop.f32.mrb[0].mxu0
      %v4594 = vadd.f32 0.0, %v4593
      %v4595 = vpop.f32.mrb[0].mxu0
      %v4596 = vpop.f32.mrb[0].mxu0
      %v4597 = vadd.f32 0.0, %v4596
      %v4598 = vpop.f32.mrb[0].mxu0
      %4599 = vmatprep.mubr.bf16.mxu0 0
      %4600 = vmatmul.mubr.bf16.gmra.mrb[0].mxu0 %v4376
      %v4601 = vpop.f32.mrb[0].mxu0
      %v4602 = vadd.f32 0.0, %v4601
      %v4603 = vpop.f32.mrb[0].mxu0
      %v4604 = vpop.f32.mrb[0].mxu0
      %v4605 = vadd.f32 0.0, %v4604
      %v4606 = vpop.f32.mrb[0].mxu0
      %4607 = vmatprep.mubr.bf16.mxu0 0
      %4608 = vmatmul.mubr.bf16.gmra.mrb[0].mxu0 %v4385
      %v4609 = vpop.f32.mrb[0].mxu0
      %v4610 = vadd.f32 0.0, %v4609
      %v4611 = vpop.f32.mrb[0].mxu0
      %v4612 = vpop.f32.mrb[0].mxu0
      %v4613 = vadd.f32 0.0, %v4612
      %v4614 = vpop.f32.mrb[0].mxu0
      %4615 = vmatprep.mubr.bf16.mxu0 0
      %4616 = vmatmul.mubr.bf16.gmra.mrb[0].mxu0 %v4394
      %v4617 = vpop.f32.mrb[0].mxu0
      %v4618 = vadd.f32 0.0, %v4617
      %v4619 = vpop.f32.mrb[0].mxu0
      %v4620 = vpop.f32.mrb[0].mxu0
      %v4621 = vadd.f32 0.0, %v4620
      %v4622 = vpop.f32.mrb[0].mxu0
      %4623 = vmatprep.mubr.bf16.mxu0 0
      %4624 = vmatmul.mubr.bf16.gmra.mrb[0].mxu0 %v4403
      %v4625 = vpop.f32.mrb[0].mxu0
      %v4626 = vadd.f32 0.0, %v4625
      %v4627 = vpop.f32.mrb[0].mxu0
      %v4628 = vpop.f32.mrb[0].mxu0
      %v4629 = vadd.f32 0.0, %v4628
      %v4630 = vpop.f32.mrb[0].mxu0
      %4631 = vmatprep.mubr.bf16.mxu0 0
      %4632 = vmatmul.mubr.bf16.gmra.mrb[0].mxu0 %v4412
      %v4633 = vpop.f32.mrb[0].mxu0
      %v4634 = vadd.f32 0.0, %v4633
      %v4635 = vpop.f32.mrb[0].mxu0
      %v4636 = vpop.f32.mrb[0].mxu0
      %v4637 = vadd.f32 0.0, %v4636
      %v4638 = vpop.f32.mrb[0].mxu0
      %4639 = vmatprep.mubr.bf16.mxu0 0
      %4640 = vmatmul.mubr.bf16.gmra.mrb[0].mxu0 %v4421
      %v4641 = vpop.f32.mrb[0].mxu0
      %v4642 = vadd.f32 0.0, %v4641
      %v4643 = vpop.f32.mrb[0].mxu0
      %v4644 = vpop.f32.mrb[0].mxu0
      %v4645 = vadd.f32 0.0, %v4644
      %v4646 = vpop.f32.mrb[0].mxu0
      %4647 = vmatprep.mubr.bf16.mxu0 0
      %4648 = vmatmul.mubr.bf16.gmra.mrb[0].mxu0 %v4430
      %v4649 = vpop.f32.mrb[0].mxu0
      %v4650 = vadd.f32 0.0, %v4649
      %v4651 = vpop.f32.mrb[0].mxu0
      %v4652 = vpop.f32.mrb[0].mxu0
      %v4653 = vadd.f32 0.0, %v4652
      %v4654 = vpop.f32.mrb[0].mxu0
      %4655 = vdwg.mxu0
      %v4656 = vadd.f32 %v4212, %v4530
      %v4657 = vadd.f32 %v4213, %v4533
      %v4658 = vadd.f32 %v4214, %v4538
      %v4659 = vadd.f32 %v4215, %v4541
      %v4660 = vadd.f32 %v4216, %v4546
      %v4661 = vadd.f32 %v4217, %v4549
      %v4662 = vadd.f32 %v4218, %v4554
      %v4663 = vadd.f32 %v4219, %v4557
      %v4664 = vadd.f32 %v4220, %v4562
      %v4665 = vadd.f32 %v4221, %v4565
      %v4666 = vadd.f32 %v4222, %v4570
      %v4667 = vadd.f32 %v4223, %v4573
      %v4668 = vadd.f32 %v4224, %v4578
      %v4669 = vadd.f32 %v4225, %v4581
      %v4670 = vadd.f32 %v4226, %v4586
      %v4671 = vadd.f32 %v4227, %v4589
      %v4672 = vadd.f32 %v4228, %v4594
      %v4673 = vadd.f32 %v4229, %v4597
      %v4674 = vadd.f32 %v4230, %v4602
      %v4675 = vadd.f32 %v4231, %v4605
      %v4676 = vadd.f32 %v4232, %v4610
      %v4677 = vadd.f32 %v4233, %v4613
      %v4678 = vadd.f32 %v4234, %v4618
      %v4679 = vadd.f32 %v4235, %v4621
      %v4680 = vadd.f32 %v4236, %v4626
      %v4681 = vadd.f32 %v4237, %v4629
      %v4682 = vadd.f32 %v4238, %v4634
      %v4683 = vadd.f32 %v4239, %v4637
      %v4684 = vadd.f32 %v4240, %v4642
      %v4685 = vadd.f32 %v4241, %v4645
      %v4686 = vadd.f32 %v4242, %v4650
      %v4687 = vadd.f32 %v4243, %v4653
      %v4688 = vld [vmem:[#allocation2 + $0x10] sm:$0xf8]
      %v4689 = vld [vmem:[#allocation2 + $0x18] sm:$0xff]
      %v4690 = vld [vmem:[#allocation2 + $0x20] sm:$0xff]
      %v4691 = vld [vmem:[#allocation2 + $0x28] sm:$0xff]
      %v4692 = vld [vmem:[#allocation2 + $0x30] sm:$0xff]
      %v4693 = vld [vmem:[#allocation2 + $0x38] sm:$0xff]
      %v4694 = vld [vmem:[#allocation2 + $0x40] sm:$0xff]
      %v4695 = vld [vmem:[#allocation2 + $0x48] sm:$0xff]
      %v4696 = vld [vmem:[#allocation2 + $0x50] sm:$0xff]
      %v4697 = vld [vmem:[#allocation2 + $0x58] sm:$0xff]
      %v4698 = vld [vmem:[#allocation2 + $0x60] sm:$0xff]
      %v4699 = vld [vmem:[#allocation2 + $0x68] sm:$0xff]
      %v4700 = vld [vmem:[#allocation2 + $0x70] sm:$0xff]
      %v4701 = vld [vmem:[#allocation2 + $0x78] sm:$0xff]
      %v4702 = vld [vmem:[#allocation2 + $0x80] sm:$0xff]
      %v4703 = vld [vmem:[#allocation2 + $0x88] sm:$0xff]
      %v4704 = vld [vmem:[#allocation2 + $0x90] sm:$0xf]
      %v4705 = vmul.bf16 %v4688, %v1998
      %v4706 = vmul.bf16 %v4689, %v2007
      %v4707 = vmul.bf16 %v4690, %v2016
      %v4708 = vmul.bf16 %v4691, %v2025
      %v4709 = vmul.bf16 %v4692, %v2034
      %v4710 = vmul.bf16 %v4693, %v2043
      %v4711 = vmul.bf16 %v4694, %v2052
      %v4712 = vmul.bf16 %v4695, %v2061
      %v4713 = vmul.bf16 %v4696, %v2070
      %v4714 = vmul.bf16 %v4697, %v2079
      %v4715 = vmul.bf16 %v4698, %v2088
      %v4716 = vmul.bf16 %v4699, %v2097
      %v4717 = vmul.bf16 %v4700, %v2106
      %v4718 = vmul.bf16 %v4701, %v2115
      %v4719 = vmul.bf16 %v4702, %v2124
      %v4720 = vmul.bf16 %v4703, %v2133
      %v4721 = vmul.bf16 %v4704, %v2132
      %s4722 = scalar_lea.vmem %s5, 384
      %v4723 = vld [vmem:[%s4722] sm:$0xf]
      %v4724 = vld [vmem:[%s4722 + $0x4] sm:$0xf]
      %v4725 = vld [vmem:[%s4722 + $0x8] sm:$0xf]
      %v4726 = vld [vmem:[%s4722 + $0xc] sm:$0xf]
      %v4727 = vld [vmem:[%s4722 + $0x10] sm:$0xf]
      %v4728 = vld [vmem:[%s4722 + $0x14] sm:$0xf]
      %v4729 = vld [vmem:[%s4722 + $0x18] sm:$0xf]
      %v4730 = vld [vmem:[%s4722 + $0x1c] sm:$0xf]
      %v4731 = vld [vmem:[%s4722 + $0x20] sm:$0xf]
      %v4732 = vld [vmem:[%s4722 + $0x24] sm:$0xf]
      %v4733 = vld [vmem:[%s4722 + $0x28] sm:$0xf]
      %v4734 = vld [vmem:[%s4722 + $0x2c] sm:$0xf]
      %v4735 = vld [vmem:[%s4722 + $0x30] sm:$0xf]
      %v4736 = vld [vmem:[%s4722 + $0x34] sm:$0xf]
      %v4737 = vld [vmem:[%s4722 + $0x38] sm:$0xf]
      %v4738 = vld [vmem:[%s4722 + $0x3c] sm:$0xf]
      %v4740 = vshrl.u32 %v4705, 16
      %v4742 = vrot.slane %v4740, 3
      %v4743 = vshll.u32 %v4705, 16
      %v4745 = vrot.slane %v4743, 4
      %v4746 = vor.u32 %v4742, %v4745
      %v4748 = vshrl.u32 %v4706, 16
      %v4750 = vrot.slane %v4748, 3
      %v4751 = vshll.u32 %v4706, 16
      %v4753 = vrot.slane %v4751, 4
      %v4754 = vor.u32 %v4750, %v4753
      %v4755 = vsel %vm2477, %v4746, %v4754
      %v4757 = vshrl.u32 %v4707, 16
      %v4759 = vrot.slane %v4757, 3
      %v4760 = vshll.u32 %v4707, 16
      %v4762 = vrot.slane %v4760, 4
      %v4763 = vor.u32 %v4759, %v4762
      %v4764 = vsel %vm2477, %v4754, %v4763
      %v4766 = vshrl.u32 %v4708, 16
      %v4768 = vrot.slane %v4766, 3
      %v4769 = vshll.u32 %v4708, 16
      %v4771 = vrot.slane %v4769, 4
      %v4772 = vor.u32 %v4768, %v4771
      %v4773 = vsel %vm2477, %v4763, %v4772
      %v4775 = vshrl.u32 %v4709, 16
      %v4777 = vrot.slane %v4775, 3
      %v4778 = vshll.u32 %v4709, 16
      %v4780 = vrot.slane %v4778, 4
      %v4781 = vor.u32 %v4777, %v4780
      %v4782 = vsel %vm2477, %v4772, %v4781
      %v4784 = vshrl.u32 %v4710, 16
      %v4786 = vrot.slane %v4784, 3
      %v4787 = vshll.u32 %v4710, 16
      %v4789 = vrot.slane %v4787, 4
      %v4790 = vor.u32 %v4786, %v4789
      %v4791 = vsel %vm2477, %v4781, %v4790
      %v4793 = vshrl.u32 %v4711, 16
      %v4795 = vrot.slane %v4793, 3
      %v4796 = vshll.u32 %v4711, 16
      %v4798 = vrot.slane %v4796, 4
      %v4799 = vor.u32 %v4795, %v4798
      %v4800 = vsel %vm2477, %v4790, %v4799
      %v4802 = vshrl.u32 %v4712, 16
      %v4804 = vrot.slane %v4802, 3
      %v4805 = vshll.u32 %v4712, 16
      %v4807 = vrot.slane %v4805, 4
      %v4808 = vor.u32 %v4804, %v4807
      %v4809 = vsel %vm2477, %v4799, %v4808
      %v4811 = vshrl.u32 %v4713, 16
      %v4813 = vrot.slane %v4811, 3
      %v4814 = vshll.u32 %v4713, 16
      %v4816 = vrot.slane %v4814, 4
      %v4817 = vor.u32 %v4813, %v4816
      %v4818 = vsel %vm2477, %v4808, %v4817
      %v4820 = vshrl.u32 %v4714, 16
      %v4822 = vrot.slane %v4820, 3
      %v4823 = vshll.u32 %v4714, 16
      %v4825 = vrot.slane %v4823, 4
      %v4826 = vor.u32 %v4822, %v4825
      %v4827 = vsel %vm2477, %v4817, %v4826
      %v4829 = vshrl.u32 %v4715, 16
      %v4831 = vrot.slane %v4829, 3
      %v4832 = vshll.u32 %v4715, 16
      %v4834 = vrot.slane %v4832, 4
      %v4835 = vor.u32 %v4831, %v4834
      %v4836 = vsel %vm2477, %v4826, %v4835
      %v4838 = vshrl.u32 %v4716, 16
      %v4840 = vrot.slane %v4838, 3
      %v4841 = vshll.u32 %v4716, 16
      %v4843 = vrot.slane %v4841, 4
      %v4844 = vor.u32 %v4840, %v4843
      %v4845 = vsel %vm2477, %v4835, %v4844
      %v4847 = vshrl.u32 %v4717, 16
      %v4849 = vrot.slane %v4847, 3
      %v4850 = vshll.u32 %v4717, 16
      %v4852 = vrot.slane %v4850, 4
      %v4853 = vor.u32 %v4849, %v4852
      %v4854 = vsel %vm2477, %v4844, %v4853
      %v4856 = vshrl.u32 %v4718, 16
      %v4858 = vrot.slane %v4856, 3
      %v4859 = vshll.u32 %v4718, 16
      %v4861 = vrot.slane %v4859, 4
      %v4862 = vor.u32 %v4858, %v4861
      %v4863 = vsel %vm2477, %v4853, %v4862
      %v4865 = vshrl.u32 %v4719, 16
      %v4867 = vrot.slane %v4865, 3
      %v4868 = vshll.u32 %v4719, 16
      %v4870 = vrot.slane %v4868, 4
      %v4871 = vor.u32 %v4867, %v4870
      %v4872 = vsel %vm2477, %v4862, %v4871
      %v4874 = vshrl.u32 %v4720, 16
      %v4876 = vrot.slane %v4874, 3
      %v4877 = vshll.u32 %v4720, 16
      %v4879 = vrot.slane %v4877, 4
      %v4880 = vor.u32 %v4876, %v4879
      %v4881 = vsel %vm2477, %v4871, %v4880
      %v4883 = vshrl.u32 %v4721, 16
      %v4885 = vrot.slane %v4883, 3
      %v4886 = vshll.u32 %v4721, 16
      %v4888 = vrot.slane %v4886, 4
      %v4889 = vor.u32 %v4885, %v4888
      %v4890 = vsel %vm2477, %v4880, %v4889
      %v4923 = vunpack.c.l.b16 %v4723
      %v4924 = vunpack.c.l.b16 %v4724
      %v4925 = vunpack.c.l.b16 %v4725
      %v4926 = vunpack.c.l.b16 %v4726
      %v4927 = vunpack.c.l.b16 %v4727
      %v4928 = vunpack.c.l.b16 %v4728
      %v4929 = vunpack.c.l.b16 %v4729
      %v4930 = vunpack.c.l.b16 %v4730
      %v4931 = vunpack.c.l.b16 %v4731
      %v4932 = vunpack.c.l.b16 %v4732
      %v4933 = vunpack.c.l.b16 %v4733
      %v4934 = vunpack.c.l.b16 %v4734
      %v4935 = vunpack.c.l.b16 %v4735
      %v4936 = vunpack.c.l.b16 %v4736
      %v4937 = vunpack.c.l.b16 %v4737
      %v4938 = vunpack.c.l.b16 %v4738
      %v4939 = vpack.c.b16 %v4924, %v4923
      %v4940 = vpack.c.b16 %v4926, %v4925
      %v4941 = vpack.c.b16 %v4928, %v4927
      %v4942 = vpack.c.b16 %v4930, %v4929
      %v4943 = vpack.c.b16 %v4932, %v4931
      %v4944 = vpack.c.b16 %v4934, %v4933
      %v4945 = vpack.c.b16 %v4936, %v4935
      %v4946 = vpack.c.b16 %v4938, %v4937
      %4955 = vmatprep.subr.bf16.mxu0 0
      %4956 = vmatpush1.bf16.msra.mxu0 %v4939
      %4957 = vmatprep.subr.bf16.mxu0 0
      %4958 = vmatpush1.bf16.msra.mxu0 %v4940
      %4959 = vmatprep.subr.bf16.mxu0 0
      %4960 = vmatpush1.bf16.msra.mxu0 %v4941
      %4961 = vmatprep.subr.bf16.mxu0 0
      %4962 = vmatpush1.bf16.msra.mxu0 %v4942
      %4963 = vmatprep.subr.bf16.mxu0 0
      %4964 = vmatpush1.bf16.msra.mxu0 %v4943
      %4965 = vmatprep.subr.bf16.mxu0 0
      %4966 = vmatpush1.bf16.msra.mxu0 %v4944
      %4967 = vmatprep.subr.bf16.mxu0 0
      %4968 = vmatpush1.bf16.msra.mxu0 %v4945
      %4969 = vmatprep.subr.bf16.mxu0 0
      %4970 = vmatpush1.bf16.msra.mxu0 %v4946
      %4971 = vmatprep.subr.bf16.mxu0 0
      %4972 = vmatpush1.bf16.msra.mxu0 0
      %4973 = vmatprep.subr.bf16.mxu0 0
      %4974 = vmatpush1.bf16.msra.mxu0 0
      %4975 = vmatprep.subr.bf16.mxu0 0
      %4976 = vmatpush1.bf16.msra.mxu0 0
      %4977 = vmatprep.subr.bf16.mxu0 0
      %4978 = vmatpush1.bf16.msra.mxu0 0
      %4979 = vmatprep.subr.bf16.mxu0 0
      %4980 = vmatpush1.bf16.msra.mxu0 0
      %4981 = vmatprep.subr.bf16.mxu0 0
      %4982 = vmatpush1.bf16.msra.mxu0 0
      %4983 = vmatprep.subr.bf16.mxu0 0
      %4984 = vmatpush1.bf16.msra.mxu0 0
      %4985 = vmatprep.subr.bf16.mxu0 0
      %4986 = vmatpush1.bf16.msra.mxu0 0
      %4987 = vmatprep.mubr.bf16.mxu0 0
      %4988 = vmatmul.mubr.bf16.gmra.mrb[0].mxu0 %v4755
      %v4989 = vpop.f32.mrb[0].mxu0
      %v4990 = vadd.f32 0.0, %v4989
      %v4991 = vpop.f32.mrb[0].mxu0
      %v4992 = vpop.f32.mrb[0].mxu0
      %v4993 = vadd.f32 0.0, %v4992
      %v4994 = vpop.f32.mrb[0].mxu0
      %4995 = vmatprep.mubr.bf16.mxu0 0
      %4996 = vmatmul.mubr.bf16.gmra.mrb[0].mxu0 %v4764
      %v4997 = vpop.f32.mrb[0].mxu0
      %v4998 = vadd.f32 0.0, %v4997
      %v4999 = vpop.f32.mrb[0].mxu0
      %v5000 = vpop.f32.mrb[0].mxu0
      %v5001 = vadd.f32 0.0, %v5000
      %v5002 = vpop.f32.mrb[0].mxu0
      %5003 = vmatprep.mubr.bf16.mxu0 0
      %5004 = vmatmul.mubr.bf16.gmra.mrb[0].mxu0 %v4773
      %v5005 = vpop.f32.mrb[0].mxu0
      %v5006 = vadd.f32 0.0, %v5005
      %v5007 = vpop.f32.mrb[0].mxu0
      %v5008 = vpop.f32.mrb[0].mxu0
      %v5009 = vadd.f32 0.0, %v5008
      %v5010 = vpop.f32.mrb[0].mxu0
      %5011 = vmatprep.mubr.bf16.mxu0 0
      %5012 = vmatmul.mubr.bf16.gmra.mrb[0].mxu0 %v4782
      %v5013 = vpop.f32.mrb[0].mxu0
      %v5014 = vadd.f32 0.0, %v5013
      %v5015 = vpop.f32.mrb[0].mxu0
      %v5016 = vpop.f32.mrb[0].mxu0
      %v5017 = vadd.f32 0.0, %v5016
      %v5018 = vpop.f32.mrb[0].mxu0
      %5019 = vmatprep.mubr.bf16.mxu0 0
      %5020 = vmatmul.mubr.bf16.gmra.mrb[0].mxu0 %v4791
      %v5021 = vpop.f32.mrb[0].mxu0
      %v5022 = vadd.f32 0.0, %v5021
      %v5023 = vpop.f32.mrb[0].mxu0
      %v5024 = vpop.f32.mrb[0].mxu0
      %v5025 = vadd.f32 0.0, %v5024
      %v5026 = vpop.f32.mrb[0].mxu0
      %5027 = vmatprep.mubr.bf16.mxu0 0
      %5028 = vmatmul.mubr.bf16.gmra.mrb[0].mxu0 %v4800
      %v5029 = vpop.f32.mrb[0].mxu0
      %v5030 = vadd.f32 0.0, %v5029
      %v5031 = vpop.f32.mrb[0].mxu0
      %v5032 = vpop.f32.mrb[0].mxu0
      %v5033 = vadd.f32 0.0, %v5032
      %v5034 = vpop.f32.mrb[0].mxu0
      %5035 = vmatprep.mubr.bf16.mxu0 0
      %5036 = vmatmul.mubr.bf16.gmra.mrb[0].mxu0 %v4809
      %v5037 = vpop.f32.mrb[0].mxu0
      %v5038 = vadd.f32 0.0, %v5037
      %v5039 = vpop.f32.mrb[0].mxu0
      %v5040 = vpop.f32.mrb[0].mxu0
      %v5041 = vadd.f32 0.0, %v5040
      %v5042 = vpop.f32.mrb[0].mxu0
      %5043 = vmatprep.mubr.bf16.mxu0 0
      %5044 = vmatmul.mubr.bf16.gmra.mrb[0].mxu0 %v4818
      %v5045 = vpop.f32.mrb[0].mxu0
      %v5046 = vadd.f32 0.0, %v5045
      %v5047 = vpop.f32.mrb[0].mxu0
      %v5048 = vpop.f32.mrb[0].mxu0
      %v5049 = vadd.f32 0.0, %v5048
      %v5050 = vpop.f32.mrb[0].mxu0
      %5051 = vmatprep.mubr.bf16.mxu0 0
      %5052 = vmatmul.mubr.bf16.gmra.mrb[0].mxu0 %v4827
      %v5053 = vpop.f32.mrb[0].mxu0
      %v5054 = vadd.f32 0.0, %v5053
      %v5055 = vpop.f32.mrb[0].mxu0
      %v5056 = vpop.f32.mrb[0].mxu0
      %v5057 = vadd.f32 0.0, %v5056
      %v5058 = vpop.f32.mrb[0].mxu0
      %5059 = vmatprep.mubr.bf16.mxu0 0
      %5060 = vmatmul.mubr.bf16.gmra.mrb[0].mxu0 %v4836
      %v5061 = vpop.f32.mrb[0].mxu0
      %v5062 = vadd.f32 0.0, %v5061
      %v5063 = vpop.f32.mrb[0].mxu0
      %v5064 = vpop.f32.mrb[0].mxu0
      %v5065 = vadd.f32 0.0, %v5064
      %v5066 = vpop.f32.mrb[0].mxu0
      %5067 = vmatprep.mubr.bf16.mxu0 0
      %5068 = vmatmul.mubr.bf16.gmra.mrb[0].mxu0 %v4845
      %v5069 = vpop.f32.mrb[0].mxu0
      %v5070 = vadd.f32 0.0, %v5069
      %v5071 = vpop.f32.mrb[0].mxu0
      %v5072 = vpop.f32.mrb[0].mxu0
      %v5073 = vadd.f32 0.0, %v5072
      %v5074 = vpop.f32.mrb[0].mxu0
      %5075 = vmatprep.mubr.bf16.mxu0 0
      %5076 = vmatmul.mubr.bf16.gmra.mrb[0].mxu0 %v4854
      %v5077 = vpop.f32.mrb[0].mxu0
      %v5078 = vadd.f32 0.0, %v5077
      %v5079 = vpop.f32.mrb[0].mxu0
      %v5080 = vpop.f32.mrb[0].mxu0
      %v5081 = vadd.f32 0.0, %v5080
      %v5082 = vpop.f32.mrb[0].mxu0
      %5083 = vmatprep.mubr.bf16.mxu0 0
      %5084 = vmatmul.mubr.bf16.gmra.mrb[0].mxu0 %v4863
      %v5085 = vpop.f32.mrb[0].mxu0
      %v5086 = vadd.f32 0.0, %v5085
      %v5087 = vpop.f32.mrb[0].mxu0
      %v5088 = vpop.f32.mrb[0].mxu0
      %v5089 = vadd.f32 0.0, %v5088
      %v5090 = vpop.f32.mrb[0].mxu0
      %5091 = vmatprep.mubr.bf16.mxu0 0
      %5092 = vmatmul.mubr.bf16.gmra.mrb[0].mxu0 %v4872
      %v5093 = vpop.f32.mrb[0].mxu0
      %v5094 = vadd.f32 0.0, %v5093
      %v5095 = vpop.f32.mrb[0].mxu0
      %v5096 = vpop.f32.mrb[0].mxu0
      %v5097 = vadd.f32 0.0, %v5096
      %v5098 = vpop.f32.mrb[0].mxu0
      %5099 = vmatprep.mubr.bf16.mxu0 0
      %5100 = vmatmul.mubr.bf16.gmra.mrb[0].mxu0 %v4881
      %v5101 = vpop.f32.mrb[0].mxu0
      %v5102 = vadd.f32 0.0, %v5101
      %v5103 = vpop.f32.mrb[0].mxu0
      %v5104 = vpop.f32.mrb[0].mxu0
      %v5105 = vadd.f32 0.0, %v5104
      %v5106 = vpop.f32.mrb[0].mxu0
      %5107 = vmatprep.mubr.bf16.mxu0 0
      %5108 = vmatmul.mubr.bf16.gmra.mrb[0].mxu0 %v4890
      %v5109 = vpop.f32.mrb[0].mxu0
      %v5110 = vadd.f32 0.0, %v5109
      %v5111 = vpop.f32.mrb[0].mxu0
      %v5112 = vpop.f32.mrb[0].mxu0
      %v5113 = vadd.f32 0.0, %v5112
      %v5114 = vpop.f32.mrb[0].mxu0
      %5115 = vdwg.mxu0
      %v5116 = vadd.f32 %v4656, %v4990
      %v5117 = vadd.f32 %v4657, %v4993
      %v5118 = vadd.f32 %v4658, %v4998
      %v5119 = vadd.f32 %v4659, %v5001
      %v5120 = vadd.f32 %v4660, %v5006
      %v5121 = vadd.f32 %v4661, %v5009
      %v5122 = vadd.f32 %v4662, %v5014
      %v5123 = vadd.f32 %v4663, %v5017
      %v5124 = vadd.f32 %v4664, %v5022
      %v5125 = vadd.f32 %v4665, %v5025
      %v5126 = vadd.f32 %v4666, %v5030
      %v5127 = vadd.f32 %v4667, %v5033
      %v5128 = vadd.f32 %v4668, %v5038
      %v5129 = vadd.f32 %v4669, %v5041
      %v5130 = vadd.f32 %v4670, %v5046
      %v5131 = vadd.f32 %v4671, %v5049
      %v5132 = vadd.f32 %v4672, %v5054
      %v5133 = vadd.f32 %v4673, %v5057
      %v5134 = vadd.f32 %v4674, %v5062
      %v5135 = vadd.f32 %v4675, %v5065
      %v5136 = vadd.f32 %v4676, %v5070
      %v5137 = vadd.f32 %v4677, %v5073
      %v5138 = vadd.f32 %v4678, %v5078
      %v5139 = vadd.f32 %v4679, %v5081
      %v5140 = vadd.f32 %v4680, %v5086
      %v5141 = vadd.f32 %v4681, %v5089
      %v5142 = vadd.f32 %v4682, %v5094
      %v5143 = vadd.f32 %v4683, %v5097
      %v5144 = vadd.f32 %v4684, %v5102
      %v5145 = vadd.f32 %v4685, %v5105
      %v5146 = vadd.f32 %v4686, %v5110
      %v5147 = vadd.f32 %v4687, %v5113
      %v5148 = vld [vmem:[#allocation2 + $0x10] sm:$0xf0]
      %s5149 = scalar_lea.vmem %s5, 448
      %v5150 = vld [vmem:[%s5149] sm:$0xf]
      %v5151 = vld [vmem:[%s5149 + $0x4] sm:$0xf]
      %v5152 = vld [vmem:[%s5149 + $0x8] sm:$0xf]
      %v5153 = vld [vmem:[%s5149 + $0xc] sm:$0xf]
      %v5154 = vld [vmem:[%s5149 + $0x10] sm:$0xf]
      %v5155 = vld [vmem:[%s5149 + $0x14] sm:$0xf]
      %v5156 = vld [vmem:[%s5149 + $0x18] sm:$0xf]
      %v5157 = vld [vmem:[%s5149 + $0x1c] sm:$0xf]
      %v5158 = vld [vmem:[%s5149 + $0x20] sm:$0xf]
      %v5159 = vld [vmem:[%s5149 + $0x24] sm:$0xf]
      %v5160 = vld [vmem:[%s5149 + $0x28] sm:$0xf]
      %v5161 = vld [vmem:[%s5149 + $0x2c] sm:$0xf]
      %v5162 = vld [vmem:[%s5149 + $0x30] sm:$0xf]
      %v5163 = vld [vmem:[%s5149 + $0x34] sm:$0xf]
      %v5164 = vld [vmem:[%s5149 + $0x38] sm:$0xf]
      %v5165 = vld [vmem:[%s5149 + $0x3c] sm:$0xf]
      %v5183 = vrot.slane %v5148, 4
      %v5184 = vrot.slane %v4689, 4
      %v5185 = vsel %vm1266, %v5183, %v5184
      %v5186 = vrot.slane %v4690, 4
      %v5187 = vsel %vm1266, %v5184, %v5186
      %v5188 = vrot.slane %v4691, 4
      %v5189 = vsel %vm1266, %v5186, %v5188
      %v5190 = vrot.slane %v4692, 4
      %v5191 = vsel %vm1266, %v5188, %v5190
      %v5192 = vrot.slane %v4693, 4
      %v5193 = vsel %vm1266, %v5190, %v5192
      %v5194 = vrot.slane %v4694, 4
      %v5195 = vsel %vm1266, %v5192, %v5194
      %v5196 = vrot.slane %v4695, 4
      %v5197 = vsel %vm1266, %v5194, %v5196
      %v5198 = vrot.slane %v4696, 4
      %v5199 = vsel %vm1266, %v5196, %v5198
      %v5200 = vrot.slane %v4697, 4
      %v5201 = vsel %vm1266, %v5198, %v5200
      %v5202 = vrot.slane %v4698, 4
      %v5203 = vsel %vm1266, %v5200, %v5202
      %v5204 = vrot.slane %v4699, 4
      %v5205 = vsel %vm1266, %v5202, %v5204
      %v5206 = vrot.slane %v4700, 4
      %v5207 = vsel %vm1266, %v5204, %v5206
      %v5208 = vrot.slane %v4701, 4
      %v5209 = vsel %vm1266, %v5206, %v5208
      %v5210 = vrot.slane %v4702, 4
      %v5211 = vsel %vm1266, %v5208, %v5210
      %v5212 = vrot.slane %v4703, 4
      %v5213 = vsel %vm1266, %v5210, %v5212
      %v5214 = vrot.slane %v4704, 4
      %v5215 = vsel %vm1266, %v5212, %v5214
      %v5248 = vunpack.c.l.b16 %v5150
      %v5249 = vunpack.c.l.b16 %v5151
      %v5250 = vunpack.c.l.b16 %v5152
      %v5251 = vunpack.c.l.b16 %v5153
      %v5252 = vunpack.c.l.b16 %v5154
      %v5253 = vunpack.c.l.b16 %v5155
      %v5254 = vunpack.c.l.b16 %v5156
      %v5255 = vunpack.c.l.b16 %v5157
      %v5256 = vunpack.c.l.b16 %v5158
      %v5257 = vunpack.c.l.b16 %v5159
      %v5258 = vunpack.c.l.b16 %v5160
      %v5259 = vunpack.c.l.b16 %v5161
      %v5260 = vunpack.c.l.b16 %v5162
      %v5261 = vunpack.c.l.b16 %v5163
      %v5262 = vunpack.c.l.b16 %v5164
      %v5263 = vunpack.c.l.b16 %v5165
      %v5264 = vpack.c.b16 %v5249, %v5248
      %v5265 = vpack.c.b16 %v5251, %v5250
      %v5266 = vpack.c.b16 %v5253, %v5252
      %v5267 = vpack.c.b16 %v5255, %v5254
      %v5268 = vpack.c.b16 %v5257, %v5256
      %v5269 = vpack.c.b16 %v5259, %v5258
      %v5270 = vpack.c.b16 %v5261, %v5260
      %v5271 = vpack.c.b16 %v5263, %v5262
      %5280 = vmatprep.subr.bf16.mxu0 0
      %5281 = vmatpush1.bf16.msra.mxu0 %v5264
      %5282 = vmatprep.subr.bf16.mxu0 0
      %5283 = vmatpush1.bf16.msra.mxu0 %v5265
      %5284 = vmatprep.subr.bf16.mxu0 0
      %5285 = vmatpush1.bf16.msra.mxu0 %v5266
      %5286 = vmatprep.subr.bf16.mxu0 0
      %5287 = vmatpush1.bf16.msra.mxu0 %v5267
      %5288 = vmatprep.subr.bf16.mxu0 0
      %5289 = vmatpush1.bf16.msra.mxu0 %v5268
      %5290 = vmatprep.subr.bf16.mxu0 0
      %5291 = vmatpush1.bf16.msra.mxu0 %v5269
      %5292 = vmatprep.subr.bf16.mxu0 0
      %5293 = vmatpush1.bf16.msra.mxu0 %v5270
      %5294 = vmatprep.subr.bf16.mxu0 0
      %5295 = vmatpush1.bf16.msra.mxu0 %v5271
      %5296 = vmatprep.subr.bf16.mxu0 0
      %5297 = vmatpush1.bf16.msra.mxu0 0
      %5298 = vmatprep.subr.bf16.mxu0 0
      %5299 = vmatpush1.bf16.msra.mxu0 0
      %5300 = vmatprep.subr.bf16.mxu0 0
      %5301 = vmatpush1.bf16.msra.mxu0 0
      %5302 = vmatprep.subr.bf16.mxu0 0
      %5303 = vmatpush1.bf16.msra.mxu0 0
      %5304 = vmatprep.subr.bf16.mxu0 0
      %5305 = vmatpush1.bf16.msra.mxu0 0
      %5306 = vmatprep.subr.bf16.mxu0 0
      %5307 = vmatpush1.bf16.msra.mxu0 0
      %5308 = vmatprep.subr.bf16.mxu0 0
      %5309 = vmatpush1.bf16.msra.mxu0 0
      %5310 = vmatprep.subr.bf16.mxu0 0
      %5311 = vmatpush1.bf16.msra.mxu0 0
      %5312 = vmatprep.mubr.bf16.mxu0 0
      %5313 = vmatmul.mubr.bf16.gmra.mrb[0].mxu0 %v5185
      %v5314 = vpop.f32.mrb[0].mxu0
      %v5315 = vadd.f32 0.0, %v5314
      %v5316 = vpop.f32.mrb[0].mxu0
      %v5317 = vpop.f32.mrb[0].mxu0
      %v5318 = vadd.f32 0.0, %v5317
      %v5319 = vpop.f32.mrb[0].mxu0
      %5320 = vmatprep.mubr.bf16.mxu0 0
      %5321 = vmatmul.mubr.bf16.gmra.mrb[0].mxu0 %v5187
      %v5322 = vpop.f32.mrb[0].mxu0
      %v5323 = vadd.f32 0.0, %v5322
      %v5324 = vpop.f32.mrb[0].mxu0
      %v5325 = vpop.f32.mrb[0].mxu0
      %v5326 = vadd.f32 0.0, %v5325
      %v5327 = vpop.f32.mrb[0].mxu0
      %5328 = vmatprep.mubr.bf16.mxu0 0
      %5329 = vmatmul.mubr.bf16.gmra.mrb[0].mxu0 %v5189
      %v5330 = vpop.f32.mrb[0].mxu0
      %v5331 = vadd.f32 0.0, %v5330
      %v5332 = vpop.f32.mrb[0].mxu0
      %v5333 = vpop.f32.mrb[0].mxu0
      %v5334 = vadd.f32 0.0, %v5333
      %v5335 = vpop.f32.mrb[0].mxu0
      %5336 = vmatprep.mubr.bf16.mxu0 0
      %5337 = vmatmul.mubr.bf16.gmra.mrb[0].mxu0 %v5191
      %v5338 = vpop.f32.mrb[0].mxu0
      %v5339 = vadd.f32 0.0, %v5338
      %v5340 = vpop.f32.mrb[0].mxu0
      %v5341 = vpop.f32.mrb[0].mxu0
      %v5342 = vadd.f32 0.0, %v5341
      %v5343 = vpop.f32.mrb[0].mxu0
      %5344 = vmatprep.mubr.bf16.mxu0 0
      %5345 = vmatmul.mubr.bf16.gmra.mrb[0].mxu0 %v5193
      %v5346 = vpop.f32.mrb[0].mxu0
      %v5347 = vadd.f32 0.0, %v5346
      %v5348 = vpop.f32.mrb[0].mxu0
      %v5349 = vpop.f32.mrb[0].mxu0
      %v5350 = vadd.f32 0.0, %v5349
      %v5351 = vpop.f32.mrb[0].mxu0
      %5352 = vmatprep.mubr.bf16.mxu0 0
      %5353 = vmatmul.mubr.bf16.gmra.mrb[0].mxu0 %v5195
      %v5354 = vpop.f32.mrb[0].mxu0
      %v5355 = vadd.f32 0.0, %v5354
      %v5356 = vpop.f32.mrb[0].mxu0
      %v5357 = vpop.f32.mrb[0].mxu0
      %v5358 = vadd.f32 0.0, %v5357
      %v5359 = vpop.f32.mrb[0].mxu0
      %5360 = vmatprep.mubr.bf16.mxu0 0
      %5361 = vmatmul.mubr.bf16.gmra.mrb[0].mxu0 %v5197
      %v5362 = vpop.f32.mrb[0].mxu0
      %v5363 = vadd.f32 0.0, %v5362
      %v5364 = vpop.f32.mrb[0].mxu0
      %v5365 = vpop.f32.mrb[0].mxu0
      %v5366 = vadd.f32 0.0, %v5365
      %v5367 = vpop.f32.mrb[0].mxu0
      %5368 = vmatprep.mubr.bf16.mxu0 0
      %5369 = vmatmul.mubr.bf16.gmra.mrb[0].mxu0 %v5199
      %v5370 = vpop.f32.mrb[0].mxu0
      %v5371 = vadd.f32 0.0, %v5370
      %v5372 = vpop.f32.mrb[0].mxu0
      %v5373 = vpop.f32.mrb[0].mxu0
      %v5374 = vadd.f32 0.0, %v5373
      %v5375 = vpop.f32.mrb[0].mxu0
      %5376 = vmatprep.mubr.bf16.mxu0 0
      %5377 = vmatmul.mubr.bf16.gmra.mrb[0].mxu0 %v5201
      %v5378 = vpop.f32.mrb[0].mxu0
      %v5379 = vadd.f32 0.0, %v5378
      %v5380 = vpop.f32.mrb[0].mxu0
      %v5381 = vpop.f32.mrb[0].mxu0
      %v5382 = vadd.f32 0.0, %v5381
      %v5383 = vpop.f32.mrb[0].mxu0
      %5384 = vmatprep.mubr.bf16.mxu0 0
      %5385 = vmatmul.mubr.bf16.gmra.mrb[0].mxu0 %v5203
      %v5386 = vpop.f32.mrb[0].mxu0
      %v5387 = vadd.f32 0.0, %v5386
      %v5388 = vpop.f32.mrb[0].mxu0
      %v5389 = vpop.f32.mrb[0].mxu0
      %v5390 = vadd.f32 0.0, %v5389
      %v5391 = vpop.f32.mrb[0].mxu0
      %5392 = vmatprep.mubr.bf16.mxu0 0
      %5393 = vmatmul.mubr.bf16.gmra.mrb[0].mxu0 %v5205
      %v5394 = vpop.f32.mrb[0].mxu0
      %v5395 = vadd.f32 0.0, %v5394
      %v5396 = vpop.f32.mrb[0].mxu0
      %v5397 = vpop.f32.mrb[0].mxu0
      %v5398 = vadd.f32 0.0, %v5397
      %v5399 = vpop.f32.mrb[0].mxu0
      %5400 = vmatprep.mubr.bf16.mxu0 0
      %5401 = vmatmul.mubr.bf16.gmra.mrb[0].mxu0 %v5207
      %v5402 = vpop.f32.mrb[0].mxu0
      %v5403 = vadd.f32 0.0, %v5402
      %v5404 = vpop.f32.mrb[0].mxu0
      %v5405 = vpop.f32.mrb[0].mxu0
      %v5406 = vadd.f32 0.0, %v5405
      %v5407 = vpop.f32.mrb[0].mxu0
      %5408 = vmatprep.mubr.bf16.mxu0 0
      %5409 = vmatmul.mubr.bf16.gmra.mrb[0].mxu0 %v5209
      %v5410 = vpop.f32.mrb[0].mxu0
      %v5411 = vadd.f32 0.0, %v5410
      %v5412 = vpop.f32.mrb[0].mxu0
      %v5413 = vpop.f32.mrb[0].mxu0
      %v5414 = vadd.f32 0.0, %v5413
      %v5415 = vpop.f32.mrb[0].mxu0
      %5416 = vmatprep.mubr.bf16.mxu0 0
      %5417 = vmatmul.mubr.bf16.gmra.mrb[0].mxu0 %v5211
      %v5418 = vpop.f32.mrb[0].mxu0
      %v5419 = vadd.f32 0.0, %v5418
      %v5420 = vpop.f32.mrb[0].mxu0
      %v5421 = vpop.f32.mrb[0].mxu0
      %v5422 = vadd.f32 0.0, %v5421
      %v5423 = vpop.f32.mrb[0].mxu0
      %5424 = vmatprep.mubr.bf16.mxu0 0
      %5425 = vmatmul.mubr.bf16.gmra.mrb[0].mxu0 %v5213
      %v5426 = vpop.f32.mrb[0].mxu0
      %v5427 = vadd.f32 0.0, %v5426
      %v5428 = vpop.f32.mrb[0].mxu0
      %v5429 = vpop.f32.mrb[0].mxu0
      %v5430 = vadd.f32 0.0, %v5429
      %v5431 = vpop.f32.mrb[0].mxu0
      %5432 = vmatprep.mubr.bf16.mxu0 0
      %5433 = vmatmul.mubr.bf16.gmra.mrb[0].mxu0 %v5215
      %v5434 = vpop.f32.mrb[0].mxu0
      %v5435 = vadd.f32 0.0, %v5434
      %v5436 = vpop.f32.mrb[0].mxu0
      %v5437 = vpop.f32.mrb[0].mxu0
      %v5438 = vadd.f32 0.0, %v5437
      %v5439 = vpop.f32.mrb[0].mxu0
      %5440 = vdwg.mxu0
      %v5441 = vadd.f32 %v5116, %v5315
      %v5442 = vadd.f32 %v5117, %v5318
      %v5443 = vadd.f32 %v5118, %v5323
      %v5444 = vadd.f32 %v5119, %v5326
      %v5445 = vadd.f32 %v5120, %v5331
      %v5446 = vadd.f32 %v5121, %v5334
      %v5447 = vadd.f32 %v5122, %v5339
      %v5448 = vadd.f32 %v5123, %v5342
      %v5449 = vadd.f32 %v5124, %v5347
      %v5450 = vadd.f32 %v5125, %v5350
      %v5451 = vadd.f32 %v5126, %v5355
      %v5452 = vadd.f32 %v5127, %v5358
      %v5453 = vadd.f32 %v5128, %v5363
      %v5454 = vadd.f32 %v5129, %v5366
      %v5455 = vadd.f32 %v5130, %v5371
      %v5456 = vadd.f32 %v5131, %v5374
      %v5457 = vadd.f32 %v5132, %v5379
      %v5458 = vadd.f32 %v5133, %v5382
      %v5459 = vadd.f32 %v5134, %v5387
      %v5460 = vadd.f32 %v5135, %v5390
      %v5461 = vadd.f32 %v5136, %v5395
      %v5462 = vadd.f32 %v5137, %v5398
      %v5463 = vadd.f32 %v5138, %v5403
      %v5464 = vadd.f32 %v5139, %v5406
      %v5465 = vadd.f32 %v5140, %v5411
      %v5466 = vadd.f32 %v5141, %v5414
      %v5467 = vadd.f32 %v5142, %v5419
      %v5468 = vadd.f32 %v5143, %v5422
      %v5469 = vadd.f32 %v5144, %v5427
      %v5470 = vadd.f32 %v5145, %v5430
      %v5471 = vadd.f32 %v5146, %v5435
      %v5472 = vadd.f32 %v5147, %v5438
      %v5473 = vld [vmem:[#allocation2 + $0x90] sm:$0x1f]
      %v5474 = vmul.bf16 %v5148, %v2863
      %v5475 = vmul.bf16 %v4689, %v2872
      %v5476 = vmul.bf16 %v4690, %v2881
      %v5477 = vmul.bf16 %v4691, %v2890
      %v5478 = vmul.bf16 %v4692, %v2899
      %v5479 = vmul.bf16 %v4693, %v2908
      %v5480 = vmul.bf16 %v4694, %v2917
      %v5481 = vmul.bf16 %v4695, %v2926
      %v5482 = vmul.bf16 %v4696, %v2935
      %v5483 = vmul.bf16 %v4697, %v2944
      %v5484 = vmul.bf16 %v4698, %v2953
      %v5485 = vmul.bf16 %v4699, %v2962
      %v5486 = vmul.bf16 %v4700, %v2971
      %v5487 = vmul.bf16 %v4701, %v2980
      %v5488 = vmul.bf16 %v4702, %v2989
      %v5489 = vmul.bf16 %v4703, %v2998
      %v5490 = vmul.bf16 %v5473, %v2997
      %s5491 = scalar_lea.vmem %s5, 512
      %v5492 = vld [vmem:[%s5491] sm:$0xf]
      %v5493 = vld [vmem:[%s5491 + $0x4] sm:$0xf]
      %v5494 = vld [vmem:[%s5491 + $0x8] sm:$0xf]
      %v5495 = vld [vmem:[%s5491 + $0xc] sm:$0xf]
      %v5496 = vld [vmem:[%s5491 + $0x10] sm:$0xf]
      %v5497 = vld [vmem:[%s5491 + $0x14] sm:$0xf]
      %v5498 = vld [vmem:[%s5491 + $0x18] sm:$0xf]
      %v5499 = vld [vmem:[%s5491 + $0x1c] sm:$0xf]
      %v5500 = vld [vmem:[%s5491 + $0x20] sm:$0xf]
      %v5501 = vld [vmem:[%s5491 + $0x24] sm:$0xf]
      %v5502 = vld [vmem:[%s5491 + $0x28] sm:$0xf]
      %v5503 = vld [vmem:[%s5491 + $0x2c] sm:$0xf]
      %v5504 = vld [vmem:[%s5491 + $0x30] sm:$0xf]
      %v5505 = vld [vmem:[%s5491 + $0x34] sm:$0xf]
      %v5506 = vld [vmem:[%s5491 + $0x38] sm:$0xf]
      %v5507 = vld [vmem:[%s5491 + $0x3c] sm:$0xf]
      %v5509 = vshrl.u32 %v5474, 16
      %v5511 = vrot.slane %v5509, 4
      %v5512 = vshll.u32 %v5474, 16
      %v5514 = vrot.slane %v5512, 5
      %v5515 = vor.u32 %v5511, %v5514
      %v5517 = vshrl.u32 %v5475, 16
      %v5519 = vrot.slane %v5517, 4
      %v5520 = vshll.u32 %v5475, 16
      %v5522 = vrot.slane %v5520, 5
      %v5523 = vor.u32 %v5519, %v5522
      %v5524 = vsel %vm1990, %v5515, %v5523
      %v5526 = vshrl.u32 %v5476, 16
      %v5528 = vrot.slane %v5526, 4
      %v5529 = vshll.u32 %v5476, 16
      %v5531 = vrot.slane %v5529, 5
      %v5532 = vor.u32 %v5528, %v5531
      %v5533 = vsel %vm1990, %v5523, %v5532
      %v5535 = vshrl.u32 %v5477, 16
      %v5537 = vrot.slane %v5535, 4
      %v5538 = vshll.u32 %v5477, 16
      %v5540 = vrot.slane %v5538, 5
      %v5541 = vor.u32 %v5537, %v5540
      %v5542 = vsel %vm1990, %v5532, %v5541
      %v5544 = vshrl.u32 %v5478, 16
      %v5546 = vrot.slane %v5544, 4
      %v5547 = vshll.u32 %v5478, 16
      %v5549 = vrot.slane %v5547, 5
      %v5550 = vor.u32 %v5546, %v5549
      %v5551 = vsel %vm1990, %v5541, %v5550
      %v5553 = vshrl.u32 %v5479, 16
      %v5555 = vrot.slane %v5553, 4
      %v5556 = vshll.u32 %v5479, 16
      %v5558 = vrot.slane %v5556, 5
      %v5559 = vor.u32 %v5555, %v5558
      %v5560 = vsel %vm1990, %v5550, %v5559
      %v5562 = vshrl.u32 %v5480, 16
      %v5564 = vrot.slane %v5562, 4
      %v5565 = vshll.u32 %v5480, 16
      %v5567 = vrot.slane %v5565, 5
      %v5568 = vor.u32 %v5564, %v5567
      %v5569 = vsel %vm1990, %v5559, %v5568
      %v5571 = vshrl.u32 %v5481, 16
      %v5573 = vrot.slane %v5571, 4
      %v5574 = vshll.u32 %v5481, 16
      %v5576 = vrot.slane %v5574, 5
      %v5577 = vor.u32 %v5573, %v5576
      %v5578 = vsel %vm1990, %v5568, %v5577
      %v5580 = vshrl.u32 %v5482, 16
      %v5582 = vrot.slane %v5580, 4
      %v5583 = vshll.u32 %v5482, 16
      %v5585 = vrot.slane %v5583, 5
      %v5586 = vor.u32 %v5582, %v5585
      %v5587 = vsel %vm1990, %v5577, %v5586
      %v5589 = vshrl.u32 %v5483, 16
      %v5591 = vrot.slane %v5589, 4
      %v5592 = vshll.u32 %v5483, 16
      %v5594 = vrot.slane %v5592, 5
      %v5595 = vor.u32 %v5591, %v5594
      %v5596 = vsel %vm1990, %v5586, %v5595
      %v5598 = vshrl.u32 %v5484, 16
      %v5600 = vrot.slane %v5598, 4
      %v5601 = vshll.u32 %v5484, 16
      %v5603 = vrot.slane %v5601, 5
      %v5604 = vor.u32 %v5600, %v5603
      %v5605 = vsel %vm1990, %v5595, %v5604
      %v5607 = vshrl.u32 %v5485, 16
      %v5609 = vrot.slane %v5607, 4
      %v5610 = vshll.u32 %v5485, 16
      %v5612 = vrot.slane %v5610, 5
      %v5613 = vor.u32 %v5609, %v5612
      %v5614 = vsel %vm1990, %v5604, %v5613
      %v5616 = vshrl.u32 %v5486, 16
      %v5618 = vrot.slane %v5616, 4
      %v5619 = vshll.u32 %v5486, 16
      %v5621 = vrot.slane %v5619, 5
      %v5622 = vor.u32 %v5618, %v5621
      %v5623 = vsel %vm1990, %v5613, %v5622
      %v5625 = vshrl.u32 %v5487, 16
      %v5627 = vrot.slane %v5625, 4
      %v5628 = vshll.u32 %v5487, 16
      %v5630 = vrot.slane %v5628, 5
      %v5631 = vor.u32 %v5627, %v5630
      %v5632 = vsel %vm1990, %v5622, %v5631
      %v5634 = vshrl.u32 %v5488, 16
      %v5636 = vrot.slane %v5634, 4
      %v5637 = vshll.u32 %v5488, 16
      %v5639 = vrot.slane %v5637, 5
      %v5640 = vor.u32 %v5636, %v5639
      %v5641 = vsel %vm1990, %v5631, %v5640
      %v5643 = vshrl.u32 %v5489, 16
      %v5645 = vrot.slane %v5643, 4
      %v5646 = vshll.u32 %v5489, 16
      %v5648 = vrot.slane %v5646, 5
      %v5649 = vor.u32 %v5645, %v5648
      %v5650 = vsel %vm1990, %v5640, %v5649
      %v5652 = vshrl.u32 %v5490, 16
      %v5654 = vrot.slane %v5652, 4
      %v5655 = vshll.u32 %v5490, 16
      %v5657 = vrot.slane %v5655, 5
      %v5658 = vor.u32 %v5654, %v5657
      %v5659 = vsel %vm1990, %v5649, %v5658
      %v5692 = vunpack.c.l.b16 %v5492
      %v5693 = vunpack.c.l.b16 %v5493
      %v5694 = vunpack.c.l.b16 %v5494
      %v5695 = vunpack.c.l.b16 %v5495
      %v5696 = vunpack.c.l.b16 %v5496
      %v5697 = vunpack.c.l.b16 %v5497
      %v5698 = vunpack.c.l.b16 %v5498
      %v5699 = vunpack.c.l.b16 %v5499
      %v5700 = vunpack.c.l.b16 %v5500
      %v5701 = vunpack.c.l.b16 %v5501
      %v5702 = vunpack.c.l.b16 %v5502
      %v5703 = vunpack.c.l.b16 %v5503
      %v5704 = vunpack.c.l.b16 %v5504
      %v5705 = vunpack.c.l.b16 %v5505
      %v5706 = vunpack.c.l.b16 %v5506
      %v5707 = vunpack.c.l.b16 %v5507
      %v5708 = vpack.c.b16 %v5693, %v5692
      %v5709 = vpack.c.b16 %v5695, %v5694
      %v5710 = vpack.c.b16 %v5697, %v5696
      %v5711 = vpack.c.b16 %v5699, %v5698
      %v5712 = vpack.c.b16 %v5701, %v5700
      %v5713 = vpack.c.b16 %v5703, %v5702
      %v5714 = vpack.c.b16 %v5705, %v5704
      %v5715 = vpack.c.b16 %v5707, %v5706
      %5724 = vmatprep.subr.bf16.mxu0 0
      %5725 = vmatpush1.bf16.msra.mxu0 %v5708
      %5726 = vmatprep.subr.bf16.mxu0 0
      %5727 = vmatpush1.bf16.msra.mxu0 %v5709
      %5728 = vmatprep.subr.bf16.mxu0 0
      %5729 = vmatpush1.bf16.msra.mxu0 %v5710
      %5730 = vmatprep.subr.bf16.mxu0 0
      %5731 = vmatpush1.bf16.msra.mxu0 %v5711
      %5732 = vmatprep.subr.bf16.mxu0 0
      %5733 = vmatpush1.bf16.msra.mxu0 %v5712
      %5734 = vmatprep.subr.bf16.mxu0 0
      %5735 = vmatpush1.bf16.msra.mxu0 %v5713
      %5736 = vmatprep.subr.bf16.mxu0 0
      %5737 = vmatpush1.bf16.msra.mxu0 %v5714
      %5738 = vmatprep.subr.bf16.mxu0 0
      %5739 = vmatpush1.bf16.msra.mxu0 %v5715
      %5740 = vmatprep.subr.bf16.mxu0 0
      %5741 = vmatpush1.bf16.msra.mxu0 0
      %5742 = vmatprep.subr.bf16.mxu0 0
      %5743 = vmatpush1.bf16.msra.mxu0 0
      %5744 = vmatprep.subr.bf16.mxu0 0
      %5745 = vmatpush1.bf16.msra.mxu0 0
      %5746 = vmatprep.subr.bf16.mxu0 0
      %5747 = vmatpush1.bf16.msra.mxu0 0
      %5748 = vmatprep.subr.bf16.mxu0 0
      %5749 = vmatpush1.bf16.msra.mxu0 0
      %5750 = vmatprep.subr.bf16.mxu0 0
      %5751 = vmatpush1.bf16.msra.mxu0 0
      %5752 = vmatprep.subr.bf16.mxu0 0
      %5753 = vmatpush1.bf16.msra.mxu0 0
      %5754 = vmatprep.subr.bf16.mxu0 0
      %5755 = vmatpush1.bf16.msra.mxu0 0
      %5756 = vmatprep.mubr.bf16.mxu0 0
      %5757 = vmatmul.mubr.bf16.gmra.mrb[0].mxu0 %v5524
      %v5758 = vpop.f32.mrb[0].mxu0
      %v5759 = vadd.f32 0.0, %v5758
      %v5760 = vpop.f32.mrb[0].mxu0
      %v5761 = vpop.f32.mrb[0].mxu0
      %v5762 = vadd.f32 0.0, %v5761
      %v5763 = vpop.f32.mrb[0].mxu0
      %5764 = vmatprep.mubr.bf16.mxu0 0
      %5765 = vmatmul.mubr.bf16.gmra.mrb[0].mxu0 %v5533
      %v5766 = vpop.f32.mrb[0].mxu0
      %v5767 = vadd.f32 0.0, %v5766
      %v5768 = vpop.f32.mrb[0].mxu0
      %v5769 = vpop.f32.mrb[0].mxu0
      %v5770 = vadd.f32 0.0, %v5769
      %v5771 = vpop.f32.mrb[0].mxu0
      %5772 = vmatprep.mubr.bf16.mxu0 0
      %5773 = vmatmul.mubr.bf16.gmra.mrb[0].mxu0 %v5542
      %v5774 = vpop.f32.mrb[0].mxu0
      %v5775 = vadd.f32 0.0, %v5774
      %v5776 = vpop.f32.mrb[0].mxu0
      %v5777 = vpop.f32.mrb[0].mxu0
      %v5778 = vadd.f32 0.0, %v5777
      %v5779 = vpop.f32.mrb[0].mxu0
      %5780 = vmatprep.mubr.bf16.mxu0 0
      %5781 = vmatmul.mubr.bf16.gmra.mrb[0].mxu0 %v5551
      %v5782 = vpop.f32.mrb[0].mxu0
      %v5783 = vadd.f32 0.0, %v5782
      %v5784 = vpop.f32.mrb[0].mxu0
      %v5785 = vpop.f32.mrb[0].mxu0
      %v5786 = vadd.f32 0.0, %v5785
      %v5787 = vpop.f32.mrb[0].mxu0
      %5788 = vmatprep.mubr.bf16.mxu0 0
      %5789 = vmatmul.mubr.bf16.gmra.mrb[0].mxu0 %v5560
      %v5790 = vpop.f32.mrb[0].mxu0
      %v5791 = vadd.f32 0.0, %v5790
      %v5792 = vpop.f32.mrb[0].mxu0
      %v5793 = vpop.f32.mrb[0].mxu0
      %v5794 = vadd.f32 0.0, %v5793
      %v5795 = vpop.f32.mrb[0].mxu0
      %5796 = vmatprep.mubr.bf16.mxu0 0
      %5797 = vmatmul.mubr.bf16.gmra.mrb[0].mxu0 %v5569
      %v5798 = vpop.f32.mrb[0].mxu0
      %v5799 = vadd.f32 0.0, %v5798
      %v5800 = vpop.f32.mrb[0].mxu0
      %v5801 = vpop.f32.mrb[0].mxu0
      %v5802 = vadd.f32 0.0, %v5801
      %v5803 = vpop.f32.mrb[0].mxu0
      %5804 = vmatprep.mubr.bf16.mxu0 0
      %5805 = vmatmul.mubr.bf16.gmra.mrb[0].mxu0 %v5578
      %v5806 = vpop.f32.mrb[0].mxu0
      %v5807 = vadd.f32 0.0, %v5806
      %v5808 = vpop.f32.mrb[0].mxu0
      %v5809 = vpop.f32.mrb[0].mxu0
      %v5810 = vadd.f32 0.0, %v5809
      %v5811 = vpop.f32.mrb[0].mxu0
      %5812 = vmatprep.mubr.bf16.mxu0 0
      %5813 = vmatmul.mubr.bf16.gmra.mrb[0].mxu0 %v5587
      %v5814 = vpop.f32.mrb[0].mxu0
      %v5815 = vadd.f32 0.0, %v5814
      %v5816 = vpop.f32.mrb[0].mxu0
      %v5817 = vpop.f32.mrb[0].mxu0
      %v5818 = vadd.f32 0.0, %v5817
      %v5819 = vpop.f32.mrb[0].mxu0
      %5820 = vmatprep.mubr.bf16.mxu0 0
      %5821 = vmatmul.mubr.bf16.gmra.mrb[0].mxu0 %v5596
      %v5822 = vpop.f32.mrb[0].mxu0
      %v5823 = vadd.f32 0.0, %v5822
      %v5824 = vpop.f32.mrb[0].mxu0
      %v5825 = vpop.f32.mrb[0].mxu0
      %v5826 = vadd.f32 0.0, %v5825
      %v5827 = vpop.f32.mrb[0].mxu0
      %5828 = vmatprep.mubr.bf16.mxu0 0
      %5829 = vmatmul.mubr.bf16.gmra.mrb[0].mxu0 %v5605
      %v5830 = vpop.f32.mrb[0].mxu0
      %v5831 = vadd.f32 0.0, %v5830
      %v5832 = vpop.f32.mrb[0].mxu0
      %v5833 = vpop.f32.mrb[0].mxu0
      %v5834 = vadd.f32 0.0, %v5833
      %v5835 = vpop.f32.mrb[0].mxu0
      %5836 = vmatprep.mubr.bf16.mxu0 0
      %5837 = vmatmul.mubr.bf16.gmra.mrb[0].mxu0 %v5614
      %v5838 = vpop.f32.mrb[0].mxu0
      %v5839 = vadd.f32 0.0, %v5838
      %v5840 = vpop.f32.mrb[0].mxu0
      %v5841 = vpop.f32.mrb[0].mxu0
      %v5842 = vadd.f32 0.0, %v5841
      %v5843 = vpop.f32.mrb[0].mxu0
      %5844 = vmatprep.mubr.bf16.mxu0 0
      %5845 = vmatmul.mubr.bf16.gmra.mrb[0].mxu0 %v5623
      %v5846 = vpop.f32.mrb[0].mxu0
      %v5847 = vadd.f32 0.0, %v5846
      %v5848 = vpop.f32.mrb[0].mxu0
      %v5849 = vpop.f32.mrb[0].mxu0
      %v5850 = vadd.f32 0.0, %v5849
      %v5851 = vpop.f32.mrb[0].mxu0
      %5852 = vmatprep.mubr.bf16.mxu0 0
      %5853 = vmatmul.mubr.bf16.gmra.mrb[0].mxu0 %v5632
      %v5854 = vpop.f32.mrb[0].mxu0
      %v5855 = vadd.f32 0.0, %v5854
      %v5856 = vpop.f32.mrb[0].mxu0
      %v5857 = vpop.f32.mrb[0].mxu0
      %v5858 = vadd.f32 0.0, %v5857
      %v5859 = vpop.f32.mrb[0].mxu0
      %5860 = vmatprep.mubr.bf16.mxu0 0
      %5861 = vmatmul.mubr.bf16.gmra.mrb[0].mxu0 %v5641
      %v5862 = vpop.f32.mrb[0].mxu0
      %v5863 = vadd.f32 0.0, %v5862
      %v5864 = vpop.f32.mrb[0].mxu0
      %v5865 = vpop.f32.mrb[0].mxu0
      %v5866 = vadd.f32 0.0, %v5865
      %v5867 = vpop.f32.mrb[0].mxu0
      %5868 = vmatprep.mubr.bf16.mxu0 0
      %5869 = vmatmul.mubr.bf16.gmra.mrb[0].mxu0 %v5650
      %v5870 = vpop.f32.mrb[0].mxu0
      %v5871 = vadd.f32 0.0, %v5870
      %v5872 = vpop.f32.mrb[0].mxu0
      %v5873 = vpop.f32.mrb[0].mxu0
      %v5874 = vadd.f32 0.0, %v5873
      %v5875 = vpop.f32.mrb[0].mxu0
      %5876 = vmatprep.mubr.bf16.mxu0 0
      %5877 = vmatmul.mubr.bf16.gmra.mrb[0].mxu0 %v5659
      %v5878 = vpop.f32.mrb[0].mxu0
      %v5879 = vadd.f32 0.0, %v5878
      %v5880 = vpop.f32.mrb[0].mxu0
      %v5881 = vpop.f32.mrb[0].mxu0
      %v5882 = vadd.f32 0.0, %v5881
      %v5883 = vpop.f32.mrb[0].mxu0
      %5884 = vdwg.mxu0
      %v5885 = vadd.f32 %v5441, %v5759
      %v5886 = vadd.f32 %v5442, %v5762
      %v5887 = vadd.f32 %v5443, %v5767
      %v5888 = vadd.f32 %v5444, %v5770
      %v5889 = vadd.f32 %v5445, %v5775
      %v5890 = vadd.f32 %v5446, %v5778
      %v5891 = vadd.f32 %v5447, %v5783
      %v5892 = vadd.f32 %v5448, %v5786
      %v5893 = vadd.f32 %v5449, %v5791
      %v5894 = vadd.f32 %v5450, %v5794
      %v5895 = vadd.f32 %v5451, %v5799
      %v5896 = vadd.f32 %v5452, %v5802
      %v5897 = vadd.f32 %v5453, %v5807
      %v5898 = vadd.f32 %v5454, %v5810
      %v5899 = vadd.f32 %v5455, %v5815
      %v5900 = vadd.f32 %v5456, %v5818
      %v5901 = vadd.f32 %v5457, %v5823
      %v5902 = vadd.f32 %v5458, %v5826
      %v5903 = vadd.f32 %v5459, %v5831
      %v5904 = vadd.f32 %v5460, %v5834
      %v5905 = vadd.f32 %v5461, %v5839
      %v5906 = vadd.f32 %v5462, %v5842
      %v5907 = vadd.f32 %v5463, %v5847
      %v5908 = vadd.f32 %v5464, %v5850
      %v5909 = vadd.f32 %v5465, %v5855
      %v5910 = vadd.f32 %v5466, %v5858
      %v5911 = vadd.f32 %v5467, %v5863
      %v5912 = vadd.f32 %v5468, %v5866
      %v5913 = vadd.f32 %v5469, %v5871
      %v5914 = vadd.f32 %v5470, %v5874
      %v5915 = vadd.f32 %v5471, %v5879
      %v5916 = vadd.f32 %v5472, %v5882
      %v5917 = vld [vmem:[%s6] sm:$0x1]
      %v5919 = vlaneseq
      %v5920 = vshrl.u32 %v5919, 7
      %v5921 = vsub.s32 0, %v5920
      %v5922 = vrot.slane %v5917, %v5921
      %v5924 = vmul.f32 %v5885, %v5922
      %v5925 = vmul.f32 %v5886, %v5922
      %v5926 = vmul.f32 %v5887, %v5922
      %v5927 = vmul.f32 %v5888, %v5922
      %v5928 = vmul.f32 %v5889, %v5922
      %v5929 = vmul.f32 %v5890, %v5922
      %v5930 = vmul.f32 %v5891, %v5922
      %v5931 = vmul.f32 %v5892, %v5922
      %v5932 = vmul.f32 %v5893, %v5922
      %v5933 = vmul.f32 %v5894, %v5922
      %v5934 = vmul.f32 %v5895, %v5922
      %v5935 = vmul.f32 %v5896, %v5922
      %v5936 = vmul.f32 %v5897, %v5922
      %v5937 = vmul.f32 %v5898, %v5922
      %v5938 = vmul.f32 %v5899, %v5922
      %v5939 = vmul.f32 %v5900, %v5922
      %v5940 = vmul.f32 %v5901, %v5922
      %v5941 = vmul.f32 %v5902, %v5922
      %v5942 = vmul.f32 %v5903, %v5922
      %v5943 = vmul.f32 %v5904, %v5922
      %v5944 = vmul.f32 %v5905, %v5922
      %v5945 = vmul.f32 %v5906, %v5922
      %v5946 = vmul.f32 %v5907, %v5922
      %v5947 = vmul.f32 %v5908, %v5922
      %v5948 = vmul.f32 %v5909, %v5922
      %v5949 = vmul.f32 %v5910, %v5922
      %v5950 = vmul.f32 %v5911, %v5922
      %v5951 = vmul.f32 %v5912, %v5922
      %v5952 = vmul.f32 %v5913, %v5922
      %v5953 = vmul.f32 %v5914, %v5922
      %v5954 = vmul.f32 %v5915, %v5922
      %v5955 = vmul.f32 %v5916, %v5922
      %v5956 = vld [vmem:[%s7] sm:$0x1]
      %v5958 = vlaneseq
      %v5959 = vshrl.u32 %v5958, 7
      %v5960 = vsub.s32 0, %v5959
      %v5961 = vrot.slane %v5956, %v5960
      %v5963 = vadd.f32 %v5924, %v5961
      %v5964 = vadd.f32 %v5925, %v5961
      %v5965 = vadd.f32 %v5926, %v5961
      %v5966 = vadd.f32 %v5927, %v5961
      %v5967 = vadd.f32 %v5928, %v5961
      %v5968 = vadd.f32 %v5929, %v5961
      %v5969 = vadd.f32 %v5930, %v5961
      %v5970 = vadd.f32 %v5931, %v5961
      %v5971 = vadd.f32 %v5932, %v5961
      %v5972 = vadd.f32 %v5933, %v5961
      %v5973 = vadd.f32 %v5934, %v5961
      %v5974 = vadd.f32 %v5935, %v5961
      %v5975 = vadd.f32 %v5936, %v5961
      %v5976 = vadd.f32 %v5937, %v5961
      %v5977 = vadd.f32 %v5938, %v5961
      %v5978 = vadd.f32 %v5939, %v5961
      %v5979 = vadd.f32 %v5940, %v5961
      %v5980 = vadd.f32 %v5941, %v5961
      %v5981 = vadd.f32 %v5942, %v5961
      %v5982 = vadd.f32 %v5943, %v5961
      %v5983 = vadd.f32 %v5944, %v5961
      %v5984 = vadd.f32 %v5945, %v5961
      %v5985 = vadd.f32 %v5946, %v5961
      %v5986 = vadd.f32 %v5947, %v5961
      %v5987 = vadd.f32 %v5948, %v5961
      %v5988 = vadd.f32 %v5949, %v5961
      %v5989 = vadd.f32 %v5950, %v5961
      %v5990 = vadd.f32 %v5951, %v5961
      %v5991 = vadd.f32 %v5952, %v5961
      %v5992 = vadd.f32 %v5953, %v5961
      %v5993 = vadd.f32 %v5954, %v5961
      %v5994 = vadd.f32 %v5955, %v5961
      %v5995 = vxor.u32 %v5963, 2147483648
      %v5996 = vxor.u32 %v5964, 2147483648
      %v5997 = vxor.u32 %v5965, 2147483648
      %v5998 = vxor.u32 %v5966, 2147483648
      %v5999 = vxor.u32 %v5967, 2147483648
      %v6000 = vxor.u32 %v5968, 2147483648
      %v6001 = vxor.u32 %v5969, 2147483648
      %v6002 = vxor.u32 %v5970, 2147483648
      %v6003 = vxor.u32 %v5971, 2147483648
      %v6004 = vxor.u32 %v5972, 2147483648
      %v6005 = vxor.u32 %v5973, 2147483648
      %v6006 = vxor.u32 %v5974, 2147483648
      %v6007 = vxor.u32 %v5975, 2147483648
      %v6008 = vxor.u32 %v5976, 2147483648
      %v6009 = vxor.u32 %v5977, 2147483648
      %v6010 = vxor.u32 %v5978, 2147483648
      %v6011 = vxor.u32 %v5979, 2147483648
      %v6012 = vxor.u32 %v5980, 2147483648
      %v6013 = vxor.u32 %v5981, 2147483648
      %v6014 = vxor.u32 %v5982, 2147483648
      %v6015 = vxor.u32 %v5983, 2147483648
      %v6016 = vxor.u32 %v5984, 2147483648
      %v6017 = vxor.u32 %v5985, 2147483648
      %v6018 = vxor.u32 %v5986, 2147483648
      %v6019 = vxor.u32 %v5987, 2147483648
      %v6020 = vxor.u32 %v5988, 2147483648
      %v6021 = vxor.u32 %v5989, 2147483648
      %v6022 = vxor.u32 %v5990, 2147483648
      %v6023 = vxor.u32 %v5991, 2147483648
      %v6024 = vxor.u32 %v5992, 2147483648
      %v6025 = vxor.u32 %v5993, 2147483648
      %v6026 = vxor.u32 %v5994, 2147483648
      %v6027 = vmul.f32 %v5995, 1.442695
      %v6028 = vpow.pop %v6027
      %v6029 = vmul.f32 %v5996, 1.442695
      %v6030 = vpow.pop %v6029
      %v6031 = vmul.f32 %v5997, 1.442695
      %v6032 = vpow.pop %v6031
      %v6033 = vmul.f32 %v5998, 1.442695
      %v6034 = vpow.pop %v6033
      %v6035 = vmul.f32 %v5999, 1.442695
      %v6036 = vpow.pop %v6035
      %v6037 = vmul.f32 %v6000, 1.442695
      %v6038 = vpow.pop %v6037
      %v6039 = vmul.f32 %v6001, 1.442695
      %v6040 = vpow.pop %v6039
      %v6041 = vmul.f32 %v6002, 1.442695
      %v6042 = vpow.pop %v6041
      %v6043 = vmul.f32 %v6003, 1.442695
      %v6044 = vpow.pop %v6043
      %v6045 = vmul.f32 %v6004, 1.442695
      %v6046 = vpow.pop %v6045
      %v6047 = vmul.f32 %v6005, 1.442695
      %v6048 = vpow.pop %v6047
      %v6049 = vmul.f32 %v6006, 1.442695
      %v6050 = vpow.pop %v6049
      %v6051 = vmul.f32 %v6007, 1.442695
      %v6052 = vpow.pop %v6051
      %v6053 = vmul.f32 %v6008, 1.442695
      %v6054 = vpow.pop %v6053
      %v6055 = vmul.f32 %v6009, 1.442695
      %v6056 = vpow.pop %v6055
      %v6057 = vmul.f32 %v6010, 1.442695
      %v6058 = vpow.pop %v6057
      %v6059 = vmul.f32 %v6011, 1.442695
      %v6060 = vpow.pop %v6059
      %v6061 = vmul.f32 %v6012, 1.442695
      %v6062 = vpow.pop %v6061
      %v6063 = vmul.f32 %v6013, 1.442695
      %v6064 = vpow.pop %v6063
      %v6065 = vmul.f32 %v6014, 1.442695
      %v6066 = vpow.pop %v6065
      %v6067 = vmul.f32 %v6015, 1.442695
      %v6068 = vpow.pop %v6067
      %v6069 = vmul.f32 %v6016, 1.442695
      %v6070 = vpow.pop %v6069
      %v6071 = vmul.f32 %v6017, 1.442695
      %v6072 = vpow.pop %v6071
      %v6073 = vmul.f32 %v6018, 1.442695
      %v6074 = vpow.pop %v6073
      %v6075 = vmul.f32 %v6019, 1.442695
      %v6076 = vpow.pop %v6075
      %v6077 = vmul.f32 %v6020, 1.442695
      %v6078 = vpow.pop %v6077
      %v6079 = vmul.f32 %v6021, 1.442695
      %v6080 = vpow.pop %v6079
      %v6081 = vmul.f32 %v6022, 1.442695
      %v6082 = vpow.pop %v6081
      %v6083 = vmul.f32 %v6023, 1.442695
      %v6084 = vpow.pop %v6083
      %v6085 = vmul.f32 %v6024, 1.442695
      %v6086 = vpow.pop %v6085
      %v6087 = vmul.f32 %v6025, 1.442695
      %v6088 = vpow.pop %v6087
      %v6089 = vmul.f32 %v6026, 1.442695
      %v6090 = vpow.pop %v6089
      %v6091 = vadd.f32 %v6028, 1.0
      %v6092 = vadd.f32 %v6030, 1.0
      %v6093 = vadd.f32 %v6032, 1.0
      %v6094 = vadd.f32 %v6034, 1.0
      %v6095 = vadd.f32 %v6036, 1.0
      %v6096 = vadd.f32 %v6038, 1.0
      %v6097 = vadd.f32 %v6040, 1.0
      %v6098 = vadd.f32 %v6042, 1.0
      %v6099 = vadd.f32 %v6044, 1.0
      %v6100 = vadd.f32 %v6046, 1.0
      %v6101 = vadd.f32 %v6048, 1.0
      %v6102 = vadd.f32 %v6050, 1.0
      %v6103 = vadd.f32 %v6052, 1.0
      %v6104 = vadd.f32 %v6054, 1.0
      %v6105 = vadd.f32 %v6056, 1.0
      %v6106 = vadd.f32 %v6058, 1.0
      %v6107 = vadd.f32 %v6060, 1.0
      %v6108 = vadd.f32 %v6062, 1.0
      %v6109 = vadd.f32 %v6064, 1.0
      %v6110 = vadd.f32 %v6066, 1.0
      %v6111 = vadd.f32 %v6068, 1.0
      %v6112 = vadd.f32 %v6070, 1.0
      %v6113 = vadd.f32 %v6072, 1.0
      %v6114 = vadd.f32 %v6074, 1.0
      %v6115 = vadd.f32 %v6076, 1.0
      %v6116 = vadd.f32 %v6078, 1.0
      %v6117 = vadd.f32 %v6080, 1.0
      %v6118 = vadd.f32 %v6082, 1.0
      %v6119 = vadd.f32 %v6084, 1.0
      %v6120 = vadd.f32 %v6086, 1.0
      %v6121 = vadd.f32 %v6088, 1.0
      %v6122 = vadd.f32 %v6090, 1.0
      %v6123 = vrcp.pop %v6091
      %v6124 = vmul.f32 1.0, %v6123
      %v6125 = vrcp.pop %v6092
      %v6126 = vmul.f32 1.0, %v6125
      %v6127 = vrcp.pop %v6093
      %v6128 = vmul.f32 1.0, %v6127
      %v6129 = vrcp.pop %v6094
      %v6130 = vmul.f32 1.0, %v6129
      %v6131 = vrcp.pop %v6095
      %v6132 = vmul.f32 1.0, %v6131
      %v6133 = vrcp.pop %v6096
      %v6134 = vmul.f32 1.0, %v6133
      %v6135 = vrcp.pop %v6097
      %v6136 = vmul.f32 1.0, %v6135
      %v6137 = vrcp.pop %v6098
      %v6138 = vmul.f32 1.0, %v6137
      %v6139 = vrcp.pop %v6099
      %v6140 = vmul.f32 1.0, %v6139
      %v6141 = vrcp.pop %v6100
      %v6142 = vmul.f32 1.0, %v6141
      %v6143 = vrcp.pop %v6101
      %v6144 = vmul.f32 1.0, %v6143
      %v6145 = vrcp.pop %v6102
      %v6146 = vmul.f32 1.0, %v6145
      %v6147 = vrcp.pop %v6103
      %v6148 = vmul.f32 1.0, %v6147
      %v6149 = vrcp.pop %v6104
      %v6150 = vmul.f32 1.0, %v6149
      %v6151 = vrcp.pop %v6105
      %v6152 = vmul.f32 1.0, %v6151
      %v6153 = vrcp.pop %v6106
      %v6154 = vmul.f32 1.0, %v6153
      %v6155 = vrcp.pop %v6107
      %v6156 = vmul.f32 1.0, %v6155
      %v6157 = vrcp.pop %v6108
      %v6158 = vmul.f32 1.0, %v6157
      %v6159 = vrcp.pop %v6109
      %v6160 = vmul.f32 1.0, %v6159
      %v6161 = vrcp.pop %v6110
      %v6162 = vmul.f32 1.0, %v6161
      %v6163 = vrcp.pop %v6111
      %v6164 = vmul.f32 1.0, %v6163
      %v6165 = vrcp.pop %v6112
      %v6166 = vmul.f32 1.0, %v6165
      %v6167 = vrcp.pop %v6113
      %v6168 = vmul.f32 1.0, %v6167
      %v6169 = vrcp.pop %v6114
      %v6170 = vmul.f32 1.0, %v6169
      %v6171 = vrcp.pop %v6115
      %v6172 = vmul.f32 1.0, %v6171
      %v6173 = vrcp.pop %v6116
      %v6174 = vmul.f32 1.0, %v6173
      %v6175 = vrcp.pop %v6117
      %v6176 = vmul.f32 1.0, %v6175
      %v6177 = vrcp.pop %v6118
      %v6178 = vmul.f32 1.0, %v6177
      %v6179 = vrcp.pop %v6119
      %v6180 = vmul.f32 1.0, %v6179
      %v6181 = vrcp.pop %v6120
      %v6182 = vmul.f32 1.0, %v6181
      %v6183 = vrcp.pop %v6121
      %v6184 = vmul.f32 1.0, %v6183
      %v6185 = vrcp.pop %v6122
      %v6186 = vmul.f32 1.0, %v6185
      %v6187 = vmul.f32 %v5963, %v6124
      %v6188 = vmul.f32 %v5964, %v6126
      %v6189 = vmul.f32 %v5965, %v6128
      %v6190 = vmul.f32 %v5966, %v6130
      %v6191 = vmul.f32 %v5967, %v6132
      %v6192 = vmul.f32 %v5968, %v6134
      %v6193 = vmul.f32 %v5969, %v6136
      %v6194 = vmul.f32 %v5970, %v6138
      %v6195 = vmul.f32 %v5971, %v6140
      %v6196 = vmul.f32 %v5972, %v6142
      %v6197 = vmul.f32 %v5973, %v6144
      %v6198 = vmul.f32 %v5974, %v6146
      %v6199 = vmul.f32 %v5975, %v6148
      %v6200 = vmul.f32 %v5976, %v6150
      %v6201 = vmul.f32 %v5977, %v6152
      %v6202 = vmul.f32 %v5978, %v6154
      %v6203 = vmul.f32 %v5979, %v6156
      %v6204 = vmul.f32 %v5980, %v6158
      %v6205 = vmul.f32 %v5981, %v6160
      %v6206 = vmul.f32 %v5982, %v6162
      %v6207 = vmul.f32 %v5983, %v6164
      %v6208 = vmul.f32 %v5984, %v6166
      %v6209 = vmul.f32 %v5985, %v6168
      %v6210 = vmul.f32 %v5986, %v6170
      %v6211 = vmul.f32 %v5987, %v6172
      %v6212 = vmul.f32 %v5988, %v6174
      %v6213 = vmul.f32 %v5989, %v6176
      %v6214 = vmul.f32 %v5990, %v6178
      %v6215 = vmul.f32 %v5991, %v6180
      %v6216 = vmul.f32 %v5992, %v6182
      %v6217 = vmul.f32 %v5993, %v6184
      %v6218 = vmul.f32 %v5994, %v6186
      %v6219 = vunpack.c.l.bf16 %v575
      %v6220 = vunpack.c.l.bf16 %v576
      %v6221 = vunpack.c.l.bf16 %v577
      %v6222 = vunpack.c.l.bf16 %v578
      %v6223 = vunpack.c.l.bf16 %v579
      %v6224 = vunpack.c.l.bf16 %v580
      %v6225 = vunpack.c.l.bf16 %v581
      %v6226 = vunpack.c.l.bf16 %v582
      %v6227 = vunpack.c.l.bf16 %v583
      %v6228 = vunpack.c.l.bf16 %v584
      %v6229 = vunpack.c.l.bf16 %v585
      %v6230 = vunpack.c.l.bf16 %v586
      %v6231 = vunpack.c.l.bf16 %v587
      %v6232 = vunpack.c.l.bf16 %v588
      %v6233 = vunpack.c.l.bf16 %v589
      %v6234 = vunpack.c.l.bf16 %v590
      %v6235 = vunpack.c.l.bf16 %v591
      %v6236 = vunpack.c.l.bf16 %v592
      %v6237 = vunpack.c.l.bf16 %v593
      %v6238 = vunpack.c.l.bf16 %v594
      %v6239 = vunpack.c.l.bf16 %v595
      %v6240 = vunpack.c.l.bf16 %v596
      %v6241 = vunpack.c.l.bf16 %v597
      %v6242 = vunpack.c.l.bf16 %v598
      %v6243 = vunpack.c.l.bf16 %v599
      %v6244 = vunpack.c.l.bf16 %v600
      %v6245 = vunpack.c.l.bf16 %v601
      %v6246 = vunpack.c.l.bf16 %v602
      %v6247 = vunpack.c.l.bf16 %v603
      %v6248 = vunpack.c.l.bf16 %v604
      %v6249 = vunpack.c.l.bf16 %v605
      %v6250 = vunpack.c.l.bf16 %v606
      %v6251 = vadd.f32 %v6219, %v6187
      %v6252 = vadd.f32 %v6220, %v6188
      %v6253 = vadd.f32 %v6221, %v6189
      %v6254 = vadd.f32 %v6222, %v6190
      %v6255 = vadd.f32 %v6223, %v6191
      %v6256 = vadd.f32 %v6224, %v6192
      %v6257 = vadd.f32 %v6225, %v6193
      %v6258 = vadd.f32 %v6226, %v6194
      %v6259 = vadd.f32 %v6227, %v6195
      %v6260 = vadd.f32 %v6228, %v6196
      %v6261 = vadd.f32 %v6229, %v6197
      %v6262 = vadd.f32 %v6230, %v6198
      %v6263 = vadd.f32 %v6231, %v6199
      %v6264 = vadd.f32 %v6232, %v6200
      %v6265 = vadd.f32 %v6233, %v6201
      %v6266 = vadd.f32 %v6234, %v6202
      %v6267 = vadd.f32 %v6235, %v6203
      %v6268 = vadd.f32 %v6236, %v6204
      %v6269 = vadd.f32 %v6237, %v6205
      %v6270 = vadd.f32 %v6238, %v6206
      %v6271 = vadd.f32 %v6239, %v6207
      %v6272 = vadd.f32 %v6240, %v6208
      %v6273 = vadd.f32 %v6241, %v6209
      %v6274 = vadd.f32 %v6242, %v6210
      %v6275 = vadd.f32 %v6243, %v6211
      %v6276 = vadd.f32 %v6244, %v6212
      %v6277 = vadd.f32 %v6245, %v6213
      %v6278 = vadd.f32 %v6246, %v6214
      %v6279 = vadd.f32 %v6247, %v6215
      %v6280 = vadd.f32 %v6248, %v6216
      %v6281 = vadd.f32 %v6249, %v6217
      %v6282 = vadd.f32 %v6250, %v6218
      %v6283 = vpack.c.bf16 %v6252, %v6251
      %v6284 = vpack.c.bf16 %v6254, %v6253
      %v6285 = vpack.c.bf16 %v6256, %v6255
      %v6286 = vpack.c.bf16 %v6258, %v6257
      %v6287 = vpack.c.bf16 %v6260, %v6259
      %v6288 = vpack.c.bf16 %v6262, %v6261
      %v6289 = vpack.c.bf16 %v6264, %v6263
      %v6290 = vpack.c.bf16 %v6266, %v6265
      %v6291 = vpack.c.bf16 %v6268, %v6267
      %v6292 = vpack.c.bf16 %v6270, %v6269
      %v6293 = vpack.c.bf16 %v6272, %v6271
      %v6294 = vpack.c.bf16 %v6274, %v6273
      %v6295 = vpack.c.bf16 %v6276, %v6275
      %v6296 = vpack.c.bf16 %v6278, %v6277
      %v6297 = vpack.c.bf16 %v6280, %v6279
      %v6298 = vpack.c.bf16 %v6282, %v6281
      %v6299 = vld [vmem:[%s8] sm:$0xf]
      %v6300 = vld [vmem:[%s8 + $0x4] sm:$0xf]
      %v6301 = vld [vmem:[%s8 + $0x8] sm:$0xf]
      %v6302 = vld [vmem:[%s8 + $0xc] sm:$0xf]
      %v6303 = vld [vmem:[%s8 + $0x10] sm:$0xf]
      %v6304 = vld [vmem:[%s8 + $0x14] sm:$0xf]
      %v6305 = vld [vmem:[%s8 + $0x18] sm:$0xf]
      %v6306 = vld [vmem:[%s8 + $0x1c] sm:$0xf]
      %v6307 = vld [vmem:[%s8 + $0x20] sm:$0xf]
      %v6308 = vld [vmem:[%s8 + $0x24] sm:$0xf]
      %v6309 = vld [vmem:[%s8 + $0x28] sm:$0xf]
      %v6310 = vld [vmem:[%s8 + $0x2c] sm:$0xf]
      %v6311 = vld [vmem:[%s8 + $0x30] sm:$0xf]
      %v6312 = vld [vmem:[%s8 + $0x34] sm:$0xf]
      %v6313 = vld [vmem:[%s8 + $0x38] sm:$0xf]
      %v6314 = vld [vmem:[%s8 + $0x3c] sm:$0xf]
      %v6331 = vunpack.c.l.b16 %v6299
      %v6332 = vunpack.c.l.b16 %v6300
      %v6333 = vunpack.c.l.b16 %v6301
      %v6334 = vunpack.c.l.b16 %v6302
      %v6335 = vunpack.c.l.b16 %v6303
      %v6336 = vunpack.c.l.b16 %v6304
      %v6337 = vunpack.c.l.b16 %v6305
      %v6338 = vunpack.c.l.b16 %v6306
      %v6339 = vunpack.c.l.b16 %v6307
      %v6340 = vunpack.c.l.b16 %v6308
      %v6341 = vunpack.c.l.b16 %v6309
      %v6342 = vunpack.c.l.b16 %v6310
      %v6343 = vunpack.c.l.b16 %v6311
      %v6344 = vunpack.c.l.b16 %v6312
      %v6345 = vunpack.c.l.b16 %v6313
      %v6346 = vunpack.c.l.b16 %v6314
      %v6347 = vpack.c.b16 %v6332, %v6331
      %v6348 = vpack.c.b16 %v6334, %v6333
      %v6349 = vpack.c.b16 %v6336, %v6335
      %v6350 = vpack.c.b16 %v6338, %v6337
      %v6351 = vpack.c.b16 %v6340, %v6339
      %v6352 = vpack.c.b16 %v6342, %v6341
      %v6353 = vpack.c.b16 %v6344, %v6343
      %v6354 = vpack.c.b16 %v6346, %v6345
      %6363 = vmatprep.subr.bf16.mxu0 0
      %6364 = vmatpush1.bf16.msra.mxu0 %v6347
      %6365 = vmatprep.subr.bf16.mxu0 0
      %6366 = vmatpush1.bf16.msra.mxu0 %v6348
      %6367 = vmatprep.subr.bf16.mxu0 0
      %6368 = vmatpush1.bf16.msra.mxu0 %v6349
      %6369 = vmatprep.subr.bf16.mxu0 0
      %6370 = vmatpush1.bf16.msra.mxu0 %v6350
      %6371 = vmatprep.subr.bf16.mxu0 0
      %6372 = vmatpush1.bf16.msra.mxu0 %v6351
      %6373 = vmatprep.subr.bf16.mxu0 0
      %6374 = vmatpush1.bf16.msra.mxu0 %v6352
      %6375 = vmatprep.subr.bf16.mxu0 0
      %6376 = vmatpush1.bf16.msra.mxu0 %v6353
      %6377 = vmatprep.subr.bf16.mxu0 0
      %6378 = vmatpush1.bf16.msra.mxu0 %v6354
      %6379 = vmatprep.subr.bf16.mxu0 0
      %6380 = vmatpush1.bf16.msra.mxu0 0
      %6381 = vmatprep.subr.bf16.mxu0 0
      %6382 = vmatpush1.bf16.msra.mxu0 0
      %6383 = vmatprep.subr.bf16.mxu0 0
      %6384 = vmatpush1.bf16.msra.mxu0 0
      %6385 = vmatprep.subr.bf16.mxu0 0
      %6386 = vmatpush1.bf16.msra.mxu0 0
      %6387 = vmatprep.subr.bf16.mxu0 0
      %6388 = vmatpush1.bf16.msra.mxu0 0
      %6389 = vmatprep.subr.bf16.mxu0 0
      %6390 = vmatpush1.bf16.msra.mxu0 0
      %6391 = vmatprep.subr.bf16.mxu0 0
      %6392 = vmatpush1.bf16.msra.mxu0 0
      %6393 = vmatprep.subr.bf16.mxu0 0
      %6394 = vmatpush1.bf16.msra.mxu0 0
      %6395 = vmatprep.mubr.bf16.mxu0 0
      %6396 = vmatmul.mubr.bf16.gmra.mrb[0].mxu0 %v6283
      %v6397 = vpop.f32.mrb[0].mxu0
      %v6398 = vadd.f32 0.0, %v6397
      %v6399 = vpop.f32.mrb[0].mxu0
      %v6400 = vpop.f32.mrb[0].mxu0
      %v6401 = vadd.f32 0.0, %v6400
      %v6402 = vpop.f32.mrb[0].mxu0
      %6403 = vmatprep.mubr.bf16.mxu0 0
      %6404 = vmatmul.mubr.bf16.gmra.mrb[0].mxu0 %v6284
      %v6405 = vpop.f32.mrb[0].mxu0
      %v6406 = vadd.f32 0.0, %v6405
      %v6407 = vpop.f32.mrb[0].mxu0
      %v6408 = vpop.f32.mrb[0].mxu0
      %v6409 = vadd.f32 0.0, %v6408
      %v6410 = vpop.f32.mrb[0].mxu0
      %6411 = vmatprep.mubr.bf16.mxu0 0
      %6412 = vmatmul.mubr.bf16.gmra.mrb[0].mxu0 %v6285
      %v6413 = vpop.f32.mrb[0].mxu0
      %v6414 = vadd.f32 0.0, %v6413
      %v6415 = vpop.f32.mrb[0].mxu0
      %v6416 = vpop.f32.mrb[0].mxu0
      %v6417 = vadd.f32 0.0, %v6416
      %v6418 = vpop.f32.mrb[0].mxu0
      %6419 = vmatprep.mubr.bf16.mxu0 0
      %6420 = vmatmul.mubr.bf16.gmra.mrb[0].mxu0 %v6286
      %v6421 = vpop.f32.mrb[0].mxu0
      %v6422 = vadd.f32 0.0, %v6421
      %v6423 = vpop.f32.mrb[0].mxu0
      %v6424 = vpop.f32.mrb[0].mxu0
      %v6425 = vadd.f32 0.0, %v6424
      %v6426 = vpop.f32.mrb[0].mxu0
      %6427 = vmatprep.mubr.bf16.mxu0 0
      %6428 = vmatmul.mubr.bf16.gmra.mrb[0].mxu0 %v6287
      %v6429 = vpop.f32.mrb[0].mxu0
      %v6430 = vadd.f32 0.0, %v6429
      %v6431 = vpop.f32.mrb[0].mxu0
      %v6432 = vpop.f32.mrb[0].mxu0
      %v6433 = vadd.f32 0.0, %v6432
      %v6434 = vpop.f32.mrb[0].mxu0
      %6435 = vmatprep.mubr.bf16.mxu0 0
      %6436 = vmatmul.mubr.bf16.gmra.mrb[0].mxu0 %v6288
      %v6437 = vpop.f32.mrb[0].mxu0
      %v6438 = vadd.f32 0.0, %v6437
      %v6439 = vpop.f32.mrb[0].mxu0
      %v6440 = vpop.f32.mrb[0].mxu0
      %v6441 = vadd.f32 0.0, %v6440
      %v6442 = vpop.f32.mrb[0].mxu0
      %6443 = vmatprep.mubr.bf16.mxu0 0
      %6444 = vmatmul.mubr.bf16.gmra.mrb[0].mxu0 %v6289
      %v6445 = vpop.f32.mrb[0].mxu0
      %v6446 = vadd.f32 0.0, %v6445
      %v6447 = vpop.f32.mrb[0].mxu0
      %v6448 = vpop.f32.mrb[0].mxu0
      %v6449 = vadd.f32 0.0, %v6448
      %v6450 = vpop.f32.mrb[0].mxu0
      %6451 = vmatprep.mubr.bf16.mxu0 0
      %6452 = vmatmul.mubr.bf16.gmra.mrb[0].mxu0 %v6290
      %v6453 = vpop.f32.mrb[0].mxu0
      %v6454 = vadd.f32 0.0, %v6453
      %v6455 = vpop.f32.mrb[0].mxu0
      %v6456 = vpop.f32.mrb[0].mxu0
      %v6457 = vadd.f32 0.0, %v6456
      %v6458 = vpop.f32.mrb[0].mxu0
      %6459 = vmatprep.mubr.bf16.mxu0 0
      %6460 = vmatmul.mubr.bf16.gmra.mrb[0].mxu0 %v6291
      %v6461 = vpop.f32.mrb[0].mxu0
      %v6462 = vadd.f32 0.0, %v6461
      %v6463 = vpop.f32.mrb[0].mxu0
      %v6464 = vpop.f32.mrb[0].mxu0
      %v6465 = vadd.f32 0.0, %v6464
      %v6466 = vpop.f32.mrb[0].mxu0
      %6467 = vmatprep.mubr.bf16.mxu0 0
      %6468 = vmatmul.mubr.bf16.gmra.mrb[0].mxu0 %v6292
      %v6469 = vpop.f32.mrb[0].mxu0
      %v6470 = vadd.f32 0.0, %v6469
      %v6471 = vpop.f32.mrb[0].mxu0
      %v6472 = vpop.f32.mrb[0].mxu0
      %v6473 = vadd.f32 0.0, %v6472
      %v6474 = vpop.f32.mrb[0].mxu0
      %6475 = vmatprep.mubr.bf16.mxu0 0
      %6476 = vmatmul.mubr.bf16.gmra.mrb[0].mxu0 %v6293
      %v6477 = vpop.f32.mrb[0].mxu0
      %v6478 = vadd.f32 0.0, %v6477
      %v6479 = vpop.f32.mrb[0].mxu0
      %v6480 = vpop.f32.mrb[0].mxu0
      %v6481 = vadd.f32 0.0, %v6480
      %v6482 = vpop.f32.mrb[0].mxu0
      %6483 = vmatprep.mubr.bf16.mxu0 0
      %6484 = vmatmul.mubr.bf16.gmra.mrb[0].mxu0 %v6294
      %v6485 = vpop.f32.mrb[0].mxu0
      %v6486 = vadd.f32 0.0, %v6485
      %v6487 = vpop.f32.mrb[0].mxu0
      %v6488 = vpop.f32.mrb[0].mxu0
      %v6489 = vadd.f32 0.0, %v6488
      %v6490 = vpop.f32.mrb[0].mxu0
      %6491 = vmatprep.mubr.bf16.mxu0 0
      %6492 = vmatmul.mubr.bf16.gmra.mrb[0].mxu0 %v6295
      %v6493 = vpop.f32.mrb[0].mxu0
      %v6494 = vadd.f32 0.0, %v6493
      %v6495 = vpop.f32.mrb[0].mxu0
      %v6496 = vpop.f32.mrb[0].mxu0
      %v6497 = vadd.f32 0.0, %v6496
      %v6498 = vpop.f32.mrb[0].mxu0
      %6499 = vmatprep.mubr.bf16.mxu0 0
      %6500 = vmatmul.mubr.bf16.gmra.mrb[0].mxu0 %v6296
      %v6501 = vpop.f32.mrb[0].mxu0
      %v6502 = vadd.f32 0.0, %v6501
      %v6503 = vpop.f32.mrb[0].mxu0
      %v6504 = vpop.f32.mrb[0].mxu0
      %v6505 = vadd.f32 0.0, %v6504
      %v6506 = vpop.f32.mrb[0].mxu0
      %6507 = vmatprep.mubr.bf16.mxu0 0
      %6508 = vmatmul.mubr.bf16.gmra.mrb[0].mxu0 %v6297
      %v6509 = vpop.f32.mrb[0].mxu0
      %v6510 = vadd.f32 0.0, %v6509
      %v6511 = vpop.f32.mrb[0].mxu0
      %v6512 = vpop.f32.mrb[0].mxu0
      %v6513 = vadd.f32 0.0, %v6512
      %v6514 = vpop.f32.mrb[0].mxu0
      %6515 = vmatprep.mubr.bf16.mxu0 0
      %6516 = vmatmul.mubr.bf16.gmra.mrb[0].mxu0 %v6298
      %v6517 = vpop.f32.mrb[0].mxu0
      %v6518 = vadd.f32 0.0, %v6517
      %v6519 = vpop.f32.mrb[0].mxu0
      %v6520 = vpop.f32.mrb[0].mxu0
      %v6521 = vadd.f32 0.0, %v6520
      %v6522 = vpop.f32.mrb[0].mxu0
      %6523 = vdwg.mxu0
      %v6524 = vld [vmem:[%s9] sm:$0x1]
      %v6526 = vlaneseq
      %v6527 = vshrl.u32 %v6526, 7
      %v6528 = vsub.s32 0, %v6527
      %v6529 = vrot.slane %v6524, %v6528
      %v6531 = vmul.f32 %v6398, %v6529
      %v6532 = vmul.f32 %v6401, %v6529
      %v6533 = vmul.f32 %v6406, %v6529
      %v6534 = vmul.f32 %v6409, %v6529
      %v6535 = vmul.f32 %v6414, %v6529
      %v6536 = vmul.f32 %v6417, %v6529
      %v6537 = vmul.f32 %v6422, %v6529
      %v6538 = vmul.f32 %v6425, %v6529
      %v6539 = vmul.f32 %v6430, %v6529
      %v6540 = vmul.f32 %v6433, %v6529
      %v6541 = vmul.f32 %v6438, %v6529
      %v6542 = vmul.f32 %v6441, %v6529
      %v6543 = vmul.f32 %v6446, %v6529
      %v6544 = vmul.f32 %v6449, %v6529
      %v6545 = vmul.f32 %v6454, %v6529
      %v6546 = vmul.f32 %v6457, %v6529
      %v6547 = vmul.f32 %v6462, %v6529
      %v6548 = vmul.f32 %v6465, %v6529
      %v6549 = vmul.f32 %v6470, %v6529
      %v6550 = vmul.f32 %v6473, %v6529
      %v6551 = vmul.f32 %v6478, %v6529
      %v6552 = vmul.f32 %v6481, %v6529
      %v6553 = vmul.f32 %v6486, %v6529
      %v6554 = vmul.f32 %v6489, %v6529
      %v6555 = vmul.f32 %v6494, %v6529
      %v6556 = vmul.f32 %v6497, %v6529
      %v6557 = vmul.f32 %v6502, %v6529
      %v6558 = vmul.f32 %v6505, %v6529
      %v6559 = vmul.f32 %v6510, %v6529
      %v6560 = vmul.f32 %v6513, %v6529
      %v6561 = vmul.f32 %v6518, %v6529
      %v6562 = vmul.f32 %v6521, %v6529
      %v6563 = vld [vmem:[%s10] sm:$0x1]
      %v6565 = vlaneseq
      %v6566 = vshrl.u32 %v6565, 7
      %v6567 = vsub.s32 0, %v6566
      %v6568 = vrot.slane %v6563, %v6567
      %v6570 = vadd.f32 %v6531, %v6568
      %v6571 = vadd.f32 %v6532, %v6568
      %v6572 = vadd.f32 %v6533, %v6568
      %v6573 = vadd.f32 %v6534, %v6568
      %v6574 = vadd.f32 %v6535, %v6568
      %v6575 = vadd.f32 %v6536, %v6568
      %v6576 = vadd.f32 %v6537, %v6568
      %v6577 = vadd.f32 %v6538, %v6568
      %v6578 = vadd.f32 %v6539, %v6568
      %v6579 = vadd.f32 %v6540, %v6568
      %v6580 = vadd.f32 %v6541, %v6568
      %v6581 = vadd.f32 %v6542, %v6568
      %v6582 = vadd.f32 %v6543, %v6568
      %v6583 = vadd.f32 %v6544, %v6568
      %v6584 = vadd.f32 %v6545, %v6568
      %v6585 = vadd.f32 %v6546, %v6568
      %v6586 = vadd.f32 %v6547, %v6568
      %v6587 = vadd.f32 %v6548, %v6568
      %v6588 = vadd.f32 %v6549, %v6568
      %v6589 = vadd.f32 %v6550, %v6568
      %v6590 = vadd.f32 %v6551, %v6568
      %v6591 = vadd.f32 %v6552, %v6568
      %v6592 = vadd.f32 %v6553, %v6568
      %v6593 = vadd.f32 %v6554, %v6568
      %v6594 = vadd.f32 %v6555, %v6568
      %v6595 = vadd.f32 %v6556, %v6568
      %v6596 = vadd.f32 %v6557, %v6568
      %v6597 = vadd.f32 %v6558, %v6568
      %v6598 = vadd.f32 %v6559, %v6568
      %v6599 = vadd.f32 %v6560, %v6568
      %v6600 = vadd.f32 %v6561, %v6568
      %v6601 = vadd.f32 %v6562, %v6568
      %v6602 = vxor.u32 %v6570, 2147483648
      %v6603 = vxor.u32 %v6571, 2147483648
      %v6604 = vxor.u32 %v6572, 2147483648
      %v6605 = vxor.u32 %v6573, 2147483648
      %v6606 = vxor.u32 %v6574, 2147483648
      %v6607 = vxor.u32 %v6575, 2147483648
      %v6608 = vxor.u32 %v6576, 2147483648
      %v6609 = vxor.u32 %v6577, 2147483648
      %v6610 = vxor.u32 %v6578, 2147483648
      %v6611 = vxor.u32 %v6579, 2147483648
      %v6612 = vxor.u32 %v6580, 2147483648
      %v6613 = vxor.u32 %v6581, 2147483648
      %v6614 = vxor.u32 %v6582, 2147483648
      %v6615 = vxor.u32 %v6583, 2147483648
      %v6616 = vxor.u32 %v6584, 2147483648
      %v6617 = vxor.u32 %v6585, 2147483648
      %v6618 = vxor.u32 %v6586, 2147483648
      %v6619 = vxor.u32 %v6587, 2147483648
      %v6620 = vxor.u32 %v6588, 2147483648
      %v6621 = vxor.u32 %v6589, 2147483648
      %v6622 = vxor.u32 %v6590, 2147483648
      %v6623 = vxor.u32 %v6591, 2147483648
      %v6624 = vxor.u32 %v6592, 2147483648
      %v6625 = vxor.u32 %v6593, 2147483648
      %v6626 = vxor.u32 %v6594, 2147483648
      %v6627 = vxor.u32 %v6595, 2147483648
      %v6628 = vxor.u32 %v6596, 2147483648
      %v6629 = vxor.u32 %v6597, 2147483648
      %v6630 = vxor.u32 %v6598, 2147483648
      %v6631 = vxor.u32 %v6599, 2147483648
      %v6632 = vxor.u32 %v6600, 2147483648
      %v6633 = vxor.u32 %v6601, 2147483648
      %v6634 = vmul.f32 %v6602, 1.442695
      %v6635 = vpow.pop %v6634
      %v6636 = vmul.f32 %v6603, 1.442695
      %v6637 = vpow.pop %v6636
      %v6638 = vmul.f32 %v6604, 1.442695
      %v6639 = vpow.pop %v6638
      %v6640 = vmul.f32 %v6605, 1.442695
      %v6641 = vpow.pop %v6640
      %v6642 = vmul.f32 %v6606, 1.442695
      %v6643 = vpow.pop %v6642
      %v6644 = vmul.f32 %v6607, 1.442695
      %v6645 = vpow.pop %v6644
      %v6646 = vmul.f32 %v6608, 1.442695
      %v6647 = vpow.pop %v6646
      %v6648 = vmul.f32 %v6609, 1.442695
      %v6649 = vpow.pop %v6648
      %v6650 = vmul.f32 %v6610, 1.442695
      %v6651 = vpow.pop %v6650
      %v6652 = vmul.f32 %v6611, 1.442695
      %v6653 = vpow.pop %v6652
      %v6654 = vmul.f32 %v6612, 1.442695
      %v6655 = vpow.pop %v6654
      %v6656 = vmul.f32 %v6613, 1.442695
      %v6657 = vpow.pop %v6656
      %v6658 = vmul.f32 %v6614, 1.442695
      %v6659 = vpow.pop %v6658
      %v6660 = vmul.f32 %v6615, 1.442695
      %v6661 = vpow.pop %v6660
      %v6662 = vmul.f32 %v6616, 1.442695
      %v6663 = vpow.pop %v6662
      %v6664 = vmul.f32 %v6617, 1.442695
      %v6665 = vpow.pop %v6664
      %v6666 = vmul.f32 %v6618, 1.442695
      %v6667 = vpow.pop %v6666
      %v6668 = vmul.f32 %v6619, 1.442695
      %v6669 = vpow.pop %v6668
      %v6670 = vmul.f32 %v6620, 1.442695
      %v6671 = vpow.pop %v6670
      %v6672 = vmul.f32 %v6621, 1.442695
      %v6673 = vpow.pop %v6672
      %v6674 = vmul.f32 %v6622, 1.442695
      %v6675 = vpow.pop %v6674
      %v6676 = vmul.f32 %v6623, 1.442695
      %v6677 = vpow.pop %v6676
      %v6678 = vmul.f32 %v6624, 1.442695
      %v6679 = vpow.pop %v6678
      %v6680 = vmul.f32 %v6625, 1.442695
      %v6681 = vpow.pop %v6680
      %v6682 = vmul.f32 %v6626, 1.442695
      %v6683 = vpow.pop %v6682
      %v6684 = vmul.f32 %v6627, 1.442695
      %v6685 = vpow.pop %v6684
      %v6686 = vmul.f32 %v6628, 1.442695
      %v6687 = vpow.pop %v6686
      %v6688 = vmul.f32 %v6629, 1.442695
      %v6689 = vpow.pop %v6688
      %v6690 = vmul.f32 %v6630, 1.442695
      %v6691 = vpow.pop %v6690
      %v6692 = vmul.f32 %v6631, 1.442695
      %v6693 = vpow.pop %v6692
      %v6694 = vmul.f32 %v6632, 1.442695
      %v6695 = vpow.pop %v6694
      %v6696 = vmul.f32 %v6633, 1.442695
      %v6697 = vpow.pop %v6696
      %v6698 = vadd.f32 %v6635, 1.0
      %v6699 = vadd.f32 %v6637, 1.0
      %v6700 = vadd.f32 %v6639, 1.0
      %v6701 = vadd.f32 %v6641, 1.0
      %v6702 = vadd.f32 %v6643, 1.0
      %v6703 = vadd.f32 %v6645, 1.0
      %v6704 = vadd.f32 %v6647, 1.0
      %v6705 = vadd.f32 %v6649, 1.0
      %v6706 = vadd.f32 %v6651, 1.0
      %v6707 = vadd.f32 %v6653, 1.0
      %v6708 = vadd.f32 %v6655, 1.0
      %v6709 = vadd.f32 %v6657, 1.0
      %v6710 = vadd.f32 %v6659, 1.0
      %v6711 = vadd.f32 %v6661, 1.0
      %v6712 = vadd.f32 %v6663, 1.0
      %v6713 = vadd.f32 %v6665, 1.0
      %v6714 = vadd.f32 %v6667, 1.0
      %v6715 = vadd.f32 %v6669, 1.0
      %v6716 = vadd.f32 %v6671, 1.0
      %v6717 = vadd.f32 %v6673, 1.0
      %v6718 = vadd.f32 %v6675, 1.0
      %v6719 = vadd.f32 %v6677, 1.0
      %v6720 = vadd.f32 %v6679, 1.0
      %v6721 = vadd.f32 %v6681, 1.0
      %v6722 = vadd.f32 %v6683, 1.0
      %v6723 = vadd.f32 %v6685, 1.0
      %v6724 = vadd.f32 %v6687, 1.0
      %v6725 = vadd.f32 %v6689, 1.0
      %v6726 = vadd.f32 %v6691, 1.0
      %v6727 = vadd.f32 %v6693, 1.0
      %v6728 = vadd.f32 %v6695, 1.0
      %v6729 = vadd.f32 %v6697, 1.0
      %v6730 = vrcp.pop %v6698
      %v6731 = vmul.f32 1.0, %v6730
      %v6732 = vrcp.pop %v6699
      %v6733 = vmul.f32 1.0, %v6732
      %v6734 = vrcp.pop %v6700
      %v6735 = vmul.f32 1.0, %v6734
      %v6736 = vrcp.pop %v6701
      %v6737 = vmul.f32 1.0, %v6736
      %v6738 = vrcp.pop %v6702
      %v6739 = vmul.f32 1.0, %v6738
      %v6740 = vrcp.pop %v6703
      %v6741 = vmul.f32 1.0, %v6740
      %v6742 = vrcp.pop %v6704
      %v6743 = vmul.f32 1.0, %v6742
      %v6744 = vrcp.pop %v6705
      %v6745 = vmul.f32 1.0, %v6744
      %v6746 = vrcp.pop %v6706
      %v6747 = vmul.f32 1.0, %v6746
      %v6748 = vrcp.pop %v6707
      %v6749 = vmul.f32 1.0, %v6748
      %v6750 = vrcp.pop %v6708
      %v6751 = vmul.f32 1.0, %v6750
      %v6752 = vrcp.pop %v6709
      %v6753 = vmul.f32 1.0, %v6752
      %v6754 = vrcp.pop %v6710
      %v6755 = vmul.f32 1.0, %v6754
      %v6756 = vrcp.pop %v6711
      %v6757 = vmul.f32 1.0, %v6756
      %v6758 = vrcp.pop %v6712
      %v6759 = vmul.f32 1.0, %v6758
      %v6760 = vrcp.pop %v6713
      %v6761 = vmul.f32 1.0, %v6760
      %v6762 = vrcp.pop %v6714
      %v6763 = vmul.f32 1.0, %v6762
      %v6764 = vrcp.pop %v6715
      %v6765 = vmul.f32 1.0, %v6764
      %v6766 = vrcp.pop %v6716
      %v6767 = vmul.f32 1.0, %v6766
      %v6768 = vrcp.pop %v6717
      %v6769 = vmul.f32 1.0, %v6768
      %v6770 = vrcp.pop %v6718
      %v6771 = vmul.f32 1.0, %v6770
      %v6772 = vrcp.pop %v6719
      %v6773 = vmul.f32 1.0, %v6772
      %v6774 = vrcp.pop %v6720
      %v6775 = vmul.f32 1.0, %v6774
      %v6776 = vrcp.pop %v6721
      %v6777 = vmul.f32 1.0, %v6776
      %v6778 = vrcp.pop %v6722
      %v6779 = vmul.f32 1.0, %v6778
      %v6780 = vrcp.pop %v6723
      %v6781 = vmul.f32 1.0, %v6780
      %v6782 = vrcp.pop %v6724
      %v6783 = vmul.f32 1.0, %v6782
      %v6784 = vrcp.pop %v6725
      %v6785 = vmul.f32 1.0, %v6784
      %v6786 = vrcp.pop %v6726
      %v6787 = vmul.f32 1.0, %v6786
      %v6788 = vrcp.pop %v6727
      %v6789 = vmul.f32 1.0, %v6788
      %v6790 = vrcp.pop %v6728
      %v6791 = vmul.f32 1.0, %v6790
      %v6792 = vrcp.pop %v6729
      %v6793 = vmul.f32 1.0, %v6792
      %v6794 = vmul.f32 %v6570, %v6731
      %v6795 = vmul.f32 %v6571, %v6733
      %v6796 = vmul.f32 %v6572, %v6735
      %v6797 = vmul.f32 %v6573, %v6737
      %v6798 = vmul.f32 %v6574, %v6739
      %v6799 = vmul.f32 %v6575, %v6741
      %v6800 = vmul.f32 %v6576, %v6743
      %v6801 = vmul.f32 %v6577, %v6745
      %v6802 = vmul.f32 %v6578, %v6747
      %v6803 = vmul.f32 %v6579, %v6749
      %v6804 = vmul.f32 %v6580, %v6751
      %v6805 = vmul.f32 %v6581, %v6753
      %v6806 = vmul.f32 %v6582, %v6755
      %v6807 = vmul.f32 %v6583, %v6757
      %v6808 = vmul.f32 %v6584, %v6759
      %v6809 = vmul.f32 %v6585, %v6761
      %v6810 = vmul.f32 %v6586, %v6763
      %v6811 = vmul.f32 %v6587, %v6765
      %v6812 = vmul.f32 %v6588, %v6767
      %v6813 = vmul.f32 %v6589, %v6769
      %v6814 = vmul.f32 %v6590, %v6771
      %v6815 = vmul.f32 %v6591, %v6773
      %v6816 = vmul.f32 %v6592, %v6775
      %v6817 = vmul.f32 %v6593, %v6777
      %v6818 = vmul.f32 %v6594, %v6779
      %v6819 = vmul.f32 %v6595, %v6781
      %v6820 = vmul.f32 %v6596, %v6783
      %v6821 = vmul.f32 %v6597, %v6785
      %v6822 = vmul.f32 %v6598, %v6787
      %v6823 = vmul.f32 %v6599, %v6789
      %v6824 = vmul.f32 %v6600, %v6791
      %v6825 = vmul.f32 %v6601, %v6793
      %v6826 = vld [vmem:[%s566] sm:$0xf]
      %v6827 = vld [vmem:[%s566 + $0x4] sm:$0xf]
      %v6828 = vld [vmem:[%s566 + $0x8] sm:$0xf]
      %v6829 = vld [vmem:[%s566 + $0xc] sm:$0xf]
      %v6830 = vld [vmem:[%s566 + $0x10] sm:$0xf]
      %v6831 = vld [vmem:[%s566 + $0x14] sm:$0xf]
      %v6832 = vld [vmem:[%s566 + $0x18] sm:$0xf]
      %v6833 = vld [vmem:[%s566 + $0x1c] sm:$0xf]
      %v6834 = vld [vmem:[%s566 + $0x20] sm:$0xf]
      %v6835 = vld [vmem:[%s566 + $0x24] sm:$0xf]
      %v6836 = vld [vmem:[%s566 + $0x28] sm:$0xf]
      %v6837 = vld [vmem:[%s566 + $0x2c] sm:$0xf]
      %v6838 = vld [vmem:[%s566 + $0x30] sm:$0xf]
      %v6839 = vld [vmem:[%s566 + $0x34] sm:$0xf]
      %v6840 = vld [vmem:[%s566 + $0x38] sm:$0xf]
      %v6841 = vld [vmem:[%s566 + $0x3c] sm:$0xf]
      %v6842 = vld [vmem:[%s566 + $0x40] sm:$0xf]
      %v6843 = vld [vmem:[%s566 + $0x44] sm:$0xf]
      %v6844 = vld [vmem:[%s566 + $0x48] sm:$0xf]
      %v6845 = vld [vmem:[%s566 + $0x4c] sm:$0xf]
      %v6846 = vld [vmem:[%s566 + $0x50] sm:$0xf]
      %v6847 = vld [vmem:[%s566 + $0x54] sm:$0xf]
      %v6848 = vld [vmem:[%s566 + $0x58] sm:$0xf]
      %v6849 = vld [vmem:[%s566 + $0x5c] sm:$0xf]
      %v6850 = vld [vmem:[%s566 + $0x60] sm:$0xf]
      %v6851 = vld [vmem:[%s566 + $0x64] sm:$0xf]
      %v6852 = vld [vmem:[%s566 + $0x68] sm:$0xf]
      %v6853 = vld [vmem:[%s566 + $0x6c] sm:$0xf]
      %v6854 = vld [vmem:[%s566 + $0x70] sm:$0xf]
      %v6855 = vld [vmem:[%s566 + $0x74] sm:$0xf]
      %v6856 = vld [vmem:[%s566 + $0x78] sm:$0xf]
      %v6857 = vld [vmem:[%s566 + $0x7c] sm:$0xf]
      %v6858 = vunpack.c.l.bf16 %v6826
      %v6859 = vunpack.c.l.bf16 %v6827
      %v6860 = vunpack.c.l.bf16 %v6828
      %v6861 = vunpack.c.l.bf16 %v6829
      %v6862 = vunpack.c.l.bf16 %v6830
      %v6863 = vunpack.c.l.bf16 %v6831
      %v6864 = vunpack.c.l.bf16 %v6832
      %v6865 = vunpack.c.l.bf16 %v6833
      %v6866 = vunpack.c.l.bf16 %v6834
      %v6867 = vunpack.c.l.bf16 %v6835
      %v6868 = vunpack.c.l.bf16 %v6836
      %v6869 = vunpack.c.l.bf16 %v6837
      %v6870 = vunpack.c.l.bf16 %v6838
      %v6871 = vunpack.c.l.bf16 %v6839
      %v6872 = vunpack.c.l.bf16 %v6840
      %v6873 = vunpack.c.l.bf16 %v6841
      %v6874 = vunpack.c.l.bf16 %v6842
      %v6875 = vunpack.c.l.bf16 %v6843
      %v6876 = vunpack.c.l.bf16 %v6844
      %v6877 = vunpack.c.l.bf16 %v6845
      %v6878 = vunpack.c.l.bf16 %v6846
      %v6879 = vunpack.c.l.bf16 %v6847
      %v6880 = vunpack.c.l.bf16 %v6848
      %v6881 = vunpack.c.l.bf16 %v6849
      %v6882 = vunpack.c.l.bf16 %v6850
      %v6883 = vunpack.c.l.bf16 %v6851
      %v6884 = vunpack.c.l.bf16 %v6852
      %v6885 = vunpack.c.l.bf16 %v6853
      %v6886 = vunpack.c.l.bf16 %v6854
      %v6887 = vunpack.c.l.bf16 %v6855
      %v6888 = vunpack.c.l.bf16 %v6856
      %v6889 = vunpack.c.l.bf16 %v6857
      %v6890 = vld [vmem:[%s11] sm:$0x1]
      %v6892 = vlaneseq
      %v6893 = vshrl.u32 %v6892, 7
      %v6894 = vsub.s32 0, %v6893
      %v6895 = vrot.slane %v6890, %v6894
      %v6897 = vmul.f32 %v6858, %v6895
      %v6898 = vmul.f32 %v6859, %v6895
      %v6899 = vmul.f32 %v6860, %v6895
      %v6900 = vmul.f32 %v6861, %v6895
      %v6901 = vmul.f32 %v6862, %v6895
      %v6902 = vmul.f32 %v6863, %v6895
      %v6903 = vmul.f32 %v6864, %v6895
      %v6904 = vmul.f32 %v6865, %v6895
      %v6905 = vmul.f32 %v6866, %v6895
      %v6906 = vmul.f32 %v6867, %v6895
      %v6907 = vmul.f32 %v6868, %v6895
      %v6908 = vmul.f32 %v6869, %v6895
      %v6909 = vmul.f32 %v6870, %v6895
      %v6910 = vmul.f32 %v6871, %v6895
      %v6911 = vmul.f32 %v6872, %v6895
      %v6912 = vmul.f32 %v6873, %v6895
      %v6913 = vmul.f32 %v6874, %v6895
      %v6914 = vmul.f32 %v6875, %v6895
      %v6915 = vmul.f32 %v6876, %v6895
      %v6916 = vmul.f32 %v6877, %v6895
      %v6917 = vmul.f32 %v6878, %v6895
      %v6918 = vmul.f32 %v6879, %v6895
      %v6919 = vmul.f32 %v6880, %v6895
      %v6920 = vmul.f32 %v6881, %v6895
      %v6921 = vmul.f32 %v6882, %v6895
      %v6922 = vmul.f32 %v6883, %v6895
      %v6923 = vmul.f32 %v6884, %v6895
      %v6924 = vmul.f32 %v6885, %v6895
      %v6925 = vmul.f32 %v6886, %v6895
      %v6926 = vmul.f32 %v6887, %v6895
      %v6927 = vmul.f32 %v6888, %v6895
      %v6928 = vmul.f32 %v6889, %v6895
      %v6929 = vld [vmem:[%s12] sm:$0x1]
      %v6931 = vlaneseq
      %v6932 = vshrl.u32 %v6931, 7
      %v6933 = vsub.s32 0, %v6932
      %v6934 = vrot.slane %v6929, %v6933
      %v6936 = vadd.f32 %v6897, %v6934
      %v6937 = vadd.f32 %v6898, %v6934
      %v6938 = vadd.f32 %v6899, %v6934
      %v6939 = vadd.f32 %v6900, %v6934
      %v6940 = vadd.f32 %v6901, %v6934
      %v6941 = vadd.f32 %v6902, %v6934
      %v6942 = vadd.f32 %v6903, %v6934
      %v6943 = vadd.f32 %v6904, %v6934
      %v6944 = vadd.f32 %v6905, %v6934
      %v6945 = vadd.f32 %v6906, %v6934
      %v6946 = vadd.f32 %v6907, %v6934
      %v6947 = vadd.f32 %v6908, %v6934
      %v6948 = vadd.f32 %v6909, %v6934
      %v6949 = vadd.f32 %v6910, %v6934
      %v6950 = vadd.f32 %v6911, %v6934
      %v6951 = vadd.f32 %v6912, %v6934
      %v6952 = vadd.f32 %v6913, %v6934
      %v6953 = vadd.f32 %v6914, %v6934
      %v6954 = vadd.f32 %v6915, %v6934
      %v6955 = vadd.f32 %v6916, %v6934
      %v6956 = vadd.f32 %v6917, %v6934
      %v6957 = vadd.f32 %v6918, %v6934
      %v6958 = vadd.f32 %v6919, %v6934
      %v6959 = vadd.f32 %v6920, %v6934
      %v6960 = vadd.f32 %v6921, %v6934
      %v6961 = vadd.f32 %v6922, %v6934
      %v6962 = vadd.f32 %v6923, %v6934
      %v6963 = vadd.f32 %v6924, %v6934
      %v6964 = vadd.f32 %v6925, %v6934
      %v6965 = vadd.f32 %v6926, %v6934
      %v6966 = vadd.f32 %v6927, %v6934
      %v6967 = vadd.f32 %v6928, %v6934
      %v6968 = vxor.u32 %v6936, 2147483648
      %v6969 = vxor.u32 %v6937, 2147483648
      %v6970 = vxor.u32 %v6938, 2147483648
      %v6971 = vxor.u32 %v6939, 2147483648
      %v6972 = vxor.u32 %v6940, 2147483648
      %v6973 = vxor.u32 %v6941, 2147483648
      %v6974 = vxor.u32 %v6942, 2147483648
      %v6975 = vxor.u32 %v6943, 2147483648
      %v6976 = vxor.u32 %v6944, 2147483648
      %v6977 = vxor.u32 %v6945, 2147483648
      %v6978 = vxor.u32 %v6946, 2147483648
      %v6979 = vxor.u32 %v6947, 2147483648
      %v6980 = vxor.u32 %v6948, 2147483648
      %v6981 = vxor.u32 %v6949, 2147483648
      %v6982 = vxor.u32 %v6950, 2147483648
      %v6983 = vxor.u32 %v6951, 2147483648
      %v6984 = vxor.u32 %v6952, 2147483648
      %v6985 = vxor.u32 %v6953, 2147483648
      %v6986 = vxor.u32 %v6954, 2147483648
      %v6987 = vxor.u32 %v6955, 2147483648
      %v6988 = vxor.u32 %v6956, 2147483648
      %v6989 = vxor.u32 %v6957, 2147483648
      %v6990 = vxor.u32 %v6958, 2147483648
      %v6991 = vxor.u32 %v6959, 2147483648
      %v6992 = vxor.u32 %v6960, 2147483648
      %v6993 = vxor.u32 %v6961, 2147483648
      %v6994 = vxor.u32 %v6962, 2147483648
      %v6995 = vxor.u32 %v6963, 2147483648
      %v6996 = vxor.u32 %v6964, 2147483648
      %v6997 = vxor.u32 %v6965, 2147483648
      %v6998 = vxor.u32 %v6966, 2147483648
      %v6999 = vxor.u32 %v6967, 2147483648
      %v7000 = vmul.f32 %v6968, 1.442695
      %v7001 = vpow.pop %v7000
      %v7002 = vmul.f32 %v6969, 1.442695
      %v7003 = vpow.pop %v7002
      %v7004 = vmul.f32 %v6970, 1.442695
      %v7005 = vpow.pop %v7004
      %v7006 = vmul.f32 %v6971, 1.442695
      %v7007 = vpow.pop %v7006
      %v7008 = vmul.f32 %v6972, 1.442695
      %v7009 = vpow.pop %v7008
      %v7010 = vmul.f32 %v6973, 1.442695
      %v7011 = vpow.pop %v7010
      %v7012 = vmul.f32 %v6974, 1.442695
      %v7013 = vpow.pop %v7012
      %v7014 = vmul.f32 %v6975, 1.442695
      %v7015 = vpow.pop %v7014
      %v7016 = vmul.f32 %v6976, 1.442695
      %v7017 = vpow.pop %v7016
      %v7018 = vmul.f32 %v6977, 1.442695
      %v7019 = vpow.pop %v7018
      %v7020 = vmul.f32 %v6978, 1.442695
      %v7021 = vpow.pop %v7020
      %v7022 = vmul.f32 %v6979, 1.442695
      %v7023 = vpow.pop %v7022
      %v7024 = vmul.f32 %v6980, 1.442695
      %v7025 = vpow.pop %v7024
      %v7026 = vmul.f32 %v6981, 1.442695
      %v7027 = vpow.pop %v7026
      %v7028 = vmul.f32 %v6982, 1.442695
      %v7029 = vpow.pop %v7028
      %v7030 = vmul.f32 %v6983, 1.442695
      %v7031 = vpow.pop %v7030
      %v7032 = vmul.f32 %v6984, 1.442695
      %v7033 = vpow.pop %v7032
      %v7034 = vmul.f32 %v6985, 1.442695
      %v7035 = vpow.pop %v7034
      %v7036 = vmul.f32 %v6986, 1.442695
      %v7037 = vpow.pop %v7036
      %v7038 = vmul.f32 %v6987, 1.442695
      %v7039 = vpow.pop %v7038
      %v7040 = vmul.f32 %v6988, 1.442695
      %v7041 = vpow.pop %v7040
      %v7042 = vmul.f32 %v6989, 1.442695
      %v7043 = vpow.pop %v7042
      %v7044 = vmul.f32 %v6990, 1.442695
      %v7045 = vpow.pop %v7044
      %v7046 = vmul.f32 %v6991, 1.442695
      %v7047 = vpow.pop %v7046
      %v7048 = vmul.f32 %v6992, 1.442695
      %v7049 = vpow.pop %v7048
      %v7050 = vmul.f32 %v6993, 1.442695
      %v7051 = vpow.pop %v7050
      %v7052 = vmul.f32 %v6994, 1.442695
      %v7053 = vpow.pop %v7052
      %v7054 = vmul.f32 %v6995, 1.442695
      %v7055 = vpow.pop %v7054
      %v7056 = vmul.f32 %v6996, 1.442695
      %v7057 = vpow.pop %v7056
      %v7058 = vmul.f32 %v6997, 1.442695
      %v7059 = vpow.pop %v7058
      %v7060 = vmul.f32 %v6998, 1.442695
      %v7061 = vpow.pop %v7060
      %v7062 = vmul.f32 %v6999, 1.442695
      %v7063 = vpow.pop %v7062
      %v7064 = vadd.f32 %v7001, 1.0
      %v7065 = vadd.f32 %v7003, 1.0
      %v7066 = vadd.f32 %v7005, 1.0
      %v7067 = vadd.f32 %v7007, 1.0
      %v7068 = vadd.f32 %v7009, 1.0
      %v7069 = vadd.f32 %v7011, 1.0
      %v7070 = vadd.f32 %v7013, 1.0
      %v7071 = vadd.f32 %v7015, 1.0
      %v7072 = vadd.f32 %v7017, 1.0
      %v7073 = vadd.f32 %v7019, 1.0
      %v7074 = vadd.f32 %v7021, 1.0
      %v7075 = vadd.f32 %v7023, 1.0
      %v7076 = vadd.f32 %v7025, 1.0
      %v7077 = vadd.f32 %v7027, 1.0
      %v7078 = vadd.f32 %v7029, 1.0
      %v7079 = vadd.f32 %v7031, 1.0
      %v7080 = vadd.f32 %v7033, 1.0
      %v7081 = vadd.f32 %v7035, 1.0
      %v7082 = vadd.f32 %v7037, 1.0
      %v7083 = vadd.f32 %v7039, 1.0
      %v7084 = vadd.f32 %v7041, 1.0
      %v7085 = vadd.f32 %v7043, 1.0
      %v7086 = vadd.f32 %v7045, 1.0
      %v7087 = vadd.f32 %v7047, 1.0
      %v7088 = vadd.f32 %v7049, 1.0
      %v7089 = vadd.f32 %v7051, 1.0
      %v7090 = vadd.f32 %v7053, 1.0
      %v7091 = vadd.f32 %v7055, 1.0
      %v7092 = vadd.f32 %v7057, 1.0
      %v7093 = vadd.f32 %v7059, 1.0
      %v7094 = vadd.f32 %v7061, 1.0
      %v7095 = vadd.f32 %v7063, 1.0
      %v7096 = vrcp.pop %v7064
      %v7097 = vmul.f32 1.0, %v7096
      %v7098 = vrcp.pop %v7065
      %v7099 = vmul.f32 1.0, %v7098
      %v7100 = vrcp.pop %v7066
      %v7101 = vmul.f32 1.0, %v7100
      %v7102 = vrcp.pop %v7067
      %v7103 = vmul.f32 1.0, %v7102
      %v7104 = vrcp.pop %v7068
      %v7105 = vmul.f32 1.0, %v7104
      %v7106 = vrcp.pop %v7069
      %v7107 = vmul.f32 1.0, %v7106
      %v7108 = vrcp.pop %v7070
      %v7109 = vmul.f32 1.0, %v7108
      %v7110 = vrcp.pop %v7071
      %v7111 = vmul.f32 1.0, %v7110
      %v7112 = vrcp.pop %v7072
      %v7113 = vmul.f32 1.0, %v7112
      %v7114 = vrcp.pop %v7073
      %v7115 = vmul.f32 1.0, %v7114
      %v7116 = vrcp.pop %v7074
      %v7117 = vmul.f32 1.0, %v7116
      %v7118 = vrcp.pop %v7075
      %v7119 = vmul.f32 1.0, %v7118
      %v7120 = vrcp.pop %v7076
      %v7121 = vmul.f32 1.0, %v7120
      %v7122 = vrcp.pop %v7077
      %v7123 = vmul.f32 1.0, %v7122
      %v7124 = vrcp.pop %v7078
      %v7125 = vmul.f32 1.0, %v7124
      %v7126 = vrcp.pop %v7079
      %v7127 = vmul.f32 1.0, %v7126
      %v7128 = vrcp.pop %v7080
      %v7129 = vmul.f32 1.0, %v7128
      %v7130 = vrcp.pop %v7081
      %v7131 = vmul.f32 1.0, %v7130
      %v7132 = vrcp.pop %v7082
      %v7133 = vmul.f32 1.0, %v7132
      %v7134 = vrcp.pop %v7083
      %v7135 = vmul.f32 1.0, %v7134
      %v7136 = vrcp.pop %v7084
      %v7137 = vmul.f32 1.0, %v7136
      %v7138 = vrcp.pop %v7085
      %v7139 = vmul.f32 1.0, %v7138
      %v7140 = vrcp.pop %v7086
      %v7141 = vmul.f32 1.0, %v7140
      %v7142 = vrcp.pop %v7087
      %v7143 = vmul.f32 1.0, %v7142
      %v7144 = vrcp.pop %v7088
      %v7145 = vmul.f32 1.0, %v7144
      %v7146 = vrcp.pop %v7089
      %v7147 = vmul.f32 1.0, %v7146
      %v7148 = vrcp.pop %v7090
      %v7149 = vmul.f32 1.0, %v7148
      %v7150 = vrcp.pop %v7091
      %v7151 = vmul.f32 1.0, %v7150
      %v7152 = vrcp.pop %v7092
      %v7153 = vmul.f32 1.0, %v7152
      %v7154 = vrcp.pop %v7093
      %v7155 = vmul.f32 1.0, %v7154
      %v7156 = vrcp.pop %v7094
      %v7157 = vmul.f32 1.0, %v7156
      %v7158 = vrcp.pop %v7095
      %v7159 = vmul.f32 1.0, %v7158
      %v7160 = vmul.f32 %v6936, %v7097
      %v7161 = vmul.f32 %v6937, %v7099
      %v7162 = vmul.f32 %v6938, %v7101
      %v7163 = vmul.f32 %v6939, %v7103
      %v7164 = vmul.f32 %v6940, %v7105
      %v7165 = vmul.f32 %v6941, %v7107
      %v7166 = vmul.f32 %v6942, %v7109
      %v7167 = vmul.f32 %v6943, %v7111
      %v7168 = vmul.f32 %v6944, %v7113
      %v7169 = vmul.f32 %v6945, %v7115
      %v7170 = vmul.f32 %v6946, %v7117
      %v7171 = vmul.f32 %v6947, %v7119
      %v7172 = vmul.f32 %v6948, %v7121
      %v7173 = vmul.f32 %v6949, %v7123
      %v7174 = vmul.f32 %v6950, %v7125
      %v7175 = vmul.f32 %v6951, %v7127
      %v7176 = vmul.f32 %v6952, %v7129
      %v7177 = vmul.f32 %v6953, %v7131
      %v7178 = vmul.f32 %v6954, %v7133
      %v7179 = vmul.f32 %v6955, %v7135
      %v7180 = vmul.f32 %v6956, %v7137
      %v7181 = vmul.f32 %v6957, %v7139
      %v7182 = vmul.f32 %v6958, %v7141
      %v7183 = vmul.f32 %v6959, %v7143
      %v7184 = vmul.f32 %v6960, %v7145
      %v7185 = vmul.f32 %v6961, %v7147
      %v7186 = vmul.f32 %v6962, %v7149
      %v7187 = vmul.f32 %v6963, %v7151
      %v7188 = vmul.f32 %v6964, %v7153
      %v7189 = vmul.f32 %v6965, %v7155
      %v7190 = vmul.f32 %v6966, %v7157
      %v7191 = vmul.f32 %v6967, %v7159
      %v7192 = vpack.c.bf16 %v6795, %v6794
      %v7193 = vpack.c.bf16 %v6797, %v6796
      %v7194 = vpack.c.bf16 %v6799, %v6798
      %v7195 = vpack.c.bf16 %v6801, %v6800
      %v7196 = vpack.c.bf16 %v6803, %v6802
      %v7197 = vpack.c.bf16 %v6805, %v6804
      %v7198 = vpack.c.bf16 %v6807, %v6806
      %v7199 = vpack.c.bf16 %v6809, %v6808
      %v7200 = vpack.c.bf16 %v6811, %v6810
      %v7201 = vpack.c.bf16 %v6813, %v6812
      %v7202 = vpack.c.bf16 %v6815, %v6814
      %v7203 = vpack.c.bf16 %v6817, %v6816
      %v7204 = vpack.c.bf16 %v6819, %v6818
      %v7205 = vpack.c.bf16 %v6821, %v6820
      %v7206 = vpack.c.bf16 %v6823, %v6822
      %v7207 = vpack.c.bf16 %v6825, %v6824
      %v7208 = vld [vmem:[%s13] sm:$0xf]
      %v7209 = vld [vmem:[%s13 + $0x4] sm:$0xf]
      %v7210 = vld [vmem:[%s13 + $0x8] sm:$0xf]
      %v7211 = vld [vmem:[%s13 + $0xc] sm:$0xf]
      %v7212 = vld [vmem:[%s13 + $0x10] sm:$0xf]
      %v7213 = vld [vmem:[%s13 + $0x14] sm:$0xf]
      %v7214 = vld [vmem:[%s13 + $0x18] sm:$0xf]
      %v7215 = vld [vmem:[%s13 + $0x1c] sm:$0xf]
      %v7216 = vld [vmem:[%s13 + $0x20] sm:$0xf]
      %v7217 = vld [vmem:[%s13 + $0x24] sm:$0xf]
      %v7218 = vld [vmem:[%s13 + $0x28] sm:$0xf]
      %v7219 = vld [vmem:[%s13 + $0x2c] sm:$0xf]
      %v7220 = vld [vmem:[%s13 + $0x30] sm:$0xf]
      %v7221 = vld [vmem:[%s13 + $0x34] sm:$0xf]
      %v7222 = vld [vmem:[%s13 + $0x38] sm:$0xf]
      %v7223 = vld [vmem:[%s13 + $0x3c] sm:$0xf]
      %v7224 = vpack.c.bf16 %v7161, %v7160
      %v7225 = vpack.c.bf16 %v7163, %v7162
      %v7226 = vpack.c.bf16 %v7165, %v7164
      %v7227 = vpack.c.bf16 %v7167, %v7166
      %v7228 = vpack.c.bf16 %v7169, %v7168
      %v7229 = vpack.c.bf16 %v7171, %v7170
      %v7230 = vpack.c.bf16 %v7173, %v7172
      %v7231 = vpack.c.bf16 %v7175, %v7174
      %v7232 = vpack.c.bf16 %v7177, %v7176
      %v7233 = vpack.c.bf16 %v7179, %v7178
      %v7234 = vpack.c.bf16 %v7181, %v7180
      %v7235 = vpack.c.bf16 %v7183, %v7182
      %v7236 = vpack.c.bf16 %v7185, %v7184
      %v7237 = vpack.c.bf16 %v7187, %v7186
      %v7238 = vpack.c.bf16 %v7189, %v7188
      %v7239 = vpack.c.bf16 %v7191, %v7190
      %v7240 = vld [vmem:[%s14] sm:$0xf]
      %v7241 = vld [vmem:[%s14 + $0x4] sm:$0xf]
      %v7242 = vld [vmem:[%s14 + $0x8] sm:$0xf]
      %v7243 = vld [vmem:[%s14 + $0xc] sm:$0xf]
      %v7244 = vld [vmem:[%s14 + $0x10] sm:$0xf]
      %v7245 = vld [vmem:[%s14 + $0x14] sm:$0xf]
      %v7246 = vld [vmem:[%s14 + $0x18] sm:$0xf]
      %v7247 = vld [vmem:[%s14 + $0x1c] sm:$0xf]
      %v7248 = vld [vmem:[%s14 + $0x20] sm:$0xf]
      %v7249 = vld [vmem:[%s14 + $0x24] sm:$0xf]
      %v7250 = vld [vmem:[%s14 + $0x28] sm:$0xf]
      %v7251 = vld [vmem:[%s14 + $0x2c] sm:$0xf]
      %v7252 = vld [vmem:[%s14 + $0x30] sm:$0xf]
      %v7253 = vld [vmem:[%s14 + $0x34] sm:$0xf]
      %v7254 = vld [vmem:[%s14 + $0x38] sm:$0xf]
      %v7255 = vld [vmem:[%s14 + $0x3c] sm:$0xf]
      %v7272 = vunpack.c.l.b16 %v7240
      %v7273 = vunpack.c.l.b16 %v7241
      %v7274 = vunpack.c.l.b16 %v7242
      %v7275 = vunpack.c.l.b16 %v7243
      %v7276 = vunpack.c.l.b16 %v7244
      %v7277 = vunpack.c.l.b16 %v7245
      %v7278 = vunpack.c.l.b16 %v7246
      %v7279 = vunpack.c.l.b16 %v7247
      %v7280 = vunpack.c.l.b16 %v7248
      %v7281 = vunpack.c.l.b16 %v7249
      %v7282 = vunpack.c.l.b16 %v7250
      %v7283 = vunpack.c.l.b16 %v7251
      %v7284 = vunpack.c.l.b16 %v7252
      %v7285 = vunpack.c.l.b16 %v7253
      %v7286 = vunpack.c.l.b16 %v7254
      %v7287 = vunpack.c.l.b16 %v7255
      %v7288 = vpack.c.b16 %v7273, %v7272
      %v7289 = vpack.c.b16 %v7275, %v7274
      %v7290 = vpack.c.b16 %v7277, %v7276
      %v7291 = vpack.c.b16 %v7279, %v7278
      %v7292 = vpack.c.b16 %v7281, %v7280
      %v7293 = vpack.c.b16 %v7283, %v7282
      %v7294 = vpack.c.b16 %v7285, %v7284
      %v7295 = vpack.c.b16 %v7287, %v7286
      %7304 = vmatprep.subr.bf16.mxu0 0
      %7305 = vmatpush1.bf16.msra.mxu0 %v7288
      %7306 = vmatprep.subr.bf16.mxu0 0
      %7307 = vmatpush1.bf16.msra.mxu0 %v7289
      %7308 = vmatprep.subr.bf16.mxu0 0
      %7309 = vmatpush1.bf16.msra.mxu0 %v7290
      %7310 = vmatprep.subr.bf16.mxu0 0
      %7311 = vmatpush1.bf16.msra.mxu0 %v7291
      %7312 = vmatprep.subr.bf16.mxu0 0
      %7313 = vmatpush1.bf16.msra.mxu0 %v7292
      %7314 = vmatprep.subr.bf16.mxu0 0
      %7315 = vmatpush1.bf16.msra.mxu0 %v7293
      %7316 = vmatprep.subr.bf16.mxu0 0
      %7317 = vmatpush1.bf16.msra.mxu0 %v7294
      %7318 = vmatprep.subr.bf16.mxu0 0
      %7319 = vmatpush1.bf16.msra.mxu0 %v7295
      %7320 = vmatprep.subr.bf16.mxu0 0
      %7321 = vmatpush1.bf16.msra.mxu0 0
      %7322 = vmatprep.subr.bf16.mxu0 0
      %7323 = vmatpush1.bf16.msra.mxu0 0
      %7324 = vmatprep.subr.bf16.mxu0 0
      %7325 = vmatpush1.bf16.msra.mxu0 0
      %7326 = vmatprep.subr.bf16.mxu0 0
      %7327 = vmatpush1.bf16.msra.mxu0 0
      %7328 = vmatprep.subr.bf16.mxu0 0
      %7329 = vmatpush1.bf16.msra.mxu0 0
      %7330 = vmatprep.subr.bf16.mxu0 0
      %7331 = vmatpush1.bf16.msra.mxu0 0
      %7332 = vmatprep.subr.bf16.mxu0 0
      %7333 = vmatpush1.bf16.msra.mxu0 0
      %7334 = vmatprep.subr.bf16.mxu0 0
      %7335 = vmatpush1.bf16.msra.mxu0 0
      %7336 = vmatprep.mubr.bf16.mxu0 0
      %7337 = vmatmul.mubr.bf16.gmra.mrb[0].mxu0 %v7224
      %v7338 = vpop.f32.mrb[0].mxu0
      %v7339 = vadd.f32 0.0, %v7338
      %v7340 = vpop.f32.mrb[0].mxu0
      %v7341 = vpop.f32.mrb[0].mxu0
      %v7342 = vadd.f32 0.0, %v7341
      %v7343 = vpop.f32.mrb[0].mxu0
      %7344 = vmatprep.mubr.bf16.mxu0 0
      %7345 = vmatmul.mubr.bf16.gmra.mrb[0].mxu0 %v7225
      %v7346 = vpop.f32.mrb[0].mxu0
      %v7347 = vadd.f32 0.0, %v7346
      %v7348 = vpop.f32.mrb[0].mxu0
      %v7349 = vpop.f32.mrb[0].mxu0
      %v7350 = vadd.f32 0.0, %v7349
      %v7351 = vpop.f32.mrb[0].mxu0
      %7352 = vmatprep.mubr.bf16.mxu0 0
      %7353 = vmatmul.mubr.bf16.gmra.mrb[0].mxu0 %v7226
      %v7354 = vpop.f32.mrb[0].mxu0
      %v7355 = vadd.f32 0.0, %v7354
      %v7356 = vpop.f32.mrb[0].mxu0
      %v7357 = vpop.f32.mrb[0].mxu0
      %v7358 = vadd.f32 0.0, %v7357
      %v7359 = vpop.f32.mrb[0].mxu0
      %7360 = vmatprep.mubr.bf16.mxu0 0
      %7361 = vmatmul.mubr.bf16.gmra.mrb[0].mxu0 %v7227
      %v7362 = vpop.f32.mrb[0].mxu0
      %v7363 = vadd.f32 0.0, %v7362
      %v7364 = vpop.f32.mrb[0].mxu0
      %v7365 = vpop.f32.mrb[0].mxu0
      %v7366 = vadd.f32 0.0, %v7365
      %v7367 = vpop.f32.mrb[0].mxu0
      %7368 = vmatprep.mubr.bf16.mxu0 0
      %7369 = vmatmul.mubr.bf16.gmra.mrb[0].mxu0 %v7228
      %v7370 = vpop.f32.mrb[0].mxu0
      %v7371 = vadd.f32 0.0, %v7370
      %v7372 = vpop.f32.mrb[0].mxu0
      %v7373 = vpop.f32.mrb[0].mxu0
      %v7374 = vadd.f32 0.0, %v7373
      %v7375 = vpop.f32.mrb[0].mxu0
      %7376 = vmatprep.mubr.bf16.mxu0 0
      %7377 = vmatmul.mubr.bf16.gmra.mrb[0].mxu0 %v7229
      %v7378 = vpop.f32.mrb[0].mxu0
      %v7379 = vadd.f32 0.0, %v7378
      %v7380 = vpop.f32.mrb[0].mxu0
      %v7381 = vpop.f32.mrb[0].mxu0
      %v7382 = vadd.f32 0.0, %v7381
      %v7383 = vpop.f32.mrb[0].mxu0
      %7384 = vmatprep.mubr.bf16.mxu0 0
      %7385 = vmatmul.mubr.bf16.gmra.mrb[0].mxu0 %v7230
      %v7386 = vpop.f32.mrb[0].mxu0
      %v7387 = vadd.f32 0.0, %v7386
      %v7388 = vpop.f32.mrb[0].mxu0
      %v7389 = vpop.f32.mrb[0].mxu0
      %v7390 = vadd.f32 0.0, %v7389
      %v7391 = vpop.f32.mrb[0].mxu0
      %7392 = vmatprep.mubr.bf16.mxu0 0
      %7393 = vmatmul.mubr.bf16.gmra.mrb[0].mxu0 %v7231
      %v7394 = vpop.f32.mrb[0].mxu0
      %v7395 = vadd.f32 0.0, %v7394
      %v7396 = vpop.f32.mrb[0].mxu0
      %v7397 = vpop.f32.mrb[0].mxu0
      %v7398 = vadd.f32 0.0, %v7397
      %v7399 = vpop.f32.mrb[0].mxu0
      %7400 = vmatprep.mubr.bf16.mxu0 0
      %7401 = vmatmul.mubr.bf16.gmra.mrb[0].mxu0 %v7232
      %v7402 = vpop.f32.mrb[0].mxu0
      %v7403 = vadd.f32 0.0, %v7402
      %v7404 = vpop.f32.mrb[0].mxu0
      %v7405 = vpop.f32.mrb[0].mxu0
      %v7406 = vadd.f32 0.0, %v7405
      %v7407 = vpop.f32.mrb[0].mxu0
      %7408 = vmatprep.mubr.bf16.mxu0 0
      %7409 = vmatmul.mubr.bf16.gmra.mrb[0].mxu0 %v7233
      %v7410 = vpop.f32.mrb[0].mxu0
      %v7411 = vadd.f32 0.0, %v7410
      %v7412 = vpop.f32.mrb[0].mxu0
      %v7413 = vpop.f32.mrb[0].mxu0
      %v7414 = vadd.f32 0.0, %v7413
      %v7415 = vpop.f32.mrb[0].mxu0
      %7416 = vmatprep.mubr.bf16.mxu0 0
      %7417 = vmatmul.mubr.bf16.gmra.mrb[0].mxu0 %v7234
      %v7418 = vpop.f32.mrb[0].mxu0
      %v7419 = vadd.f32 0.0, %v7418
      %v7420 = vpop.f32.mrb[0].mxu0
      %v7421 = vpop.f32.mrb[0].mxu0
      %v7422 = vadd.f32 0.0, %v7421
      %v7423 = vpop.f32.mrb[0].mxu0
      %7424 = vmatprep.mubr.bf16.mxu0 0
      %7425 = vmatmul.mubr.bf16.gmra.mrb[0].mxu0 %v7235
      %v7426 = vpop.f32.mrb[0].mxu0
      %v7427 = vadd.f32 0.0, %v7426
      %v7428 = vpop.f32.mrb[0].mxu0
      %v7429 = vpop.f32.mrb[0].mxu0
      %v7430 = vadd.f32 0.0, %v7429
      %v7431 = vpop.f32.mrb[0].mxu0
      %7432 = vmatprep.mubr.bf16.mxu0 0
      %7433 = vmatmul.mubr.bf16.gmra.mrb[0].mxu0 %v7236
      %v7434 = vpop.f32.mrb[0].mxu0
      %v7435 = vadd.f32 0.0, %v7434
      %v7436 = vpop.f32.mrb[0].mxu0
      %v7437 = vpop.f32.mrb[0].mxu0
      %v7438 = vadd.f32 0.0, %v7437
      %v7439 = vpop.f32.mrb[0].mxu0
      %7440 = vmatprep.mubr.bf16.mxu0 0
      %7441 = vmatmul.mubr.bf16.gmra.mrb[0].mxu0 %v7237
      %v7442 = vpop.f32.mrb[0].mxu0
      %v7443 = vadd.f32 0.0, %v7442
      %v7444 = vpop.f32.mrb[0].mxu0
      %v7445 = vpop.f32.mrb[0].mxu0
      %v7446 = vadd.f32 0.0, %v7445
      %v7447 = vpop.f32.mrb[0].mxu0
      %7448 = vmatprep.mubr.bf16.mxu0 0
      %7449 = vmatmul.mubr.bf16.gmra.mrb[0].mxu0 %v7238
      %v7450 = vpop.f32.mrb[0].mxu0
      %v7451 = vadd.f32 0.0, %v7450
      %v7452 = vpop.f32.mrb[0].mxu0
      %v7453 = vpop.f32.mrb[0].mxu0
      %v7454 = vadd.f32 0.0, %v7453
      %v7455 = vpop.f32.mrb[0].mxu0
      %7456 = vmatprep.mubr.bf16.mxu0 0
      %7457 = vmatmul.mubr.bf16.gmra.mrb[0].mxu0 %v7239
      %v7458 = vpop.f32.mrb[0].mxu0
      %v7459 = vadd.f32 0.0, %v7458
      %v7460 = vpop.f32.mrb[0].mxu0
      %v7461 = vpop.f32.mrb[0].mxu0
      %v7462 = vadd.f32 0.0, %v7461
      %v7463 = vpop.f32.mrb[0].mxu0
      %7464 = vdwg.mxu0
      %v7481 = vunpack.c.l.b16 %v7208
      %v7482 = vunpack.c.l.b16 %v7209
      %v7483 = vunpack.c.l.b16 %v7210
      %v7484 = vunpack.c.l.b16 %v7211
      %v7485 = vunpack.c.l.b16 %v7212
      %v7486 = vunpack.c.l.b16 %v7213
      %v7487 = vunpack.c.l.b16 %v7214
      %v7488 = vunpack.c.l.b16 %v7215
      %v7489 = vunpack.c.l.b16 %v7216
      %v7490 = vunpack.c.l.b16 %v7217
      %v7491 = vunpack.c.l.b16 %v7218
      %v7492 = vunpack.c.l.b16 %v7219
      %v7493 = vunpack.c.l.b16 %v7220
      %v7494 = vunpack.c.l.b16 %v7221
      %v7495 = vunpack.c.l.b16 %v7222
      %v7496 = vunpack.c.l.b16 %v7223
      %v7497 = vpack.c.b16 %v7482, %v7481
      %v7498 = vpack.c.b16 %v7484, %v7483
      %v7499 = vpack.c.b16 %v7486, %v7485
      %v7500 = vpack.c.b16 %v7488, %v7487
      %v7501 = vpack.c.b16 %v7490, %v7489
      %v7502 = vpack.c.b16 %v7492, %v7491
      %v7503 = vpack.c.b16 %v7494, %v7493
      %v7504 = vpack.c.b16 %v7496, %v7495
      %7513 = vmatprep.subr.bf16.mxu0 0
      %7514 = vmatpush1.bf16.msra.mxu0 %v7497
      %7515 = vmatprep.subr.bf16.mxu0 0
      %7516 = vmatpush1.bf16.msra.mxu0 %v7498
      %7517 = vmatprep.subr.bf16.mxu0 0
      %7518 = vmatpush1.bf16.msra.mxu0 %v7499
      %7519 = vmatprep.subr.bf16.mxu0 0
      %7520 = vmatpush1.bf16.msra.mxu0 %v7500
      %7521 = vmatprep.subr.bf16.mxu0 0
      %7522 = vmatpush1.bf16.msra.mxu0 %v7501
      %7523 = vmatprep.subr.bf16.mxu0 0
      %7524 = vmatpush1.bf16.msra.mxu0 %v7502
      %7525 = vmatprep.subr.bf16.mxu0 0
      %7526 = vmatpush1.bf16.msra.mxu0 %v7503
      %7527 = vmatprep.subr.bf16.mxu0 0
      %7528 = vmatpush1.bf16.msra.mxu0 %v7504
      %7529 = vmatprep.subr.bf16.mxu0 0
      %7530 = vmatpush1.bf16.msra.mxu0 0
      %7531 = vmatprep.subr.bf16.mxu0 0
      %7532 = vmatpush1.bf16.msra.mxu0 0
      %7533 = vmatprep.subr.bf16.mxu0 0
      %7534 = vmatpush1.bf16.msra.mxu0 0
      %7535 = vmatprep.subr.bf16.mxu0 0
      %7536 = vmatpush1.bf16.msra.mxu0 0
      %7537 = vmatprep.subr.bf16.mxu0 0
      %7538 = vmatpush1.bf16.msra.mxu0 0
      %7539 = vmatprep.subr.bf16.mxu0 0
      %7540 = vmatpush1.bf16.msra.mxu0 0
      %7541 = vmatprep.subr.bf16.mxu0 0
      %7542 = vmatpush1.bf16.msra.mxu0 0
      %7543 = vmatprep.subr.bf16.mxu0 0
      %7544 = vmatpush1.bf16.msra.mxu0 0
      %7545 = vmatprep.mubr.bf16.mxu0 0
      %7546 = vmatmul.mubr.bf16.gmra.mrb[0].mxu0 %v7192
      %v7547 = vpop.f32.mrb[0].mxu0
      %v7548 = vadd.f32 %v7339, %v7547
      %v7549 = vpop.f32.mrb[0].mxu0
      %v7550 = vpop.f32.mrb[0].mxu0
      %v7551 = vadd.f32 %v7342, %v7550
      %v7552 = vpop.f32.mrb[0].mxu0
      %7553 = vmatprep.mubr.bf16.mxu0 0
      %7554 = vmatmul.mubr.bf16.gmra.mrb[0].mxu0 %v7193
      %v7555 = vpop.f32.mrb[0].mxu0
      %v7556 = vadd.f32 %v7347, %v7555
      %v7557 = vpop.f32.mrb[0].mxu0
      %v7558 = vpop.f32.mrb[0].mxu0
      %v7559 = vadd.f32 %v7350, %v7558
      %v7560 = vpop.f32.mrb[0].mxu0
      %7561 = vmatprep.mubr.bf16.mxu0 0
      %7562 = vmatmul.mubr.bf16.gmra.mrb[0].mxu0 %v7194
      %v7563 = vpop.f32.mrb[0].mxu0
      %v7564 = vadd.f32 %v7355, %v7563
      %v7565 = vpop.f32.mrb[0].mxu0
      %v7566 = vpop.f32.mrb[0].mxu0
      %v7567 = vadd.f32 %v7358, %v7566
      %v7568 = vpop.f32.mrb[0].mxu0
      %7569 = vmatprep.mubr.bf16.mxu0 0
      %7570 = vmatmul.mubr.bf16.gmra.mrb[0].mxu0 %v7195
      %v7571 = vpop.f32.mrb[0].mxu0
      %v7572 = vadd.f32 %v7363, %v7571
      %v7573 = vpop.f32.mrb[0].mxu0
      %v7574 = vpop.f32.mrb[0].mxu0
      %v7575 = vadd.f32 %v7366, %v7574
      %v7576 = vpop.f32.mrb[0].mxu0
      %7577 = vmatprep.mubr.bf16.mxu0 0
      %7578 = vmatmul.mubr.bf16.gmra.mrb[0].mxu0 %v7196
      %v7579 = vpop.f32.mrb[0].mxu0
      %v7580 = vadd.f32 %v7371, %v7579
      %v7581 = vpop.f32.mrb[0].mxu0
      %v7582 = vpop.f32.mrb[0].mxu0
      %v7583 = vadd.f32 %v7374, %v7582
      %v7584 = vpop.f32.mrb[0].mxu0
      %7585 = vmatprep.mubr.bf16.mxu0 0
      %7586 = vmatmul.mubr.bf16.gmra.mrb[0].mxu0 %v7197
      %v7587 = vpop.f32.mrb[0].mxu0
      %v7588 = vadd.f32 %v7379, %v7587
      %v7589 = vpop.f32.mrb[0].mxu0
      %v7590 = vpop.f32.mrb[0].mxu0
      %v7591 = vadd.f32 %v7382, %v7590
      %v7592 = vpop.f32.mrb[0].mxu0
      %7593 = vmatprep.mubr.bf16.mxu0 0
      %7594 = vmatmul.mubr.bf16.gmra.mrb[0].mxu0 %v7198
      %v7595 = vpop.f32.mrb[0].mxu0
      %v7596 = vadd.f32 %v7387, %v7595
      %v7597 = vpop.f32.mrb[0].mxu0
      %v7598 = vpop.f32.mrb[0].mxu0
      %v7599 = vadd.f32 %v7390, %v7598
      %v7600 = vpop.f32.mrb[0].mxu0
      %7601 = vmatprep.mubr.bf16.mxu0 0
      %7602 = vmatmul.mubr.bf16.gmra.mrb[0].mxu0 %v7199
      %v7603 = vpop.f32.mrb[0].mxu0
      %v7604 = vadd.f32 %v7395, %v7603
      %v7605 = vpop.f32.mrb[0].mxu0
      %v7606 = vpop.f32.mrb[0].mxu0
      %v7607 = vadd.f32 %v7398, %v7606
      %v7608 = vpop.f32.mrb[0].mxu0
      %7609 = vmatprep.mubr.bf16.mxu0 0
      %7610 = vmatmul.mubr.bf16.gmra.mrb[0].mxu0 %v7200
      %v7611 = vpop.f32.mrb[0].mxu0
      %v7612 = vadd.f32 %v7403, %v7611
      %v7613 = vpop.f32.mrb[0].mxu0
      %v7614 = vpop.f32.mrb[0].mxu0
      %v7615 = vadd.f32 %v7406, %v7614
      %v7616 = vpop.f32.mrb[0].mxu0
      %7617 = vmatprep.mubr.bf16.mxu0 0
      %7618 = vmatmul.mubr.bf16.gmra.mrb[0].mxu0 %v7201
      %v7619 = vpop.f32.mrb[0].mxu0
      %v7620 = vadd.f32 %v7411, %v7619
      %v7621 = vpop.f32.mrb[0].mxu0
      %v7622 = vpop.f32.mrb[0].mxu0
      %v7623 = vadd.f32 %v7414, %v7622
      %v7624 = vpop.f32.mrb[0].mxu0
      %7625 = vmatprep.mubr.bf16.mxu0 0
      %7626 = vmatmul.mubr.bf16.gmra.mrb[0].mxu0 %v7202
      %v7627 = vpop.f32.mrb[0].mxu0
      %v7628 = vadd.f32 %v7419, %v7627
      %v7629 = vpop.f32.mrb[0].mxu0
      %v7630 = vpop.f32.mrb[0].mxu0
      %v7631 = vadd.f32 %v7422, %v7630
      %v7632 = vpop.f32.mrb[0].mxu0
      %7633 = vmatprep.mubr.bf16.mxu0 0
      %7634 = vmatmul.mubr.bf16.gmra.mrb[0].mxu0 %v7203
      %v7635 = vpop.f32.mrb[0].mxu0
      %v7636 = vadd.f32 %v7427, %v7635
      %v7637 = vpop.f32.mrb[0].mxu0
      %v7638 = vpop.f32.mrb[0].mxu0
      %v7639 = vadd.f32 %v7430, %v7638
      %v7640 = vpop.f32.mrb[0].mxu0
      %7641 = vmatprep.mubr.bf16.mxu0 0
      %7642 = vmatmul.mubr.bf16.gmra.mrb[0].mxu0 %v7204
      %v7643 = vpop.f32.mrb[0].mxu0
      %v7644 = vadd.f32 %v7435, %v7643
      %v7645 = vpop.f32.mrb[0].mxu0
      %v7646 = vpop.f32.mrb[0].mxu0
      %v7647 = vadd.f32 %v7438, %v7646
      %v7648 = vpop.f32.mrb[0].mxu0
      %7649 = vmatprep.mubr.bf16.mxu0 0
      %7650 = vmatmul.mubr.bf16.gmra.mrb[0].mxu0 %v7205
      %v7651 = vpop.f32.mrb[0].mxu0
      %v7652 = vadd.f32 %v7443, %v7651
      %v7653 = vpop.f32.mrb[0].mxu0
      %v7654 = vpop.f32.mrb[0].mxu0
      %v7655 = vadd.f32 %v7446, %v7654
      %v7656 = vpop.f32.mrb[0].mxu0
      %7657 = vmatprep.mubr.bf16.mxu0 0
      %7658 = vmatmul.mubr.bf16.gmra.mrb[0].mxu0 %v7206
      %v7659 = vpop.f32.mrb[0].mxu0
      %v7660 = vadd.f32 %v7451, %v7659
      %v7661 = vpop.f32.mrb[0].mxu0
      %v7662 = vpop.f32.mrb[0].mxu0
      %v7663 = vadd.f32 %v7454, %v7662
      %v7664 = vpop.f32.mrb[0].mxu0
      %7665 = vmatprep.mubr.bf16.mxu0 0
      %7666 = vmatmul.mubr.bf16.gmra.mrb[0].mxu0 %v7207
      %v7667 = vpop.f32.mrb[0].mxu0
      %v7668 = vadd.f32 %v7459, %v7667
      %v7669 = vpop.f32.mrb[0].mxu0
      %v7670 = vpop.f32.mrb[0].mxu0
      %v7671 = vadd.f32 %v7462, %v7670
      %v7672 = vpop.f32.mrb[0].mxu0
      %7673 = vdwg.mxu0
      %v7674 = vld [vmem:[%s15] sm:$0x1]
      %v7676 = vlaneseq
      %v7677 = vshrl.u32 %v7676, 7
      %v7678 = vsub.s32 0, %v7677
      %v7679 = vrot.slane %v7674, %v7678
      %v7681 = vmul.f32 %v7548, %v7679
      %v7682 = vmul.f32 %v7551, %v7679
      %v7683 = vmul.f32 %v7556, %v7679
      %v7684 = vmul.f32 %v7559, %v7679
      %v7685 = vmul.f32 %v7564, %v7679
      %v7686 = vmul.f32 %v7567, %v7679
      %v7687 = vmul.f32 %v7572, %v7679
      %v7688 = vmul.f32 %v7575, %v7679
      %v7689 = vmul.f32 %v7580, %v7679
      %v7690 = vmul.f32 %v7583, %v7679
      %v7691 = vmul.f32 %v7588, %v7679
      %v7692 = vmul.f32 %v7591, %v7679
      %v7693 = vmul.f32 %v7596, %v7679
      %v7694 = vmul.f32 %v7599, %v7679
      %v7695 = vmul.f32 %v7604, %v7679
      %v7696 = vmul.f32 %v7607, %v7679
      %v7697 = vmul.f32 %v7612, %v7679
      %v7698 = vmul.f32 %v7615, %v7679
      %v7699 = vmul.f32 %v7620, %v7679
      %v7700 = vmul.f32 %v7623, %v7679
      %v7701 = vmul.f32 %v7628, %v7679
      %v7702 = vmul.f32 %v7631, %v7679
      %v7703 = vmul.f32 %v7636, %v7679
      %v7704 = vmul.f32 %v7639, %v7679
      %v7705 = vmul.f32 %v7644, %v7679
      %v7706 = vmul.f32 %v7647, %v7679
      %v7707 = vmul.f32 %v7652, %v7679
      %v7708 = vmul.f32 %v7655, %v7679
      %v7709 = vmul.f32 %v7660, %v7679
      %v7710 = vmul.f32 %v7663, %v7679
      %v7711 = vmul.f32 %v7668, %v7679
      %v7712 = vmul.f32 %v7671, %v7679
      %v7713 = vld [vmem:[%s16] sm:$0x1]
      %v7715 = vlaneseq
      %v7716 = vshrl.u32 %v7715, 7
      %v7717 = vsub.s32 0, %v7716
      %v7718 = vrot.slane %v7713, %v7717
      %v7720 = vadd.f32 %v7681, %v7718
      %v7721 = vadd.f32 %v7682, %v7718
      %v7722 = vadd.f32 %v7683, %v7718
      %v7723 = vadd.f32 %v7684, %v7718
      %v7724 = vadd.f32 %v7685, %v7718
      %v7725 = vadd.f32 %v7686, %v7718
      %v7726 = vadd.f32 %v7687, %v7718
      %v7727 = vadd.f32 %v7688, %v7718
      %v7728 = vadd.f32 %v7689, %v7718
      %v7729 = vadd.f32 %v7690, %v7718
      %v7730 = vadd.f32 %v7691, %v7718
      %v7731 = vadd.f32 %v7692, %v7718
      %v7732 = vadd.f32 %v7693, %v7718
      %v7733 = vadd.f32 %v7694, %v7718
      %v7734 = vadd.f32 %v7695, %v7718
      %v7735 = vadd.f32 %v7696, %v7718
      %v7736 = vadd.f32 %v7697, %v7718
      %v7737 = vadd.f32 %v7698, %v7718
      %v7738 = vadd.f32 %v7699, %v7718
      %v7739 = vadd.f32 %v7700, %v7718
      %v7740 = vadd.f32 %v7701, %v7718
      %v7741 = vadd.f32 %v7702, %v7718
      %v7742 = vadd.f32 %v7703, %v7718
      %v7743 = vadd.f32 %v7704, %v7718
      %v7744 = vadd.f32 %v7705, %v7718
      %v7745 = vadd.f32 %v7706, %v7718
      %v7746 = vadd.f32 %v7707, %v7718
      %v7747 = vadd.f32 %v7708, %v7718
      %v7748 = vadd.f32 %v7709, %v7718
      %v7749 = vadd.f32 %v7710, %v7718
      %v7750 = vadd.f32 %v7711, %v7718
      %v7751 = vadd.f32 %v7712, %v7718
      %v7752 = vxor.u32 %v7720, 2147483648
      %v7753 = vxor.u32 %v7721, 2147483648
      %v7754 = vxor.u32 %v7722, 2147483648
      %v7755 = vxor.u32 %v7723, 2147483648
      %v7756 = vxor.u32 %v7724, 2147483648
      %v7757 = vxor.u32 %v7725, 2147483648
      %v7758 = vxor.u32 %v7726, 2147483648
      %v7759 = vxor.u32 %v7727, 2147483648
      %v7760 = vxor.u32 %v7728, 2147483648
      %v7761 = vxor.u32 %v7729, 2147483648
      %v7762 = vxor.u32 %v7730, 2147483648
      %v7763 = vxor.u32 %v7731, 2147483648
      %v7764 = vxor.u32 %v7732, 2147483648
      %v7765 = vxor.u32 %v7733, 2147483648
      %v7766 = vxor.u32 %v7734, 2147483648
      %v7767 = vxor.u32 %v7735, 2147483648
      %v7768 = vxor.u32 %v7736, 2147483648
      %v7769 = vxor.u32 %v7737, 2147483648
      %v7770 = vxor.u32 %v7738, 2147483648
      %v7771 = vxor.u32 %v7739, 2147483648
      %v7772 = vxor.u32 %v7740, 2147483648
      %v7773 = vxor.u32 %v7741, 2147483648
      %v7774 = vxor.u32 %v7742, 2147483648
      %v7775 = vxor.u32 %v7743, 2147483648
      %v7776 = vxor.u32 %v7744, 2147483648
      %v7777 = vxor.u32 %v7745, 2147483648
      %v7778 = vxor.u32 %v7746, 2147483648
      %v7779 = vxor.u32 %v7747, 2147483648
      %v7780 = vxor.u32 %v7748, 2147483648
      %v7781 = vxor.u32 %v7749, 2147483648
      %v7782 = vxor.u32 %v7750, 2147483648
      %v7783 = vxor.u32 %v7751, 2147483648
      %v7784 = vmul.f32 %v7752, 1.442695
      %v7785 = vpow.pop %v7784
      %v7786 = vmul.f32 %v7753, 1.442695
      %v7787 = vpow.pop %v7786
      %v7788 = vmul.f32 %v7754, 1.442695
      %v7789 = vpow.pop %v7788
      %v7790 = vmul.f32 %v7755, 1.442695
      %v7791 = vpow.pop %v7790
      %v7792 = vmul.f32 %v7756, 1.442695
      %v7793 = vpow.pop %v7792
      %v7794 = vmul.f32 %v7757, 1.442695
      %v7795 = vpow.pop %v7794
      %v7796 = vmul.f32 %v7758, 1.442695
      %v7797 = vpow.pop %v7796
      %v7798 = vmul.f32 %v7759, 1.442695
      %v7799 = vpow.pop %v7798
      %v7800 = vmul.f32 %v7760, 1.442695
      %v7801 = vpow.pop %v7800
      %v7802 = vmul.f32 %v7761, 1.442695
      %v7803 = vpow.pop %v7802
      %v7804 = vmul.f32 %v7762, 1.442695
      %v7805 = vpow.pop %v7804
      %v7806 = vmul.f32 %v7763, 1.442695
      %v7807 = vpow.pop %v7806
      %v7808 = vmul.f32 %v7764, 1.442695
      %v7809 = vpow.pop %v7808
      %v7810 = vmul.f32 %v7765, 1.442695
      %v7811 = vpow.pop %v7810
      %v7812 = vmul.f32 %v7766, 1.442695
      %v7813 = vpow.pop %v7812
      %v7814 = vmul.f32 %v7767, 1.442695
      %v7815 = vpow.pop %v7814
      %v7816 = vmul.f32 %v7768, 1.442695
      %v7817 = vpow.pop %v7816
      %v7818 = vmul.f32 %v7769, 1.442695
      %v7819 = vpow.pop %v7818
      %v7820 = vmul.f32 %v7770, 1.442695
      %v7821 = vpow.pop %v7820
      %v7822 = vmul.f32 %v7771, 1.442695
      %v7823 = vpow.pop %v7822
      %v7824 = vmul.f32 %v7772, 1.442695
      %v7825 = vpow.pop %v7824
      %v7826 = vmul.f32 %v7773, 1.442695
      %v7827 = vpow.pop %v7826
      %v7828 = vmul.f32 %v7774, 1.442695
      %v7829 = vpow.pop %v7828
      %v7830 = vmul.f32 %v7775, 1.442695
      %v7831 = vpow.pop %v7830
      %v7832 = vmul.f32 %v7776, 1.442695
      %v7833 = vpow.pop %v7832
      %v7834 = vmul.f32 %v7777, 1.442695
      %v7835 = vpow.pop %v7834
      %v7836 = vmul.f32 %v7778, 1.442695
      %v7837 = vpow.pop %v7836
      %v7838 = vmul.f32 %v7779, 1.442695
      %v7839 = vpow.pop %v7838
      %v7840 = vmul.f32 %v7780, 1.442695
      %v7841 = vpow.pop %v7840
      %v7842 = vmul.f32 %v7781, 1.442695
      %v7843 = vpow.pop %v7842
      %v7844 = vmul.f32 %v7782, 1.442695
      %v7845 = vpow.pop %v7844
      %v7846 = vmul.f32 %v7783, 1.442695
      %v7847 = vpow.pop %v7846
      %v7848 = vadd.f32 %v7785, 1.0
      %v7849 = vadd.f32 %v7787, 1.0
      %v7850 = vadd.f32 %v7789, 1.0
      %v7851 = vadd.f32 %v7791, 1.0
      %v7852 = vadd.f32 %v7793, 1.0
      %v7853 = vadd.f32 %v7795, 1.0
      %v7854 = vadd.f32 %v7797, 1.0
      %v7855 = vadd.f32 %v7799, 1.0
      %v7856 = vadd.f32 %v7801, 1.0
      %v7857 = vadd.f32 %v7803, 1.0
      %v7858 = vadd.f32 %v7805, 1.0
      %v7859 = vadd.f32 %v7807, 1.0
      %v7860 = vadd.f32 %v7809, 1.0
      %v7861 = vadd.f32 %v7811, 1.0
      %v7862 = vadd.f32 %v7813, 1.0
      %v7863 = vadd.f32 %v7815, 1.0
      %v7864 = vadd.f32 %v7817, 1.0
      %v7865 = vadd.f32 %v7819, 1.0
      %v7866 = vadd.f32 %v7821, 1.0
      %v7867 = vadd.f32 %v7823, 1.0
      %v7868 = vadd.f32 %v7825, 1.0
      %v7869 = vadd.f32 %v7827, 1.0
      %v7870 = vadd.f32 %v7829, 1.0
      %v7871 = vadd.f32 %v7831, 1.0
      %v7872 = vadd.f32 %v7833, 1.0
      %v7873 = vadd.f32 %v7835, 1.0
      %v7874 = vadd.f32 %v7837, 1.0
      %v7875 = vadd.f32 %v7839, 1.0
      %v7876 = vadd.f32 %v7841, 1.0
      %v7877 = vadd.f32 %v7843, 1.0
      %v7878 = vadd.f32 %v7845, 1.0
      %v7879 = vadd.f32 %v7847, 1.0
      %v7880 = vrcp.pop %v7848
      %v7881 = vmul.f32 1.0, %v7880
      %v7882 = vrcp.pop %v7849
      %v7883 = vmul.f32 1.0, %v7882
      %v7884 = vrcp.pop %v7850
      %v7885 = vmul.f32 1.0, %v7884
      %v7886 = vrcp.pop %v7851
      %v7887 = vmul.f32 1.0, %v7886
      %v7888 = vrcp.pop %v7852
      %v7889 = vmul.f32 1.0, %v7888
      %v7890 = vrcp.pop %v7853
      %v7891 = vmul.f32 1.0, %v7890
      %v7892 = vrcp.pop %v7854
      %v7893 = vmul.f32 1.0, %v7892
      %v7894 = vrcp.pop %v7855
      %v7895 = vmul.f32 1.0, %v7894
      %v7896 = vrcp.pop %v7856
      %v7897 = vmul.f32 1.0, %v7896
      %v7898 = vrcp.pop %v7857
      %v7899 = vmul.f32 1.0, %v7898
      %v7900 = vrcp.pop %v7858
      %v7901 = vmul.f32 1.0, %v7900
      %v7902 = vrcp.pop %v7859
      %v7903 = vmul.f32 1.0, %v7902
      %v7904 = vrcp.pop %v7860
      %v7905 = vmul.f32 1.0, %v7904
      %v7906 = vrcp.pop %v7861
      %v7907 = vmul.f32 1.0, %v7906
      %v7908 = vrcp.pop %v7862
      %v7909 = vmul.f32 1.0, %v7908
      %v7910 = vrcp.pop %v7863
      %v7911 = vmul.f32 1.0, %v7910
      %v7912 = vrcp.pop %v7864
      %v7913 = vmul.f32 1.0, %v7912
      %v7914 = vrcp.pop %v7865
      %v7915 = vmul.f32 1.0, %v7914
      %v7916 = vrcp.pop %v7866
      %v7917 = vmul.f32 1.0, %v7916
      %v7918 = vrcp.pop %v7867
      %v7919 = vmul.f32 1.0, %v7918
      %v7920 = vrcp.pop %v7868
      %v7921 = vmul.f32 1.0, %v7920
      %v7922 = vrcp.pop %v7869
      %v7923 = vmul.f32 1.0, %v7922
      %v7924 = vrcp.pop %v7870
      %v7925 = vmul.f32 1.0, %v7924
      %v7926 = vrcp.pop %v7871
      %v7927 = vmul.f32 1.0, %v7926
      %v7928 = vrcp.pop %v7872
      %v7929 = vmul.f32 1.0, %v7928
      %v7930 = vrcp.pop %v7873
      %v7931 = vmul.f32 1.0, %v7930
      %v7932 = vrcp.pop %v7874
      %v7933 = vmul.f32 1.0, %v7932
      %v7934 = vrcp.pop %v7875
      %v7935 = vmul.f32 1.0, %v7934
      %v7936 = vrcp.pop %v7876
      %v7937 = vmul.f32 1.0, %v7936
      %v7938 = vrcp.pop %v7877
      %v7939 = vmul.f32 1.0, %v7938
      %v7940 = vrcp.pop %v7878
      %v7941 = vmul.f32 1.0, %v7940
      %v7942 = vrcp.pop %v7879
      %v7943 = vmul.f32 1.0, %v7942
      %v7944 = vmul.f32 %v7720, %v7881
      %v7945 = vmul.f32 %v7721, %v7883
      %v7946 = vmul.f32 %v7722, %v7885
      %v7947 = vmul.f32 %v7723, %v7887
      %v7948 = vmul.f32 %v7724, %v7889
      %v7949 = vmul.f32 %v7725, %v7891
      %v7950 = vmul.f32 %v7726, %v7893
      %v7951 = vmul.f32 %v7727, %v7895
      %v7952 = vmul.f32 %v7728, %v7897
      %v7953 = vmul.f32 %v7729, %v7899
      %v7954 = vmul.f32 %v7730, %v7901
      %v7955 = vmul.f32 %v7731, %v7903
      %v7956 = vmul.f32 %v7732, %v7905
      %v7957 = vmul.f32 %v7733, %v7907
      %v7958 = vmul.f32 %v7734, %v7909
      %v7959 = vmul.f32 %v7735, %v7911
      %v7960 = vmul.f32 %v7736, %v7913
      %v7961 = vmul.f32 %v7737, %v7915
      %v7962 = vmul.f32 %v7738, %v7917
      %v7963 = vmul.f32 %v7739, %v7919
      %v7964 = vmul.f32 %v7740, %v7921
      %v7965 = vmul.f32 %v7741, %v7923
      %v7966 = vmul.f32 %v7742, %v7925
      %v7967 = vmul.f32 %v7743, %v7927
      %v7968 = vmul.f32 %v7744, %v7929
      %v7969 = vmul.f32 %v7745, %v7931
      %v7970 = vmul.f32 %v7746, %v7933
      %v7971 = vmul.f32 %v7747, %v7935
      %v7972 = vmul.f32 %v7748, %v7937
      %v7973 = vmul.f32 %v7749, %v7939
      %v7974 = vmul.f32 %v7750, %v7941
      %v7975 = vmul.f32 %v7751, %v7943
      %v7976 = vpack.c.bf16 %v7945, %v7944
      %v7977 = vpack.c.bf16 %v7947, %v7946
      %v7978 = vpack.c.bf16 %v7949, %v7948
      %v7979 = vpack.c.bf16 %v7951, %v7950
      %v7980 = vpack.c.bf16 %v7953, %v7952
      %v7981 = vpack.c.bf16 %v7955, %v7954
      %v7982 = vpack.c.bf16 %v7957, %v7956
      %v7983 = vpack.c.bf16 %v7959, %v7958
      %v7984 = vpack.c.bf16 %v7961, %v7960
      %v7985 = vpack.c.bf16 %v7963, %v7962
      %v7986 = vpack.c.bf16 %v7965, %v7964
      %v7987 = vpack.c.bf16 %v7967, %v7966
      %v7988 = vpack.c.bf16 %v7969, %v7968
      %v7989 = vpack.c.bf16 %v7971, %v7970
      %v7990 = vpack.c.bf16 %v7973, %v7972
      %v7991 = vpack.c.bf16 %v7975, %v7974
      %v8008 = vunpack.c.l.b16 %v7976
      %v8009 = vunpack.c.h.b16 %v7976
      %v8010 = vunpack.c.l.b16 %v7977
      %v8011 = vunpack.c.h.b16 %v7977
      %v8012 = vunpack.c.l.b16 %v7978
      %v8013 = vunpack.c.h.b16 %v7978
      %v8014 = vunpack.c.l.b16 %v7979
      %v8015 = vunpack.c.h.b16 %v7979
      %v8016 = vunpack.c.l.b16 %v7980
      %v8017 = vunpack.c.h.b16 %v7980
      %v8018 = vunpack.c.l.b16 %v7981
      %v8019 = vunpack.c.h.b16 %v7981
      %v8020 = vunpack.c.l.b16 %v7982
      %v8021 = vunpack.c.h.b16 %v7982
      %v8022 = vunpack.c.l.b16 %v7983
      %v8023 = vunpack.c.h.b16 %v7983
      %v8024 = vunpack.c.l.b16 %v7984
      %v8025 = vunpack.c.h.b16 %v7984
      %v8026 = vunpack.c.l.b16 %v7985
      %v8027 = vunpack.c.h.b16 %v7985
      %v8028 = vunpack.c.l.b16 %v7986
      %v8029 = vunpack.c.h.b16 %v7986
      %v8030 = vunpack.c.l.b16 %v7987
      %v8031 = vunpack.c.h.b16 %v7987
      %v8032 = vunpack.c.l.b16 %v7988
      %v8033 = vunpack.c.h.b16 %v7988
      %v8034 = vunpack.c.l.b16 %v7989
      %v8035 = vunpack.c.h.b16 %v7989
      %v8036 = vunpack.c.l.b16 %v7990
      %v8037 = vunpack.c.h.b16 %v7990
      %v8038 = vunpack.c.l.b16 %v7991
      %v8039 = vunpack.c.h.b16 %v7991
      %v8040 = vpack.c.b16 %v8008, %v8008
      %v8041 = vpack.c.b16 %v8009, %v8009
      %v8042 = vpack.c.b16 %v8010, %v8010
      %v8043 = vpack.c.b16 %v8011, %v8011
      %v8044 = vpack.c.b16 %v8012, %v8012
      %v8045 = vpack.c.b16 %v8013, %v8013
      %v8046 = vpack.c.b16 %v8014, %v8014
      %v8047 = vpack.c.b16 %v8015, %v8015
      %v8048 = vpack.c.b16 %v8016, %v8016
      %v8049 = vpack.c.b16 %v8017, %v8017
      %v8050 = vpack.c.b16 %v8018, %v8018
      %v8051 = vpack.c.b16 %v8019, %v8019
      %v8052 = vpack.c.b16 %v8020, %v8020
      %v8053 = vpack.c.b16 %v8021, %v8021
      %v8054 = vpack.c.b16 %v8022, %v8022
      %v8055 = vpack.c.b16 %v8023, %v8023
      %v8056 = vpack.c.b16 %v8024, %v8024
      %v8057 = vpack.c.b16 %v8025, %v8025
      %v8058 = vpack.c.b16 %v8026, %v8026
      %v8059 = vpack.c.b16 %v8027, %v8027
      %v8060 = vpack.c.b16 %v8028, %v8028
      %v8061 = vpack.c.b16 %v8029, %v8029
      %v8062 = vpack.c.b16 %v8030, %v8030
      %v8063 = vpack.c.b16 %v8031, %v8031
      %v8064 = vpack.c.b16 %v8032, %v8032
      %v8065 = vpack.c.b16 %v8033, %v8033
      %v8066 = vpack.c.b16 %v8034, %v8034
      %v8067 = vpack.c.b16 %v8035, %v8035
      %v8068 = vpack.c.b16 %v8036, %v8036
      %v8069 = vpack.c.b16 %v8037, %v8037
      %v8070 = vpack.c.b16 %v8038, %v8038
      %v8071 = vpack.c.b16 %v8039, %v8039
      %8104 = vst [vmem:[%s572] sm:$0xf] %v8040
      %8105 = vst [vmem:[%s572 + $0x4] sm:$0xf] %v8041
      %8106 = vst [vmem:[%s572 + $0x8] sm:$0xf] %v8042
      %8107 = vst [vmem:[%s572 + $0xc] sm:$0xf] %v8043
      %8108 = vst [vmem:[%s572 + $0x10] sm:$0xf] %v8044
      %8109 = vst [vmem:[%s572 + $0x14] sm:$0xf] %v8045
      %8110 = vst [vmem:[%s572 + $0x18] sm:$0xf] %v8046
      %8111 = vst [vmem:[%s572 + $0x1c] sm:$0xf] %v8047
      %8112 = vst [vmem:[%s572 + $0x20] sm:$0xf] %v8048
      %8113 = vst [vmem:[%s572 + $0x24] sm:$0xf] %v8049
      %8114 = vst [vmem:[%s572 + $0x28] sm:$0xf] %v8050
      %8115 = vst [vmem:[%s572 + $0x2c] sm:$0xf] %v8051
      %8116 = vst [vmem:[%s572 + $0x30] sm:$0xf] %v8052
      %8117 = vst [vmem:[%s572 + $0x34] sm:$0xf] %v8053
      %8118 = vst [vmem:[%s572 + $0x38] sm:$0xf] %v8054
      %8119 = vst [vmem:[%s572 + $0x3c] sm:$0xf] %v8055
      %8120 = vst [vmem:[%s572 + $0x40] sm:$0xf] %v8056
      %8121 = vst [vmem:[%s572 + $0x44] sm:$0xf] %v8057
      %8122 = vst [vmem:[%s572 + $0x48] sm:$0xf] %v8058
      %8123 = vst [vmem:[%s572 + $0x4c] sm:$0xf] %v8059
      %8124 = vst [vmem:[%s572 + $0x50] sm:$0xf] %v8060
      %8125 = vst [vmem:[%s572 + $0x54] sm:$0xf] %v8061
      %8126 = vst [vmem:[%s572 + $0x58] sm:$0xf] %v8062
      %8127 = vst [vmem:[%s572 + $0x5c] sm:$0xf] %v8063
      %8128 = vst [vmem:[%s572 + $0x60] sm:$0xf] %v8064
      %8129 = vst [vmem:[%s572 + $0x64] sm:$0xf] %v8065
      %8130 = vst [vmem:[%s572 + $0x68] sm:$0xf] %v8066
      %8131 = vst [vmem:[%s572 + $0x6c] sm:$0xf] %v8067
      %8132 = vst [vmem:[%s572 + $0x70] sm:$0xf] %v8068
      %8133 = vst [vmem:[%s572 + $0x74] sm:$0xf] %v8069
      %8134 = vst [vmem:[%s572 + $0x78] sm:$0xf] %v8070
      %8135 = vst [vmem:[%s572 + $0x7c] sm:$0xf] %v8071
      %s8136 = smul.u32 32, %s28
      %p8137 = scmp.lt.s32.totalorder %s8136, 63
      %s8138 = scalar_select %p8137, %s8136, 63
      %s8139 = smul.addr %s8138, 4
      %s8140 = scalar_lea.vmem %s17, %s8139
      // Predicated region
      $region89: #{bottleneck_csp_forward.3} parent=87 // pred_check
        %p8141 = pneg %p413
      $region90: #{bottleneck_csp_forward.3} parent=87 // pred_check_branch
        %8143 = sbr.rel (%p8141) target = $region92
      $region91: #{bottleneck_csp_forward.3} parent=87 // pred_region
        %s8144 = smul.u32 32, %s28
      $region92: #{bottleneck_csp_forward.3} parent=87 // pred_fallthru
        _
    $region88: #{bottleneck_csp_forward.3} parent=5 // pred_fallthru
      _
    %p8145 = scmp.le.s32.totalorder 2, %s23
    // Predicated region
    $region93: #{bottleneck_csp_forward.3} parent=5 // pred_check
      %p8146 = pneg %p8145
    $region94: #{bottleneck_csp_forward.3} parent=5 // pred_check_branch
      %8148 = sbr.rel (%p8146) target = $region96
    $region95: #{bottleneck_csp_forward.3} parent=5 // pred_region
      %s8149 = ssub.s32 %s23, 2
      // Predicated region
      $region97: #{bottleneck_csp_forward.3} parent=95 // pred_check
        %p8150 = pneg %p419
      $region98: #{bottleneck_csp_forward.3} parent=95 // pred_check_branch
        %8152 = sbr.rel (%p8150) target = $region100
      $region99: #{bottleneck_csp_forward.3} parent=95 // pred_region
        %s8153 = smul.u32 32, %s29
        %p8154 = scmp.lt.s32.totalorder %s8153, 63
        %s8155 = scalar_select %p8154, %s8153, 63
        %s8156 = smul.addr %s8155, 4
        %s8157 = scalar_lea.vmem %s17, %s8156
      $region100: #{bottleneck_csp_forward.3} parent=95 // pred_fallthru
        _
    $region96: #{bottleneck_csp_forward.3} parent=5 // pred_fallthru
      _
  $region6: #{bottleneck_csp_forward.3} parent=0 // loop_footer
    %s27 = sadd.s32 1, %s23
  $region7: #{bottleneck_csp_forward.3} parent=0 // loop_footer_branch
    %22 = sbr.rel target = $region3
  $region8: #{bottleneck_csp_forward.3} parent=0 // loop_exit
    _

</llo_original>
